<compile_context>
chip_gen: v6e
topology: v6e:2x2x1
jax: 0.10.0
libtpu: 0.0.40
codegen_flags: <defaults>
</compile_context>

<pallas_src>
import numpy as np

import jax
import jax.numpy as jnp
from jax.experimental import pallas as pl
from jax.experimental.pallas import tpu as pltpu


# ============================================================================
# Pallas kernels
# ============================================================================
def _conv_band_kernel(x_ref, w_ref, b_ref, o_ref):
    """3x3 conv (pad=1) + bias + ReLU as three row-shifted banded matmuls.

    Layout: one padded image row per vector row; lanes = width * channels.
      x_ref: (1, R + 2, K)  bf16   R = tb*(H+2) padded rows (+2 zero halo rows)
      w_ref: (3, K, N)      bf16   banded weights, K = (W+2)*Cin, N = W*Cout
      b_ref: (1, N)         f32    bias tiled over the output width
      o_ref: (1, R, N)      bf16   row r = output row (r mod H+2) of image
                                   (r div H+2); rows H, H+1 of each image are
                                   garbage and are never read downstream.
    """
    rows = o_ref.shape[1]
    acc = jnp.dot(x_ref[0, 0:rows, :], w_ref[0],
                  preferred_element_type=jnp.float32)
    acc = acc + jnp.dot(x_ref[0, 1:rows + 1, :], w_ref[1],
                        preferred_element_type=jnp.float32)
    acc = acc + jnp.dot(x_ref[0, 2:rows + 2, :], w_ref[2],
                        preferred_element_type=jnp.float32)
    o_ref[0] = jnp.maximum(acc + b_ref[...], 0.0).astype(o_ref.dtype)


def _mlp_softmax_kernel(x_ref, w1_ref, b1_ref, w2_ref, b2_ref, o_ref):
    """Linear(3136->128) + ReLU + Linear(128->10) + exact Softmax(dim=1)."""
    h = jnp.dot(x_ref[...], w1_ref[...], preferred_element_type=jnp.float32)
    h = jnp.maximum(h + b1_ref[...], 0.0).astype(w2_ref.dtype)
    logits = jnp.dot(h, w2_ref[...], preferred_element_type=jnp.float32)
    logits = logits + b2_ref[...]
    m = jnp.max(logits, axis=1, keepdims=True)
    e = jnp.exp(logits - m)
    s = jnp.sum(e, axis=1, keepdims=True)
    o_ref[...] = (e / s).astype(o_ref.dtype)


_COMPILER_PARAMS = pltpu.CompilerParams(
    dimension_semantics=("parallel",),
    vmem_limit_bytes=48 * 1024 * 1024,   # safe on v7x (64 MiB physical)
)


def _conv_call(x_chunks, w, b, rows_out):
    g, rows_in, k = x_chunks.shape
    n = w.shape[2]
    return pl.pallas_call(
        _conv_band_kernel,
        out_shape=jax.ShapeDtypeStruct((g, rows_out, n), jnp.bfloat16),
        grid=(g,),
        in_specs=[
            pl.BlockSpec((1, rows_in, k), lambda i: (i, 0, 0)),
            pl.BlockSpec((3, k, n), lambda i: (0, 0, 0)),
            pl.BlockSpec((1, n), lambda i: (0, 0)),
        ],
        out_specs=pl.BlockSpec((1, rows_out, n), lambda i: (i, 0, 0)),
        compiler_params=_COMPILER_PARAMS,
    )(x_chunks, w, b)


def _mlp_call(x, w1, b1, w2, b2, tb):
    bp2, d = x.shape
    g = bp2 // tb
    hdim = w1.shape[1]
    n = w2.shape[1]
    return pl.pallas_call(
        _mlp_softmax_kernel,
        out_shape=jax.ShapeDtypeStruct((bp2, n), jnp.float32),
        grid=(g,),
        in_specs=[
            pl.BlockSpec((tb, d), lambda i: (i, 0)),
            pl.BlockSpec((d, hdim), lambda i: (0, 0)),
            pl.BlockSpec((1, hdim), lambda i: (0, 0)),
            pl.BlockSpec((hdim, n), lambda i: (0, 0)),
            pl.BlockSpec((1, n), lambda i: (0, 0)),
        ],
        out_specs=pl.BlockSpec((tb, n), lambda i: (i, 0)),
        compiler_params=_COMPILER_PARAMS,
    )(x, w1, b1, w2, b2)


# ============================================================================
# Glue (one small fused XLA segment between pallas_calls; no 3x intermediates)
# ============================================================================
def _round_up(x, m):
    return ((x + m - 1) // m) * m


def _chunk_rows(x, tb):
    """(bp, rows, K) -> (g, tb*rows + 2, K) with 2 zero halo rows per chunk."""
    bp, rows, k = x.shape
    g = bp // tb
    x = x.reshape(g, tb * rows, k)
    return jnp.pad(x, ((0, 0), (0, 2), (0, 0)))


def _pool_and_prep(y, bp, h, w, c):
    """Conv output (g, tb*(h+2), w*c) -> 2x2 maxpool + zero pad, as padded-row
    layout (bp, h//2 + 2, (w//2 + 2) * c) ready for the next banded conv.

    # TODO(synk): fuse this maxpool/pad epilogue into the conv kernel itself;
    # kept as a single fused XLA segment because in-kernel strided-row and
    # lane-group pooling reshapes are fragile to lower.
    """
    hp = h + 2
    y = y.reshape(bp, hp, w, c)[:, :h]                              # drop garbage rows
    y = y.reshape(bp, h // 2, 2, w // 2, 2, c).max(axis=(2, 4))     # maxpool 2x2
    y = jnp.pad(y, ((0, 0), (1, 1), (1, 1), (0, 0)))                # conv pad=1
    return y.reshape(bp, h // 2 + 2, (w // 2 + 2) * c)


# ============================================================================
# Full forward pass
# ============================================================================
@jax.jit
def net_forward(x_nchw, params):
    b = x_nchw.shape[0]

    # Conv chunking: up to 32 images per grid step, grid >= 2 when batch allows.
    bp8 = _round_up(b, 8)
    if bp8 >= 64:
        tb_conv, bp = 32, _round_up(b, 32)
    elif bp8 >= 16:
        tb_conv, bp = bp8 // 2, bp8
    else:
        tb_conv, bp = bp8, bp8

    x = x_nchw.astype(jnp.float32)
    if bp != b:
        x = jnp.pad(x, ((0, bp - b), (0, 0), (0, 0), (0, 0)))

    # Padded-row layout for conv1: (bp, 30, 30), lanes = padded width * Cin(=1).
    x = jnp.pad(x[:, 0], ((0, 0), (1, 1), (1, 1)))
    x1 = _chunk_rows(x.astype(jnp.bfloat16), tb_conv)                # (g, tb*30+2, 30)

    # Block 1: Conv2d(1,16,3,p=1)+ReLU (Pallas); pool+pad glue (one fused op).
    y1 = _conv_call(x1, params["w1"], params["b1"], tb_conv * 30)    # (g, tb*30, 448)
    x2 = _chunk_rows(_pool_and_prep(y1, bp, 28, 28, 16), tb_conv)    # (g, tb*16+2, 256)

    # Block 2: Conv2d(16,32,3,p=1)+ReLU (Pallas); pool+pad glue.
    y2 = _conv_call(x2, params["w2"], params["b2"], tb_conv * 16)    # (g, tb*16, 448)
    x3 = _chunk_rows(_pool_and_prep(y2, bp, 14, 14, 32), tb_conv)    # (g, tb*9+2, 288)

    # Block 3: Conv2d(32,64,3,p=1)+ReLU (Pallas), no pooling.
    y3 = _conv_call(x3, params["w3"], params["b3"], tb_conv * 9)     # (g, tb*9, 448)

    # Flatten in (y, x, c) order; the PyTorch NCHW flatten is folded into the
    # FC1 weight rows, so no activation transpose is needed.
    flat = y3.reshape(bp, 9, 448)[:, :7, :].reshape(bp, 7 * 448)     # (bp, 3136) bf16

    # MLP chunking, decoupled from the conv chunking.
    if bp >= 512:
        tb_mlp = 256
    elif bp >= 16:
        tb_mlp = max(8, (bp // 2) // 8 * 8)
    else:
        tb_mlp = bp
    bp2 = _round_up(bp, tb_mlp)
    if bp2 != bp:
        flat = jnp.pad(flat, ((0, bp2 - bp), (0, 0)))

    out = _mlp_call(flat, params["wfc1"], params["bfc1"],
                    params["wfc2"], params["bfc2"], tb_mlp)          # (bp2, 10) f32
    return out[:b]


# ============================================================================
# Parameters (deterministic synthetic init, PyTorch layouts folded for TPU)
# ============================================================================
def _band_conv_weight(wt, w_in):
    """(Cout, Cin, 3, 3) torch conv weight -> (3, w_in*Cin, (w_in-2)*Cout).

    Band[dy, xi*Cin + ci, x*Cout + co] = wt[co, ci, dy, xi - x] for xi-x in 0..2,
    so `padded_row[y+dy] @ Band[dy]` summed over dy is the full 3x3 conv row.
    """
    wt = np.asarray(jax.device_get(wt), dtype=np.float32)
    cout, cin = wt.shape[:2]
    w_out = w_in - 2
    band = np.zeros((3, w_in, cin, w_out, cout), np.float32)
    for dy in range(3):
        for dx in range(3):
            for x in range(w_out):
                band[dy, x + dx, :, x, :] = wt[:, :, dy, dx].T
    return jnp.asarray(band.reshape(3, w_in * cin, w_out * cout),
                       dtype=jnp.bfloat16)


def init_params(key):
    ks = jax.random.split(key, 10)
    scale = 0.05

    def rnd(k, shape):
        return (scale * jax.random.normal(k, shape)).astype(jnp.float32)

    # PyTorch-shaped parameters.
    w1c = rnd(ks[0], (16, 1, 3, 3));      b1 = rnd(ks[1], (16,))
    w2c = rnd(ks[2], (32, 16, 3, 3));     b2 = rnd(ks[3], (32,))
    w3c = rnd(ks[4], (64, 32, 3, 3));     b3 = rnd(ks[5], (64,))
    wfc1 = rnd(ks[6], (128, 7 * 7 * 64)); bfc1 = rnd(ks[7], (128,))
    wfc2 = rnd(ks[8], (10, 128));         bfc2 = rnd(ks[9], (10,))

    # Fold the PyTorch NCHW flatten into FC1: reorder rows (c,h,w) -> (h,w,c).
    w_fc1 = wfc1.T.reshape(64, 7, 7, 128)
    w_fc1 = jnp.transpose(w_fc1, (1, 2, 0, 3)).reshape(7 * 7 * 64, 128)

    params = {
        "w1": _band_conv_weight(w1c, 30), "b1": jnp.tile(b1, 28)[None, :],
        "w2": _band_conv_weight(w2c, 16), "b2": jnp.tile(b2, 14)[None, :],
        "w3": _band_conv_weight(w3c, 9),  "b3": jnp.tile(b3, 7)[None, :],
        "wfc1": w_fc1.astype(jnp.bfloat16),  "bfc1": bfc1[None, :],
        "wfc2": wfc2.T.astype(jnp.bfloat16), "bfc2": bfc2[None, :],
    }
    raw = {"w1": w1c, "b1": b1, "w2": w2c, "b2": b2, "w3": w3c, "b3": b3,
           "wfc1": wfc1, "bfc1": bfc1, "wfc2": wfc2, "bfc2": bfc2}
    return params, raw


# ============================================================================
# Pure-JAX reference (f32) of the original PyTorch module, for validation
# ============================================================================
def _reference_forward(x_nchw, raw):
    x = x_nchw.astype(jnp.float32)

    def conv(z, w, b):
        y = jax.lax.conv_general_dilated(
            z, w, window_strides=(1, 1), padding=((1, 1), (1, 1)),
            dimension_numbers=("NCHW", "OIHW", "NCHW"))
        return jax.nn.relu(y + b[None, :, None, None])

    def pool(z):
        n, c, h, w = z.shape
        return z.reshape(n, c, h // 2, 2, w // 2, 2).max(axis=(3, 5))

    y = pool(conv(x, raw["w1"], raw["b1"]))
    y = pool(conv(y, raw["w2"], raw["b2"]))
    y = conv(y, raw["w3"], raw["b3"])
    y = y.reshape(y.shape[0], -1)                      # NCHW flatten, like torch
    y = jax.nn.relu(y @ raw["wfc1"].T + raw["bfc1"])
    y = y @ raw["wfc2"].T + raw["bfc2"]
    return jax.nn.softmax(y, axis=1)


if __name__ == "__main__":
    key = jax.random.PRNGKey(0)
    pkey, xkey1, xkey2 = jax.random.split(key, 3)
    params, raw = init_params(pkey)

    # Small primary test (spatial must be 28x28: the Flatten assumes 7*7*64).
    x_small = jax.random.normal(xkey1, (2, 1, 28, 28), dtype=jnp.float32)
    out = jax.block_until_ready(net_forward(x_small, params))
    assert out.shape == (2, 10), out.shape
    assert bool(jnp.all(jnp.isfinite(out)))
    assert bool(jnp.all(jnp.abs(jnp.sum(out, axis=1) - 1.0) < 1e-3))
    ref = _reference_forward(x_small, raw)
    assert float(jnp.max(jnp.abs(out - ref))) < 3e-2

    # Second run exercising multi-chunk grids (conv and MLP grid >= 2).
    x_big = jax.random.normal(xkey2, (48, 1, 28, 28), dtype=jnp.float32)
    out_big = jax.block_until_ready(net_forward(x_big, params))
    assert out_big.shape == (48, 10), out_big.shape
    assert bool(jnp.all(jnp.isfinite(out_big)))
    assert bool(jnp.all(jnp.abs(jnp.sum(out_big, axis=1) - 1.0) < 1e-3))
    ref_big = _reference_forward(x_big, raw)
    assert float(jnp.max(jnp.abs(out_big - ref_big))) < 3e-2

    print("KERNEL_OK")
</pallas_src>

<mosaic_0001>
module attributes {stable_mosaic.version = 11 : i64} {
  func.func @_conv_band_kernel(%arg0: i32, %arg1: memref<1x242x30xbf16, #tpu.memory_space<vmem>>, %arg2: memref<3x30x448xbf16, #tpu.memory_space<vmem>>, %arg3: memref<1x448xf32, #tpu.memory_space<vmem>>, %arg4: memref<1x240x448xbf16, #tpu.memory_space<vmem>>) attributes {dimension_semantics = [#tpu.dimension_semantics<parallel>], iteration_bounds = array<i64: 1>, scalar_prefetch = 0 : i64, scratch_operands = 0 : i64, tpu.core_type = #tpu.core_type<tc>, window_params = [{transform_indices = @transform_0, window_bounds = array<i64: 1, 242, 30>}, {pipeline_mode = #tpu.pipeline_mode<synchronous>, transform_indices = @transform_1, window_bounds = array<i64: 3, 30, 448>}, {pipeline_mode = #tpu.pipeline_mode<synchronous>, transform_indices = @transform_2, window_bounds = array<i64: 1, 448>}, {transform_indices = @transform_3, window_bounds = array<i64: 1, 240, 448>}]} {
    %c0 = arith.constant 0 : index
    %c0_0 = arith.constant 0 : index
    %c0_1 = arith.constant 0 : index
    %0 = vector.load %arg1[%c0, %c0_0, %c0_1] : memref<1x242x30xbf16, #tpu.memory_space<vmem>>, vector<1x240x30xbf16>
    %1 = vector.shape_cast %0 : vector<1x240x30xbf16> to vector<240x30xbf16>
    %c0_2 = arith.constant 0 : index
    %c0_3 = arith.constant 0 : index
    %c0_4 = arith.constant 0 : index
    %2 = vector.load %arg2[%c0_2, %c0_3, %c0_4] : memref<3x30x448xbf16, #tpu.memory_space<vmem>>, vector<1x30x448xbf16>
    %3 = vector.shape_cast %2 : vector<1x30x448xbf16> to vector<30x448xbf16>
    %cst = arith.constant dense<0.000000e+00> : vector<240x448xf32>
    %4 = tpu.matmul %1, %3, %cst {dimension_numbers = #tpu.dot_dimension_numbers<[1], [0], [0], [1], [0, 0, 1, 1], [], []>} : vector<240x30xbf16>, vector<30x448xbf16>, vector<240x448xf32> -> vector<240x448xf32>
    %c0_5 = arith.constant 0 : index
    %c1 = arith.constant 1 : index
    %c0_6 = arith.constant 0 : index
    %5 = vector.load %arg1[%c0_5, %c1, %c0_6] : memref<1x242x30xbf16, #tpu.memory_space<vmem>>, vector<1x240x30xbf16>
    %6 = vector.shape_cast %5 : vector<1x240x30xbf16> to vector<240x30xbf16>
    %c1_7 = arith.constant 1 : index
    %c0_8 = arith.constant 0 : index
    %c0_9 = arith.constant 0 : index
    %7 = vector.load %arg2[%c1_7, %c0_8, %c0_9] : memref<3x30x448xbf16, #tpu.memory_space<vmem>>, vector<1x30x448xbf16>
    %8 = vector.shape_cast %7 : vector<1x30x448xbf16> to vector<30x448xbf16>
    %cst_10 = arith.constant dense<0.000000e+00> : vector<240x448xf32>
    %9 = tpu.matmul %6, %8, %cst_10 {dimension_numbers = #tpu.dot_dimension_numbers<[1], [0], [0], [1], [0, 0, 1, 1], [], []>} : vector<240x30xbf16>, vector<30x448xbf16>, vector<240x448xf32> -> vector<240x448xf32>
    %10 = arith.addf %4, %9 : vector<240x448xf32>
    %c0_11 = arith.constant 0 : index
    %c2 = arith.constant 2 : index
    %c0_12 = arith.constant 0 : index
    %11 = vector.load %arg1[%c0_11, %c2, %c0_12] : memref<1x242x30xbf16, #tpu.memory_space<vmem>>, vector<1x240x30xbf16>
    %12 = vector.shape_cast %11 : vector<1x240x30xbf16> to vector<240x30xbf16>
    %c2_13 = arith.constant 2 : index
    %c0_14 = arith.constant 0 : index
    %c0_15 = arith.constant 0 : index
    %13 = vector.load %arg2[%c2_13, %c0_14, %c0_15] : memref<3x30x448xbf16, #tpu.memory_space<vmem>>, vector<1x30x448xbf16>
    %14 = vector.shape_cast %13 : vector<1x30x448xbf16> to vector<30x448xbf16>
    %cst_16 = arith.constant dense<0.000000e+00> : vector<240x448xf32>
    %15 = tpu.matmul %12, %14, %cst_16 {dimension_numbers = #tpu.dot_dimension_numbers<[1], [0], [0], [1], [0, 0, 1, 1], [], []>} : vector<240x30xbf16>, vector<30x448xbf16>, vector<240x448xf32> -> vector<240x448xf32>
    %16 = arith.addf %10, %15 : vector<240x448xf32>
    %c0_17 = arith.constant 0 : index
    %c0_18 = arith.constant 0 : index
    %17 = vector.load %arg3[%c0_17, %c0_18] : memref<1x448xf32, #tpu.memory_space<vmem>>, vector<1x448xf32>
    %18 = vector.broadcast %17 : vector<1x448xf32> to vector<240x448xf32>
    %19 = arith.addf %16, %18 : vector<240x448xf32>
    %cst_19 = arith.constant 0.000000e+00 : f32
    %20 = vector.broadcast %cst_19 : f32 to vector<240x448xf32>
    %21 = arith.maximumf %19, %20 : vector<240x448xf32>
    %22 = arith.truncf %21 : vector<240x448xf32> to vector<240x448xbf16>
    %c0_20 = arith.constant 0 : index
    %c0_21 = arith.constant 0 : index
    %c0_22 = arith.constant 0 : index
    %23 = vector.load %arg4[%c0_20, %c0_21, %c0_22] : memref<1x240x448xbf16, #tpu.memory_space<vmem>>, vector<1x240x448xbf16>
    %24 = vector.shape_cast %23 : vector<1x240x448xbf16> to vector<240x448xbf16>
    %25 = vector.shape_cast %22 : vector<240x448xbf16> to vector<1x240x448xbf16>
    tpu.vector_store %arg4[%c0_20, %c0_21, %c0_22], %25 {strides = array<i32>} : memref<1x240x448xbf16, #tpu.memory_space<vmem>>, vector<1x240x448xbf16>,
    return
  }
  func.func @transform_0(%arg0: i32) -> (i32, i32, i32) {
    %c0_i32 = arith.constant 0 : i32
    %c0_i32_0 = arith.constant 0 : i32
    %c0_i32_1 = arith.constant 0 : i32
    return %arg0, %c0_i32, %c0_i32_0 : i32, i32, i32
  }
  func.func @transform_1(%arg0: i32) -> (i32, i32, i32) {
    %c0_i32 = arith.constant 0 : i32
    %c0_i32_0 = arith.constant 0 : i32
    %c0_i32_1 = arith.constant 0 : i32
    %c0_i32_2 = arith.constant 0 : i32
    return %c0_i32, %c0_i32_0, %c0_i32_1 : i32, i32, i32
  }
  func.func @transform_2(%arg0: i32) -> (i32, i32) {
    %c0_i32 = arith.constant 0 : i32
    %c0_i32_0 = arith.constant 0 : i32
    %c0_i32_1 = arith.constant 0 : i32
    return %c0_i32, %c0_i32_0 : i32, i32
  }
  func.func @transform_3(%arg0: i32) -> (i32, i32, i32) {
    %c0_i32 = arith.constant 0 : i32
    %c0_i32_0 = arith.constant 0 : i32
    %c0_i32_1 = arith.constant 0 : i32
    return %arg0, %c0_i32, %c0_i32_0 : i32, i32, i32
  }
}

module attributes {stable_mosaic.version = 11 : i64} {
  func.func @_conv_band_kernel(%arg0: i32, %arg1: memref<1x130x256xbf16, #tpu.memory_space<vmem>>, %arg2: memref<3x256x448xbf16, #tpu.memory_space<vmem>>, %arg3: memref<1x448xf32, #tpu.memory_space<vmem>>, %arg4: memref<1x128x448xbf16, #tpu.memory_space<vmem>>) attributes {dimension_semantics = [#tpu.dimension_semantics<parallel>], iteration_bounds = array<i64: 1>, scalar_prefetch = 0 : i64, scratch_operands = 0 : i64, tpu.core_type = #tpu.core_type<tc>, window_params = [{transform_indices = @transform_0, window_bounds = array<i64: 1, 130, 256>}, {pipeline_mode = #tpu.pipeline_mode<synchronous>, transform_indices = @transform_1, window_bounds = array<i64: 3, 256, 448>}, {pipeline_mode = #tpu.pipeline_mode<synchronous>, transform_indices = @transform_2, window_bounds = array<i64: 1, 448>}, {transform_indices = @transform_3, window_bounds = array<i64: 1, 128, 448>}]} {
    %c0 = arith.constant 0 : index
    %c0_0 = arith.constant 0 : index
    %c0_1 = arith.constant 0 : index
    %0 = vector.load %arg1[%c0, %c0_0, %c0_1] : memref<1x130x256xbf16, #tpu.memory_space<vmem>>, vector<1x128x256xbf16>
    %1 = vector.shape_cast %0 : vector<1x128x256xbf16> to vector<128x256xbf16>
    %c0_2 = arith.constant 0 : index
    %c0_3 = arith.constant 0 : index
    %c0_4 = arith.constant 0 : index
    %2 = vector.load %arg2[%c0_2, %c0_3, %c0_4] : memref<3x256x448xbf16, #tpu.memory_space<vmem>>, vector<1x256x448xbf16>
    %3 = vector.shape_cast %2 : vector<1x256x448xbf16> to vector<256x448xbf16>
    %cst = arith.constant dense<0.000000e+00> : vector<128x448xf32>
    %4 = tpu.matmul %1, %3, %cst {dimension_numbers = #tpu.dot_dimension_numbers<[1], [0], [0], [1], [0, 0, 1, 1], [], []>} : vector<128x256xbf16>, vector<256x448xbf16>, vector<128x448xf32> -> vector<128x448xf32>
    %c0_5 = arith.constant 0 : index
    %c1 = arith.constant 1 : index
    %c0_6 = arith.constant 0 : index
    %5 = vector.load %arg1[%c0_5, %c1, %c0_6] : memref<1x130x256xbf16, #tpu.memory_space<vmem>>, vector<1x128x256xbf16>
    %6 = vector.shape_cast %5 : vector<1x128x256xbf16> to vector<128x256xbf16>
    %c1_7 = arith.constant 1 : index
    %c0_8 = arith.constant 0 : index
    %c0_9 = arith.constant 0 : index
    %7 = vector.load %arg2[%c1_7, %c0_8, %c0_9] : memref<3x256x448xbf16, #tpu.memory_space<vmem>>, vector<1x256x448xbf16>
    %8 = vector.shape_cast %7 : vector<1x256x448xbf16> to vector<256x448xbf16>
    %cst_10 = arith.constant dense<0.000000e+00> : vector<128x448xf32>
    %9 = tpu.matmul %6, %8, %cst_10 {dimension_numbers = #tpu.dot_dimension_numbers<[1], [0], [0], [1], [0, 0, 1, 1], [], []>} : vector<128x256xbf16>, vector<256x448xbf16>, vector<128x448xf32> -> vector<128x448xf32>
    %10 = arith.addf %4, %9 : vector<128x448xf32>
    %c0_11 = arith.constant 0 : index
    %c2 = arith.constant 2 : index
    %c0_12 = arith.constant 0 : index
    %11 = vector.load %arg1[%c0_11, %c2, %c0_12] : memref<1x130x256xbf16, #tpu.memory_space<vmem>>, vector<1x128x256xbf16>
    %12 = vector.shape_cast %11 : vector<1x128x256xbf16> to vector<128x256xbf16>
    %c2_13 = arith.constant 2 : index
    %c0_14 = arith.constant 0 : index
    %c0_15 = arith.constant 0 : index
    %13 = vector.load %arg2[%c2_13, %c0_14, %c0_15] : memref<3x256x448xbf16, #tpu.memory_space<vmem>>, vector<1x256x448xbf16>
    %14 = vector.shape_cast %13 : vector<1x256x448xbf16> to vector<256x448xbf16>
    %cst_16 = arith.constant dense<0.000000e+00> : vector<128x448xf32>
    %15 = tpu.matmul %12, %14, %cst_16 {dimension_numbers = #tpu.dot_dimension_numbers<[1], [0], [0], [1], [0, 0, 1, 1], [], []>} : vector<128x256xbf16>, vector<256x448xbf16>, vector<128x448xf32> -> vector<128x448xf32>
    %16 = arith.addf %10, %15 : vector<128x448xf32>
    %c0_17 = arith.constant 0 : index
    %c0_18 = arith.constant 0 : index
    %17 = vector.load %arg3[%c0_17, %c0_18] : memref<1x448xf32, #tpu.memory_space<vmem>>, vector<1x448xf32>
    %18 = vector.broadcast %17 : vector<1x448xf32> to vector<128x448xf32>
    %19 = arith.addf %16, %18 : vector<128x448xf32>
    %cst_19 = arith.constant 0.000000e+00 : f32
    %20 = vector.broadcast %cst_19 : f32 to vector<128x448xf32>
    %21 = arith.maximumf %19, %20 : vector<128x448xf32>
    %22 = arith.truncf %21 : vector<128x448xf32> to vector<128x448xbf16>
    %c0_20 = arith.constant 0 : index
    %c0_21 = arith.constant 0 : index
    %c0_22 = arith.constant 0 : index
    %23 = vector.load %arg4[%c0_20, %c0_21, %c0_22] : memref<1x128x448xbf16, #tpu.memory_space<vmem>>, vector<1x128x448xbf16>
    %24 = vector.shape_cast %23 : vector<1x128x448xbf16> to vector<128x448xbf16>
    %25 = vector.shape_cast %22 : vector<128x448xbf16> to vector<1x128x448xbf16>
    tpu.vector_store %arg4[%c0_20, %c0_21, %c0_22], %25 {strides = array<i32>} : memref<1x128x448xbf16, #tpu.memory_space<vmem>>, vector<1x128x448xbf16>,
    return
  }
  func.func @transform_0(%arg0: i32) -> (i32, i32, i32) {
    %c0_i32 = arith.constant 0 : i32
    %c0_i32_0 = arith.constant 0 : i32
    %c0_i32_1 = arith.constant 0 : i32
    return %arg0, %c0_i32, %c0_i32_0 : i32, i32, i32
  }
  func.func @transform_1(%arg0: i32) -> (i32, i32, i32) {
    %c0_i32 = arith.constant 0 : i32
    %c0_i32_0 = arith.constant 0 : i32
    %c0_i32_1 = arith.constant 0 : i32
    %c0_i32_2 = arith.constant 0 : i32
    return %c0_i32, %c0_i32_0, %c0_i32_1 : i32, i32, i32
  }
  func.func @transform_2(%arg0: i32) -> (i32, i32) {
    %c0_i32 = arith.constant 0 : i32
    %c0_i32_0 = arith.constant 0 : i32
    %c0_i32_1 = arith.constant 0 : i32
    return %c0_i32, %c0_i32_0 : i32, i32
  }
  func.func @transform_3(%arg0: i32) -> (i32, i32, i32) {
    %c0_i32 = arith.constant 0 : i32
    %c0_i32_0 = arith.constant 0 : i32
    %c0_i32_1 = arith.constant 0 : i32
    return %arg0, %c0_i32, %c0_i32_0 : i32, i32, i32
  }
}

module attributes {stable_mosaic.version = 11 : i64} {
  func.func @_conv_band_kernel(%arg0: i32, %arg1: memref<1x74x288xbf16, #tpu.memory_space<vmem>>, %arg2: memref<3x288x448xbf16, #tpu.memory_space<vmem>>, %arg3: memref<1x448xf32, #tpu.memory_space<vmem>>, %arg4: memref<1x72x448xbf16, #tpu.memory_space<vmem>>) attributes {dimension_semantics = [#tpu.dimension_semantics<parallel>], iteration_bounds = array<i64: 1>, scalar_prefetch = 0 : i64, scratch_operands = 0 : i64, tpu.core_type = #tpu.core_type<tc>, window_params = [{transform_indices = @transform_0, window_bounds = array<i64: 1, 74, 288>}, {pipeline_mode = #tpu.pipeline_mode<synchronous>, transform_indices = @transform_1, window_bounds = array<i64: 3, 288, 448>}, {pipeline_mode = #tpu.pipeline_mode<synchronous>, transform_indices = @transform_2, window_bounds = array<i64: 1, 448>}, {transform_indices = @transform_3, window_bounds = array<i64: 1, 72, 448>}]} {
    %c0 = arith.constant 0 : index
    %c0_0 = arith.constant 0 : index
    %c0_1 = arith.constant 0 : index
    %0 = vector.load %arg1[%c0, %c0_0, %c0_1] : memref<1x74x288xbf16, #tpu.memory_space<vmem>>, vector<1x72x288xbf16>
    %1 = vector.shape_cast %0 : vector<1x72x288xbf16> to vector<72x288xbf16>
    %c0_2 = arith.constant 0 : index
    %c0_3 = arith.constant 0 : index
    %c0_4 = arith.constant 0 : index
    %2 = vector.load %arg2[%c0_2, %c0_3, %c0_4] : memref<3x288x448xbf16, #tpu.memory_space<vmem>>, vector<1x288x448xbf16>
    %3 = vector.shape_cast %2 : vector<1x288x448xbf16> to vector<288x448xbf16>
    %cst = arith.constant dense<0.000000e+00> : vector<72x448xf32>
    %4 = tpu.matmul %1, %3, %cst {dimension_numbers = #tpu.dot_dimension_numbers<[1], [0], [0], [1], [0, 0, 1, 1], [], []>} : vector<72x288xbf16>, vector<288x448xbf16>, vector<72x448xf32> -> vector<72x448xf32>
    %c0_5 = arith.constant 0 : index
    %c1 = arith.constant 1 : index
    %c0_6 = arith.constant 0 : index
    %5 = vector.load %arg1[%c0_5, %c1, %c0_6] : memref<1x74x288xbf16, #tpu.memory_space<vmem>>, vector<1x72x288xbf16>
    %6 = vector.shape_cast %5 : vector<1x72x288xbf16> to vector<72x288xbf16>
    %c1_7 = arith.constant 1 : index
    %c0_8 = arith.constant 0 : index
    %c0_9 = arith.constant 0 : index
    %7 = vector.load %arg2[%c1_7, %c0_8, %c0_9] : memref<3x288x448xbf16, #tpu.memory_space<vmem>>, vector<1x288x448xbf16>
    %8 = vector.shape_cast %7 : vector<1x288x448xbf16> to vector<288x448xbf16>
    %cst_10 = arith.constant dense<0.000000e+00> : vector<72x448xf32>
    %9 = tpu.matmul %6, %8, %cst_10 {dimension_numbers = #tpu.dot_dimension_numbers<[1], [0], [0], [1], [0, 0, 1, 1], [], []>} : vector<72x288xbf16>, vector<288x448xbf16>, vector<72x448xf32> -> vector<72x448xf32>
    %10 = arith.addf %4, %9 : vector<72x448xf32>
    %c0_11 = arith.constant 0 : index
    %c2 = arith.constant 2 : index
    %c0_12 = arith.constant 0 : index
    %11 = vector.load %arg1[%c0_11, %c2, %c0_12] : memref<1x74x288xbf16, #tpu.memory_space<vmem>>, vector<1x72x288xbf16>
    %12 = vector.shape_cast %11 : vector<1x72x288xbf16> to vector<72x288xbf16>
    %c2_13 = arith.constant 2 : index
    %c0_14 = arith.constant 0 : index
    %c0_15 = arith.constant 0 : index
    %13 = vector.load %arg2[%c2_13, %c0_14, %c0_15] : memref<3x288x448xbf16, #tpu.memory_space<vmem>>, vector<1x288x448xbf16>
    %14 = vector.shape_cast %13 : vector<1x288x448xbf16> to vector<288x448xbf16>
    %cst_16 = arith.constant dense<0.000000e+00> : vector<72x448xf32>
    %15 = tpu.matmul %12, %14, %cst_16 {dimension_numbers = #tpu.dot_dimension_numbers<[1], [0], [0], [1], [0, 0, 1, 1], [], []>} : vector<72x288xbf16>, vector<288x448xbf16>, vector<72x448xf32> -> vector<72x448xf32>
    %16 = arith.addf %10, %15 : vector<72x448xf32>
    %c0_17 = arith.constant 0 : index
    %c0_18 = arith.constant 0 : index
    %17 = vector.load %arg3[%c0_17, %c0_18] : memref<1x448xf32, #tpu.memory_space<vmem>>, vector<1x448xf32>
    %18 = vector.broadcast %17 : vector<1x448xf32> to vector<72x448xf32>
    %19 = arith.addf %16, %18 : vector<72x448xf32>
    %cst_19 = arith.constant 0.000000e+00 : f32
    %20 = vector.broadcast %cst_19 : f32 to vector<72x448xf32>
    %21 = arith.maximumf %19, %20 : vector<72x448xf32>
    %22 = arith.truncf %21 : vector<72x448xf32> to vector<72x448xbf16>
    %c0_20 = arith.constant 0 : index
    %c0_21 = arith.constant 0 : index
    %c0_22 = arith.constant 0 : index
    %23 = vector.load %arg4[%c0_20, %c0_21, %c0_22] : memref<1x72x448xbf16, #tpu.memory_space<vmem>>, vector<1x72x448xbf16>
    %24 = vector.shape_cast %23 : vector<1x72x448xbf16> to vector<72x448xbf16>
    %25 = vector.shape_cast %22 : vector<72x448xbf16> to vector<1x72x448xbf16>
    tpu.vector_store %arg4[%c0_20, %c0_21, %c0_22], %25 {strides = array<i32>} : memref<1x72x448xbf16, #tpu.memory_space<vmem>>, vector<1x72x448xbf16>,
    return
  }
  func.func @transform_0(%arg0: i32) -> (i32, i32, i32) {
    %c0_i32 = arith.constant 0 : i32
    %c0_i32_0 = arith.constant 0 : i32
    %c0_i32_1 = arith.constant 0 : i32
    return %arg0, %c0_i32, %c0_i32_0 : i32, i32, i32
  }
  func.func @transform_1(%arg0: i32) -> (i32, i32, i32) {
    %c0_i32 = arith.constant 0 : i32
    %c0_i32_0 = arith.constant 0 : i32
    %c0_i32_1 = arith.constant 0 : i32
    %c0_i32_2 = arith.constant 0 : i32
    return %c0_i32, %c0_i32_0, %c0_i32_1 : i32, i32, i32
  }
  func.func @transform_2(%arg0: i32) -> (i32, i32) {
    %c0_i32 = arith.constant 0 : i32
    %c0_i32_0 = arith.constant 0 : i32
    %c0_i32_1 = arith.constant 0 : i32
    return %c0_i32, %c0_i32_0 : i32, i32
  }
  func.func @transform_3(%arg0: i32) -> (i32, i32, i32) {
    %c0_i32 = arith.constant 0 : i32
    %c0_i32_0 = arith.constant 0 : i32
    %c0_i32_1 = arith.constant 0 : i32
    return %arg0, %c0_i32, %c0_i32_0 : i32, i32, i32
  }
}

module attributes {stable_mosaic.version = 11 : i64} {
  func.func @_mlp_softmax_kernel(%arg0: i32, %arg1: memref<8x3136xbf16, #tpu.memory_space<vmem>>, %arg2: memref<3136x128xbf16, #tpu.memory_space<vmem>>, %arg3: memref<1x128xf32, #tpu.memory_space<vmem>>, %arg4: memref<128x10xbf16, #tpu.memory_space<vmem>>, %arg5: memref<1x10xf32, #tpu.memory_space<vmem>>, %arg6: memref<8x10xf32, #tpu.memory_space<vmem>>) attributes {dimension_semantics = [#tpu.dimension_semantics<parallel>], iteration_bounds = array<i64: 1>, scalar_prefetch = 0 : i64, scratch_operands = 0 : i64, tpu.core_type = #tpu.core_type<tc>, window_params = [{transform_indices = @transform_0, window_bounds = array<i64: 8, 3136>}, {pipeline_mode = #tpu.pipeline_mode<synchronous>, transform_indices = @transform_1, window_bounds = array<i64: 3136, 128>}, {pipeline_mode = #tpu.pipeline_mode<synchronous>, transform_indices = @transform_2, window_bounds = array<i64: 1, 128>}, {pipeline_mode = #tpu.pipeline_mode<synchronous>, transform_indices = @transform_3, window_bounds = array<i64: 128, 10>}, {pipeline_mode = #tpu.pipeline_mode<synchronous>, transform_indices = @transform_4, window_bounds = array<i64: 1, 10>}, {transform_indices = @transform_5, window_bounds = array<i64: 8, 10>}]} {
    %c0 = arith.constant 0 : index
    %c0_0 = arith.constant 0 : index
    %0 = vector.load %arg1[%c0, %c0_0] : memref<8x3136xbf16, #tpu.memory_space<vmem>>, vector<8x3136xbf16>
    %c0_1 = arith.constant 0 : index
    %c0_2 = arith.constant 0 : index
    %1 = vector.load %arg2[%c0_1, %c0_2] : memref<3136x128xbf16, #tpu.memory_space<vmem>>, vector<3136x128xbf16>
    %cst = arith.constant dense<0.000000e+00> : vector<8x128xf32>
    %2 = tpu.matmul %0, %1, %cst {dimension_numbers = #tpu.dot_dimension_numbers<[1], [0], [0], [1], [0, 0, 1, 1], [], []>} : vector<8x3136xbf16>, vector<3136x128xbf16>, vector<8x128xf32> -> vector<8x128xf32>
    %c0_3 = arith.constant 0 : index
    %c0_4 = arith.constant 0 : index
    %3 = vector.load %arg3[%c0_3, %c0_4] : memref<1x128xf32, #tpu.memory_space<vmem>>, vector<1x128xf32>
    %4 = vector.broadcast %3 : vector<1x128xf32> to vector<8x128xf32>
    %5 = arith.addf %2, %4 : vector<8x128xf32>
    %cst_5 = arith.constant 0.000000e+00 : f32
    %6 = vector.broadcast %cst_5 : f32 to vector<8x128xf32>
    %7 = arith.maximumf %5, %6 : vector<8x128xf32>
    %8 = arith.truncf %7 : vector<8x128xf32> to vector<8x128xbf16>
    %c0_6 = arith.constant 0 : index
    %c0_7 = arith.constant 0 : index
    %9 = vector.load %arg4[%c0_6, %c0_7] : memref<128x10xbf16, #tpu.memory_space<vmem>>, vector<128x10xbf16>
    %cst_8 = arith.constant dense<0.000000e+00> : vector<8x10xf32>
    %10 = tpu.matmul %8, %9, %cst_8 {dimension_numbers = #tpu.dot_dimension_numbers<[1], [0], [0], [1], [0, 0, 1, 1], [], []>} : vector<8x128xbf16>, vector<128x10xbf16>, vector<8x10xf32> -> vector<8x10xf32>
    %c0_9 = arith.constant 0 : index
    %c0_10 = arith.constant 0 : index
    %11 = vector.load %arg5[%c0_9, %c0_10] : memref<1x10xf32, #tpu.memory_space<vmem>>, vector<1x10xf32>
    %12 = vector.broadcast %11 : vector<1x10xf32> to vector<8x10xf32>
    %13 = arith.addf %10, %12 : vector<8x10xf32>
    %cst_11 = arith.constant dense<0xFF800000> : vector<8xf32>
    %14 = vector.multi_reduction <maximumf>, %13, %cst_11 [1] : vector<8x10xf32> to vector<8xf32>
    %15 = vector.shape_cast %14 : vector<8xf32> to vector<8x1xf32>
    %16 = vector.broadcast %15 : vector<8x1xf32> to vector<8x10xf32>
    %17 = arith.subf %13, %16 : vector<8x10xf32>
    %18 = math.exp %17 : vector<8x10xf32>
    %cst_12 = arith.constant dense<0.000000e+00> : vector<8xf32>
    %19 = vector.multi_reduction <add>, %18, %cst_12 [1] : vector<8x10xf32> to vector<8xf32>
    %20 = vector.shape_cast %19 : vector<8xf32> to vector<8x1xf32>
    %21 = vector.broadcast %20 : vector<8x1xf32> to vector<8x10xf32>
    %22 = arith.divf %18, %21 : vector<8x10xf32>
    %c0_13 = arith.constant 0 : index
    %c0_14 = arith.constant 0 : index
    %23 = vector.load %arg6[%c0_13, %c0_14] : memref<8x10xf32, #tpu.memory_space<vmem>>, vector<8x10xf32>
    tpu.vector_store %arg6[%c0_13, %c0_14], %22 {strides = array<i32>} : memref<8x10xf32, #tpu.memory_space<vmem>>, vector<8x10xf32>,
    return
  }
  func.func @transform_0(%arg0: i32) -> (i32, i32) {
    %c0_i32 = arith.constant 0 : i32
    %c0_i32_0 = arith.constant 0 : i32
    return %arg0, %c0_i32 : i32, i32
  }
  func.func @transform_1(%arg0: i32) -> (i32, i32) {
    %c0_i32 = arith.constant 0 : i32
    %c0_i32_0 = arith.constant 0 : i32
    %c0_i32_1 = arith.constant 0 : i32
    return %c0_i32, %c0_i32_0 : i32, i32
  }
  func.func @transform_2(%arg0: i32) -> (i32, i32) {
    %c0_i32 = arith.constant 0 : i32
    %c0_i32_0 = arith.constant 0 : i32
    %c0_i32_1 = arith.constant 0 : i32
    return %c0_i32, %c0_i32_0 : i32, i32
  }
  func.func @transform_3(%arg0: i32) -> (i32, i32) {
    %c0_i32 = arith.constant 0 : i32
    %c0_i32_0 = arith.constant 0 : i32
    %c0_i32_1 = arith.constant 0 : i32
    return %c0_i32, %c0_i32_0 : i32, i32
  }
  func.func @transform_4(%arg0: i32) -> (i32, i32) {
    %c0_i32 = arith.constant 0 : i32
    %c0_i32_0 = arith.constant 0 : i32
    %c0_i32_1 = arith.constant 0 : i32
    return %c0_i32, %c0_i32_0 : i32, i32
  }
  func.func @transform_5(%arg0: i32) -> (i32, i32) {
    %c0_i32 = arith.constant 0 : i32
    %c0_i32_0 = arith.constant 0 : i32
    return %arg0, %c0_i32 : i32, i32
  }
}

</mosaic_0001>

<llo_original>
// kernel: net_forward.4
$region0: #{net_forward.4}
  #allocation0 [shape = 'u32[]', space=smem, size = 0x4, offset = 0x4, fixed_abs, tag = 'smem constant byte address 0x4 - core index']
  #allocation1 [shape = 'u32[144,128]{1,0:T(1,128)}', space=vmem, size = 0x12000, scoped, tag = 'internal scratch']
  %s0 = inlined_call_operand.vmem [shape: bf16[1,242,30], index: 0, kind: input, shape index: {}]
  %s1 = inlined_call_operand.hbm [shape: bf16[3,30,448], index: 1, kind: input, shape index: {}]
  %s2 = inlined_call_operand.hbm [shape: f32[1,448], index: 2, kind: input, shape index: {}]
  %s3 = inlined_call_operand.vmem [shape: bf16[1,240,448], index: 3, kind: output, shape index: {}]
  %s4 = sld [smem:[#allocation0]]
  $region30: #{net_forward.4} parent=0
    _
  %s6 = ssub.s32 1, %s4
  %s7 = scalar_select 0, %s6, %s4
  $region1: #{net_forward.4} parent=0
    #allocation2 [shape = 'u8[98304]{0}', space=vmem, size = 0x18000, scoped, tag = 'input window, operand 1, single buffered']
    #allocation3 [shape = 's32[1]{0}', space=sflag, size = 0x4, scoped, tag = 'scoped memory for net_forward.4']
    #allocation4 [shape = 'u8[2048]{0}', space=vmem, size = 0x800, scoped, tag = 'input window, operand 2, single buffered']
    #allocation5 [shape = 's32[1]{0}', space=sflag, size = 0x4, scoped, tag = 'scoped memory for net_forward.4']
    %8 = vsyncpa [#allocation3], 0
    %9 = vsyncpa [#allocation5], 0
    // Predicated region
    $region2: #{net_forward.4} parent=1 // pred_check
      _
    $region3: #{net_forward.4} parent=1 // pred_check_branch
      %11 = sbr.rel (0) target = $region5
    $region4: #{net_forward.4} parent=1 // pred_region
      _
    $region5: #{net_forward.4} parent=1 // pred_fallthru
      _
    // Predicated region
    $region6: #{net_forward.4} parent=1 // pred_check
      _
    $region7: #{net_forward.4} parent=1 // pred_check_branch
      %13 = sbr.rel (0) target = $region9
    $region8: #{net_forward.4} parent=1 // pred_region
      %s15 = ssub.s32 3072, 3072
      %16 = vsyncadd [#allocation3], %s15
      %s17 = sshll.u32 [#allocation2], 4
      %s18 = int_to_ptr.vmem [resolvable:$true] %s17
      %23 = dma.hbm_to_vmem [thread:$0]  %s1, 3072, %s18, [#allocation3], 256, 256, 16
    $region9: #{net_forward.4} parent=1 // pred_fallthru
      _
    // Predicated region
    $region10: #{net_forward.4} parent=1 // pred_check
      _
    $region11: #{net_forward.4} parent=1 // pred_check_branch
      %25 = sbr.rel (0) target = $region13
    $region12: #{net_forward.4} parent=1 // pred_region
      %s27 = ssub.s32 64, 64
      %28 = vsyncadd [#allocation5], %s27
      %s30 = sshll.u32 [#allocation4], 4
      %s31 = int_to_ptr.vmem [resolvable:$true] %s30
      %33 = dma.hbm_to_vmem [thread:$0]  %s2, 64, %s31, [#allocation5]
    $region13: #{net_forward.4} parent=1 // pred_fallthru
      _
    // Predicated region
    $region14: #{net_forward.4} parent=1 // pred_check
      _
    $region15: #{net_forward.4} parent=1 // pred_check_branch
      %35 = sbr.rel (0) target = $region17
    $region16: #{net_forward.4} parent=1 // pred_region
      %36 = dma.done [#allocation3], 3072
    $region17: #{net_forward.4} parent=1 // pred_fallthru
      _
    // Predicated region
    $region18: #{net_forward.4} parent=1 // pred_check
      _
    $region19: #{net_forward.4} parent=1 // pred_check_branch
      %38 = sbr.rel (0) target = $region21
    $region20: #{net_forward.4} parent=1 // pred_region
      %39 = dma.done [#allocation5], 64
    $region21: #{net_forward.4} parent=1 // pred_fallthru
      _
    %v41 = vld [vmem:[%s0] sm:$0xf]
    %v42 = vld [vmem:[%s0 + $0x4] sm:$0xf]
    %v43 = vld [vmem:[%s0 + $0x8] sm:$0xf]
    %v44 = vld [vmem:[%s0 + $0xc] sm:$0xf]
    %v45 = vld [vmem:[%s0 + $0x10] sm:$0xf]
    %v46 = vld [vmem:[%s0 + $0x14] sm:$0xf]
    %v47 = vld [vmem:[%s0 + $0x18] sm:$0xf]
    %v48 = vld [vmem:[%s0 + $0x1c] sm:$0xf]
    %v49 = vld [vmem:[%s0 + $0x20] sm:$0xf]
    %v50 = vld [vmem:[%s0 + $0x24] sm:$0xf]
    %v51 = vld [vmem:[%s0 + $0x28] sm:$0xf]
    %v52 = vld [vmem:[%s0 + $0x2c] sm:$0xf]
    %v53 = vld [vmem:[%s0 + $0x30] sm:$0xf]
    %v54 = vld [vmem:[%s0 + $0x34] sm:$0xf]
    %v55 = vld [vmem:[%s0 + $0x38] sm:$0xf]
    %v56 = vld [vmem:[%s0 + $0x3c] sm:$0xf]
    %v57 = vld [vmem:[%s0 + $0x40] sm:$0xf]
    %v58 = vld [vmem:[%s0 + $0x44] sm:$0xf]
    %v59 = vld [vmem:[%s0 + $0x48] sm:$0xf]
    %v60 = vld [vmem:[%s0 + $0x4c] sm:$0xf]
    %v61 = vld [vmem:[%s0 + $0x50] sm:$0xf]
    %v62 = vld [vmem:[%s0 + $0x54] sm:$0xf]
    %v63 = vld [vmem:[%s0 + $0x58] sm:$0xf]
    %v64 = vld [vmem:[%s0 + $0x5c] sm:$0xf]
    %v65 = vld [vmem:[%s0 + $0x60] sm:$0xf]
    %v66 = vld [vmem:[%s0 + $0x64] sm:$0xf]
    %v67 = vld [vmem:[%s0 + $0x68] sm:$0xf]
    %v68 = vld [vmem:[%s0 + $0x6c] sm:$0xf]
    %v69 = vld [vmem:[%s0 + $0x70] sm:$0xf]
    %v70 = vld [vmem:[%s0 + $0x74] sm:$0xf]
    %v71 = vld [vmem:[#allocation2] sm:$0xff]
    %v72 = vld [vmem:[#allocation2 + $0x8] sm:$0xff]
    %v73 = vld [vmem:[#allocation2 + $0x10] sm:$0xff]
    %v74 = vld [vmem:[#allocation2 + $0x18] sm:$0xff]
    %v75 = vld [vmem:[#allocation2 + $0x20] sm:$0xff]
    %v76 = vld [vmem:[#allocation2 + $0x28] sm:$0xff]
    %v77 = vld [vmem:[#allocation2 + $0x30] sm:$0x77]
    %v78 = vld [vmem:[#allocation2 + $0x38] sm:$0x77]
    %v79 = vld [vmem:[%s0 + $0x78] sm:$0x1]
    %s80 = scalar_lea.vmem [#allocation2], 64
    %v81 = vld [vmem:[%s80] sm:$0xff]
    %v82 = vld [vmem:[%s80 + $0x8] sm:$0xff]
    %v83 = vld [vmem:[%s80 + $0x10] sm:$0xff]
    %v84 = vld [vmem:[%s80 + $0x18] sm:$0xff]
    %v85 = vld [vmem:[%s80 + $0x20] sm:$0xff]
    %v86 = vld [vmem:[%s80 + $0x28] sm:$0xff]
    %v87 = vld [vmem:[%s80 + $0x30] sm:$0x77]
    %v88 = vld [vmem:[%s80 + $0x38] sm:$0x77]
    %v120 = vunpack.c.l.b16 %v41
    %v121 = vunpack.c.l.b16 %v42
    %v122 = vunpack.c.l.b16 %v43
    %v123 = vunpack.c.l.b16 %v44
    %v124 = vunpack.c.l.b16 %v45
    %v125 = vunpack.c.l.b16 %v46
    %v126 = vunpack.c.l.b16 %v47
    %v127 = vunpack.c.l.b16 %v48
    %v128 = vunpack.c.l.b16 %v49
    %v129 = vunpack.c.l.b16 %v50
    %v130 = vunpack.c.l.b16 %v51
    %v131 = vunpack.c.l.b16 %v52
    %v132 = vunpack.c.l.b16 %v53
    %v133 = vunpack.c.l.b16 %v54
    %v134 = vunpack.c.l.b16 %v55
    %v135 = vunpack.c.l.b16 %v56
    %v136 = vunpack.c.l.b16 %v57
    %v137 = vunpack.c.l.b16 %v58
    %v138 = vunpack.c.l.b16 %v59
    %v139 = vunpack.c.l.b16 %v60
    %v140 = vunpack.c.l.b16 %v61
    %v141 = vunpack.c.l.b16 %v62
    %v142 = vunpack.c.l.b16 %v63
    %v143 = vunpack.c.l.b16 %v64
    %v144 = vunpack.c.l.b16 %v65
    %v145 = vunpack.c.l.b16 %v66
    %v146 = vunpack.c.l.b16 %v67
    %v147 = vunpack.c.l.b16 %v68
    %v148 = vunpack.c.l.b16 %v69
    %v149 = vunpack.c.l.b16 %v70
    %v150 = vunpack.c.l.b16 %v79
    %v151 = vpack.c.b16 %v121, %v120
    %v152 = vpack.c.b16 %v123, %v122
    %v153 = vpack.c.b16 %v125, %v124
    %v154 = vpack.c.b16 %v127, %v126
    %v155 = vpack.c.b16 %v129, %v128
    %v156 = vpack.c.b16 %v131, %v130
    %v157 = vpack.c.b16 %v133, %v132
    %v158 = vpack.c.b16 %v135, %v134
    %v159 = vpack.c.b16 %v137, %v136
    %v160 = vpack.c.b16 %v139, %v138
    %v161 = vpack.c.b16 %v141, %v140
    %v162 = vpack.c.b16 %v143, %v142
    %v163 = vpack.c.b16 %v145, %v144
    %v164 = vpack.c.b16 %v147, %v146
    %v165 = vpack.c.b16 %v149, %v148
    %v166 = vpack.c.b16 %v150, %v150
    %vm167 = vsmask.f32 7424
    %v169 = vshrl.u32 %v151, 16
    %v171 = vshll.u32 %v151, 16
    %v173 = vrot.slane %v171, 1
    %v174 = vor.u32 %v169, %v173
    %v176 = vshll.u32 %v152, 16
    %v178 = vrot.slane %v176, 1
    %v179 = vsel %vm167, %v174, %v178
    %v180 = vshrl.u32 %v152, 16
    %v182 = vor.u32 %v180, %v178
    %v184 = vshll.u32 %v153, 16
    %v186 = vrot.slane %v184, 1
    %v187 = vsel %vm167, %v182, %v186
    %v188 = vshrl.u32 %v153, 16
    %v190 = vor.u32 %v188, %v186
    %v192 = vshll.u32 %v154, 16
    %v194 = vrot.slane %v192, 1
    %v195 = vsel %vm167, %v190, %v194
    %v196 = vshrl.u32 %v154, 16
    %v198 = vor.u32 %v196, %v194
    %v200 = vshll.u32 %v155, 16
    %v202 = vrot.slane %v200, 1
    %v203 = vsel %vm167, %v198, %v202
    %v204 = vshrl.u32 %v155, 16
    %v206 = vor.u32 %v204, %v202
    %v208 = vshll.u32 %v156, 16
    %v210 = vrot.slane %v208, 1
    %v211 = vsel %vm167, %v206, %v210
    %v212 = vshrl.u32 %v156, 16
    %v214 = vor.u32 %v212, %v210
    %v216 = vshll.u32 %v157, 16
    %v218 = vrot.slane %v216, 1
    %v219 = vsel %vm167, %v214, %v218
    %v220 = vshrl.u32 %v157, 16
    %v222 = vor.u32 %v220, %v218
    %v224 = vshll.u32 %v158, 16
    %v226 = vrot.slane %v224, 1
    %v227 = vsel %vm167, %v222, %v226
    %v228 = vshrl.u32 %v158, 16
    %v230 = vor.u32 %v228, %v226
    %v232 = vshll.u32 %v159, 16
    %v234 = vrot.slane %v232, 1
    %v235 = vsel %vm167, %v230, %v234
    %v236 = vshrl.u32 %v159, 16
    %v238 = vor.u32 %v236, %v234
    %v240 = vshll.u32 %v160, 16
    %v242 = vrot.slane %v240, 1
    %v243 = vsel %vm167, %v238, %v242
    %v244 = vshrl.u32 %v160, 16
    %v246 = vor.u32 %v244, %v242
    %v248 = vshll.u32 %v161, 16
    %v250 = vrot.slane %v248, 1
    %v251 = vsel %vm167, %v246, %v250
    %v252 = vshrl.u32 %v161, 16
    %v254 = vor.u32 %v252, %v250
    %v256 = vshll.u32 %v162, 16
    %v258 = vrot.slane %v256, 1
    %v259 = vsel %vm167, %v254, %v258
    %v260 = vshrl.u32 %v162, 16
    %v262 = vor.u32 %v260, %v258
    %v264 = vshll.u32 %v163, 16
    %v266 = vrot.slane %v264, 1
    %v267 = vsel %vm167, %v262, %v266
    %v268 = vshrl.u32 %v163, 16
    %v270 = vor.u32 %v268, %v266
    %v272 = vshll.u32 %v164, 16
    %v274 = vrot.slane %v272, 1
    %v275 = vsel %vm167, %v270, %v274
    %v276 = vshrl.u32 %v164, 16
    %v278 = vor.u32 %v276, %v274
    %v280 = vshll.u32 %v165, 16
    %v282 = vrot.slane %v280, 1
    %v283 = vsel %vm167, %v278, %v282
    %v284 = vshrl.u32 %v165, 16
    %v286 = vor.u32 %v284, %v282
    %v288 = vshll.u32 %v166, 16
    %v290 = vrot.slane %v288, 1
    %v291 = vsel %vm167, %v286, %v290
    %v300 = vunpack.c.l.b16 %v81
    %v301 = vunpack.c.h.b16 %v81
    %v302 = vunpack.c.l.b16 %v82
    %v303 = vunpack.c.h.b16 %v82
    %v304 = vunpack.c.l.b16 %v83
    %v305 = vunpack.c.h.b16 %v83
    %v306 = vunpack.c.l.b16 %v84
    %v307 = vunpack.c.h.b16 %v84
    %v308 = vunpack.c.l.b16 %v85
    %v309 = vunpack.c.h.b16 %v85
    %v310 = vunpack.c.l.b16 %v86
    %v311 = vunpack.c.h.b16 %v86
    %v312 = vunpack.c.l.b16 %v87
    %v313 = vunpack.c.h.b16 %v87
    %v314 = vunpack.c.l.b16 %v88
    %v315 = vunpack.c.h.b16 %v88
    %v316 = vpack.c.b16 %v304, %v300
    %v317 = vpack.c.b16 %v305, %v301
    %v318 = vpack.c.b16 %v306, %v302
    %v319 = vpack.c.b16 %v307, %v303
    %v320 = vpack.c.b16 %v312, %v308
    %v321 = vpack.c.b16 %v313, %v309
    %v322 = vpack.c.b16 %v314, %v310
    %v323 = vpack.c.b16 %v315, %v311
    %vm328 = vcmask 244736
    %v330 = vsel %vm328, %v179, 0
    %v333 = vsel %vm328, %v187, 0
    %v336 = vsel %vm328, %v195, 0
    %v339 = vsel %vm328, %v203, 0
    %v342 = vsel %vm328, %v211, 0
    %v345 = vsel %vm328, %v219, 0
    %v348 = vsel %vm328, %v227, 0
    %v351 = vsel %vm328, %v235, 0
    %v354 = vsel %vm328, %v243, 0
    %v357 = vsel %vm328, %v251, 0
    %v360 = vsel %vm328, %v259, 0
    %v363 = vsel %vm328, %v267, 0
    %v366 = vsel %vm328, %v275, 0
    %v369 = vsel %vm328, %v283, 0
    %v372 = vsel %vm328, %v291, 0
    %vm374 = vcmask 1046528
    %v376 = vsel %vm374, %v320, 0
    %v379 = vsel %vm374, %v321, 0
    %v382 = vsel %vm374, %v322, 0
    %v385 = vsel %vm374, %v323, 0
    %387 = vmatprep.subr.bf16.mxu0 0
    %388 = vmatpush1.bf16.msra.mxu0 0
    %389 = vmatprep.subr.bf16.mxu0 0
    %390 = vmatpush1.bf16.msra.mxu0 0
    %391 = vmatprep.subr.bf16.mxu0 0
    %392 = vmatpush1.bf16.msra.mxu0 0
    %393 = vmatprep.subr.bf16.mxu0 0
    %394 = vmatpush1.bf16.msra.mxu0 0
    %395 = vmatprep.subr.bf16.mxu0 0
    %396 = vmatpush1.bf16.msra.mxu0 0
    %397 = vmatprep.subr.bf16.mxu0 0
    %398 = vmatpush1.bf16.msra.mxu0 0
    %399 = vmatprep.subr.bf16.mxu0 %v379
    %400 = vmatpush1.bf16.msra.mxu0 %v376
    %401 = vmatprep.subr.bf16.mxu0 %v317
    %402 = vmatpush1.bf16.msra.mxu0 %v316
    %403 = vmatprep.subr.bf16.mxu0 0
    %404 = vmatpush2.bf16.msra.mxu0 0
    %405 = vmatprep.subr.bf16.mxu0 0
    %406 = vmatpush2.bf16.msra.mxu0 0
    %407 = vmatprep.subr.bf16.mxu0 0
    %408 = vmatpush2.bf16.msra.mxu0 0
    %409 = vmatprep.subr.bf16.mxu0 0
    %410 = vmatpush2.bf16.msra.mxu0 0
    %411 = vmatprep.subr.bf16.mxu0 0
    %412 = vmatpush2.bf16.msra.mxu0 0
    %413 = vmatprep.subr.bf16.mxu0 0
    %414 = vmatpush2.bf16.msra.mxu0 0
    %415 = vmatprep.subr.bf16.mxu0 0
    %416 = vmatpush2.bf16.msra.mxu0 0
    %417 = vmatprep.subr.bf16.mxu0 0
    %418 = vmatpush2.bf16.msra.mxu0 0
    %419 = vmatprep.mubr.bf16.mxu0 0
    %420 = vmatmul.mubr.bf16.gmra.mxu0 %v330
    %v421 = vpop.f32.mrf.mxu0
    %v422 = vadd.f32 0.0, %v421
    %v423 = vpop.f32.mrf.mxu0
    %v424 = vadd.f32 0.0, %v423
    %v425 = vpop.f32.mrf.mxu0
    %v426 = vadd.f32 0.0, %v425
    %v427 = vpop.f32.mrf.mxu0
    %v428 = vadd.f32 0.0, %v427
    %429 = vmatprep.mubr.bf16.mxu0 0
    %430 = vmatmul.mubr.bf16.gmra.mxu0 %v333
    %v431 = vpop.f32.mrf.mxu0
    %v432 = vadd.f32 0.0, %v431
    %v433 = vpop.f32.mrf.mxu0
    %v434 = vadd.f32 0.0, %v433
    %v435 = vpop.f32.mrf.mxu0
    %v436 = vadd.f32 0.0, %v435
    %v437 = vpop.f32.mrf.mxu0
    %v438 = vadd.f32 0.0, %v437
    %439 = vmatprep.mubr.bf16.mxu0 0
    %440 = vmatmul.mubr.bf16.gmra.mxu0 %v336
    %v441 = vpop.f32.mrf.mxu0
    %v442 = vadd.f32 0.0, %v441
    %v443 = vpop.f32.mrf.mxu0
    %v444 = vadd.f32 0.0, %v443
    %v445 = vpop.f32.mrf.mxu0
    %v446 = vadd.f32 0.0, %v445
    %v447 = vpop.f32.mrf.mxu0
    %v448 = vadd.f32 0.0, %v447
    %449 = vmatprep.mubr.bf16.mxu0 0
    %450 = vmatmul.mubr.bf16.gmra.mxu0 %v339
    %v451 = vpop.f32.mrf.mxu0
    %v452 = vadd.f32 0.0, %v451
    %v453 = vpop.f32.mrf.mxu0
    %v454 = vadd.f32 0.0, %v453
    %v455 = vpop.f32.mrf.mxu0
    %v456 = vadd.f32 0.0, %v455
    %v457 = vpop.f32.mrf.mxu0
    %v458 = vadd.f32 0.0, %v457
    %459 = vmatprep.mubr.bf16.mxu0 0
    %460 = vmatmul.mubr.bf16.gmra.mxu0 %v342
    %v461 = vpop.f32.mrf.mxu0
    %v462 = vadd.f32 0.0, %v461
    %v463 = vpop.f32.mrf.mxu0
    %v464 = vadd.f32 0.0, %v463
    %v465 = vpop.f32.mrf.mxu0
    %v466 = vadd.f32 0.0, %v465
    %v467 = vpop.f32.mrf.mxu0
    %v468 = vadd.f32 0.0, %v467
    %469 = vmatprep.mubr.bf16.mxu0 0
    %470 = vmatmul.mubr.bf16.gmra.mxu0 %v345
    %v471 = vpop.f32.mrf.mxu0
    %v472 = vadd.f32 0.0, %v471
    %v473 = vpop.f32.mrf.mxu0
    %v474 = vadd.f32 0.0, %v473
    %v475 = vpop.f32.mrf.mxu0
    %v476 = vadd.f32 0.0, %v475
    %v477 = vpop.f32.mrf.mxu0
    %v478 = vadd.f32 0.0, %v477
    %479 = vmatprep.mubr.bf16.mxu0 0
    %480 = vmatmul.mubr.bf16.gmra.mxu0 %v348
    %v481 = vpop.f32.mrf.mxu0
    %v482 = vadd.f32 0.0, %v481
    %v483 = vpop.f32.mrf.mxu0
    %v484 = vadd.f32 0.0, %v483
    %v485 = vpop.f32.mrf.mxu0
    %v486 = vadd.f32 0.0, %v485
    %v487 = vpop.f32.mrf.mxu0
    %v488 = vadd.f32 0.0, %v487
    %489 = vmatprep.mubr.bf16.mxu0 0
    %490 = vmatmul.mubr.bf16.gmra.mxu0 %v351
    %v491 = vpop.f32.mrf.mxu0
    %v492 = vadd.f32 0.0, %v491
    %v493 = vpop.f32.mrf.mxu0
    %v494 = vadd.f32 0.0, %v493
    %v495 = vpop.f32.mrf.mxu0
    %v496 = vadd.f32 0.0, %v495
    %v497 = vpop.f32.mrf.mxu0
    %v498 = vadd.f32 0.0, %v497
    %499 = vmatprep.mubr.bf16.mxu0 0
    %500 = vmatmul.mubr.bf16.gmra.mxu0 %v354
    %v501 = vpop.f32.mrf.mxu0
    %v502 = vadd.f32 0.0, %v501
    %v503 = vpop.f32.mrf.mxu0
    %v504 = vadd.f32 0.0, %v503
    %v505 = vpop.f32.mrf.mxu0
    %v506 = vadd.f32 0.0, %v505
    %v507 = vpop.f32.mrf.mxu0
    %v508 = vadd.f32 0.0, %v507
    %509 = vmatprep.mubr.bf16.mxu0 0
    %510 = vmatmul.mubr.bf16.gmra.mxu0 %v357
    %v511 = vpop.f32.mrf.mxu0
    %v512 = vadd.f32 0.0, %v511
    %v513 = vpop.f32.mrf.mxu0
    %v514 = vadd.f32 0.0, %v513
    %v515 = vpop.f32.mrf.mxu0
    %v516 = vadd.f32 0.0, %v515
    %v517 = vpop.f32.mrf.mxu0
    %v518 = vadd.f32 0.0, %v517
    %519 = vmatprep.mubr.bf16.mxu0 0
    %520 = vmatmul.mubr.bf16.gmra.mxu0 %v360
    %v521 = vpop.f32.mrf.mxu0
    %v522 = vadd.f32 0.0, %v521
    %v523 = vpop.f32.mrf.mxu0
    %v524 = vadd.f32 0.0, %v523
    %v525 = vpop.f32.mrf.mxu0
    %v526 = vadd.f32 0.0, %v525
    %v527 = vpop.f32.mrf.mxu0
    %v528 = vadd.f32 0.0, %v527
    %529 = vmatprep.mubr.bf16.mxu0 0
    %530 = vmatmul.mubr.bf16.gmra.mxu0 %v363
    %v531 = vpop.f32.mrf.mxu0
    %v532 = vadd.f32 0.0, %v531
    %v533 = vpop.f32.mrf.mxu0
    %v534 = vadd.f32 0.0, %v533
    %v535 = vpop.f32.mrf.mxu0
    %v536 = vadd.f32 0.0, %v535
    %v537 = vpop.f32.mrf.mxu0
    %v538 = vadd.f32 0.0, %v537
    %539 = vmatprep.mubr.bf16.mxu0 0
    %540 = vmatmul.mubr.bf16.gmra.mxu0 %v366
    %v541 = vpop.f32.mrf.mxu0
    %v542 = vadd.f32 0.0, %v541
    %v543 = vpop.f32.mrf.mxu0
    %v544 = vadd.f32 0.0, %v543
    %v545 = vpop.f32.mrf.mxu0
    %v546 = vadd.f32 0.0, %v545
    %v547 = vpop.f32.mrf.mxu0
    %v548 = vadd.f32 0.0, %v547
    %549 = vmatprep.mubr.bf16.mxu0 0
    %550 = vmatmul.mubr.bf16.gmra.mxu0 %v369
    %v551 = vpop.f32.mrf.mxu0
    %v552 = vadd.f32 0.0, %v551
    %v553 = vpop.f32.mrf.mxu0
    %v554 = vadd.f32 0.0, %v553
    %v555 = vpop.f32.mrf.mxu0
    %v556 = vadd.f32 0.0, %v555
    %v557 = vpop.f32.mrf.mxu0
    %v558 = vadd.f32 0.0, %v557
    %559 = vmatprep.mubr.bf16.mxu0 0
    %560 = vmatmul.mubr.bf16.gmra.mxu0 %v372
    %v561 = vpop.f32.mrf.mxu0
    %v562 = vadd.f32 0.0, %v561
    %v563 = vpop.f32.mrf.mxu0
    %v564 = vadd.f32 0.0, %v563
    %v565 = vpop.f32.mrf.mxu0
    %v566 = vadd.f32 0.0, %v565
    %v567 = vpop.f32.mrf.mxu0
    %v568 = vadd.f32 0.0, %v567
    %569 = vdwg.mxu0
    %570 = vmatprep.subr.bf16.mxu0 0
    %571 = vmatpush1.bf16.msra.mxu0 0
    %572 = vmatprep.subr.bf16.mxu0 0
    %573 = vmatpush1.bf16.msra.mxu0 0
    %574 = vmatprep.subr.bf16.mxu0 0
    %575 = vmatpush1.bf16.msra.mxu0 0
    %576 = vmatprep.subr.bf16.mxu0 0
    %577 = vmatpush1.bf16.msra.mxu0 0
    %578 = vmatprep.subr.bf16.mxu0 0
    %579 = vmatpush1.bf16.msra.mxu0 0
    %580 = vmatprep.subr.bf16.mxu0 0
    %581 = vmatpush1.bf16.msra.mxu0 0
    %582 = vmatprep.subr.bf16.mxu0 %v385
    %583 = vmatpush1.bf16.msra.mxu0 %v382
    %584 = vmatprep.subr.bf16.mxu0 %v319
    %585 = vmatpush1.bf16.msra.mxu0 %v318
    %586 = vmatprep.subr.bf16.mxu0 0
    %587 = vmatpush2.bf16.msra.mxu0 0
    %588 = vmatprep.subr.bf16.mxu0 0
    %589 = vmatpush2.bf16.msra.mxu0 0
    %590 = vmatprep.subr.bf16.mxu0 0
    %591 = vmatpush2.bf16.msra.mxu0 0
    %592 = vmatprep.subr.bf16.mxu0 0
    %593 = vmatpush2.bf16.msra.mxu0 0
    %594 = vmatprep.subr.bf16.mxu0 0
    %595 = vmatpush2.bf16.msra.mxu0 0
    %596 = vmatprep.subr.bf16.mxu0 0
    %597 = vmatpush2.bf16.msra.mxu0 0
    %598 = vmatprep.subr.bf16.mxu0 0
    %599 = vmatpush2.bf16.msra.mxu0 0
    %600 = vmatprep.subr.bf16.mxu0 0
    %601 = vmatpush2.bf16.msra.mxu0 0
    %602 = vmatprep.mubr.bf16.mxu0 0
    %603 = vmatmul.mubr.bf16.gmra.mxu0 %v330
    %v604 = vpop.f32.mrf.mxu0
    %v605 = vadd.f32 0.0, %v604
    %v606 = vpop.f32.mrf.mxu0
    %v607 = vadd.f32 0.0, %v606
    %v608 = vpop.f32.mrf.mxu0
    %v609 = vadd.f32 0.0, %v608
    %v610 = vpop.f32.mrf.mxu0
    %v611 = vadd.f32 0.0, %v610
    %612 = vmatprep.mubr.bf16.mxu0 0
    %613 = vmatmul.mubr.bf16.gmra.mxu0 %v333
    %v614 = vpop.f32.mrf.mxu0
    %v615 = vadd.f32 0.0, %v614
    %v616 = vpop.f32.mrf.mxu0
    %v617 = vadd.f32 0.0, %v616
    %v618 = vpop.f32.mrf.mxu0
    %v619 = vadd.f32 0.0, %v618
    %v620 = vpop.f32.mrf.mxu0
    %v621 = vadd.f32 0.0, %v620
    %622 = vmatprep.mubr.bf16.mxu0 0
    %623 = vmatmul.mubr.bf16.gmra.mxu0 %v336
    %v624 = vpop.f32.mrf.mxu0
    %v625 = vadd.f32 0.0, %v624
    %v626 = vpop.f32.mrf.mxu0
    %v627 = vadd.f32 0.0, %v626
    %v628 = vpop.f32.mrf.mxu0
    %v629 = vadd.f32 0.0, %v628
    %v630 = vpop.f32.mrf.mxu0
    %v631 = vadd.f32 0.0, %v630
    %632 = vmatprep.mubr.bf16.mxu0 0
    %633 = vmatmul.mubr.bf16.gmra.mxu0 %v339
    %v634 = vpop.f32.mrf.mxu0
    %v635 = vadd.f32 0.0, %v634
    %v636 = vpop.f32.mrf.mxu0
    %v637 = vadd.f32 0.0, %v636
    %v638 = vpop.f32.mrf.mxu0
    %v639 = vadd.f32 0.0, %v638
    %v640 = vpop.f32.mrf.mxu0
    %v641 = vadd.f32 0.0, %v640
    %642 = vmatprep.mubr.bf16.mxu0 0
    %643 = vmatmul.mubr.bf16.gmra.mxu0 %v342
    %v644 = vpop.f32.mrf.mxu0
    %v645 = vadd.f32 0.0, %v644
    %v646 = vpop.f32.mrf.mxu0
    %v647 = vadd.f32 0.0, %v646
    %v648 = vpop.f32.mrf.mxu0
    %v649 = vadd.f32 0.0, %v648
    %v650 = vpop.f32.mrf.mxu0
    %v651 = vadd.f32 0.0, %v650
    %652 = vmatprep.mubr.bf16.mxu0 0
    %653 = vmatmul.mubr.bf16.gmra.mxu0 %v345
    %v654 = vpop.f32.mrf.mxu0
    %v655 = vadd.f32 0.0, %v654
    %v656 = vpop.f32.mrf.mxu0
    %v657 = vadd.f32 0.0, %v656
    %v658 = vpop.f32.mrf.mxu0
    %v659 = vadd.f32 0.0, %v658
    %v660 = vpop.f32.mrf.mxu0
    %v661 = vadd.f32 0.0, %v660
    %662 = vmatprep.mubr.bf16.mxu0 0
    %663 = vmatmul.mubr.bf16.gmra.mxu0 %v348
    %v664 = vpop.f32.mrf.mxu0
    %v665 = vadd.f32 0.0, %v664
    %v666 = vpop.f32.mrf.mxu0
    %v667 = vadd.f32 0.0, %v666
    %v668 = vpop.f32.mrf.mxu0
    %v669 = vadd.f32 0.0, %v668
    %v670 = vpop.f32.mrf.mxu0
    %v671 = vadd.f32 0.0, %v670
    %672 = vmatprep.mubr.bf16.mxu0 0
    %673 = vmatmul.mubr.bf16.gmra.mxu0 %v351
    %v674 = vpop.f32.mrf.mxu0
    %v675 = vadd.f32 0.0, %v674
    %v676 = vpop.f32.mrf.mxu0
    %v677 = vadd.f32 0.0, %v676
    %v678 = vpop.f32.mrf.mxu0
    %v679 = vadd.f32 0.0, %v678
    %v680 = vpop.f32.mrf.mxu0
    %v681 = vadd.f32 0.0, %v680
    %682 = vmatprep.mubr.bf16.mxu0 0
    %683 = vmatmul.mubr.bf16.gmra.mxu0 %v354
    %v684 = vpop.f32.mrf.mxu0
    %v685 = vadd.f32 0.0, %v684
    %v686 = vpop.f32.mrf.mxu0
    %v687 = vadd.f32 0.0, %v686
    %v688 = vpop.f32.mrf.mxu0
    %v689 = vadd.f32 0.0, %v688
    %v690 = vpop.f32.mrf.mxu0
    %v691 = vadd.f32 0.0, %v690
    %692 = vmatprep.mubr.bf16.mxu0 0
    %693 = vmatmul.mubr.bf16.gmra.mxu0 %v357
    %v694 = vpop.f32.mrf.mxu0
    %v695 = vadd.f32 0.0, %v694
    %v696 = vpop.f32.mrf.mxu0
    %v697 = vadd.f32 0.0, %v696
    %v698 = vpop.f32.mrf.mxu0
    %v699 = vadd.f32 0.0, %v698
    %v700 = vpop.f32.mrf.mxu0
    %v701 = vadd.f32 0.0, %v700
    %702 = vmatprep.mubr.bf16.mxu0 0
    %703 = vmatmul.mubr.bf16.gmra.mxu0 %v360
    %v704 = vpop.f32.mrf.mxu0
    %v705 = vadd.f32 0.0, %v704
    %v706 = vpop.f32.mrf.mxu0
    %v707 = vadd.f32 0.0, %v706
    %v708 = vpop.f32.mrf.mxu0
    %v709 = vadd.f32 0.0, %v708
    %v710 = vpop.f32.mrf.mxu0
    %v711 = vadd.f32 0.0, %v710
    %712 = vmatprep.mubr.bf16.mxu0 0
    %713 = vmatmul.mubr.bf16.gmra.mxu0 %v363
    %v714 = vpop.f32.mrf.mxu0
    %v715 = vadd.f32 0.0, %v714
    %v716 = vpop.f32.mrf.mxu0
    %v717 = vadd.f32 0.0, %v716
    %v718 = vpop.f32.mrf.mxu0
    %v719 = vadd.f32 0.0, %v718
    %v720 = vpop.f32.mrf.mxu0
    %v721 = vadd.f32 0.0, %v720
    %722 = vmatprep.mubr.bf16.mxu0 0
    %723 = vmatmul.mubr.bf16.gmra.mxu0 %v366
    %v724 = vpop.f32.mrf.mxu0
    %v725 = vadd.f32 0.0, %v724
    %v726 = vpop.f32.mrf.mxu0
    %v727 = vadd.f32 0.0, %v726
    %v728 = vpop.f32.mrf.mxu0
    %v729 = vadd.f32 0.0, %v728
    %v730 = vpop.f32.mrf.mxu0
    %v731 = vadd.f32 0.0, %v730
    %732 = vmatprep.mubr.bf16.mxu0 0
    %733 = vmatmul.mubr.bf16.gmra.mxu0 %v369
    %v734 = vpop.f32.mrf.mxu0
    %v735 = vadd.f32 0.0, %v734
    %v736 = vpop.f32.mrf.mxu0
    %v737 = vadd.f32 0.0, %v736
    %v738 = vpop.f32.mrf.mxu0
    %v739 = vadd.f32 0.0, %v738
    %v740 = vpop.f32.mrf.mxu0
    %v741 = vadd.f32 0.0, %v740
    %742 = vmatprep.mubr.bf16.mxu0 0
    %743 = vmatmul.mubr.bf16.gmra.mxu0 %v372
    %v744 = vpop.f32.mrf.mxu0
    %v745 = vadd.f32 0.0, %v744
    %v746 = vpop.f32.mrf.mxu0
    %v747 = vadd.f32 0.0, %v746
    %v748 = vpop.f32.mrf.mxu0
    %v749 = vadd.f32 0.0, %v748
    %v750 = vpop.f32.mrf.mxu0
    %v751 = vadd.f32 0.0, %v750
    %752 = vdwg.mxu0
    %v761 = vunpack.c.l.b16 %v71
    %v762 = vunpack.c.h.b16 %v71
    %v763 = vunpack.c.l.b16 %v72
    %v764 = vunpack.c.h.b16 %v72
    %v765 = vunpack.c.l.b16 %v73
    %v766 = vunpack.c.h.b16 %v73
    %v767 = vunpack.c.l.b16 %v74
    %v768 = vunpack.c.h.b16 %v74
    %v769 = vunpack.c.l.b16 %v75
    %v770 = vunpack.c.h.b16 %v75
    %v771 = vunpack.c.l.b16 %v76
    %v772 = vunpack.c.h.b16 %v76
    %v773 = vunpack.c.l.b16 %v77
    %v774 = vunpack.c.h.b16 %v77
    %v775 = vunpack.c.l.b16 %v78
    %v776 = vunpack.c.h.b16 %v78
    %v777 = vpack.c.b16 %v765, %v761
    %v778 = vpack.c.b16 %v766, %v762
    %v779 = vpack.c.b16 %v767, %v763
    %v780 = vpack.c.b16 %v768, %v764
    %v781 = vpack.c.b16 %v773, %v769
    %v782 = vpack.c.b16 %v774, %v770
    %v783 = vpack.c.b16 %v775, %v771
    %v784 = vpack.c.b16 %v776, %v772
    %v789 = vsel %vm328, %v151, 0
    %v791 = vsel %vm328, %v152, 0
    %v793 = vsel %vm328, %v153, 0
    %v795 = vsel %vm328, %v154, 0
    %v797 = vsel %vm328, %v155, 0
    %v799 = vsel %vm328, %v156, 0
    %v801 = vsel %vm328, %v157, 0
    %v803 = vsel %vm328, %v158, 0
    %v805 = vsel %vm328, %v159, 0
    %v807 = vsel %vm328, %v160, 0
    %v809 = vsel %vm328, %v161, 0
    %v811 = vsel %vm328, %v162, 0
    %v813 = vsel %vm328, %v163, 0
    %v815 = vsel %vm328, %v164, 0
    %v817 = vsel %vm328, %v165, 0
    %v820 = vsel %vm374, %v781, 0
    %v823 = vsel %vm374, %v782, 0
    %v826 = vsel %vm374, %v783, 0
    %v829 = vsel %vm374, %v784, 0
    %831 = vmatprep.subr.bf16.mxu0 0
    %832 = vmatpush1.bf16.msra.mxu0 0
    %833 = vmatprep.subr.bf16.mxu0 0
    %834 = vmatpush1.bf16.msra.mxu0 0
    %835 = vmatprep.subr.bf16.mxu0 0
    %836 = vmatpush1.bf16.msra.mxu0 0
    %837 = vmatprep.subr.bf16.mxu0 0
    %838 = vmatpush1.bf16.msra.mxu0 0
    %839 = vmatprep.subr.bf16.mxu0 0
    %840 = vmatpush1.bf16.msra.mxu0 0
    %841 = vmatprep.subr.bf16.mxu0 0
    %842 = vmatpush1.bf16.msra.mxu0 0
    %843 = vmatprep.subr.bf16.mxu0 %v823
    %844 = vmatpush1.bf16.msra.mxu0 %v820
    %845 = vmatprep.subr.bf16.mxu0 %v778
    %846 = vmatpush1.bf16.msra.mxu0 %v777
    %847 = vmatprep.subr.bf16.mxu0 0
    %848 = vmatpush2.bf16.msra.mxu0 0
    %849 = vmatprep.subr.bf16.mxu0 0
    %850 = vmatpush2.bf16.msra.mxu0 0
    %851 = vmatprep.subr.bf16.mxu0 0
    %852 = vmatpush2.bf16.msra.mxu0 0
    %853 = vmatprep.subr.bf16.mxu0 0
    %854 = vmatpush2.bf16.msra.mxu0 0
    %855 = vmatprep.subr.bf16.mxu0 0
    %856 = vmatpush2.bf16.msra.mxu0 0
    %857 = vmatprep.subr.bf16.mxu0 0
    %858 = vmatpush2.bf16.msra.mxu0 0
    %859 = vmatprep.subr.bf16.mxu0 0
    %860 = vmatpush2.bf16.msra.mxu0 0
    %861 = vmatprep.subr.bf16.mxu0 0
    %862 = vmatpush2.bf16.msra.mxu0 0
    %863 = vmatprep.mubr.bf16.mxu0 0
    %864 = vmatmul.mubr.bf16.gmra.mxu0 %v789
    %v865 = vpop.f32.mrf.mxu0
    %v866 = vadd.f32 %v422, %v865
    %v867 = vpop.f32.mrf.mxu0
    %v868 = vadd.f32 %v424, %v867
    %v869 = vpop.f32.mrf.mxu0
    %v870 = vadd.f32 %v426, %v869
    %v871 = vpop.f32.mrf.mxu0
    %v872 = vadd.f32 %v428, %v871
    %873 = vmatprep.mubr.bf16.mxu0 0
    %874 = vmatmul.mubr.bf16.gmra.mxu0 %v791
    %v875 = vpop.f32.mrf.mxu0
    %v876 = vadd.f32 %v432, %v875
    %v877 = vpop.f32.mrf.mxu0
    %v878 = vadd.f32 %v434, %v877
    %v879 = vpop.f32.mrf.mxu0
    %v880 = vadd.f32 %v436, %v879
    %v881 = vpop.f32.mrf.mxu0
    %v882 = vadd.f32 %v438, %v881
    %883 = vmatprep.mubr.bf16.mxu0 0
    %884 = vmatmul.mubr.bf16.gmra.mxu0 %v793
    %v885 = vpop.f32.mrf.mxu0
    %v886 = vadd.f32 %v442, %v885
    %v887 = vpop.f32.mrf.mxu0
    %v888 = vadd.f32 %v444, %v887
    %v889 = vpop.f32.mrf.mxu0
    %v890 = vadd.f32 %v446, %v889
    %v891 = vpop.f32.mrf.mxu0
    %v892 = vadd.f32 %v448, %v891
    %893 = vmatprep.mubr.bf16.mxu0 0
    %894 = vmatmul.mubr.bf16.gmra.mxu0 %v795
    %v895 = vpop.f32.mrf.mxu0
    %v896 = vadd.f32 %v452, %v895
    %v897 = vpop.f32.mrf.mxu0
    %v898 = vadd.f32 %v454, %v897
    %v899 = vpop.f32.mrf.mxu0
    %v900 = vadd.f32 %v456, %v899
    %v901 = vpop.f32.mrf.mxu0
    %v902 = vadd.f32 %v458, %v901
    %903 = vmatprep.mubr.bf16.mxu0 0
    %904 = vmatmul.mubr.bf16.gmra.mxu0 %v797
    %v905 = vpop.f32.mrf.mxu0
    %v906 = vadd.f32 %v462, %v905
    %v907 = vpop.f32.mrf.mxu0
    %v908 = vadd.f32 %v464, %v907
    %v909 = vpop.f32.mrf.mxu0
    %v910 = vadd.f32 %v466, %v909
    %v911 = vpop.f32.mrf.mxu0
    %v912 = vadd.f32 %v468, %v911
    %913 = vmatprep.mubr.bf16.mxu0 0
    %914 = vmatmul.mubr.bf16.gmra.mxu0 %v799
    %v915 = vpop.f32.mrf.mxu0
    %v916 = vadd.f32 %v472, %v915
    %v917 = vpop.f32.mrf.mxu0
    %v918 = vadd.f32 %v474, %v917
    %v919 = vpop.f32.mrf.mxu0
    %v920 = vadd.f32 %v476, %v919
    %v921 = vpop.f32.mrf.mxu0
    %v922 = vadd.f32 %v478, %v921
    %923 = vmatprep.mubr.bf16.mxu0 0
    %924 = vmatmul.mubr.bf16.gmra.mxu0 %v801
    %v925 = vpop.f32.mrf.mxu0
    %v926 = vadd.f32 %v482, %v925
    %v927 = vpop.f32.mrf.mxu0
    %v928 = vadd.f32 %v484, %v927
    %v929 = vpop.f32.mrf.mxu0
    %v930 = vadd.f32 %v486, %v929
    %v931 = vpop.f32.mrf.mxu0
    %v932 = vadd.f32 %v488, %v931
    %933 = vmatprep.mubr.bf16.mxu0 0
    %934 = vmatmul.mubr.bf16.gmra.mxu0 %v803
    %v935 = vpop.f32.mrf.mxu0
    %v936 = vadd.f32 %v492, %v935
    %v937 = vpop.f32.mrf.mxu0
    %v938 = vadd.f32 %v494, %v937
    %v939 = vpop.f32.mrf.mxu0
    %v940 = vadd.f32 %v496, %v939
    %v941 = vpop.f32.mrf.mxu0
    %v942 = vadd.f32 %v498, %v941
    %943 = vmatprep.mubr.bf16.mxu0 0
    %944 = vmatmul.mubr.bf16.gmra.mxu0 %v805
    %v945 = vpop.f32.mrf.mxu0
    %v946 = vadd.f32 %v502, %v945
    %v947 = vpop.f32.mrf.mxu0
    %v948 = vadd.f32 %v504, %v947
    %v949 = vpop.f32.mrf.mxu0
    %v950 = vadd.f32 %v506, %v949
    %v951 = vpop.f32.mrf.mxu0
    %v952 = vadd.f32 %v508, %v951
    %953 = vmatprep.mubr.bf16.mxu0 0
    %954 = vmatmul.mubr.bf16.gmra.mxu0 %v807
    %v955 = vpop.f32.mrf.mxu0
    %v956 = vadd.f32 %v512, %v955
    %v957 = vpop.f32.mrf.mxu0
    %v958 = vadd.f32 %v514, %v957
    %v959 = vpop.f32.mrf.mxu0
    %v960 = vadd.f32 %v516, %v959
    %v961 = vpop.f32.mrf.mxu0
    %v962 = vadd.f32 %v518, %v961
    %963 = vmatprep.mubr.bf16.mxu0 0
    %964 = vmatmul.mubr.bf16.gmra.mxu0 %v809
    %v965 = vpop.f32.mrf.mxu0
    %v966 = vadd.f32 %v522, %v965
    %v967 = vpop.f32.mrf.mxu0
    %v968 = vadd.f32 %v524, %v967
    %v969 = vpop.f32.mrf.mxu0
    %v970 = vadd.f32 %v526, %v969
    %v971 = vpop.f32.mrf.mxu0
    %v972 = vadd.f32 %v528, %v971
    %973 = vmatprep.mubr.bf16.mxu0 0
    %974 = vmatmul.mubr.bf16.gmra.mxu0 %v811
    %v975 = vpop.f32.mrf.mxu0
    %v976 = vadd.f32 %v532, %v975
    %v977 = vpop.f32.mrf.mxu0
    %v978 = vadd.f32 %v534, %v977
    %v979 = vpop.f32.mrf.mxu0
    %v980 = vadd.f32 %v536, %v979
    %v981 = vpop.f32.mrf.mxu0
    %v982 = vadd.f32 %v538, %v981
    %983 = vmatprep.mubr.bf16.mxu0 0
    %984 = vmatmul.mubr.bf16.gmra.mxu0 %v813
    %v985 = vpop.f32.mrf.mxu0
    %v986 = vadd.f32 %v542, %v985
    %v987 = vpop.f32.mrf.mxu0
    %v988 = vadd.f32 %v544, %v987
    %v989 = vpop.f32.mrf.mxu0
    %v990 = vadd.f32 %v546, %v989
    %v991 = vpop.f32.mrf.mxu0
    %v992 = vadd.f32 %v548, %v991
    %993 = vmatprep.mubr.bf16.mxu0 0
    %994 = vmatmul.mubr.bf16.gmra.mxu0 %v815
    %v995 = vpop.f32.mrf.mxu0
    %v996 = vadd.f32 %v552, %v995
    %v997 = vpop.f32.mrf.mxu0
    %v998 = vadd.f32 %v554, %v997
    %v999 = vpop.f32.mrf.mxu0
    %v1000 = vadd.f32 %v556, %v999
    %v1001 = vpop.f32.mrf.mxu0
    %v1002 = vadd.f32 %v558, %v1001
    %1003 = vmatprep.mubr.bf16.mxu0 0
    %1004 = vmatmul.mubr.bf16.gmra.mxu0 %v817
    %v1005 = vpop.f32.mrf.mxu0
    %v1006 = vadd.f32 %v562, %v1005
    %v1007 = vpop.f32.mrf.mxu0
    %v1008 = vadd.f32 %v564, %v1007
    %v1009 = vpop.f32.mrf.mxu0
    %v1010 = vadd.f32 %v566, %v1009
    %v1011 = vpop.f32.mrf.mxu0
    %v1012 = vadd.f32 %v568, %v1011
    %1013 = vdwg.mxu0
    %1014 = vmatprep.subr.bf16.mxu0 0
    %1015 = vmatpush1.bf16.msra.mxu0 0
    %1016 = vmatprep.subr.bf16.mxu0 0
    %1017 = vmatpush1.bf16.msra.mxu0 0
    %1018 = vmatprep.subr.bf16.mxu0 0
    %1019 = vmatpush1.bf16.msra.mxu0 0
    %1020 = vmatprep.subr.bf16.mxu0 0
    %1021 = vmatpush1.bf16.msra.mxu0 0
    %1022 = vmatprep.subr.bf16.mxu0 0
    %1023 = vmatpush1.bf16.msra.mxu0 0
    %1024 = vmatprep.subr.bf16.mxu0 0
    %1025 = vmatpush1.bf16.msra.mxu0 0
    %1026 = vmatprep.subr.bf16.mxu0 %v829
    %1027 = vmatpush1.bf16.msra.mxu0 %v826
    %1028 = vmatprep.subr.bf16.mxu0 %v780
    %1029 = vmatpush1.bf16.msra.mxu0 %v779
    %1030 = vmatprep.subr.bf16.mxu0 0
    %1031 = vmatpush2.bf16.msra.mxu0 0
    %1032 = vmatprep.subr.bf16.mxu0 0
    %1033 = vmatpush2.bf16.msra.mxu0 0
    %1034 = vmatprep.subr.bf16.mxu0 0
    %1035 = vmatpush2.bf16.msra.mxu0 0
    %1036 = vmatprep.subr.bf16.mxu0 0
    %1037 = vmatpush2.bf16.msra.mxu0 0
    %1038 = vmatprep.subr.bf16.mxu0 0
    %1039 = vmatpush2.bf16.msra.mxu0 0
    %1040 = vmatprep.subr.bf16.mxu0 0
    %1041 = vmatpush2.bf16.msra.mxu0 0
    %1042 = vmatprep.subr.bf16.mxu0 0
    %1043 = vmatpush2.bf16.msra.mxu0 0
    %1044 = vmatprep.subr.bf16.mxu0 0
    %1045 = vmatpush2.bf16.msra.mxu0 0
    %1046 = vmatprep.mubr.bf16.mxu0 0
    %1047 = vmatmul.mubr.bf16.gmra.mxu0 %v789
    %v1048 = vpop.f32.mrf.mxu0
    %v1049 = vadd.f32 %v605, %v1048
    %v1050 = vpop.f32.mrf.mxu0
    %v1051 = vadd.f32 %v607, %v1050
    %v1052 = vpop.f32.mrf.mxu0
    %v1053 = vadd.f32 %v609, %v1052
    %v1054 = vpop.f32.mrf.mxu0
    %v1055 = vadd.f32 %v611, %v1054
    %1056 = vmatprep.mubr.bf16.mxu0 0
    %1057 = vmatmul.mubr.bf16.gmra.mxu0 %v791
    %v1058 = vpop.f32.mrf.mxu0
    %v1059 = vadd.f32 %v615, %v1058
    %v1060 = vpop.f32.mrf.mxu0
    %v1061 = vadd.f32 %v617, %v1060
    %v1062 = vpop.f32.mrf.mxu0
    %v1063 = vadd.f32 %v619, %v1062
    %v1064 = vpop.f32.mrf.mxu0
    %v1065 = vadd.f32 %v621, %v1064
    %1066 = vmatprep.mubr.bf16.mxu0 0
    %1067 = vmatmul.mubr.bf16.gmra.mxu0 %v793
    %v1068 = vpop.f32.mrf.mxu0
    %v1069 = vadd.f32 %v625, %v1068
    %v1070 = vpop.f32.mrf.mxu0
    %v1071 = vadd.f32 %v627, %v1070
    %v1072 = vpop.f32.mrf.mxu0
    %v1073 = vadd.f32 %v629, %v1072
    %v1074 = vpop.f32.mrf.mxu0
    %v1075 = vadd.f32 %v631, %v1074
    %1076 = vmatprep.mubr.bf16.mxu0 0
    %1077 = vmatmul.mubr.bf16.gmra.mxu0 %v795
    %v1078 = vpop.f32.mrf.mxu0
    %v1079 = vadd.f32 %v635, %v1078
    %v1080 = vpop.f32.mrf.mxu0
    %v1081 = vadd.f32 %v637, %v1080
    %v1082 = vpop.f32.mrf.mxu0
    %v1083 = vadd.f32 %v639, %v1082
    %v1084 = vpop.f32.mrf.mxu0
    %v1085 = vadd.f32 %v641, %v1084
    %1086 = vmatprep.mubr.bf16.mxu0 0
    %1087 = vmatmul.mubr.bf16.gmra.mxu0 %v797
    %v1088 = vpop.f32.mrf.mxu0
    %v1089 = vadd.f32 %v645, %v1088
    %v1090 = vpop.f32.mrf.mxu0
    %v1091 = vadd.f32 %v647, %v1090
    %v1092 = vpop.f32.mrf.mxu0
    %v1093 = vadd.f32 %v649, %v1092
    %v1094 = vpop.f32.mrf.mxu0
    %v1095 = vadd.f32 %v651, %v1094
    %1096 = vmatprep.mubr.bf16.mxu0 0
    %1097 = vmatmul.mubr.bf16.gmra.mxu0 %v799
    %v1098 = vpop.f32.mrf.mxu0
    %v1099 = vadd.f32 %v655, %v1098
    %v1100 = vpop.f32.mrf.mxu0
    %v1101 = vadd.f32 %v657, %v1100
    %v1102 = vpop.f32.mrf.mxu0
    %v1103 = vadd.f32 %v659, %v1102
    %v1104 = vpop.f32.mrf.mxu0
    %v1105 = vadd.f32 %v661, %v1104
    %1106 = vmatprep.mubr.bf16.mxu0 0
    %1107 = vmatmul.mubr.bf16.gmra.mxu0 %v801
    %v1108 = vpop.f32.mrf.mxu0
    %v1109 = vadd.f32 %v665, %v1108
    %v1110 = vpop.f32.mrf.mxu0
    %v1111 = vadd.f32 %v667, %v1110
    %v1112 = vpop.f32.mrf.mxu0
    %v1113 = vadd.f32 %v669, %v1112
    %v1114 = vpop.f32.mrf.mxu0
    %v1115 = vadd.f32 %v671, %v1114
    %1116 = vmatprep.mubr.bf16.mxu0 0
    %1117 = vmatmul.mubr.bf16.gmra.mxu0 %v803
    %v1118 = vpop.f32.mrf.mxu0
    %v1119 = vadd.f32 %v675, %v1118
    %v1120 = vpop.f32.mrf.mxu0
    %v1121 = vadd.f32 %v677, %v1120
    %v1122 = vpop.f32.mrf.mxu0
    %v1123 = vadd.f32 %v679, %v1122
    %v1124 = vpop.f32.mrf.mxu0
    %v1125 = vadd.f32 %v681, %v1124
    %1126 = vmatprep.mubr.bf16.mxu0 0
    %1127 = vmatmul.mubr.bf16.gmra.mxu0 %v805
    %v1128 = vpop.f32.mrf.mxu0
    %v1129 = vadd.f32 %v685, %v1128
    %v1130 = vpop.f32.mrf.mxu0
    %v1131 = vadd.f32 %v687, %v1130
    %v1132 = vpop.f32.mrf.mxu0
    %v1133 = vadd.f32 %v689, %v1132
    %v1134 = vpop.f32.mrf.mxu0
    %v1135 = vadd.f32 %v691, %v1134
    %1136 = vmatprep.mubr.bf16.mxu0 0
    %1137 = vmatmul.mubr.bf16.gmra.mxu0 %v807
    %v1138 = vpop.f32.mrf.mxu0
    %v1139 = vadd.f32 %v695, %v1138
    %v1140 = vpop.f32.mrf.mxu0
    %v1141 = vadd.f32 %v697, %v1140
    %v1142 = vpop.f32.mrf.mxu0
    %v1143 = vadd.f32 %v699, %v1142
    %v1144 = vpop.f32.mrf.mxu0
    %v1145 = vadd.f32 %v701, %v1144
    %1146 = vmatprep.mubr.bf16.mxu0 0
    %1147 = vmatmul.mubr.bf16.gmra.mxu0 %v809
    %v1148 = vpop.f32.mrf.mxu0
    %v1149 = vadd.f32 %v705, %v1148
    %v1150 = vpop.f32.mrf.mxu0
    %v1151 = vadd.f32 %v707, %v1150
    %v1152 = vpop.f32.mrf.mxu0
    %v1153 = vadd.f32 %v709, %v1152
    %v1154 = vpop.f32.mrf.mxu0
    %v1155 = vadd.f32 %v711, %v1154
    %1156 = vmatprep.mubr.bf16.mxu0 0
    %1157 = vmatmul.mubr.bf16.gmra.mxu0 %v811
    %v1158 = vpop.f32.mrf.mxu0
    %v1159 = vadd.f32 %v715, %v1158
    %v1160 = vpop.f32.mrf.mxu0
    %v1161 = vadd.f32 %v717, %v1160
    %v1162 = vpop.f32.mrf.mxu0
    %v1163 = vadd.f32 %v719, %v1162
    %v1164 = vpop.f32.mrf.mxu0
    %v1165 = vadd.f32 %v721, %v1164
    %1166 = vmatprep.mubr.bf16.mxu0 0
    %1167 = vmatmul.mubr.bf16.gmra.mxu0 %v813
    %v1168 = vpop.f32.mrf.mxu0
    %v1169 = vadd.f32 %v725, %v1168
    %v1170 = vpop.f32.mrf.mxu0
    %v1171 = vadd.f32 %v727, %v1170
    %v1172 = vpop.f32.mrf.mxu0
    %v1173 = vadd.f32 %v729, %v1172
    %v1174 = vpop.f32.mrf.mxu0
    %v1175 = vadd.f32 %v731, %v1174
    %1176 = vmatprep.mubr.bf16.mxu0 0
    %1177 = vmatmul.mubr.bf16.gmra.mxu0 %v815
    %v1178 = vpop.f32.mrf.mxu0
    %v1179 = vadd.f32 %v735, %v1178
    %v1180 = vpop.f32.mrf.mxu0
    %v1181 = vadd.f32 %v737, %v1180
    %v1182 = vpop.f32.mrf.mxu0
    %v1183 = vadd.f32 %v739, %v1182
    %v1184 = vpop.f32.mrf.mxu0
    %v1185 = vadd.f32 %v741, %v1184
    %1186 = vmatprep.mubr.bf16.mxu0 0
    %1187 = vmatmul.mubr.bf16.gmra.mxu0 %v817
    %v1188 = vpop.f32.mrf.mxu0
    %v1189 = vadd.f32 %v745, %v1188
    %v1190 = vpop.f32.mrf.mxu0
    %v1191 = vadd.f32 %v747, %v1190
    %v1192 = vpop.f32.mrf.mxu0
    %v1193 = vadd.f32 %v749, %v1192
    %v1194 = vpop.f32.mrf.mxu0
    %v1195 = vadd.f32 %v751, %v1194
    %1196 = vdwg.mxu0
    %v1197 = vld [vmem:[%s0] sm:$0xe]
    %s1198 = scalar_lea.vmem [#allocation2], 128
    %v1199 = vld [vmem:[%s1198] sm:$0xff]
    %v1200 = vld [vmem:[%s1198 + $0x8] sm:$0xff]
    %v1201 = vld [vmem:[%s1198 + $0x10] sm:$0xff]
    %v1202 = vld [vmem:[%s1198 + $0x18] sm:$0xff]
    %v1203 = vld [vmem:[%s1198 + $0x20] sm:$0xff]
    %v1204 = vld [vmem:[%s1198 + $0x28] sm:$0xff]
    %v1205 = vld [vmem:[%s1198 + $0x30] sm:$0x77]
    %v1206 = vld [vmem:[%s1198 + $0x38] sm:$0x77]
    %v1208 = vunpack.c.l.b16 %v1197
    %v1209 = vpack.c.b16 %v121, %v1208
    %vm1210 = vcmask 1046528
    %v1211 = vrot.slane %v1209, 1
    %v1212 = vrot.slane %v152, 1
    %v1213 = vsel %vm1210, %v1211, %v1212
    %v1214 = vrot.slane %v153, 1
    %v1215 = vsel %vm1210, %v1212, %v1214
    %v1216 = vrot.slane %v154, 1
    %v1217 = vsel %vm1210, %v1214, %v1216
    %v1218 = vrot.slane %v155, 1
    %v1219 = vsel %vm1210, %v1216, %v1218
    %v1220 = vrot.slane %v156, 1
    %v1221 = vsel %vm1210, %v1218, %v1220
    %v1222 = vrot.slane %v157, 1
    %v1223 = vsel %vm1210, %v1220, %v1222
    %v1224 = vrot.slane %v158, 1
    %v1225 = vsel %vm1210, %v1222, %v1224
    %v1226 = vrot.slane %v159, 1
    %v1227 = vsel %vm1210, %v1224, %v1226
    %v1228 = vrot.slane %v160, 1
    %v1229 = vsel %vm1210, %v1226, %v1228
    %v1230 = vrot.slane %v161, 1
    %v1231 = vsel %vm1210, %v1228, %v1230
    %v1232 = vrot.slane %v162, 1
    %v1233 = vsel %vm1210, %v1230, %v1232
    %v1234 = vrot.slane %v163, 1
    %v1235 = vsel %vm1210, %v1232, %v1234
    %v1236 = vrot.slane %v164, 1
    %v1237 = vsel %vm1210, %v1234, %v1236
    %v1238 = vrot.slane %v165, 1
    %v1239 = vsel %vm1210, %v1236, %v1238
    %v1240 = vrot.slane %v166, 1
    %v1241 = vsel %vm1210, %v1238, %v1240
    %v1250 = vunpack.c.l.b16 %v1199
    %v1251 = vunpack.c.h.b16 %v1199
    %v1252 = vunpack.c.l.b16 %v1200
    %v1253 = vunpack.c.h.b16 %v1200
    %v1254 = vunpack.c.l.b16 %v1201
    %v1255 = vunpack.c.h.b16 %v1201
    %v1256 = vunpack.c.l.b16 %v1202
    %v1257 = vunpack.c.h.b16 %v1202
    %v1258 = vunpack.c.l.b16 %v1203
    %v1259 = vunpack.c.h.b16 %v1203
    %v1260 = vunpack.c.l.b16 %v1204
    %v1261 = vunpack.c.h.b16 %v1204
    %v1262 = vunpack.c.l.b16 %v1205
    %v1263 = vunpack.c.h.b16 %v1205
    %v1264 = vunpack.c.l.b16 %v1206
    %v1265 = vunpack.c.h.b16 %v1206
    %v1266 = vpack.c.b16 %v1254, %v1250
    %v1267 = vpack.c.b16 %v1255, %v1251
    %v1268 = vpack.c.b16 %v1256, %v1252
    %v1269 = vpack.c.b16 %v1257, %v1253
    %v1270 = vpack.c.b16 %v1262, %v1258
    %v1271 = vpack.c.b16 %v1263, %v1259
    %v1272 = vpack.c.b16 %v1264, %v1260
    %v1273 = vpack.c.b16 %v1265, %v1261
    %v1279 = vsel %vm328, %v1213, 0
    %v1282 = vsel %vm328, %v1215, 0
    %v1285 = vsel %vm328, %v1217, 0
    %v1288 = vsel %vm328, %v1219, 0
    %v1291 = vsel %vm328, %v1221, 0
    %v1294 = vsel %vm328, %v1223, 0
    %v1297 = vsel %vm328, %v1225, 0
    %v1300 = vsel %vm328, %v1227, 0
    %v1303 = vsel %vm328, %v1229, 0
    %v1306 = vsel %vm328, %v1231, 0
    %v1309 = vsel %vm328, %v1233, 0
    %v1312 = vsel %vm328, %v1235, 0
    %v1315 = vsel %vm328, %v1237, 0
    %v1318 = vsel %vm328, %v1239, 0
    %v1321 = vsel %vm328, %v1241, 0
    %v1324 = vsel %vm374, %v1270, 0
    %v1327 = vsel %vm374, %v1271, 0
    %v1330 = vsel %vm374, %v1272, 0
    %v1333 = vsel %vm374, %v1273, 0
    %1335 = vmatprep.subr.bf16.mxu0 0
    %1336 = vmatpush1.bf16.msra.mxu0 0
    %1337 = vmatprep.subr.bf16.mxu0 0
    %1338 = vmatpush1.bf16.msra.mxu0 0
    %1339 = vmatprep.subr.bf16.mxu0 0
    %1340 = vmatpush1.bf16.msra.mxu0 0
    %1341 = vmatprep.subr.bf16.mxu0 0
    %1342 = vmatpush1.bf16.msra.mxu0 0
    %1343 = vmatprep.subr.bf16.mxu0 0
    %1344 = vmatpush1.bf16.msra.mxu0 0
    %1345 = vmatprep.subr.bf16.mxu0 0
    %1346 = vmatpush1.bf16.msra.mxu0 0
    %1347 = vmatprep.subr.bf16.mxu0 %v1327
    %1348 = vmatpush1.bf16.msra.mxu0 %v1324
    %1349 = vmatprep.subr.bf16.mxu0 %v1267
    %1350 = vmatpush1.bf16.msra.mxu0 %v1266
    %1351 = vmatprep.subr.bf16.mxu0 0
    %1352 = vmatpush2.bf16.msra.mxu0 0
    %1353 = vmatprep.subr.bf16.mxu0 0
    %1354 = vmatpush2.bf16.msra.mxu0 0
    %1355 = vmatprep.subr.bf16.mxu0 0
    %1356 = vmatpush2.bf16.msra.mxu0 0
    %1357 = vmatprep.subr.bf16.mxu0 0
    %1358 = vmatpush2.bf16.msra.mxu0 0
    %1359 = vmatprep.subr.bf16.mxu0 0
    %1360 = vmatpush2.bf16.msra.mxu0 0
    %1361 = vmatprep.subr.bf16.mxu0 0
    %1362 = vmatpush2.bf16.msra.mxu0 0
    %1363 = vmatprep.subr.bf16.mxu0 0
    %1364 = vmatpush2.bf16.msra.mxu0 0
    %1365 = vmatprep.subr.bf16.mxu0 0
    %1366 = vmatpush2.bf16.msra.mxu0 0
    %1367 = vmatprep.mubr.bf16.mxu0 0
    %1368 = vmatmul.mubr.bf16.gmra.mxu0 %v1279
    %v1369 = vpop.f32.mrf.mxu0
    %v1370 = vadd.f32 0.0, %v1369
    %v1371 = vpop.f32.mrf.mxu0
    %v1372 = vadd.f32 0.0, %v1371
    %v1373 = vpop.f32.mrf.mxu0
    %v1374 = vadd.f32 0.0, %v1373
    %v1375 = vpop.f32.mrf.mxu0
    %v1376 = vadd.f32 0.0, %v1375
    %1377 = vmatprep.mubr.bf16.mxu0 0
    %1378 = vmatmul.mubr.bf16.gmra.mxu0 %v1282
    %v1379 = vpop.f32.mrf.mxu0
    %v1380 = vadd.f32 0.0, %v1379
    %v1381 = vpop.f32.mrf.mxu0
    %v1382 = vadd.f32 0.0, %v1381
    %v1383 = vpop.f32.mrf.mxu0
    %v1384 = vadd.f32 0.0, %v1383
    %v1385 = vpop.f32.mrf.mxu0
    %v1386 = vadd.f32 0.0, %v1385
    %1387 = vmatprep.mubr.bf16.mxu0 0
    %1388 = vmatmul.mubr.bf16.gmra.mxu0 %v1285
    %v1389 = vpop.f32.mrf.mxu0
    %v1390 = vadd.f32 0.0, %v1389
    %v1391 = vpop.f32.mrf.mxu0
    %v1392 = vadd.f32 0.0, %v1391
    %v1393 = vpop.f32.mrf.mxu0
    %v1394 = vadd.f32 0.0, %v1393
    %v1395 = vpop.f32.mrf.mxu0
    %v1396 = vadd.f32 0.0, %v1395
    %1397 = vmatprep.mubr.bf16.mxu0 0
    %1398 = vmatmul.mubr.bf16.gmra.mxu0 %v1288
    %v1399 = vpop.f32.mrf.mxu0
    %v1400 = vadd.f32 0.0, %v1399
    %v1401 = vpop.f32.mrf.mxu0
    %v1402 = vadd.f32 0.0, %v1401
    %v1403 = vpop.f32.mrf.mxu0
    %v1404 = vadd.f32 0.0, %v1403
    %v1405 = vpop.f32.mrf.mxu0
    %v1406 = vadd.f32 0.0, %v1405
    %1407 = vmatprep.mubr.bf16.mxu0 0
    %1408 = vmatmul.mubr.bf16.gmra.mxu0 %v1291
    %v1409 = vpop.f32.mrf.mxu0
    %v1410 = vadd.f32 0.0, %v1409
    %v1411 = vpop.f32.mrf.mxu0
    %v1412 = vadd.f32 0.0, %v1411
    %v1413 = vpop.f32.mrf.mxu0
    %v1414 = vadd.f32 0.0, %v1413
    %v1415 = vpop.f32.mrf.mxu0
    %v1416 = vadd.f32 0.0, %v1415
    %1417 = vmatprep.mubr.bf16.mxu0 0
    %1418 = vmatmul.mubr.bf16.gmra.mxu0 %v1294
    %v1419 = vpop.f32.mrf.mxu0
    %v1420 = vadd.f32 0.0, %v1419
    %v1421 = vpop.f32.mrf.mxu0
    %v1422 = vadd.f32 0.0, %v1421
    %v1423 = vpop.f32.mrf.mxu0
    %v1424 = vadd.f32 0.0, %v1423
    %v1425 = vpop.f32.mrf.mxu0
    %v1426 = vadd.f32 0.0, %v1425
    %1427 = vmatprep.mubr.bf16.mxu0 0
    %1428 = vmatmul.mubr.bf16.gmra.mxu0 %v1297
    %v1429 = vpop.f32.mrf.mxu0
    %v1430 = vadd.f32 0.0, %v1429
    %v1431 = vpop.f32.mrf.mxu0
    %v1432 = vadd.f32 0.0, %v1431
    %v1433 = vpop.f32.mrf.mxu0
    %v1434 = vadd.f32 0.0, %v1433
    %v1435 = vpop.f32.mrf.mxu0
    %v1436 = vadd.f32 0.0, %v1435
    %1437 = vmatprep.mubr.bf16.mxu0 0
    %1438 = vmatmul.mubr.bf16.gmra.mxu0 %v1300
    %v1439 = vpop.f32.mrf.mxu0
    %v1440 = vadd.f32 0.0, %v1439
    %v1441 = vpop.f32.mrf.mxu0
    %v1442 = vadd.f32 0.0, %v1441
    %v1443 = vpop.f32.mrf.mxu0
    %v1444 = vadd.f32 0.0, %v1443
    %v1445 = vpop.f32.mrf.mxu0
    %v1446 = vadd.f32 0.0, %v1445
    %1447 = vmatprep.mubr.bf16.mxu0 0
    %1448 = vmatmul.mubr.bf16.gmra.mxu0 %v1303
    %v1449 = vpop.f32.mrf.mxu0
    %v1450 = vadd.f32 0.0, %v1449
    %v1451 = vpop.f32.mrf.mxu0
    %v1452 = vadd.f32 0.0, %v1451
    %v1453 = vpop.f32.mrf.mxu0
    %v1454 = vadd.f32 0.0, %v1453
    %v1455 = vpop.f32.mrf.mxu0
    %v1456 = vadd.f32 0.0, %v1455
    %1457 = vmatprep.mubr.bf16.mxu0 0
    %1458 = vmatmul.mubr.bf16.gmra.mxu0 %v1306
    %v1459 = vpop.f32.mrf.mxu0
    %v1460 = vadd.f32 0.0, %v1459
    %v1461 = vpop.f32.mrf.mxu0
    %v1462 = vadd.f32 0.0, %v1461
    %v1463 = vpop.f32.mrf.mxu0
    %v1464 = vadd.f32 0.0, %v1463
    %v1465 = vpop.f32.mrf.mxu0
    %v1466 = vadd.f32 0.0, %v1465
    %1467 = vmatprep.mubr.bf16.mxu0 0
    %1468 = vmatmul.mubr.bf16.gmra.mxu0 %v1309
    %v1469 = vpop.f32.mrf.mxu0
    %v1470 = vadd.f32 0.0, %v1469
    %v1471 = vpop.f32.mrf.mxu0
    %v1472 = vadd.f32 0.0, %v1471
    %v1473 = vpop.f32.mrf.mxu0
    %v1474 = vadd.f32 0.0, %v1473
    %v1475 = vpop.f32.mrf.mxu0
    %v1476 = vadd.f32 0.0, %v1475
    %1477 = vmatprep.mubr.bf16.mxu0 0
    %1478 = vmatmul.mubr.bf16.gmra.mxu0 %v1312
    %v1479 = vpop.f32.mrf.mxu0
    %v1480 = vadd.f32 0.0, %v1479
    %v1481 = vpop.f32.mrf.mxu0
    %v1482 = vadd.f32 0.0, %v1481
    %v1483 = vpop.f32.mrf.mxu0
    %v1484 = vadd.f32 0.0, %v1483
    %v1485 = vpop.f32.mrf.mxu0
    %v1486 = vadd.f32 0.0, %v1485
    %1487 = vmatprep.mubr.bf16.mxu0 0
    %1488 = vmatmul.mubr.bf16.gmra.mxu0 %v1315
    %v1489 = vpop.f32.mrf.mxu0
    %v1490 = vadd.f32 0.0, %v1489
    %v1491 = vpop.f32.mrf.mxu0
    %v1492 = vadd.f32 0.0, %v1491
    %v1493 = vpop.f32.mrf.mxu0
    %v1494 = vadd.f32 0.0, %v1493
    %v1495 = vpop.f32.mrf.mxu0
    %v1496 = vadd.f32 0.0, %v1495
    %1497 = vmatprep.mubr.bf16.mxu0 0
    %1498 = vmatmul.mubr.bf16.gmra.mxu0 %v1318
    %v1499 = vpop.f32.mrf.mxu0
    %v1500 = vadd.f32 0.0, %v1499
    %v1501 = vpop.f32.mrf.mxu0
    %v1502 = vadd.f32 0.0, %v1501
    %v1503 = vpop.f32.mrf.mxu0
    %v1504 = vadd.f32 0.0, %v1503
    %v1505 = vpop.f32.mrf.mxu0
    %v1506 = vadd.f32 0.0, %v1505
    %1507 = vmatprep.mubr.bf16.mxu0 0
    %1508 = vmatmul.mubr.bf16.gmra.mxu0 %v1321
    %v1509 = vpop.f32.mrf.mxu0
    %v1510 = vadd.f32 0.0, %v1509
    %v1511 = vpop.f32.mrf.mxu0
    %v1512 = vadd.f32 0.0, %v1511
    %v1513 = vpop.f32.mrf.mxu0
    %v1514 = vadd.f32 0.0, %v1513
    %v1515 = vpop.f32.mrf.mxu0
    %v1516 = vadd.f32 0.0, %v1515
    %1517 = vdwg.mxu0
    %1518 = vmatprep.subr.bf16.mxu0 0
    %1519 = vmatpush1.bf16.msra.mxu0 0
    %1520 = vmatprep.subr.bf16.mxu0 0
    %1521 = vmatpush1.bf16.msra.mxu0 0
    %1522 = vmatprep.subr.bf16.mxu0 0
    %1523 = vmatpush1.bf16.msra.mxu0 0
    %1524 = vmatprep.subr.bf16.mxu0 0
    %1525 = vmatpush1.bf16.msra.mxu0 0
    %1526 = vmatprep.subr.bf16.mxu0 0
    %1527 = vmatpush1.bf16.msra.mxu0 0
    %1528 = vmatprep.subr.bf16.mxu0 0
    %1529 = vmatpush1.bf16.msra.mxu0 0
    %1530 = vmatprep.subr.bf16.mxu0 %v1333
    %1531 = vmatpush1.bf16.msra.mxu0 %v1330
    %1532 = vmatprep.subr.bf16.mxu0 %v1269
    %1533 = vmatpush1.bf16.msra.mxu0 %v1268
    %1534 = vmatprep.subr.bf16.mxu0 0
    %1535 = vmatpush2.bf16.msra.mxu0 0
    %1536 = vmatprep.subr.bf16.mxu0 0
    %1537 = vmatpush2.bf16.msra.mxu0 0
    %1538 = vmatprep.subr.bf16.mxu0 0
    %1539 = vmatpush2.bf16.msra.mxu0 0
    %1540 = vmatprep.subr.bf16.mxu0 0
    %1541 = vmatpush2.bf16.msra.mxu0 0
    %1542 = vmatprep.subr.bf16.mxu0 0
    %1543 = vmatpush2.bf16.msra.mxu0 0
    %1544 = vmatprep.subr.bf16.mxu0 0
    %1545 = vmatpush2.bf16.msra.mxu0 0
    %1546 = vmatprep.subr.bf16.mxu0 0
    %1547 = vmatpush2.bf16.msra.mxu0 0
    %1548 = vmatprep.subr.bf16.mxu0 0
    %1549 = vmatpush2.bf16.msra.mxu0 0
    %1550 = vmatprep.mubr.bf16.mxu0 0
    %1551 = vmatmul.mubr.bf16.gmra.mxu0 %v1279
    %v1552 = vpop.f32.mrf.mxu0
    %v1553 = vadd.f32 0.0, %v1552
    %v1554 = vpop.f32.mrf.mxu0
    %v1555 = vadd.f32 0.0, %v1554
    %v1556 = vpop.f32.mrf.mxu0
    %v1557 = vadd.f32 0.0, %v1556
    %v1558 = vpop.f32.mrf.mxu0
    %v1559 = vadd.f32 0.0, %v1558
    %1560 = vmatprep.mubr.bf16.mxu0 0
    %1561 = vmatmul.mubr.bf16.gmra.mxu0 %v1282
    %v1562 = vpop.f32.mrf.mxu0
    %v1563 = vadd.f32 0.0, %v1562
    %v1564 = vpop.f32.mrf.mxu0
    %v1565 = vadd.f32 0.0, %v1564
    %v1566 = vpop.f32.mrf.mxu0
    %v1567 = vadd.f32 0.0, %v1566
    %v1568 = vpop.f32.mrf.mxu0
    %v1569 = vadd.f32 0.0, %v1568
    %1570 = vmatprep.mubr.bf16.mxu0 0
    %1571 = vmatmul.mubr.bf16.gmra.mxu0 %v1285
    %v1572 = vpop.f32.mrf.mxu0
    %v1573 = vadd.f32 0.0, %v1572
    %v1574 = vpop.f32.mrf.mxu0
    %v1575 = vadd.f32 0.0, %v1574
    %v1576 = vpop.f32.mrf.mxu0
    %v1577 = vadd.f32 0.0, %v1576
    %v1578 = vpop.f32.mrf.mxu0
    %v1579 = vadd.f32 0.0, %v1578
    %1580 = vmatprep.mubr.bf16.mxu0 0
    %1581 = vmatmul.mubr.bf16.gmra.mxu0 %v1288
    %v1582 = vpop.f32.mrf.mxu0
    %v1583 = vadd.f32 0.0, %v1582
    %v1584 = vpop.f32.mrf.mxu0
    %v1585 = vadd.f32 0.0, %v1584
    %v1586 = vpop.f32.mrf.mxu0
    %v1587 = vadd.f32 0.0, %v1586
    %v1588 = vpop.f32.mrf.mxu0
    %v1589 = vadd.f32 0.0, %v1588
    %1590 = vmatprep.mubr.bf16.mxu0 0
    %1591 = vmatmul.mubr.bf16.gmra.mxu0 %v1291
    %v1592 = vpop.f32.mrf.mxu0
    %v1593 = vadd.f32 0.0, %v1592
    %v1594 = vpop.f32.mrf.mxu0
    %v1595 = vadd.f32 0.0, %v1594
    %v1596 = vpop.f32.mrf.mxu0
    %v1597 = vadd.f32 0.0, %v1596
    %v1598 = vpop.f32.mrf.mxu0
    %v1599 = vadd.f32 0.0, %v1598
    %1600 = vmatprep.mubr.bf16.mxu0 0
    %1601 = vmatmul.mubr.bf16.gmra.mxu0 %v1294
    %v1602 = vpop.f32.mrf.mxu0
    %v1603 = vadd.f32 0.0, %v1602
    %v1604 = vpop.f32.mrf.mxu0
    %v1605 = vadd.f32 0.0, %v1604
    %v1606 = vpop.f32.mrf.mxu0
    %v1607 = vadd.f32 0.0, %v1606
    %v1608 = vpop.f32.mrf.mxu0
    %v1609 = vadd.f32 0.0, %v1608
    %1610 = vmatprep.mubr.bf16.mxu0 0
    %1611 = vmatmul.mubr.bf16.gmra.mxu0 %v1297
    %v1612 = vpop.f32.mrf.mxu0
    %v1613 = vadd.f32 0.0, %v1612
    %v1614 = vpop.f32.mrf.mxu0
    %v1615 = vadd.f32 0.0, %v1614
    %v1616 = vpop.f32.mrf.mxu0
    %v1617 = vadd.f32 0.0, %v1616
    %v1618 = vpop.f32.mrf.mxu0
    %v1619 = vadd.f32 0.0, %v1618
    %1620 = vmatprep.mubr.bf16.mxu0 0
    %1621 = vmatmul.mubr.bf16.gmra.mxu0 %v1300
    %v1622 = vpop.f32.mrf.mxu0
    %v1623 = vadd.f32 0.0, %v1622
    %v1624 = vpop.f32.mrf.mxu0
    %v1625 = vadd.f32 0.0, %v1624
    %v1626 = vpop.f32.mrf.mxu0
    %v1627 = vadd.f32 0.0, %v1626
    %v1628 = vpop.f32.mrf.mxu0
    %v1629 = vadd.f32 0.0, %v1628
    %1630 = vmatprep.mubr.bf16.mxu0 0
    %1631 = vmatmul.mubr.bf16.gmra.mxu0 %v1303
    %v1632 = vpop.f32.mrf.mxu0
    %v1633 = vadd.f32 0.0, %v1632
    %v1634 = vpop.f32.mrf.mxu0
    %v1635 = vadd.f32 0.0, %v1634
    %v1636 = vpop.f32.mrf.mxu0
    %v1637 = vadd.f32 0.0, %v1636
    %v1638 = vpop.f32.mrf.mxu0
    %v1639 = vadd.f32 0.0, %v1638
    %1640 = vmatprep.mubr.bf16.mxu0 0
    %1641 = vmatmul.mubr.bf16.gmra.mxu0 %v1306
    %v1642 = vpop.f32.mrf.mxu0
    %v1643 = vadd.f32 0.0, %v1642
    %v1644 = vpop.f32.mrf.mxu0
    %v1645 = vadd.f32 0.0, %v1644
    %v1646 = vpop.f32.mrf.mxu0
    %v1647 = vadd.f32 0.0, %v1646
    %v1648 = vpop.f32.mrf.mxu0
    %v1649 = vadd.f32 0.0, %v1648
    %1650 = vmatprep.mubr.bf16.mxu0 0
    %1651 = vmatmul.mubr.bf16.gmra.mxu0 %v1309
    %v1652 = vpop.f32.mrf.mxu0
    %v1653 = vadd.f32 0.0, %v1652
    %v1654 = vpop.f32.mrf.mxu0
    %v1655 = vadd.f32 0.0, %v1654
    %v1656 = vpop.f32.mrf.mxu0
    %v1657 = vadd.f32 0.0, %v1656
    %v1658 = vpop.f32.mrf.mxu0
    %v1659 = vadd.f32 0.0, %v1658
    %1660 = vmatprep.mubr.bf16.mxu0 0
    %1661 = vmatmul.mubr.bf16.gmra.mxu0 %v1312
    %v1662 = vpop.f32.mrf.mxu0
    %v1663 = vadd.f32 0.0, %v1662
    %v1664 = vpop.f32.mrf.mxu0
    %v1665 = vadd.f32 0.0, %v1664
    %v1666 = vpop.f32.mrf.mxu0
    %v1667 = vadd.f32 0.0, %v1666
    %v1668 = vpop.f32.mrf.mxu0
    %v1669 = vadd.f32 0.0, %v1668
    %1670 = vmatprep.mubr.bf16.mxu0 0
    %1671 = vmatmul.mubr.bf16.gmra.mxu0 %v1315
    %v1672 = vpop.f32.mrf.mxu0
    %v1673 = vadd.f32 0.0, %v1672
    %v1674 = vpop.f32.mrf.mxu0
    %v1675 = vadd.f32 0.0, %v1674
    %v1676 = vpop.f32.mrf.mxu0
    %v1677 = vadd.f32 0.0, %v1676
    %v1678 = vpop.f32.mrf.mxu0
    %v1679 = vadd.f32 0.0, %v1678
    %1680 = vmatprep.mubr.bf16.mxu0 0
    %1681 = vmatmul.mubr.bf16.gmra.mxu0 %v1318
    %v1682 = vpop.f32.mrf.mxu0
    %v1683 = vadd.f32 0.0, %v1682
    %v1684 = vpop.f32.mrf.mxu0
    %v1685 = vadd.f32 0.0, %v1684
    %v1686 = vpop.f32.mrf.mxu0
    %v1687 = vadd.f32 0.0, %v1686
    %v1688 = vpop.f32.mrf.mxu0
    %v1689 = vadd.f32 0.0, %v1688
    %1690 = vmatprep.mubr.bf16.mxu0 0
    %1691 = vmatmul.mubr.bf16.gmra.mxu0 %v1321
    %v1692 = vpop.f32.mrf.mxu0
    %v1693 = vadd.f32 0.0, %v1692
    %v1694 = vpop.f32.mrf.mxu0
    %v1695 = vadd.f32 0.0, %v1694
    %v1696 = vpop.f32.mrf.mxu0
    %v1697 = vadd.f32 0.0, %v1696
    %v1698 = vpop.f32.mrf.mxu0
    %v1699 = vadd.f32 0.0, %v1698
    %1700 = vdwg.mxu0
    %v1701 = vadd.f32 %v866, %v1370
    %v1702 = vadd.f32 %v868, %v1372
    %v1703 = vadd.f32 %v1049, %v1553
    %v1704 = vadd.f32 %v1051, %v1555
    %v1705 = vadd.f32 %v870, %v1374
    %v1706 = vadd.f32 %v872, %v1376
    %v1707 = vadd.f32 %v1053, %v1557
    %v1708 = vadd.f32 %v1055, %v1559
    %v1709 = vadd.f32 %v876, %v1380
    %v1710 = vadd.f32 %v878, %v1382
    %v1711 = vadd.f32 %v1059, %v1563
    %v1712 = vadd.f32 %v1061, %v1565
    %v1713 = vadd.f32 %v880, %v1384
    %v1714 = vadd.f32 %v882, %v1386
    %v1715 = vadd.f32 %v1063, %v1567
    %v1716 = vadd.f32 %v1065, %v1569
    %v1717 = vadd.f32 %v886, %v1390
    %v1718 = vadd.f32 %v888, %v1392
    %v1719 = vadd.f32 %v1069, %v1573
    %v1720 = vadd.f32 %v1071, %v1575
    %v1721 = vadd.f32 %v890, %v1394
    %v1722 = vadd.f32 %v892, %v1396
    %v1723 = vadd.f32 %v1073, %v1577
    %v1724 = vadd.f32 %v1075, %v1579
    %v1725 = vadd.f32 %v896, %v1400
    %v1726 = vadd.f32 %v898, %v1402
    %v1727 = vadd.f32 %v1079, %v1583
    %v1728 = vadd.f32 %v1081, %v1585
    %v1729 = vadd.f32 %v900, %v1404
    %v1730 = vadd.f32 %v902, %v1406
    %v1731 = vadd.f32 %v1083, %v1587
    %v1732 = vadd.f32 %v1085, %v1589
    %v1733 = vadd.f32 %v906, %v1410
    %v1734 = vadd.f32 %v908, %v1412
    %v1735 = vadd.f32 %v1089, %v1593
    %v1736 = vadd.f32 %v1091, %v1595
    %v1737 = vadd.f32 %v910, %v1414
    %v1738 = vadd.f32 %v912, %v1416
    %v1739 = vadd.f32 %v1093, %v1597
    %v1740 = vadd.f32 %v1095, %v1599
    %v1741 = vadd.f32 %v916, %v1420
    %v1742 = vadd.f32 %v918, %v1422
    %v1743 = vadd.f32 %v1099, %v1603
    %v1744 = vadd.f32 %v1101, %v1605
    %v1745 = vadd.f32 %v920, %v1424
    %v1746 = vadd.f32 %v922, %v1426
    %v1747 = vadd.f32 %v1103, %v1607
    %v1748 = vadd.f32 %v1105, %v1609
    %v1749 = vadd.f32 %v926, %v1430
    %v1750 = vadd.f32 %v928, %v1432
    %v1751 = vadd.f32 %v1109, %v1613
    %v1752 = vadd.f32 %v1111, %v1615
    %v1753 = vadd.f32 %v930, %v1434
    %v1754 = vadd.f32 %v932, %v1436
    %v1755 = vadd.f32 %v1113, %v1617
    %v1756 = vadd.f32 %v1115, %v1619
    %v1757 = vadd.f32 %v936, %v1440
    %v1758 = vadd.f32 %v938, %v1442
    %v1759 = vadd.f32 %v1119, %v1623
    %v1760 = vadd.f32 %v1121, %v1625
    %v1761 = vadd.f32 %v940, %v1444
    %v1762 = vadd.f32 %v942, %v1446
    %v1763 = vadd.f32 %v1123, %v1627
    %v1764 = vadd.f32 %v1125, %v1629
    %v1765 = vadd.f32 %v946, %v1450
    %v1766 = vadd.f32 %v948, %v1452
    %v1767 = vadd.f32 %v1129, %v1633
    %v1768 = vadd.f32 %v1131, %v1635
    %v1769 = vadd.f32 %v950, %v1454
    %v1770 = vadd.f32 %v952, %v1456
    %v1771 = vadd.f32 %v1133, %v1637
    %v1772 = vadd.f32 %v1135, %v1639
    %v1773 = vadd.f32 %v956, %v1460
    %v1774 = vadd.f32 %v958, %v1462
    %v1775 = vadd.f32 %v1139, %v1643
    %v1776 = vadd.f32 %v1141, %v1645
    %v1777 = vadd.f32 %v960, %v1464
    %v1778 = vadd.f32 %v962, %v1466
    %v1779 = vadd.f32 %v1143, %v1647
    %v1780 = vadd.f32 %v1145, %v1649
    %v1781 = vadd.f32 %v966, %v1470
    %v1782 = vadd.f32 %v968, %v1472
    %v1783 = vadd.f32 %v1149, %v1653
    %v1784 = vadd.f32 %v1151, %v1655
    %v1785 = vadd.f32 %v970, %v1474
    %v1786 = vadd.f32 %v972, %v1476
    %v1787 = vadd.f32 %v1153, %v1657
    %v1788 = vadd.f32 %v1155, %v1659
    %v1789 = vadd.f32 %v976, %v1480
    %v1790 = vadd.f32 %v978, %v1482
    %v1791 = vadd.f32 %v1159, %v1663
    %v1792 = vadd.f32 %v1161, %v1665
    %v1793 = vadd.f32 %v980, %v1484
    %v1794 = vadd.f32 %v982, %v1486
    %v1795 = vadd.f32 %v1163, %v1667
    %v1796 = vadd.f32 %v1165, %v1669
    %v1797 = vadd.f32 %v986, %v1490
    %v1798 = vadd.f32 %v988, %v1492
    %v1799 = vadd.f32 %v1169, %v1673
    %v1800 = vadd.f32 %v1171, %v1675
    %v1801 = vadd.f32 %v990, %v1494
    %v1802 = vadd.f32 %v992, %v1496
    %v1803 = vadd.f32 %v1173, %v1677
    %v1804 = vadd.f32 %v1175, %v1679
    %v1805 = vadd.f32 %v996, %v1500
    %v1806 = vadd.f32 %v998, %v1502
    %v1807 = vadd.f32 %v1179, %v1683
    %v1808 = vadd.f32 %v1181, %v1685
    %v1809 = vadd.f32 %v1000, %v1504
    %v1810 = vadd.f32 %v1002, %v1506
    %v1811 = vadd.f32 %v1183, %v1687
    %v1812 = vadd.f32 %v1185, %v1689
    %v1813 = vadd.f32 %v1006, %v1510
    %v1814 = vadd.f32 %v1008, %v1512
    %v1815 = vadd.f32 %v1189, %v1693
    %v1816 = vadd.f32 %v1191, %v1695
    %v1817 = vadd.f32 %v1010, %v1514
    %v1818 = vadd.f32 %v1012, %v1516
    %v1819 = vadd.f32 %v1193, %v1697
    %v1820 = vadd.f32 %v1195, %v1699
    %v1821 = vld [vmem:[#allocation4] sm:$0xf]
    %v1823 = vlaneseq
    %v1824 = vshrl.u32 %v1823, 7
    %v1825 = vsub.s32 0, %v1824
    %v1826 = vrot.slane %v1821, %v1825
    %v1827 = vlaneseq
    %v1828 = vshrl.u32 %v1827, 7
    %v1829 = vsub.s32 1, %v1828
    %v1830 = vrot.slane %v1821, %v1829
    %v1831 = vlaneseq
    %v1832 = vshrl.u32 %v1831, 7
    %v1833 = vsub.s32 2, %v1832
    %v1834 = vrot.slane %v1821, %v1833
    %v1835 = vlaneseq
    %v1836 = vshrl.u32 %v1835, 7
    %v1837 = vsub.s32 3, %v1836
    %v1838 = vrot.slane %v1821, %v1837
    %v1843 = vadd.f32 %v1701, %v1826
    %v1844 = vadd.f32 %v1702, %v1830
    %v1845 = vadd.f32 %v1703, %v1834
    %v1846 = vadd.f32 %v1704, %v1838
    %v1847 = vadd.f32 %v1705, %v1826
    %v1848 = vadd.f32 %v1706, %v1830
    %v1849 = vadd.f32 %v1707, %v1834
    %v1850 = vadd.f32 %v1708, %v1838
    %v1851 = vadd.f32 %v1709, %v1826
    %v1852 = vadd.f32 %v1710, %v1830
    %v1853 = vadd.f32 %v1711, %v1834
    %v1854 = vadd.f32 %v1712, %v1838
    %v1855 = vadd.f32 %v1713, %v1826
    %v1856 = vadd.f32 %v1714, %v1830
    %v1857 = vadd.f32 %v1715, %v1834
    %v1858 = vadd.f32 %v1716, %v1838
    %v1859 = vadd.f32 %v1717, %v1826
    %v1860 = vadd.f32 %v1718, %v1830
    %v1861 = vadd.f32 %v1719, %v1834
    %v1862 = vadd.f32 %v1720, %v1838
    %v1863 = vadd.f32 %v1721, %v1826
    %v1864 = vadd.f32 %v1722, %v1830
    %v1865 = vadd.f32 %v1723, %v1834
    %v1866 = vadd.f32 %v1724, %v1838
    %v1867 = vadd.f32 %v1725, %v1826
    %v1868 = vadd.f32 %v1726, %v1830
    %v1869 = vadd.f32 %v1727, %v1834
    %v1870 = vadd.f32 %v1728, %v1838
    %v1871 = vadd.f32 %v1729, %v1826
    %v1872 = vadd.f32 %v1730, %v1830
    %v1873 = vadd.f32 %v1731, %v1834
    %v1874 = vadd.f32 %v1732, %v1838
    %v1875 = vadd.f32 %v1733, %v1826
    %v1876 = vadd.f32 %v1734, %v1830
    %v1877 = vadd.f32 %v1735, %v1834
    %v1878 = vadd.f32 %v1736, %v1838
    %v1879 = vadd.f32 %v1737, %v1826
    %v1880 = vadd.f32 %v1738, %v1830
    %v1881 = vadd.f32 %v1739, %v1834
    %v1882 = vadd.f32 %v1740, %v1838
    %v1883 = vadd.f32 %v1741, %v1826
    %v1884 = vadd.f32 %v1742, %v1830
    %v1885 = vadd.f32 %v1743, %v1834
    %v1886 = vadd.f32 %v1744, %v1838
    %v1887 = vadd.f32 %v1745, %v1826
    %v1888 = vadd.f32 %v1746, %v1830
    %v1889 = vadd.f32 %v1747, %v1834
    %v1890 = vadd.f32 %v1748, %v1838
    %v1891 = vadd.f32 %v1749, %v1826
    %v1892 = vadd.f32 %v1750, %v1830
    %v1893 = vadd.f32 %v1751, %v1834
    %v1894 = vadd.f32 %v1752, %v1838
    %v1895 = vadd.f32 %v1753, %v1826
    %v1896 = vadd.f32 %v1754, %v1830
    %v1897 = vadd.f32 %v1755, %v1834
    %v1898 = vadd.f32 %v1756, %v1838
    %v1899 = vadd.f32 %v1757, %v1826
    %v1900 = vadd.f32 %v1758, %v1830
    %v1901 = vadd.f32 %v1759, %v1834
    %v1902 = vadd.f32 %v1760, %v1838
    %v1903 = vadd.f32 %v1761, %v1826
    %v1904 = vadd.f32 %v1762, %v1830
    %v1905 = vadd.f32 %v1763, %v1834
    %v1906 = vadd.f32 %v1764, %v1838
    %v1907 = vadd.f32 %v1765, %v1826
    %v1908 = vadd.f32 %v1766, %v1830
    %v1909 = vadd.f32 %v1767, %v1834
    %v1910 = vadd.f32 %v1768, %v1838
    %v1911 = vadd.f32 %v1769, %v1826
    %v1912 = vadd.f32 %v1770, %v1830
    %v1913 = vadd.f32 %v1771, %v1834
    %v1914 = vadd.f32 %v1772, %v1838
    %v1915 = vadd.f32 %v1773, %v1826
    %v1916 = vadd.f32 %v1774, %v1830
    %v1917 = vadd.f32 %v1775, %v1834
    %v1918 = vadd.f32 %v1776, %v1838
    %v1919 = vadd.f32 %v1777, %v1826
    %v1920 = vadd.f32 %v1778, %v1830
    %v1921 = vadd.f32 %v1779, %v1834
    %v1922 = vadd.f32 %v1780, %v1838
    %v1923 = vadd.f32 %v1781, %v1826
    %v1924 = vadd.f32 %v1782, %v1830
    %v1925 = vadd.f32 %v1783, %v1834
    %v1926 = vadd.f32 %v1784, %v1838
    %v1927 = vadd.f32 %v1785, %v1826
    %v1928 = vadd.f32 %v1786, %v1830
    %v1929 = vadd.f32 %v1787, %v1834
    %v1930 = vadd.f32 %v1788, %v1838
    %v1931 = vadd.f32 %v1789, %v1826
    %v1932 = vadd.f32 %v1790, %v1830
    %v1933 = vadd.f32 %v1791, %v1834
    %v1934 = vadd.f32 %v1792, %v1838
    %v1935 = vadd.f32 %v1793, %v1826
    %v1936 = vadd.f32 %v1794, %v1830
    %v1937 = vadd.f32 %v1795, %v1834
    %v1938 = vadd.f32 %v1796, %v1838
    %v1939 = vadd.f32 %v1797, %v1826
    %v1940 = vadd.f32 %v1798, %v1830
    %v1941 = vadd.f32 %v1799, %v1834
    %v1942 = vadd.f32 %v1800, %v1838
    %v1943 = vadd.f32 %v1801, %v1826
    %v1944 = vadd.f32 %v1802, %v1830
    %v1945 = vadd.f32 %v1803, %v1834
    %v1946 = vadd.f32 %v1804, %v1838
    %v1947 = vadd.f32 %v1805, %v1826
    %v1948 = vadd.f32 %v1806, %v1830
    %v1949 = vadd.f32 %v1807, %v1834
    %v1950 = vadd.f32 %v1808, %v1838
    %v1951 = vadd.f32 %v1809, %v1826
    %v1952 = vadd.f32 %v1810, %v1830
    %v1953 = vadd.f32 %v1811, %v1834
    %v1954 = vadd.f32 %v1812, %v1838
    %v1955 = vadd.f32 %v1813, %v1826
    %v1956 = vadd.f32 %v1814, %v1830
    %v1957 = vadd.f32 %v1815, %v1834
    %v1958 = vadd.f32 %v1816, %v1838
    %v1959 = vadd.f32 %v1817, %v1826
    %v1960 = vadd.f32 %v1818, %v1830
    %v1961 = vadd.f32 %v1819, %v1834
    %v1962 = vadd.f32 %v1820, %v1838
    %v1963 = vmax.f32 %v1843, 0.0
    %v1964 = vmax.f32 %v1844, 0.0
    %v1965 = vmax.f32 %v1845, 0.0
    %v1966 = vmax.f32 %v1846, 0.0
    %v1967 = vmax.f32 %v1847, 0.0
    %v1968 = vmax.f32 %v1848, 0.0
    %v1969 = vmax.f32 %v1849, 0.0
    %v1970 = vmax.f32 %v1850, 0.0
    %v1971 = vmax.f32 %v1851, 0.0
    %v1972 = vmax.f32 %v1852, 0.0
    %v1973 = vmax.f32 %v1853, 0.0
    %v1974 = vmax.f32 %v1854, 0.0
    %v1975 = vmax.f32 %v1855, 0.0
    %v1976 = vmax.f32 %v1856, 0.0
    %v1977 = vmax.f32 %v1857, 0.0
    %v1978 = vmax.f32 %v1858, 0.0
    %v1979 = vmax.f32 %v1859, 0.0
    %v1980 = vmax.f32 %v1860, 0.0
    %v1981 = vmax.f32 %v1861, 0.0
    %v1982 = vmax.f32 %v1862, 0.0
    %v1983 = vmax.f32 %v1863, 0.0
    %v1984 = vmax.f32 %v1864, 0.0
    %v1985 = vmax.f32 %v1865, 0.0
    %v1986 = vmax.f32 %v1866, 0.0
    %v1987 = vmax.f32 %v1867, 0.0
    %v1988 = vmax.f32 %v1868, 0.0
    %v1989 = vmax.f32 %v1869, 0.0
    %v1990 = vmax.f32 %v1870, 0.0
    %v1991 = vmax.f32 %v1871, 0.0
    %v1992 = vmax.f32 %v1872, 0.0
    %v1993 = vmax.f32 %v1873, 0.0
    %v1994 = vmax.f32 %v1874, 0.0
    %v1995 = vmax.f32 %v1875, 0.0
    %v1996 = vmax.f32 %v1876, 0.0
    %v1997 = vmax.f32 %v1877, 0.0
    %v1998 = vmax.f32 %v1878, 0.0
    %v1999 = vmax.f32 %v1879, 0.0
    %v2000 = vmax.f32 %v1880, 0.0
    %v2001 = vmax.f32 %v1881, 0.0
    %v2002 = vmax.f32 %v1882, 0.0
    %v2003 = vmax.f32 %v1883, 0.0
    %v2004 = vmax.f32 %v1884, 0.0
    %v2005 = vmax.f32 %v1885, 0.0
    %v2006 = vmax.f32 %v1886, 0.0
    %v2007 = vmax.f32 %v1887, 0.0
    %v2008 = vmax.f32 %v1888, 0.0
    %v2009 = vmax.f32 %v1889, 0.0
    %v2010 = vmax.f32 %v1890, 0.0
    %v2011 = vmax.f32 %v1891, 0.0
    %v2012 = vmax.f32 %v1892, 0.0
    %v2013 = vmax.f32 %v1893, 0.0
    %v2014 = vmax.f32 %v1894, 0.0
    %v2015 = vmax.f32 %v1895, 0.0
    %v2016 = vmax.f32 %v1896, 0.0
    %v2017 = vmax.f32 %v1897, 0.0
    %v2018 = vmax.f32 %v1898, 0.0
    %v2019 = vmax.f32 %v1899, 0.0
    %v2020 = vmax.f32 %v1900, 0.0
    %v2021 = vmax.f32 %v1901, 0.0
    %v2022 = vmax.f32 %v1902, 0.0
    %v2023 = vmax.f32 %v1903, 0.0
    %v2024 = vmax.f32 %v1904, 0.0
    %v2025 = vmax.f32 %v1905, 0.0
    %v2026 = vmax.f32 %v1906, 0.0
    %v2027 = vmax.f32 %v1907, 0.0
    %v2028 = vmax.f32 %v1908, 0.0
    %v2029 = vmax.f32 %v1909, 0.0
    %v2030 = vmax.f32 %v1910, 0.0
    %v2031 = vmax.f32 %v1911, 0.0
    %v2032 = vmax.f32 %v1912, 0.0
    %v2033 = vmax.f32 %v1913, 0.0
    %v2034 = vmax.f32 %v1914, 0.0
    %v2035 = vmax.f32 %v1915, 0.0
    %v2036 = vmax.f32 %v1916, 0.0
    %v2037 = vmax.f32 %v1917, 0.0
    %v2038 = vmax.f32 %v1918, 0.0
    %v2039 = vmax.f32 %v1919, 0.0
    %v2040 = vmax.f32 %v1920, 0.0
    %v2041 = vmax.f32 %v1921, 0.0
    %v2042 = vmax.f32 %v1922, 0.0
    %v2043 = vmax.f32 %v1923, 0.0
    %v2044 = vmax.f32 %v1924, 0.0
    %v2045 = vmax.f32 %v1925, 0.0
    %v2046 = vmax.f32 %v1926, 0.0
    %v2047 = vmax.f32 %v1927, 0.0
    %v2048 = vmax.f32 %v1928, 0.0
    %v2049 = vmax.f32 %v1929, 0.0
    %v2050 = vmax.f32 %v1930, 0.0
    %v2051 = vmax.f32 %v1931, 0.0
    %v2052 = vmax.f32 %v1932, 0.0
    %v2053 = vmax.f32 %v1933, 0.0
    %v2054 = vmax.f32 %v1934, 0.0
    %v2055 = vmax.f32 %v1935, 0.0
    %v2056 = vmax.f32 %v1936, 0.0
    %v2057 = vmax.f32 %v1937, 0.0
    %v2058 = vmax.f32 %v1938, 0.0
    %v2059 = vmax.f32 %v1939, 0.0
    %v2060 = vmax.f32 %v1940, 0.0
    %v2061 = vmax.f32 %v1941, 0.0
    %v2062 = vmax.f32 %v1942, 0.0
    %v2063 = vmax.f32 %v1943, 0.0
    %v2064 = vmax.f32 %v1944, 0.0
    %v2065 = vmax.f32 %v1945, 0.0
    %v2066 = vmax.f32 %v1946, 0.0
    %v2067 = vmax.f32 %v1947, 0.0
    %v2068 = vmax.f32 %v1948, 0.0
    %v2069 = vmax.f32 %v1949, 0.0
    %v2070 = vmax.f32 %v1950, 0.0
    %v2071 = vmax.f32 %v1951, 0.0
    %v2072 = vmax.f32 %v1952, 0.0
    %v2073 = vmax.f32 %v1953, 0.0
    %v2074 = vmax.f32 %v1954, 0.0
    %v2075 = vmax.f32 %v1955, 0.0
    %v2076 = vmax.f32 %v1956, 0.0
    %v2077 = vmax.f32 %v1957, 0.0
    %v2078 = vmax.f32 %v1958, 0.0
    %v2079 = vmax.f32 %v1959, 0.0
    %v2080 = vmax.f32 %v1960, 0.0
    %v2081 = vmax.f32 %v1961, 0.0
    %v2082 = vmax.f32 %v1962, 0.0
    %v2083 = vpack.c.bf16 %v1967, %v1963
    %v2084 = vpack.c.bf16 %v1968, %v1964
    %v2085 = vpack.c.bf16 %v1969, %v1965
    %v2086 = vpack.c.bf16 %v1970, %v1966
    %v2087 = vpack.c.bf16 %v1975, %v1971
    %v2088 = vpack.c.bf16 %v1976, %v1972
    %v2089 = vpack.c.bf16 %v1977, %v1973
    %v2090 = vpack.c.bf16 %v1978, %v1974
    %v2091 = vpack.c.bf16 %v1983, %v1979
    %v2092 = vpack.c.bf16 %v1984, %v1980
    %v2093 = vpack.c.bf16 %v1985, %v1981
    %v2094 = vpack.c.bf16 %v1986, %v1982
    %v2095 = vpack.c.bf16 %v1991, %v1987
    %v2096 = vpack.c.bf16 %v1992, %v1988
    %v2097 = vpack.c.bf16 %v1993, %v1989
    %v2098 = vpack.c.bf16 %v1994, %v1990
    %v2099 = vpack.c.bf16 %v1999, %v1995
    %v2100 = vpack.c.bf16 %v2000, %v1996
    %v2101 = vpack.c.bf16 %v2001, %v1997
    %v2102 = vpack.c.bf16 %v2002, %v1998
    %v2103 = vpack.c.bf16 %v2007, %v2003
    %v2104 = vpack.c.bf16 %v2008, %v2004
    %v2105 = vpack.c.bf16 %v2009, %v2005
    %v2106 = vpack.c.bf16 %v2010, %v2006
    %v2107 = vpack.c.bf16 %v2015, %v2011
    %v2108 = vpack.c.bf16 %v2016, %v2012
    %v2109 = vpack.c.bf16 %v2017, %v2013
    %v2110 = vpack.c.bf16 %v2018, %v2014
    %v2111 = vpack.c.bf16 %v2023, %v2019
    %v2112 = vpack.c.bf16 %v2024, %v2020
    %v2113 = vpack.c.bf16 %v2025, %v2021
    %v2114 = vpack.c.bf16 %v2026, %v2022
    %v2115 = vpack.c.bf16 %v2031, %v2027
    %v2116 = vpack.c.bf16 %v2032, %v2028
    %v2117 = vpack.c.bf16 %v2033, %v2029
    %v2118 = vpack.c.bf16 %v2034, %v2030
    %v2119 = vpack.c.bf16 %v2039, %v2035
    %v2120 = vpack.c.bf16 %v2040, %v2036
    %v2121 = vpack.c.bf16 %v2041, %v2037
    %v2122 = vpack.c.bf16 %v2042, %v2038
    %v2123 = vpack.c.bf16 %v2047, %v2043
    %v2124 = vpack.c.bf16 %v2048, %v2044
    %v2125 = vpack.c.bf16 %v2049, %v2045
    %v2126 = vpack.c.bf16 %v2050, %v2046
    %v2127 = vpack.c.bf16 %v2055, %v2051
    %v2128 = vpack.c.bf16 %v2056, %v2052
    %v2129 = vpack.c.bf16 %v2057, %v2053
    %v2130 = vpack.c.bf16 %v2058, %v2054
    %v2131 = vpack.c.bf16 %v2063, %v2059
    %v2132 = vpack.c.bf16 %v2064, %v2060
    %v2133 = vpack.c.bf16 %v2065, %v2061
    %v2134 = vpack.c.bf16 %v2066, %v2062
    %v2135 = vpack.c.bf16 %v2071, %v2067
    %v2136 = vpack.c.bf16 %v2072, %v2068
    %v2137 = vpack.c.bf16 %v2073, %v2069
    %v2138 = vpack.c.bf16 %v2074, %v2070
    %v2139 = vpack.c.bf16 %v2079, %v2075
    %v2140 = vpack.c.bf16 %v2080, %v2076
    %v2141 = vpack.c.bf16 %v2081, %v2077
    %v2142 = vpack.c.bf16 %v2082, %v2078
    %v2203 = vunpack.c.l.b16 %v2083
    %v2204 = vunpack.c.l.b16 %v2084
    %v2205 = vunpack.c.l.b16 %v2085
    %v2206 = vunpack.c.l.b16 %v2086
    %v2207 = vunpack.c.h.b16 %v2083
    %v2208 = vunpack.c.h.b16 %v2084
    %v2209 = vunpack.c.h.b16 %v2085
    %v2210 = vunpack.c.h.b16 %v2086
    %v2211 = vunpack.c.l.b16 %v2087
    %v2212 = vunpack.c.l.b16 %v2088
    %v2213 = vunpack.c.l.b16 %v2089
    %v2214 = vunpack.c.l.b16 %v2090
    %v2215 = vunpack.c.h.b16 %v2087
    %v2216 = vunpack.c.h.b16 %v2088
    %v2217 = vunpack.c.h.b16 %v2089
    %v2218 = vunpack.c.h.b16 %v2090
    %v2219 = vunpack.c.l.b16 %v2091
    %v2220 = vunpack.c.l.b16 %v2092
    %v2221 = vunpack.c.l.b16 %v2093
    %v2222 = vunpack.c.l.b16 %v2094
    %v2223 = vunpack.c.h.b16 %v2091
    %v2224 = vunpack.c.h.b16 %v2092
    %v2225 = vunpack.c.h.b16 %v2093
    %v2226 = vunpack.c.h.b16 %v2094
    %v2227 = vunpack.c.l.b16 %v2095
    %v2228 = vunpack.c.l.b16 %v2096
    %v2229 = vunpack.c.l.b16 %v2097
    %v2230 = vunpack.c.l.b16 %v2098
    %v2231 = vunpack.c.h.b16 %v2095
    %v2232 = vunpack.c.h.b16 %v2096
    %v2233 = vunpack.c.h.b16 %v2097
    %v2234 = vunpack.c.h.b16 %v2098
    %v2235 = vunpack.c.l.b16 %v2099
    %v2236 = vunpack.c.l.b16 %v2100
    %v2237 = vunpack.c.l.b16 %v2101
    %v2238 = vunpack.c.l.b16 %v2102
    %v2239 = vunpack.c.h.b16 %v2099
    %v2240 = vunpack.c.h.b16 %v2100
    %v2241 = vunpack.c.h.b16 %v2101
    %v2242 = vunpack.c.h.b16 %v2102
    %v2243 = vunpack.c.l.b16 %v2103
    %v2244 = vunpack.c.l.b16 %v2104
    %v2245 = vunpack.c.l.b16 %v2105
    %v2246 = vunpack.c.l.b16 %v2106
    %v2247 = vunpack.c.h.b16 %v2103
    %v2248 = vunpack.c.h.b16 %v2104
    %v2249 = vunpack.c.h.b16 %v2105
    %v2250 = vunpack.c.h.b16 %v2106
    %v2251 = vunpack.c.l.b16 %v2107
    %v2252 = vunpack.c.l.b16 %v2108
    %v2253 = vunpack.c.l.b16 %v2109
    %v2254 = vunpack.c.l.b16 %v2110
    %v2255 = vunpack.c.h.b16 %v2107
    %v2256 = vunpack.c.h.b16 %v2108
    %v2257 = vunpack.c.h.b16 %v2109
    %v2258 = vunpack.c.h.b16 %v2110
    %v2259 = vunpack.c.l.b16 %v2111
    %v2260 = vunpack.c.l.b16 %v2112
    %v2261 = vunpack.c.l.b16 %v2113
    %v2262 = vunpack.c.l.b16 %v2114
    %v2263 = vunpack.c.h.b16 %v2111
    %v2264 = vunpack.c.h.b16 %v2112
    %v2265 = vunpack.c.h.b16 %v2113
    %v2266 = vunpack.c.h.b16 %v2114
    %v2267 = vunpack.c.l.b16 %v2115
    %v2268 = vunpack.c.l.b16 %v2116
    %v2269 = vunpack.c.l.b16 %v2117
    %v2270 = vunpack.c.l.b16 %v2118
    %v2271 = vunpack.c.h.b16 %v2115
    %v2272 = vunpack.c.h.b16 %v2116
    %v2273 = vunpack.c.h.b16 %v2117
    %v2274 = vunpack.c.h.b16 %v2118
    %v2275 = vunpack.c.l.b16 %v2119
    %v2276 = vunpack.c.l.b16 %v2120
    %v2277 = vunpack.c.l.b16 %v2121
    %v2278 = vunpack.c.l.b16 %v2122
    %v2279 = vunpack.c.h.b16 %v2119
    %v2280 = vunpack.c.h.b16 %v2120
    %v2281 = vunpack.c.h.b16 %v2121
    %v2282 = vunpack.c.h.b16 %v2122
    %v2283 = vunpack.c.l.b16 %v2123
    %v2284 = vunpack.c.l.b16 %v2124
    %v2285 = vunpack.c.l.b16 %v2125
    %v2286 = vunpack.c.l.b16 %v2126
    %v2287 = vunpack.c.h.b16 %v2123
    %v2288 = vunpack.c.h.b16 %v2124
    %v2289 = vunpack.c.h.b16 %v2125
    %v2290 = vunpack.c.h.b16 %v2126
    %v2291 = vunpack.c.l.b16 %v2127
    %v2292 = vunpack.c.l.b16 %v2128
    %v2293 = vunpack.c.l.b16 %v2129
    %v2294 = vunpack.c.l.b16 %v2130
    %v2295 = vunpack.c.h.b16 %v2127
    %v2296 = vunpack.c.h.b16 %v2128
    %v2297 = vunpack.c.h.b16 %v2129
    %v2298 = vunpack.c.h.b16 %v2130
    %v2299 = vunpack.c.l.b16 %v2131
    %v2300 = vunpack.c.l.b16 %v2132
    %v2301 = vunpack.c.l.b16 %v2133
    %v2302 = vunpack.c.l.b16 %v2134
    %v2303 = vunpack.c.h.b16 %v2131
    %v2304 = vunpack.c.h.b16 %v2132
    %v2305 = vunpack.c.h.b16 %v2133
    %v2306 = vunpack.c.h.b16 %v2134
    %v2307 = vunpack.c.l.b16 %v2135
    %v2308 = vunpack.c.l.b16 %v2136
    %v2309 = vunpack.c.l.b16 %v2137
    %v2310 = vunpack.c.l.b16 %v2138
    %v2311 = vunpack.c.h.b16 %v2135
    %v2312 = vunpack.c.h.b16 %v2136
    %v2313 = vunpack.c.h.b16 %v2137
    %v2314 = vunpack.c.h.b16 %v2138
    %v2315 = vunpack.c.l.b16 %v2139
    %v2316 = vunpack.c.l.b16 %v2140
    %v2317 = vunpack.c.l.b16 %v2141
    %v2318 = vunpack.c.l.b16 %v2142
    %v2319 = vunpack.c.h.b16 %v2139
    %v2320 = vunpack.c.h.b16 %v2140
    %v2321 = vunpack.c.h.b16 %v2141
    %v2322 = vunpack.c.h.b16 %v2142
    %v2323 = vpack.c.b16 %v2204, %v2203
    %v2324 = vpack.c.b16 %v2206, %v2205
    %v2325 = vpack.c.b16 %v2208, %v2207
    %v2326 = vpack.c.b16 %v2210, %v2209
    %v2327 = vpack.c.b16 %v2212, %v2211
    %v2328 = vpack.c.b16 %v2214, %v2213
    %v2329 = vpack.c.b16 %v2216, %v2215
    %v2330 = vpack.c.b16 %v2218, %v2217
    %v2331 = vpack.c.b16 %v2220, %v2219
    %v2332 = vpack.c.b16 %v2222, %v2221
    %v2333 = vpack.c.b16 %v2224, %v2223
    %v2334 = vpack.c.b16 %v2226, %v2225
    %v2335 = vpack.c.b16 %v2228, %v2227
    %v2336 = vpack.c.b16 %v2230, %v2229
    %v2337 = vpack.c.b16 %v2232, %v2231
    %v2338 = vpack.c.b16 %v2234, %v2233
    %v2339 = vpack.c.b16 %v2236, %v2235
    %v2340 = vpack.c.b16 %v2238, %v2237
    %v2341 = vpack.c.b16 %v2240, %v2239
    %v2342 = vpack.c.b16 %v2242, %v2241
    %v2343 = vpack.c.b16 %v2244, %v2243
    %v2344 = vpack.c.b16 %v2246, %v2245
    %v2345 = vpack.c.b16 %v2248, %v2247
    %v2346 = vpack.c.b16 %v2250, %v2249
    %v2347 = vpack.c.b16 %v2252, %v2251
    %v2348 = vpack.c.b16 %v2254, %v2253
    %v2349 = vpack.c.b16 %v2256, %v2255
    %v2350 = vpack.c.b16 %v2258, %v2257
    %v2351 = vpack.c.b16 %v2260, %v2259
    %v2352 = vpack.c.b16 %v2262, %v2261
    %v2353 = vpack.c.b16 %v2264, %v2263
    %v2354 = vpack.c.b16 %v2266, %v2265
    %v2355 = vpack.c.b16 %v2268, %v2267
    %v2356 = vpack.c.b16 %v2270, %v2269
    %v2357 = vpack.c.b16 %v2272, %v2271
    %v2358 = vpack.c.b16 %v2274, %v2273
    %v2359 = vpack.c.b16 %v2276, %v2275
    %v2360 = vpack.c.b16 %v2278, %v2277
    %v2361 = vpack.c.b16 %v2280, %v2279
    %v2362 = vpack.c.b16 %v2282, %v2281
    %v2363 = vpack.c.b16 %v2284, %v2283
    %v2364 = vpack.c.b16 %v2286, %v2285
    %v2365 = vpack.c.b16 %v2288, %v2287
    %v2366 = vpack.c.b16 %v2290, %v2289
    %v2367 = vpack.c.b16 %v2292, %v2291
    %v2368 = vpack.c.b16 %v2294, %v2293
    %v2369 = vpack.c.b16 %v2296, %v2295
    %v2370 = vpack.c.b16 %v2298, %v2297
    %v2371 = vpack.c.b16 %v2300, %v2299
    %v2372 = vpack.c.b16 %v2302, %v2301
    %v2373 = vpack.c.b16 %v2304, %v2303
    %v2374 = vpack.c.b16 %v2306, %v2305
    %v2375 = vpack.c.b16 %v2308, %v2307
    %v2376 = vpack.c.b16 %v2310, %v2309
    %v2377 = vpack.c.b16 %v2312, %v2311
    %v2378 = vpack.c.b16 %v2314, %v2313
    %v2379 = vpack.c.b16 %v2316, %v2315
    %v2380 = vpack.c.b16 %v2318, %v2317
    %v2381 = vpack.c.b16 %v2320, %v2319
    %v2382 = vpack.c.b16 %v2322, %v2321
    %2443 = vst [vmem:[%s3] sm:$0xff] %v2323
    %vm2444 = vcmask 1043456
    %vm2445 = vcmask 523268
    %vm2446 = vmor %vm2445, %vm2444
    %2447 = vst.msk [vmem:[%s3 + $0x8] sm:$0xff] %vm2446, %v2324
    %2448 = vst [vmem:[%s3 + $0x10] sm:$0xff] %v2325
    %2449 = vst.msk [vmem:[%s3 + $0x18] sm:$0xff] %vm2446, %v2326
    %2450 = vst [vmem:[%s3 + $0x20] sm:$0xff] %v2327
    %2451 = vst.msk [vmem:[%s3 + $0x28] sm:$0xff] %vm2446, %v2328
    %2452 = vst [vmem:[%s3 + $0x30] sm:$0xff] %v2329
    %2453 = vst.msk [vmem:[%s3 + $0x38] sm:$0xff] %vm2446, %v2330
    %2454 = vst [vmem:[%s3 + $0x40] sm:$0xff] %v2331
    %2455 = vst.msk [vmem:[%s3 + $0x48] sm:$0xff] %vm2446, %v2332
    %2456 = vst [vmem:[%s3 + $0x50] sm:$0xff] %v2333
    %2457 = vst.msk [vmem:[%s3 + $0x58] sm:$0xff] %vm2446, %v2334
    %2458 = vst [vmem:[%s3 + $0x60] sm:$0xff] %v2335
    %2459 = vst.msk [vmem:[%s3 + $0x68] sm:$0xff] %vm2446, %v2336
    %2460 = vst [vmem:[%s3 + $0x70] sm:$0xff] %v2337
    %2461 = vst.msk [vmem:[%s3 + $0x78] sm:$0xff] %vm2446, %v2338
    %2462 = vst [vmem:[%s3 + $0x80] sm:$0xff] %v2339
    %2463 = vst.msk [vmem:[%s3 + $0x88] sm:$0xff] %vm2446, %v2340
    %2464 = vst [vmem:[%s3 + $0x90] sm:$0xff] %v2341
    %2465 = vst.msk [vmem:[%s3 + $0x98] sm:$0xff] %vm2446, %v2342
    %2466 = vst [vmem:[%s3 + $0xa0] sm:$0xff] %v2343
    %2467 = vst.msk [vmem:[%s3 + $0xa8] sm:$0xff] %vm2446, %v2344
    %2468 = vst [vmem:[%s3 + $0xb0] sm:$0xff] %v2345
    %2469 = vst.msk [vmem:[%s3 + $0xb8] sm:$0xff] %vm2446, %v2346
    %2470 = vst [vmem:[%s3 + $0xc0] sm:$0xff] %v2347
    %2471 = vst.msk [vmem:[%s3 + $0xc8] sm:$0xff] %vm2446, %v2348
    %2472 = vst [vmem:[%s3 + $0xd0] sm:$0xff] %v2349
    %2473 = vst.msk [vmem:[%s3 + $0xd8] sm:$0xff] %vm2446, %v2350
    %2474 = vst [vmem:[%s3 + $0xe0] sm:$0xff] %v2351
    %2475 = vst.msk [vmem:[%s3 + $0xe8] sm:$0xff] %vm2446, %v2352
    %2476 = vst [vmem:[%s3 + $0xf0] sm:$0xff] %v2353
    %2477 = vst.msk [vmem:[%s3 + $0xf8] sm:$0xff] %vm2446, %v2354
    %2478 = vst [vmem:[%s3 + $0x100] sm:$0xff] %v2355
    %2479 = vst.msk [vmem:[%s3 + $0x108] sm:$0xff] %vm2446, %v2356
    %2480 = vst [vmem:[%s3 + $0x110] sm:$0xff] %v2357
    %2481 = vst.msk [vmem:[%s3 + $0x118] sm:$0xff] %vm2446, %v2358
    %2482 = vst [vmem:[%s3 + $0x120] sm:$0xff] %v2359
    %2483 = vst.msk [vmem:[%s3 + $0x128] sm:$0xff] %vm2446, %v2360
    %2484 = vst [vmem:[%s3 + $0x130] sm:$0xff] %v2361
    %2485 = vst.msk [vmem:[%s3 + $0x138] sm:$0xff] %vm2446, %v2362
    %2486 = vst [vmem:[%s3 + $0x140] sm:$0xff] %v2363
    %2487 = vst.msk [vmem:[%s3 + $0x148] sm:$0xff] %vm2446, %v2364
    %2488 = vst [vmem:[%s3 + $0x150] sm:$0xff] %v2365
    %2489 = vst.msk [vmem:[%s3 + $0x158] sm:$0xff] %vm2446, %v2366
    %2490 = vst [vmem:[%s3 + $0x160] sm:$0xff] %v2367
    %2491 = vst.msk [vmem:[%s3 + $0x168] sm:$0xff] %vm2446, %v2368
    %2492 = vst [vmem:[%s3 + $0x170] sm:$0xff] %v2369
    %2493 = vst.msk [vmem:[%s3 + $0x178] sm:$0xff] %vm2446, %v2370
    %2494 = vst [vmem:[%s3 + $0x180] sm:$0xff] %v2371
    %2495 = vst.msk [vmem:[%s3 + $0x188] sm:$0xff] %vm2446, %v2372
    %2496 = vst [vmem:[%s3 + $0x190] sm:$0xff] %v2373
    %2497 = vst.msk [vmem:[%s3 + $0x198] sm:$0xff] %vm2446, %v2374
    %2498 = vst [vmem:[%s3 + $0x1a0] sm:$0xff] %v2375
    %2499 = vst.msk [vmem:[%s3 + $0x1a8] sm:$0xff] %vm2446, %v2376
    %2500 = vst [vmem:[%s3 + $0x1b0] sm:$0xff] %v2377
    %2501 = vst.msk [vmem:[%s3 + $0x1b8] sm:$0xff] %vm2446, %v2378
    %2502 = vst [vmem:[%s3 + $0x1c0] sm:$0xff] %v2379
    %2503 = vst.msk [vmem:[%s3 + $0x1c8] sm:$0xff] %vm2446, %v2380
    %2504 = vst [vmem:[%s3 + $0x1d0] sm:$0xff] %v2381
    %2505 = vst.msk [vmem:[%s3 + $0x1d8] sm:$0xff] %vm2446, %v2382
    // Predicated region
    $region22: #{net_forward.4} parent=1 // pred_check
      _
    $region23: #{net_forward.4} parent=1 // pred_check_branch
      %2507 = sbr.rel (0) target = $region25
    $region24: #{net_forward.4} parent=1 // pred_region
      _
    $region25: #{net_forward.4} parent=1 // pred_fallthru
      _
    // Predicated region
    $region26: #{net_forward.4} parent=1 // pred_check
      _
    $region27: #{net_forward.4} parent=1 // pred_check_branch
      %2509 = sbr.rel (0) target = $region29
    $region28: #{net_forward.4} parent=1 // pred_region
      _
    $region29: #{net_forward.4} parent=1 // pred_fallthru
      _
    %2510 = vsyncpa [#allocation3], 1
    %2511 = vsyncpa [#allocation5], 1

// kernel: net_forward.5
$region0: #{net_forward.5}
  #allocation0 [shape = 'u32[]', space=smem, size = 0x4, offset = 0x4, fixed_abs, tag = 'smem constant byte address 0x4 - core index']
  #allocation1 [shape = 'u32[144,128]{1,0:T(1,128)}', space=vmem, size = 0x12000, scoped, tag = 'internal scratch']
  %s0 = inlined_call_operand.vmem [shape: bf16[1,130,256], index: 0, kind: input, shape index: {}]
  %s1 = inlined_call_operand.vmem [shape: bf16[3,256,448], index: 1, kind: input, shape index: {}]
  %s2 = inlined_call_operand.vmem [shape: f32[1,448], index: 2, kind: input, shape index: {}]
  %s3 = inlined_call_operand.vmem [shape: bf16[1,128,448], index: 3, kind: output, shape index: {}]
  %s4 = sld [smem:[#allocation0]]
  $region22: #{net_forward.5} parent=0
    _
  %s6 = ssub.s32 1, %s4
  %s7 = scalar_select 0, %s6, %s4
  // Predicated region
  $region2: #{net_forward.5} parent=0 // pred_check
    _
  $region3: #{net_forward.5} parent=0 // pred_check_branch
    %9 = sbr.rel (0) target = $region5
  $region4: #{net_forward.5} parent=0 // pred_region
    _
  $region5: #{net_forward.5} parent=0 // pred_fallthru
    _
  // Predicated region
  $region6: #{net_forward.5} parent=0 // pred_check
    _
  $region7: #{net_forward.5} parent=0 // pred_check_branch
    %11 = sbr.rel (0) target = $region9
  $region8: #{net_forward.5} parent=0 // pred_region
    _
  $region9: #{net_forward.5} parent=0 // pred_fallthru
    _
  // Predicated region
  $region10: #{net_forward.5} parent=0 // pred_check
    _
  $region11: #{net_forward.5} parent=0 // pred_check_branch
    %13 = sbr.rel (0) target = $region13
  $region12: #{net_forward.5} parent=0 // pred_region
    _
  $region13: #{net_forward.5} parent=0 // pred_fallthru
    _
  %v14 = vld [vmem:[%s0] sm:$0xff]
  %v15 = vld [vmem:[%s0 + $0x8] sm:$0xff]
  %v16 = vld [vmem:[%s0 + $0x10] sm:$0xff]
  %v17 = vld [vmem:[%s0 + $0x18] sm:$0xff]
  %v18 = vld [vmem:[%s0 + $0x20] sm:$0xff]
  %v19 = vld [vmem:[%s0 + $0x28] sm:$0xff]
  %v20 = vld [vmem:[%s0 + $0x30] sm:$0xff]
  %v21 = vld [vmem:[%s0 + $0x38] sm:$0xff]
  %v22 = vld [vmem:[%s0 + $0x40] sm:$0xff]
  %v23 = vld [vmem:[%s0 + $0x48] sm:$0xff]
  %v24 = vld [vmem:[%s0 + $0x50] sm:$0xff]
  %v25 = vld [vmem:[%s0 + $0x58] sm:$0xff]
  %v26 = vld [vmem:[%s0 + $0x60] sm:$0xff]
  %v27 = vld [vmem:[%s0 + $0x68] sm:$0xff]
  %v28 = vld [vmem:[%s0 + $0x70] sm:$0xff]
  %v29 = vld [vmem:[%s0 + $0x78] sm:$0xff]
  %v30 = vld [vmem:[%s1] sm:$0xff]
  %v31 = vld [vmem:[%s1 + $0x8] sm:$0xff]
  %v32 = vld [vmem:[%s1 + $0x10] sm:$0xff]
  %v33 = vld [vmem:[%s1 + $0x18] sm:$0xff]
  %v34 = vld [vmem:[%s1 + $0x20] sm:$0xff]
  %v35 = vld [vmem:[%s1 + $0x28] sm:$0xff]
  %v36 = vld [vmem:[%s1 + $0x30] sm:$0xff]
  %v37 = vld [vmem:[%s1 + $0x38] sm:$0xff]
  %v38 = vld [vmem:[%s1 + $0x40] sm:$0xff]
  %v39 = vld [vmem:[%s1 + $0x48] sm:$0xff]
  %v40 = vld [vmem:[%s1 + $0x50] sm:$0xff]
  %v41 = vld [vmem:[%s1 + $0x58] sm:$0xff]
  %v42 = vld [vmem:[%s1 + $0x60] sm:$0xff]
  %v43 = vld [vmem:[%s1 + $0x68] sm:$0xff]
  %v44 = vld [vmem:[%s1 + $0x70] sm:$0xff]
  %v45 = vld [vmem:[%s1 + $0x78] sm:$0xff]
  %v46 = vld [vmem:[%s1 + $0x80] sm:$0xff]
  %v47 = vld [vmem:[%s1 + $0x88] sm:$0xff]
  %v48 = vld [vmem:[%s1 + $0x90] sm:$0xff]
  %v49 = vld [vmem:[%s1 + $0x98] sm:$0xff]
  %v50 = vld [vmem:[%s1 + $0xa0] sm:$0xff]
  %v51 = vld [vmem:[%s1 + $0xa8] sm:$0xff]
  %v52 = vld [vmem:[%s1 + $0xb0] sm:$0xff]
  %v53 = vld [vmem:[%s1 + $0xb8] sm:$0xff]
  %v54 = vld [vmem:[%s1 + $0xc0] sm:$0xff]
  %v55 = vld [vmem:[%s1 + $0xc8] sm:$0xff]
  %v56 = vld [vmem:[%s1 + $0xd0] sm:$0xff]
  %v57 = vld [vmem:[%s1 + $0xd8] sm:$0xff]
  %v58 = vld [vmem:[%s1 + $0xe0] sm:$0xff]
  %v59 = vld [vmem:[%s1 + $0xe8] sm:$0xff]
  %v60 = vld [vmem:[%s1 + $0xf0] sm:$0xff]
  %v61 = vld [vmem:[%s1 + $0xf8] sm:$0xff]
  %v62 = vld [vmem:[%s1 + $0x100] sm:$0xff]
  %v63 = vld [vmem:[%s1 + $0x108] sm:$0xff]
  %v64 = vld [vmem:[%s1 + $0x110] sm:$0xff]
  %v65 = vld [vmem:[%s1 + $0x118] sm:$0xff]
  %v66 = vld [vmem:[%s1 + $0x120] sm:$0xff]
  %v67 = vld [vmem:[%s1 + $0x128] sm:$0xff]
  %v68 = vld [vmem:[%s1 + $0x130] sm:$0xff]
  %v69 = vld [vmem:[%s1 + $0x138] sm:$0xff]
  %v70 = vld [vmem:[%s1 + $0x140] sm:$0xff]
  %v71 = vld [vmem:[%s1 + $0x148] sm:$0xff]
  %v72 = vld [vmem:[%s1 + $0x150] sm:$0xff]
  %v73 = vld [vmem:[%s1 + $0x158] sm:$0xff]
  %v74 = vld [vmem:[%s1 + $0x160] sm:$0xff]
  %v75 = vld [vmem:[%s1 + $0x168] sm:$0xff]
  %v76 = vld [vmem:[%s1 + $0x170] sm:$0xff]
  %v77 = vld [vmem:[%s1 + $0x178] sm:$0xff]
  %v78 = vld [vmem:[%s1 + $0x180] sm:$0xff]
  %v79 = vld [vmem:[%s1 + $0x188] sm:$0xff]
  %v80 = vld [vmem:[%s1 + $0x190] sm:$0xff]
  %v81 = vld [vmem:[%s1 + $0x198] sm:$0xff]
  %v82 = vld [vmem:[%s1 + $0x1a0] sm:$0xff]
  %v83 = vld [vmem:[%s1 + $0x1a8] sm:$0xff]
  %v84 = vld [vmem:[%s1 + $0x1b0] sm:$0xff]
  %v85 = vld [vmem:[%s1 + $0x1b8] sm:$0xff]
  %v86 = vld [vmem:[%s1 + $0x1c0] sm:$0xff]
  %v87 = vld [vmem:[%s1 + $0x1c8] sm:$0xff]
  %v88 = vld [vmem:[%s1 + $0x1d0] sm:$0xff]
  %v89 = vld [vmem:[%s1 + $0x1d8] sm:$0xff]
  %v90 = vld [vmem:[%s1 + $0x1e0] sm:$0xff]
  %v91 = vld [vmem:[%s1 + $0x1e8] sm:$0xff]
  %v92 = vld [vmem:[%s1 + $0x1f0] sm:$0xff]
  %v93 = vld [vmem:[%s1 + $0x1f8] sm:$0xff]
  %v94 = vld [vmem:[%s0 + $0x80] sm:$0x11]
  %s95 = scalar_lea.vmem %s1, 512
  %v96 = vld [vmem:[%s95] sm:$0xff]
  %v97 = vld [vmem:[%s95 + $0x8] sm:$0xff]
  %v98 = vld [vmem:[%s95 + $0x10] sm:$0xff]
  %v99 = vld [vmem:[%s95 + $0x18] sm:$0xff]
  %v100 = vld [vmem:[%s95 + $0x20] sm:$0xff]
  %v101 = vld [vmem:[%s95 + $0x28] sm:$0xff]
  %v102 = vld [vmem:[%s95 + $0x30] sm:$0xff]
  %v103 = vld [vmem:[%s95 + $0x38] sm:$0xff]
  %v104 = vld [vmem:[%s95 + $0x40] sm:$0xff]
  %v105 = vld [vmem:[%s95 + $0x48] sm:$0xff]
  %v106 = vld [vmem:[%s95 + $0x50] sm:$0xff]
  %v107 = vld [vmem:[%s95 + $0x58] sm:$0xff]
  %v108 = vld [vmem:[%s95 + $0x60] sm:$0xff]
  %v109 = vld [vmem:[%s95 + $0x68] sm:$0xff]
  %v110 = vld [vmem:[%s95 + $0x70] sm:$0xff]
  %v111 = vld [vmem:[%s95 + $0x78] sm:$0xff]
  %v112 = vld [vmem:[%s95 + $0x80] sm:$0xff]
  %v113 = vld [vmem:[%s95 + $0x88] sm:$0xff]
  %v114 = vld [vmem:[%s95 + $0x90] sm:$0xff]
  %v115 = vld [vmem:[%s95 + $0x98] sm:$0xff]
  %v116 = vld [vmem:[%s95 + $0xa0] sm:$0xff]
  %v117 = vld [vmem:[%s95 + $0xa8] sm:$0xff]
  %v118 = vld [vmem:[%s95 + $0xb0] sm:$0xff]
  %v119 = vld [vmem:[%s95 + $0xb8] sm:$0xff]
  %v120 = vld [vmem:[%s95 + $0xc0] sm:$0xff]
  %v121 = vld [vmem:[%s95 + $0xc8] sm:$0xff]
  %v122 = vld [vmem:[%s95 + $0xd0] sm:$0xff]
  %v123 = vld [vmem:[%s95 + $0xd8] sm:$0xff]
  %v124 = vld [vmem:[%s95 + $0xe0] sm:$0xff]
  %v125 = vld [vmem:[%s95 + $0xe8] sm:$0xff]
  %v126 = vld [vmem:[%s95 + $0xf0] sm:$0xff]
  %v127 = vld [vmem:[%s95 + $0xf8] sm:$0xff]
  %v128 = vld [vmem:[%s95 + $0x100] sm:$0xff]
  %v129 = vld [vmem:[%s95 + $0x108] sm:$0xff]
  %v130 = vld [vmem:[%s95 + $0x110] sm:$0xff]
  %v131 = vld [vmem:[%s95 + $0x118] sm:$0xff]
  %v132 = vld [vmem:[%s95 + $0x120] sm:$0xff]
  %v133 = vld [vmem:[%s95 + $0x128] sm:$0xff]
  %v134 = vld [vmem:[%s95 + $0x130] sm:$0xff]
  %v135 = vld [vmem:[%s95 + $0x138] sm:$0xff]
  %v136 = vld [vmem:[%s95 + $0x140] sm:$0xff]
  %v137 = vld [vmem:[%s95 + $0x148] sm:$0xff]
  %v138 = vld [vmem:[%s95 + $0x150] sm:$0xff]
  %v139 = vld [vmem:[%s95 + $0x158] sm:$0xff]
  %v140 = vld [vmem:[%s95 + $0x160] sm:$0xff]
  %v141 = vld [vmem:[%s95 + $0x168] sm:$0xff]
  %v142 = vld [vmem:[%s95 + $0x170] sm:$0xff]
  %v143 = vld [vmem:[%s95 + $0x178] sm:$0xff]
  %v144 = vld [vmem:[%s95 + $0x180] sm:$0xff]
  %v145 = vld [vmem:[%s95 + $0x188] sm:$0xff]
  %v146 = vld [vmem:[%s95 + $0x190] sm:$0xff]
  %v147 = vld [vmem:[%s95 + $0x198] sm:$0xff]
  %v148 = vld [vmem:[%s95 + $0x1a0] sm:$0xff]
  %v149 = vld [vmem:[%s95 + $0x1a8] sm:$0xff]
  %v150 = vld [vmem:[%s95 + $0x1b0] sm:$0xff]
  %v151 = vld [vmem:[%s95 + $0x1b8] sm:$0xff]
  %v152 = vld [vmem:[%s95 + $0x1c0] sm:$0xff]
  %v153 = vld [vmem:[%s95 + $0x1c8] sm:$0xff]
  %v154 = vld [vmem:[%s95 + $0x1d0] sm:$0xff]
  %v155 = vld [vmem:[%s95 + $0x1d8] sm:$0xff]
  %v156 = vld [vmem:[%s95 + $0x1e0] sm:$0xff]
  %v157 = vld [vmem:[%s95 + $0x1e8] sm:$0xff]
  %v158 = vld [vmem:[%s95 + $0x1f0] sm:$0xff]
  %v159 = vld [vmem:[%s95 + $0x1f8] sm:$0xff]
  %v177 = vunpack.c.l.b16 %v14
  %v178 = vunpack.c.h.b16 %v14
  %v179 = vunpack.c.l.b16 %v15
  %v180 = vunpack.c.h.b16 %v15
  %v181 = vunpack.c.l.b16 %v16
  %v182 = vunpack.c.h.b16 %v16
  %v183 = vunpack.c.l.b16 %v17
  %v184 = vunpack.c.h.b16 %v17
  %v185 = vunpack.c.l.b16 %v18
  %v186 = vunpack.c.h.b16 %v18
  %v187 = vunpack.c.l.b16 %v19
  %v188 = vunpack.c.h.b16 %v19
  %v189 = vunpack.c.l.b16 %v20
  %v190 = vunpack.c.h.b16 %v20
  %v191 = vunpack.c.l.b16 %v21
  %v192 = vunpack.c.h.b16 %v21
  %v193 = vunpack.c.l.b16 %v22
  %v194 = vunpack.c.h.b16 %v22
  %v195 = vunpack.c.l.b16 %v23
  %v196 = vunpack.c.h.b16 %v23
  %v197 = vunpack.c.l.b16 %v24
  %v198 = vunpack.c.h.b16 %v24
  %v199 = vunpack.c.l.b16 %v25
  %v200 = vunpack.c.h.b16 %v25
  %v201 = vunpack.c.l.b16 %v26
  %v202 = vunpack.c.h.b16 %v26
  %v203 = vunpack.c.l.b16 %v27
  %v204 = vunpack.c.h.b16 %v27
  %v205 = vunpack.c.l.b16 %v28
  %v206 = vunpack.c.h.b16 %v28
  %v207 = vunpack.c.l.b16 %v29
  %v208 = vunpack.c.h.b16 %v29
  %v209 = vunpack.c.l.b16 %v94
  %v210 = vunpack.c.h.b16 %v94
  %v211 = vpack.c.b16 %v179, %v177
  %v212 = vpack.c.b16 %v180, %v178
  %v213 = vpack.c.b16 %v183, %v181
  %v214 = vpack.c.b16 %v184, %v182
  %v215 = vpack.c.b16 %v187, %v185
  %v216 = vpack.c.b16 %v188, %v186
  %v217 = vpack.c.b16 %v191, %v189
  %v218 = vpack.c.b16 %v192, %v190
  %v219 = vpack.c.b16 %v195, %v193
  %v220 = vpack.c.b16 %v196, %v194
  %v221 = vpack.c.b16 %v199, %v197
  %v222 = vpack.c.b16 %v200, %v198
  %v223 = vpack.c.b16 %v203, %v201
  %v224 = vpack.c.b16 %v204, %v202
  %v225 = vpack.c.b16 %v207, %v205
  %v226 = vpack.c.b16 %v208, %v206
  %v227 = vpack.c.b16 %v209, %v209
  %v228 = vpack.c.b16 %v210, %v210
  %vm229 = vsmask.f32 7424
  %v231 = vshrl.u32 %v211, 16
  %v233 = vshll.u32 %v211, 16
  %v235 = vrot.slane %v233, 1
  %v236 = vor.u32 %v231, %v235
  %v238 = vshll.u32 %v213, 16
  %v240 = vrot.slane %v238, 1
  %v241 = vsel %vm229, %v236, %v240
  %v243 = vshrl.u32 %v212, 16
  %v245 = vshll.u32 %v212, 16
  %v247 = vrot.slane %v245, 1
  %v248 = vor.u32 %v243, %v247
  %v250 = vshll.u32 %v214, 16
  %v252 = vrot.slane %v250, 1
  %v253 = vsel %vm229, %v248, %v252
  %v254 = vshrl.u32 %v213, 16
  %v256 = vor.u32 %v254, %v240
  %v258 = vshll.u32 %v215, 16
  %v260 = vrot.slane %v258, 1
  %v261 = vsel %vm229, %v256, %v260
  %v262 = vshrl.u32 %v214, 16
  %v264 = vor.u32 %v262, %v252
  %v266 = vshll.u32 %v216, 16
  %v268 = vrot.slane %v266, 1
  %v269 = vsel %vm229, %v264, %v268
  %v270 = vshrl.u32 %v215, 16
  %v272 = vor.u32 %v270, %v260
  %v274 = vshll.u32 %v217, 16
  %v276 = vrot.slane %v274, 1
  %v277 = vsel %vm229, %v272, %v276
  %v278 = vshrl.u32 %v216, 16
  %v280 = vor.u32 %v278, %v268
  %v282 = vshll.u32 %v218, 16
  %v284 = vrot.slane %v282, 1
  %v285 = vsel %vm229, %v280, %v284
  %v286 = vshrl.u32 %v217, 16
  %v288 = vor.u32 %v286, %v276
  %v290 = vshll.u32 %v219, 16
  %v292 = vrot.slane %v290, 1
  %v293 = vsel %vm229, %v288, %v292
  %v294 = vshrl.u32 %v218, 16
  %v296 = vor.u32 %v294, %v284
  %v298 = vshll.u32 %v220, 16
  %v300 = vrot.slane %v298, 1
  %v301 = vsel %vm229, %v296, %v300
  %v302 = vshrl.u32 %v219, 16
  %v304 = vor.u32 %v302, %v292
  %v306 = vshll.u32 %v221, 16
  %v308 = vrot.slane %v306, 1
  %v309 = vsel %vm229, %v304, %v308
  %v310 = vshrl.u32 %v220, 16
  %v312 = vor.u32 %v310, %v300
  %v314 = vshll.u32 %v222, 16
  %v316 = vrot.slane %v314, 1
  %v317 = vsel %vm229, %v312, %v316
  %v318 = vshrl.u32 %v221, 16
  %v320 = vor.u32 %v318, %v308
  %v322 = vshll.u32 %v223, 16
  %v324 = vrot.slane %v322, 1
  %v325 = vsel %vm229, %v320, %v324
  %v326 = vshrl.u32 %v222, 16
  %v328 = vor.u32 %v326, %v316
  %v330 = vshll.u32 %v224, 16
  %v332 = vrot.slane %v330, 1
  %v333 = vsel %vm229, %v328, %v332
  %v334 = vshrl.u32 %v223, 16
  %v336 = vor.u32 %v334, %v324
  %v338 = vshll.u32 %v225, 16
  %v340 = vrot.slane %v338, 1
  %v341 = vsel %vm229, %v336, %v340
  %v342 = vshrl.u32 %v224, 16
  %v344 = vor.u32 %v342, %v332
  %v346 = vshll.u32 %v226, 16
  %v348 = vrot.slane %v346, 1
  %v349 = vsel %vm229, %v344, %v348
  %v350 = vshrl.u32 %v225, 16
  %v352 = vor.u32 %v350, %v340
  %v354 = vshll.u32 %v227, 16
  %v356 = vrot.slane %v354, 1
  %v357 = vsel %vm229, %v352, %v356
  %v358 = vshrl.u32 %v226, 16
  %v360 = vor.u32 %v358, %v348
  %v362 = vshll.u32 %v228, 16
  %v364 = vrot.slane %v362, 1
  %v365 = vsel %vm229, %v360, %v364
  %v446 = vunpack.c.l.b16 %v96
  %v447 = vunpack.c.h.b16 %v96
  %v448 = vunpack.c.l.b16 %v97
  %v449 = vunpack.c.h.b16 %v97
  %v450 = vunpack.c.l.b16 %v98
  %v451 = vunpack.c.h.b16 %v98
  %v452 = vunpack.c.l.b16 %v99
  %v453 = vunpack.c.h.b16 %v99
  %v454 = vunpack.c.l.b16 %v100
  %v455 = vunpack.c.h.b16 %v100
  %v456 = vunpack.c.l.b16 %v101
  %v457 = vunpack.c.h.b16 %v101
  %v458 = vunpack.c.l.b16 %v102
  %v459 = vunpack.c.h.b16 %v102
  %v460 = vunpack.c.l.b16 %v103
  %v461 = vunpack.c.h.b16 %v103
  %v462 = vunpack.c.l.b16 %v104
  %v463 = vunpack.c.h.b16 %v104
  %v464 = vunpack.c.l.b16 %v105
  %v465 = vunpack.c.h.b16 %v105
  %v466 = vunpack.c.l.b16 %v106
  %v467 = vunpack.c.h.b16 %v106
  %v468 = vunpack.c.l.b16 %v107
  %v469 = vunpack.c.h.b16 %v107
  %v470 = vunpack.c.l.b16 %v108
  %v471 = vunpack.c.h.b16 %v108
  %v472 = vunpack.c.l.b16 %v109
  %v473 = vunpack.c.h.b16 %v109
  %v474 = vunpack.c.l.b16 %v110
  %v475 = vunpack.c.h.b16 %v110
  %v476 = vunpack.c.l.b16 %v111
  %v477 = vunpack.c.h.b16 %v111
  %v478 = vunpack.c.l.b16 %v112
  %v479 = vunpack.c.h.b16 %v112
  %v480 = vunpack.c.l.b16 %v113
  %v481 = vunpack.c.h.b16 %v113
  %v482 = vunpack.c.l.b16 %v114
  %v483 = vunpack.c.h.b16 %v114
  %v484 = vunpack.c.l.b16 %v115
  %v485 = vunpack.c.h.b16 %v115
  %v486 = vunpack.c.l.b16 %v116
  %v487 = vunpack.c.h.b16 %v116
  %v488 = vunpack.c.l.b16 %v117
  %v489 = vunpack.c.h.b16 %v117
  %v490 = vunpack.c.l.b16 %v118
  %v491 = vunpack.c.h.b16 %v118
  %v492 = vunpack.c.l.b16 %v119
  %v493 = vunpack.c.h.b16 %v119
  %v494 = vunpack.c.l.b16 %v120
  %v495 = vunpack.c.h.b16 %v120
  %v496 = vunpack.c.l.b16 %v121
  %v497 = vunpack.c.h.b16 %v121
  %v498 = vunpack.c.l.b16 %v122
  %v499 = vunpack.c.h.b16 %v122
  %v500 = vunpack.c.l.b16 %v123
  %v501 = vunpack.c.h.b16 %v123
  %v502 = vunpack.c.l.b16 %v124
  %v503 = vunpack.c.h.b16 %v124
  %v504 = vunpack.c.l.b16 %v125
  %v505 = vunpack.c.h.b16 %v125
  %v506 = vunpack.c.l.b16 %v126
  %v507 = vunpack.c.h.b16 %v126
  %v508 = vunpack.c.l.b16 %v127
  %v509 = vunpack.c.h.b16 %v127
  %v510 = vunpack.c.l.b16 %v128
  %v511 = vunpack.c.h.b16 %v128
  %v512 = vunpack.c.l.b16 %v129
  %v513 = vunpack.c.h.b16 %v129
  %v514 = vunpack.c.l.b16 %v130
  %v515 = vunpack.c.h.b16 %v130
  %v516 = vunpack.c.l.b16 %v131
  %v517 = vunpack.c.h.b16 %v131
  %v518 = vunpack.c.l.b16 %v132
  %v519 = vunpack.c.h.b16 %v132
  %v520 = vunpack.c.l.b16 %v133
  %v521 = vunpack.c.h.b16 %v133
  %v522 = vunpack.c.l.b16 %v134
  %v523 = vunpack.c.h.b16 %v134
  %v524 = vunpack.c.l.b16 %v135
  %v525 = vunpack.c.h.b16 %v135
  %v526 = vunpack.c.l.b16 %v136
  %v527 = vunpack.c.h.b16 %v136
  %v528 = vunpack.c.l.b16 %v137
  %v529 = vunpack.c.h.b16 %v137
  %v530 = vunpack.c.l.b16 %v138
  %v531 = vunpack.c.h.b16 %v138
  %v532 = vunpack.c.l.b16 %v139
  %v533 = vunpack.c.h.b16 %v139
  %v534 = vunpack.c.l.b16 %v140
  %v535 = vunpack.c.h.b16 %v140
  %v536 = vunpack.c.l.b16 %v141
  %v537 = vunpack.c.h.b16 %v141
  %v538 = vunpack.c.l.b16 %v142
  %v539 = vunpack.c.h.b16 %v142
  %v540 = vunpack.c.l.b16 %v143
  %v541 = vunpack.c.h.b16 %v143
  %v542 = vunpack.c.l.b16 %v144
  %v543 = vunpack.c.h.b16 %v144
  %v544 = vunpack.c.l.b16 %v145
  %v545 = vunpack.c.h.b16 %v145
  %v546 = vunpack.c.l.b16 %v146
  %v547 = vunpack.c.h.b16 %v146
  %v548 = vunpack.c.l.b16 %v147
  %v549 = vunpack.c.h.b16 %v147
  %v550 = vunpack.c.l.b16 %v148
  %v551 = vunpack.c.h.b16 %v148
  %v552 = vunpack.c.l.b16 %v149
  %v553 = vunpack.c.h.b16 %v149
  %v554 = vunpack.c.l.b16 %v150
  %v555 = vunpack.c.h.b16 %v150
  %v556 = vunpack.c.l.b16 %v151
  %v557 = vunpack.c.h.b16 %v151
  %v558 = vunpack.c.l.b16 %v152
  %v559 = vunpack.c.h.b16 %v152
  %v560 = vunpack.c.l.b16 %v153
  %v561 = vunpack.c.h.b16 %v153
  %v562 = vunpack.c.l.b16 %v154
  %v563 = vunpack.c.h.b16 %v154
  %v564 = vunpack.c.l.b16 %v155
  %v565 = vunpack.c.h.b16 %v155
  %v566 = vunpack.c.l.b16 %v156
  %v567 = vunpack.c.h.b16 %v156
  %v568 = vunpack.c.l.b16 %v157
  %v569 = vunpack.c.h.b16 %v157
  %v570 = vunpack.c.l.b16 %v158
  %v571 = vunpack.c.h.b16 %v158
  %v572 = vunpack.c.l.b16 %v159
  %v573 = vunpack.c.h.b16 %v159
  %v574 = vpack.c.b16 %v450, %v446
  %v575 = vpack.c.b16 %v451, %v447
  %v576 = vpack.c.b16 %v452, %v448
  %v577 = vpack.c.b16 %v453, %v449
  %v578 = vpack.c.b16 %v458, %v454
  %v579 = vpack.c.b16 %v459, %v455
  %v580 = vpack.c.b16 %v460, %v456
  %v581 = vpack.c.b16 %v461, %v457
  %v582 = vpack.c.b16 %v466, %v462
  %v583 = vpack.c.b16 %v467, %v463
  %v584 = vpack.c.b16 %v468, %v464
  %v585 = vpack.c.b16 %v469, %v465
  %v586 = vpack.c.b16 %v474, %v470
  %v587 = vpack.c.b16 %v475, %v471
  %v588 = vpack.c.b16 %v476, %v472
  %v589 = vpack.c.b16 %v477, %v473
  %v590 = vpack.c.b16 %v482, %v478
  %v591 = vpack.c.b16 %v483, %v479
  %v592 = vpack.c.b16 %v484, %v480
  %v593 = vpack.c.b16 %v485, %v481
  %v594 = vpack.c.b16 %v490, %v486
  %v595 = vpack.c.b16 %v491, %v487
  %v596 = vpack.c.b16 %v492, %v488
  %v597 = vpack.c.b16 %v493, %v489
  %v598 = vpack.c.b16 %v498, %v494
  %v599 = vpack.c.b16 %v499, %v495
  %v600 = vpack.c.b16 %v500, %v496
  %v601 = vpack.c.b16 %v501, %v497
  %v602 = vpack.c.b16 %v506, %v502
  %v603 = vpack.c.b16 %v507, %v503
  %v604 = vpack.c.b16 %v508, %v504
  %v605 = vpack.c.b16 %v509, %v505
  %v606 = vpack.c.b16 %v514, %v510
  %v607 = vpack.c.b16 %v515, %v511
  %v608 = vpack.c.b16 %v516, %v512
  %v609 = vpack.c.b16 %v517, %v513
  %v610 = vpack.c.b16 %v522, %v518
  %v611 = vpack.c.b16 %v523, %v519
  %v612 = vpack.c.b16 %v524, %v520
  %v613 = vpack.c.b16 %v525, %v521
  %v614 = vpack.c.b16 %v530, %v526
  %v615 = vpack.c.b16 %v531, %v527
  %v616 = vpack.c.b16 %v532, %v528
  %v617 = vpack.c.b16 %v533, %v529
  %v618 = vpack.c.b16 %v538, %v534
  %v619 = vpack.c.b16 %v539, %v535
  %v620 = vpack.c.b16 %v540, %v536
  %v621 = vpack.c.b16 %v541, %v537
  %v622 = vpack.c.b16 %v546, %v542
  %v623 = vpack.c.b16 %v547, %v543
  %v624 = vpack.c.b16 %v548, %v544
  %v625 = vpack.c.b16 %v549, %v545
  %v626 = vpack.c.b16 %v554, %v550
  %v627 = vpack.c.b16 %v555, %v551
  %v628 = vpack.c.b16 %v556, %v552
  %v629 = vpack.c.b16 %v557, %v553
  %v630 = vpack.c.b16 %v562, %v558
  %v631 = vpack.c.b16 %v563, %v559
  %v632 = vpack.c.b16 %v564, %v560
  %v633 = vpack.c.b16 %v565, %v561
  %v634 = vpack.c.b16 %v570, %v566
  %v635 = vpack.c.b16 %v571, %v567
  %v636 = vpack.c.b16 %v572, %v568
  %v637 = vpack.c.b16 %v573, %v569
  %702 = vmatprep.subr.bf16.mxu0 %v603
  %703 = vmatpush1.bf16.msra.mxu0 %v602
  %704 = vmatprep.subr.bf16.mxu0 %v599
  %705 = vmatpush1.bf16.msra.mxu0 %v598
  %706 = vmatprep.subr.bf16.mxu0 %v595
  %707 = vmatpush1.bf16.msra.mxu0 %v594
  %708 = vmatprep.subr.bf16.mxu0 %v591
  %709 = vmatpush1.bf16.msra.mxu0 %v590
  %710 = vmatprep.subr.bf16.mxu0 %v587
  %711 = vmatpush1.bf16.msra.mxu0 %v586
  %712 = vmatprep.subr.bf16.mxu0 %v583
  %713 = vmatpush1.bf16.msra.mxu0 %v582
  %714 = vmatprep.subr.bf16.mxu0 %v579
  %715 = vmatpush1.bf16.msra.mxu0 %v578
  %716 = vmatprep.subr.bf16.mxu0 %v575
  %717 = vmatpush1.bf16.msra.mxu0 %v574
  %718 = vmatprep.subr.bf16.mxu0 %v635
  %719 = vmatpush2.bf16.msra.mxu0 %v634
  %720 = vmatprep.subr.bf16.mxu0 %v631
  %721 = vmatpush2.bf16.msra.mxu0 %v630
  %722 = vmatprep.subr.bf16.mxu0 %v627
  %723 = vmatpush2.bf16.msra.mxu0 %v626
  %724 = vmatprep.subr.bf16.mxu0 %v623
  %725 = vmatpush2.bf16.msra.mxu0 %v622
  %726 = vmatprep.subr.bf16.mxu0 %v619
  %727 = vmatpush2.bf16.msra.mxu0 %v618
  %728 = vmatprep.subr.bf16.mxu0 %v615
  %729 = vmatpush2.bf16.msra.mxu0 %v614
  %730 = vmatprep.subr.bf16.mxu0 %v611
  %731 = vmatpush2.bf16.msra.mxu0 %v610
  %732 = vmatprep.subr.bf16.mxu0 %v607
  %733 = vmatpush2.bf16.msra.mxu0 %v606
  %734 = vmatprep.mubr.bf16.mxu0 %v253
  %735 = vmatmul.mubr.bf16.gmra.mxu0 %v241
  %v736 = vpop.f32.mrf.mxu0
  %v737 = vadd.f32 0.0, %v736
  %v738 = vpop.f32.mrf.mxu0
  %v739 = vadd.f32 0.0, %v738
  %v740 = vpop.f32.mrf.mxu0
  %v741 = vadd.f32 0.0, %v740
  %v742 = vpop.f32.mrf.mxu0
  %v743 = vadd.f32 0.0, %v742
  %744 = vmatprep.mubr.bf16.mxu0 %v269
  %745 = vmatmul.mubr.bf16.gmra.mxu0 %v261
  %v746 = vpop.f32.mrf.mxu0
  %v747 = vadd.f32 0.0, %v746
  %v748 = vpop.f32.mrf.mxu0
  %v749 = vadd.f32 0.0, %v748
  %v750 = vpop.f32.mrf.mxu0
  %v751 = vadd.f32 0.0, %v750
  %v752 = vpop.f32.mrf.mxu0
  %v753 = vadd.f32 0.0, %v752
  %754 = vmatprep.mubr.bf16.mxu0 %v285
  %755 = vmatmul.mubr.bf16.gmra.mxu0 %v277
  %v756 = vpop.f32.mrf.mxu0
  %v757 = vadd.f32 0.0, %v756
  %v758 = vpop.f32.mrf.mxu0
  %v759 = vadd.f32 0.0, %v758
  %v760 = vpop.f32.mrf.mxu0
  %v761 = vadd.f32 0.0, %v760
  %v762 = vpop.f32.mrf.mxu0
  %v763 = vadd.f32 0.0, %v762
  %764 = vmatprep.mubr.bf16.mxu0 %v301
  %765 = vmatmul.mubr.bf16.gmra.mxu0 %v293
  %v766 = vpop.f32.mrf.mxu0
  %v767 = vadd.f32 0.0, %v766
  %v768 = vpop.f32.mrf.mxu0
  %v769 = vadd.f32 0.0, %v768
  %v770 = vpop.f32.mrf.mxu0
  %v771 = vadd.f32 0.0, %v770
  %v772 = vpop.f32.mrf.mxu0
  %v773 = vadd.f32 0.0, %v772
  %774 = vmatprep.mubr.bf16.mxu0 %v317
  %775 = vmatmul.mubr.bf16.gmra.mxu0 %v309
  %v776 = vpop.f32.mrf.mxu0
  %v777 = vadd.f32 0.0, %v776
  %v778 = vpop.f32.mrf.mxu0
  %v779 = vadd.f32 0.0, %v778
  %v780 = vpop.f32.mrf.mxu0
  %v781 = vadd.f32 0.0, %v780
  %v782 = vpop.f32.mrf.mxu0
  %v783 = vadd.f32 0.0, %v782
  %784 = vmatprep.mubr.bf16.mxu0 %v333
  %785 = vmatmul.mubr.bf16.gmra.mxu0 %v325
  %v786 = vpop.f32.mrf.mxu0
  %v787 = vadd.f32 0.0, %v786
  %v788 = vpop.f32.mrf.mxu0
  %v789 = vadd.f32 0.0, %v788
  %v790 = vpop.f32.mrf.mxu0
  %v791 = vadd.f32 0.0, %v790
  %v792 = vpop.f32.mrf.mxu0
  %v793 = vadd.f32 0.0, %v792
  %794 = vmatprep.mubr.bf16.mxu0 %v349
  %795 = vmatmul.mubr.bf16.gmra.mxu0 %v341
  %v796 = vpop.f32.mrf.mxu0
  %v797 = vadd.f32 0.0, %v796
  %v798 = vpop.f32.mrf.mxu0
  %v799 = vadd.f32 0.0, %v798
  %v800 = vpop.f32.mrf.mxu0
  %v801 = vadd.f32 0.0, %v800
  %v802 = vpop.f32.mrf.mxu0
  %v803 = vadd.f32 0.0, %v802
  %804 = vmatprep.mubr.bf16.mxu0 %v365
  %805 = vmatmul.mubr.bf16.gmra.mxu0 %v357
  %v806 = vpop.f32.mrf.mxu0
  %v807 = vadd.f32 0.0, %v806
  %v808 = vpop.f32.mrf.mxu0
  %v809 = vadd.f32 0.0, %v808
  %v810 = vpop.f32.mrf.mxu0
  %v811 = vadd.f32 0.0, %v810
  %v812 = vpop.f32.mrf.mxu0
  %v813 = vadd.f32 0.0, %v812
  %814 = vdwg.mxu0
  %815 = vmatprep.subr.bf16.mxu0 %v605
  %816 = vmatpush1.bf16.msra.mxu0 %v604
  %817 = vmatprep.subr.bf16.mxu0 %v601
  %818 = vmatpush1.bf16.msra.mxu0 %v600
  %819 = vmatprep.subr.bf16.mxu0 %v597
  %820 = vmatpush1.bf16.msra.mxu0 %v596
  %821 = vmatprep.subr.bf16.mxu0 %v593
  %822 = vmatpush1.bf16.msra.mxu0 %v592
  %823 = vmatprep.subr.bf16.mxu0 %v589
  %824 = vmatpush1.bf16.msra.mxu0 %v588
  %825 = vmatprep.subr.bf16.mxu0 %v585
  %826 = vmatpush1.bf16.msra.mxu0 %v584
  %827 = vmatprep.subr.bf16.mxu0 %v581
  %828 = vmatpush1.bf16.msra.mxu0 %v580
  %829 = vmatprep.subr.bf16.mxu0 %v577
  %830 = vmatpush1.bf16.msra.mxu0 %v576
  %831 = vmatprep.subr.bf16.mxu0 %v637
  %832 = vmatpush2.bf16.msra.mxu0 %v636
  %833 = vmatprep.subr.bf16.mxu0 %v633
  %834 = vmatpush2.bf16.msra.mxu0 %v632
  %835 = vmatprep.subr.bf16.mxu0 %v629
  %836 = vmatpush2.bf16.msra.mxu0 %v628
  %837 = vmatprep.subr.bf16.mxu0 %v625
  %838 = vmatpush2.bf16.msra.mxu0 %v624
  %839 = vmatprep.subr.bf16.mxu0 %v621
  %840 = vmatpush2.bf16.msra.mxu0 %v620
  %841 = vmatprep.subr.bf16.mxu0 %v617
  %842 = vmatpush2.bf16.msra.mxu0 %v616
  %843 = vmatprep.subr.bf16.mxu0 %v613
  %844 = vmatpush2.bf16.msra.mxu0 %v612
  %845 = vmatprep.subr.bf16.mxu0 %v609
  %846 = vmatpush2.bf16.msra.mxu0 %v608
  %847 = vmatprep.mubr.bf16.mxu0 %v253
  %848 = vmatmul.mubr.bf16.gmra.mxu0 %v241
  %v849 = vpop.f32.mrf.mxu0
  %v850 = vadd.f32 0.0, %v849
  %v851 = vpop.f32.mrf.mxu0
  %v852 = vadd.f32 0.0, %v851
  %v853 = vpop.f32.mrf.mxu0
  %v854 = vadd.f32 0.0, %v853
  %v855 = vpop.f32.mrf.mxu0
  %v856 = vadd.f32 0.0, %v855
  %857 = vmatprep.mubr.bf16.mxu0 %v269
  %858 = vmatmul.mubr.bf16.gmra.mxu0 %v261
  %v859 = vpop.f32.mrf.mxu0
  %v860 = vadd.f32 0.0, %v859
  %v861 = vpop.f32.mrf.mxu0
  %v862 = vadd.f32 0.0, %v861
  %v863 = vpop.f32.mrf.mxu0
  %v864 = vadd.f32 0.0, %v863
  %v865 = vpop.f32.mrf.mxu0
  %v866 = vadd.f32 0.0, %v865
  %867 = vmatprep.mubr.bf16.mxu0 %v285
  %868 = vmatmul.mubr.bf16.gmra.mxu0 %v277
  %v869 = vpop.f32.mrf.mxu0
  %v870 = vadd.f32 0.0, %v869
  %v871 = vpop.f32.mrf.mxu0
  %v872 = vadd.f32 0.0, %v871
  %v873 = vpop.f32.mrf.mxu0
  %v874 = vadd.f32 0.0, %v873
  %v875 = vpop.f32.mrf.mxu0
  %v876 = vadd.f32 0.0, %v875
  %877 = vmatprep.mubr.bf16.mxu0 %v301
  %878 = vmatmul.mubr.bf16.gmra.mxu0 %v293
  %v879 = vpop.f32.mrf.mxu0
  %v880 = vadd.f32 0.0, %v879
  %v881 = vpop.f32.mrf.mxu0
  %v882 = vadd.f32 0.0, %v881
  %v883 = vpop.f32.mrf.mxu0
  %v884 = vadd.f32 0.0, %v883
  %v885 = vpop.f32.mrf.mxu0
  %v886 = vadd.f32 0.0, %v885
  %887 = vmatprep.mubr.bf16.mxu0 %v317
  %888 = vmatmul.mubr.bf16.gmra.mxu0 %v309
  %v889 = vpop.f32.mrf.mxu0
  %v890 = vadd.f32 0.0, %v889
  %v891 = vpop.f32.mrf.mxu0
  %v892 = vadd.f32 0.0, %v891
  %v893 = vpop.f32.mrf.mxu0
  %v894 = vadd.f32 0.0, %v893
  %v895 = vpop.f32.mrf.mxu0
  %v896 = vadd.f32 0.0, %v895
  %897 = vmatprep.mubr.bf16.mxu0 %v333
  %898 = vmatmul.mubr.bf16.gmra.mxu0 %v325
  %v899 = vpop.f32.mrf.mxu0
  %v900 = vadd.f32 0.0, %v899
  %v901 = vpop.f32.mrf.mxu0
  %v902 = vadd.f32 0.0, %v901
  %v903 = vpop.f32.mrf.mxu0
  %v904 = vadd.f32 0.0, %v903
  %v905 = vpop.f32.mrf.mxu0
  %v906 = vadd.f32 0.0, %v905
  %907 = vmatprep.mubr.bf16.mxu0 %v349
  %908 = vmatmul.mubr.bf16.gmra.mxu0 %v341
  %v909 = vpop.f32.mrf.mxu0
  %v910 = vadd.f32 0.0, %v909
  %v911 = vpop.f32.mrf.mxu0
  %v912 = vadd.f32 0.0, %v911
  %v913 = vpop.f32.mrf.mxu0
  %v914 = vadd.f32 0.0, %v913
  %v915 = vpop.f32.mrf.mxu0
  %v916 = vadd.f32 0.0, %v915
  %917 = vmatprep.mubr.bf16.mxu0 %v365
  %918 = vmatmul.mubr.bf16.gmra.mxu0 %v357
  %v919 = vpop.f32.mrf.mxu0
  %v920 = vadd.f32 0.0, %v919
  %v921 = vpop.f32.mrf.mxu0
  %v922 = vadd.f32 0.0, %v921
  %v923 = vpop.f32.mrf.mxu0
  %v924 = vadd.f32 0.0, %v923
  %v925 = vpop.f32.mrf.mxu0
  %v926 = vadd.f32 0.0, %v925
  %927 = vdwg.mxu0
  %v1008 = vunpack.c.l.b16 %v30
  %v1009 = vunpack.c.h.b16 %v30
  %v1010 = vunpack.c.l.b16 %v31
  %v1011 = vunpack.c.h.b16 %v31
  %v1012 = vunpack.c.l.b16 %v32
  %v1013 = vunpack.c.h.b16 %v32
  %v1014 = vunpack.c.l.b16 %v33
  %v1015 = vunpack.c.h.b16 %v33
  %v1016 = vunpack.c.l.b16 %v34
  %v1017 = vunpack.c.h.b16 %v34
  %v1018 = vunpack.c.l.b16 %v35
  %v1019 = vunpack.c.h.b16 %v35
  %v1020 = vunpack.c.l.b16 %v36
  %v1021 = vunpack.c.h.b16 %v36
  %v1022 = vunpack.c.l.b16 %v37
  %v1023 = vunpack.c.h.b16 %v37
  %v1024 = vunpack.c.l.b16 %v38
  %v1025 = vunpack.c.h.b16 %v38
  %v1026 = vunpack.c.l.b16 %v39
  %v1027 = vunpack.c.h.b16 %v39
  %v1028 = vunpack.c.l.b16 %v40
  %v1029 = vunpack.c.h.b16 %v40
  %v1030 = vunpack.c.l.b16 %v41
  %v1031 = vunpack.c.h.b16 %v41
  %v1032 = vunpack.c.l.b16 %v42
  %v1033 = vunpack.c.h.b16 %v42
  %v1034 = vunpack.c.l.b16 %v43
  %v1035 = vunpack.c.h.b16 %v43
  %v1036 = vunpack.c.l.b16 %v44
  %v1037 = vunpack.c.h.b16 %v44
  %v1038 = vunpack.c.l.b16 %v45
  %v1039 = vunpack.c.h.b16 %v45
  %v1040 = vunpack.c.l.b16 %v46
  %v1041 = vunpack.c.h.b16 %v46
  %v1042 = vunpack.c.l.b16 %v47
  %v1043 = vunpack.c.h.b16 %v47
  %v1044 = vunpack.c.l.b16 %v48
  %v1045 = vunpack.c.h.b16 %v48
  %v1046 = vunpack.c.l.b16 %v49
  %v1047 = vunpack.c.h.b16 %v49
  %v1048 = vunpack.c.l.b16 %v50
  %v1049 = vunpack.c.h.b16 %v50
  %v1050 = vunpack.c.l.b16 %v51
  %v1051 = vunpack.c.h.b16 %v51
  %v1052 = vunpack.c.l.b16 %v52
  %v1053 = vunpack.c.h.b16 %v52
  %v1054 = vunpack.c.l.b16 %v53
  %v1055 = vunpack.c.h.b16 %v53
  %v1056 = vunpack.c.l.b16 %v54
  %v1057 = vunpack.c.h.b16 %v54
  %v1058 = vunpack.c.l.b16 %v55
  %v1059 = vunpack.c.h.b16 %v55
  %v1060 = vunpack.c.l.b16 %v56
  %v1061 = vunpack.c.h.b16 %v56
  %v1062 = vunpack.c.l.b16 %v57
  %v1063 = vunpack.c.h.b16 %v57
  %v1064 = vunpack.c.l.b16 %v58
  %v1065 = vunpack.c.h.b16 %v58
  %v1066 = vunpack.c.l.b16 %v59
  %v1067 = vunpack.c.h.b16 %v59
  %v1068 = vunpack.c.l.b16 %v60
  %v1069 = vunpack.c.h.b16 %v60
  %v1070 = vunpack.c.l.b16 %v61
  %v1071 = vunpack.c.h.b16 %v61
  %v1072 = vunpack.c.l.b16 %v62
  %v1073 = vunpack.c.h.b16 %v62
  %v1074 = vunpack.c.l.b16 %v63
  %v1075 = vunpack.c.h.b16 %v63
  %v1076 = vunpack.c.l.b16 %v64
  %v1077 = vunpack.c.h.b16 %v64
  %v1078 = vunpack.c.l.b16 %v65
  %v1079 = vunpack.c.h.b16 %v65
  %v1080 = vunpack.c.l.b16 %v66
  %v1081 = vunpack.c.h.b16 %v66
  %v1082 = vunpack.c.l.b16 %v67
  %v1083 = vunpack.c.h.b16 %v67
  %v1084 = vunpack.c.l.b16 %v68
  %v1085 = vunpack.c.h.b16 %v68
  %v1086 = vunpack.c.l.b16 %v69
  %v1087 = vunpack.c.h.b16 %v69
  %v1088 = vunpack.c.l.b16 %v70
  %v1089 = vunpack.c.h.b16 %v70
  %v1090 = vunpack.c.l.b16 %v71
  %v1091 = vunpack.c.h.b16 %v71
  %v1092 = vunpack.c.l.b16 %v72
  %v1093 = vunpack.c.h.b16 %v72
  %v1094 = vunpack.c.l.b16 %v73
  %v1095 = vunpack.c.h.b16 %v73
  %v1096 = vunpack.c.l.b16 %v74
  %v1097 = vunpack.c.h.b16 %v74
  %v1098 = vunpack.c.l.b16 %v75
  %v1099 = vunpack.c.h.b16 %v75
  %v1100 = vunpack.c.l.b16 %v76
  %v1101 = vunpack.c.h.b16 %v76
  %v1102 = vunpack.c.l.b16 %v77
  %v1103 = vunpack.c.h.b16 %v77
  %v1104 = vunpack.c.l.b16 %v78
  %v1105 = vunpack.c.h.b16 %v78
  %v1106 = vunpack.c.l.b16 %v79
  %v1107 = vunpack.c.h.b16 %v79
  %v1108 = vunpack.c.l.b16 %v80
  %v1109 = vunpack.c.h.b16 %v80
  %v1110 = vunpack.c.l.b16 %v81
  %v1111 = vunpack.c.h.b16 %v81
  %v1112 = vunpack.c.l.b16 %v82
  %v1113 = vunpack.c.h.b16 %v82
  %v1114 = vunpack.c.l.b16 %v83
  %v1115 = vunpack.c.h.b16 %v83
  %v1116 = vunpack.c.l.b16 %v84
  %v1117 = vunpack.c.h.b16 %v84
  %v1118 = vunpack.c.l.b16 %v85
  %v1119 = vunpack.c.h.b16 %v85
  %v1120 = vunpack.c.l.b16 %v86
  %v1121 = vunpack.c.h.b16 %v86
  %v1122 = vunpack.c.l.b16 %v87
  %v1123 = vunpack.c.h.b16 %v87
  %v1124 = vunpack.c.l.b16 %v88
  %v1125 = vunpack.c.h.b16 %v88
  %v1126 = vunpack.c.l.b16 %v89
  %v1127 = vunpack.c.h.b16 %v89
  %v1128 = vunpack.c.l.b16 %v90
  %v1129 = vunpack.c.h.b16 %v90
  %v1130 = vunpack.c.l.b16 %v91
  %v1131 = vunpack.c.h.b16 %v91
  %v1132 = vunpack.c.l.b16 %v92
  %v1133 = vunpack.c.h.b16 %v92
  %v1134 = vunpack.c.l.b16 %v93
  %v1135 = vunpack.c.h.b16 %v93
  %v1136 = vpack.c.b16 %v1012, %v1008
  %v1137 = vpack.c.b16 %v1013, %v1009
  %v1138 = vpack.c.b16 %v1014, %v1010
  %v1139 = vpack.c.b16 %v1015, %v1011
  %v1140 = vpack.c.b16 %v1020, %v1016
  %v1141 = vpack.c.b16 %v1021, %v1017
  %v1142 = vpack.c.b16 %v1022, %v1018
  %v1143 = vpack.c.b16 %v1023, %v1019
  %v1144 = vpack.c.b16 %v1028, %v1024
  %v1145 = vpack.c.b16 %v1029, %v1025
  %v1146 = vpack.c.b16 %v1030, %v1026
  %v1147 = vpack.c.b16 %v1031, %v1027
  %v1148 = vpack.c.b16 %v1036, %v1032
  %v1149 = vpack.c.b16 %v1037, %v1033
  %v1150 = vpack.c.b16 %v1038, %v1034
  %v1151 = vpack.c.b16 %v1039, %v1035
  %v1152 = vpack.c.b16 %v1044, %v1040
  %v1153 = vpack.c.b16 %v1045, %v1041
  %v1154 = vpack.c.b16 %v1046, %v1042
  %v1155 = vpack.c.b16 %v1047, %v1043
  %v1156 = vpack.c.b16 %v1052, %v1048
  %v1157 = vpack.c.b16 %v1053, %v1049
  %v1158 = vpack.c.b16 %v1054, %v1050
  %v1159 = vpack.c.b16 %v1055, %v1051
  %v1160 = vpack.c.b16 %v1060, %v1056
  %v1161 = vpack.c.b16 %v1061, %v1057
  %v1162 = vpack.c.b16 %v1062, %v1058
  %v1163 = vpack.c.b16 %v1063, %v1059
  %v1164 = vpack.c.b16 %v1068, %v1064
  %v1165 = vpack.c.b16 %v1069, %v1065
  %v1166 = vpack.c.b16 %v1070, %v1066
  %v1167 = vpack.c.b16 %v1071, %v1067
  %v1168 = vpack.c.b16 %v1076, %v1072
  %v1169 = vpack.c.b16 %v1077, %v1073
  %v1170 = vpack.c.b16 %v1078, %v1074
  %v1171 = vpack.c.b16 %v1079, %v1075
  %v1172 = vpack.c.b16 %v1084, %v1080
  %v1173 = vpack.c.b16 %v1085, %v1081
  %v1174 = vpack.c.b16 %v1086, %v1082
  %v1175 = vpack.c.b16 %v1087, %v1083
  %v1176 = vpack.c.b16 %v1092, %v1088
  %v1177 = vpack.c.b16 %v1093, %v1089
  %v1178 = vpack.c.b16 %v1094, %v1090
  %v1179 = vpack.c.b16 %v1095, %v1091
  %v1180 = vpack.c.b16 %v1100, %v1096
  %v1181 = vpack.c.b16 %v1101, %v1097
  %v1182 = vpack.c.b16 %v1102, %v1098
  %v1183 = vpack.c.b16 %v1103, %v1099
  %v1184 = vpack.c.b16 %v1108, %v1104
  %v1185 = vpack.c.b16 %v1109, %v1105
  %v1186 = vpack.c.b16 %v1110, %v1106
  %v1187 = vpack.c.b16 %v1111, %v1107
  %v1188 = vpack.c.b16 %v1116, %v1112
  %v1189 = vpack.c.b16 %v1117, %v1113
  %v1190 = vpack.c.b16 %v1118, %v1114
  %v1191 = vpack.c.b16 %v1119, %v1115
  %v1192 = vpack.c.b16 %v1124, %v1120
  %v1193 = vpack.c.b16 %v1125, %v1121
  %v1194 = vpack.c.b16 %v1126, %v1122
  %v1195 = vpack.c.b16 %v1127, %v1123
  %v1196 = vpack.c.b16 %v1132, %v1128
  %v1197 = vpack.c.b16 %v1133, %v1129
  %v1198 = vpack.c.b16 %v1134, %v1130
  %v1199 = vpack.c.b16 %v1135, %v1131
  %1264 = vmatprep.subr.bf16.mxu0 %v1165
  %1265 = vmatpush1.bf16.msra.mxu0 %v1164
  %1266 = vmatprep.subr.bf16.mxu0 %v1161
  %1267 = vmatpush1.bf16.msra.mxu0 %v1160
  %1268 = vmatprep.subr.bf16.mxu0 %v1157
  %1269 = vmatpush1.bf16.msra.mxu0 %v1156
  %1270 = vmatprep.subr.bf16.mxu0 %v1153
  %1271 = vmatpush1.bf16.msra.mxu0 %v1152
  %1272 = vmatprep.subr.bf16.mxu0 %v1149
  %1273 = vmatpush1.bf16.msra.mxu0 %v1148
  %1274 = vmatprep.subr.bf16.mxu0 %v1145
  %1275 = vmatpush1.bf16.msra.mxu0 %v1144
  %1276 = vmatprep.subr.bf16.mxu0 %v1141
  %1277 = vmatpush1.bf16.msra.mxu0 %v1140
  %1278 = vmatprep.subr.bf16.mxu0 %v1137
  %1279 = vmatpush1.bf16.msra.mxu0 %v1136
  %1280 = vmatprep.subr.bf16.mxu0 %v1197
  %1281 = vmatpush2.bf16.msra.mxu0 %v1196
  %1282 = vmatprep.subr.bf16.mxu0 %v1193
  %1283 = vmatpush2.bf16.msra.mxu0 %v1192
  %1284 = vmatprep.subr.bf16.mxu0 %v1189
  %1285 = vmatpush2.bf16.msra.mxu0 %v1188
  %1286 = vmatprep.subr.bf16.mxu0 %v1185
  %1287 = vmatpush2.bf16.msra.mxu0 %v1184
  %1288 = vmatprep.subr.bf16.mxu0 %v1181
  %1289 = vmatpush2.bf16.msra.mxu0 %v1180
  %1290 = vmatprep.subr.bf16.mxu0 %v1177
  %1291 = vmatpush2.bf16.msra.mxu0 %v1176
  %1292 = vmatprep.subr.bf16.mxu0 %v1173
  %1293 = vmatpush2.bf16.msra.mxu0 %v1172
  %1294 = vmatprep.subr.bf16.mxu0 %v1169
  %1295 = vmatpush2.bf16.msra.mxu0 %v1168
  %1296 = vmatprep.mubr.bf16.mxu0 %v212
  %1297 = vmatmul.mubr.bf16.gmra.mxu0 %v211
  %v1298 = vpop.f32.mrf.mxu0
  %v1299 = vadd.f32 %v737, %v1298
  %v1300 = vpop.f32.mrf.mxu0
  %v1301 = vadd.f32 %v739, %v1300
  %v1302 = vpop.f32.mrf.mxu0
  %v1303 = vadd.f32 %v741, %v1302
  %v1304 = vpop.f32.mrf.mxu0
  %v1305 = vadd.f32 %v743, %v1304
  %1306 = vmatprep.mubr.bf16.mxu0 %v214
  %1307 = vmatmul.mubr.bf16.gmra.mxu0 %v213
  %v1308 = vpop.f32.mrf.mxu0
  %v1309 = vadd.f32 %v747, %v1308
  %v1310 = vpop.f32.mrf.mxu0
  %v1311 = vadd.f32 %v749, %v1310
  %v1312 = vpop.f32.mrf.mxu0
  %v1313 = vadd.f32 %v751, %v1312
  %v1314 = vpop.f32.mrf.mxu0
  %v1315 = vadd.f32 %v753, %v1314
  %1316 = vmatprep.mubr.bf16.mxu0 %v216
  %1317 = vmatmul.mubr.bf16.gmra.mxu0 %v215
  %v1318 = vpop.f32.mrf.mxu0
  %v1319 = vadd.f32 %v757, %v1318
  %v1320 = vpop.f32.mrf.mxu0
  %v1321 = vadd.f32 %v759, %v1320
  %v1322 = vpop.f32.mrf.mxu0
  %v1323 = vadd.f32 %v761, %v1322
  %v1324 = vpop.f32.mrf.mxu0
  %v1325 = vadd.f32 %v763, %v1324
  %1326 = vmatprep.mubr.bf16.mxu0 %v218
  %1327 = vmatmul.mubr.bf16.gmra.mxu0 %v217
  %v1328 = vpop.f32.mrf.mxu0
  %v1329 = vadd.f32 %v767, %v1328
  %v1330 = vpop.f32.mrf.mxu0
  %v1331 = vadd.f32 %v769, %v1330
  %v1332 = vpop.f32.mrf.mxu0
  %v1333 = vadd.f32 %v771, %v1332
  %v1334 = vpop.f32.mrf.mxu0
  %v1335 = vadd.f32 %v773, %v1334
  %1336 = vmatprep.mubr.bf16.mxu0 %v220
  %1337 = vmatmul.mubr.bf16.gmra.mxu0 %v219
  %v1338 = vpop.f32.mrf.mxu0
  %v1339 = vadd.f32 %v777, %v1338
  %v1340 = vpop.f32.mrf.mxu0
  %v1341 = vadd.f32 %v779, %v1340
  %v1342 = vpop.f32.mrf.mxu0
  %v1343 = vadd.f32 %v781, %v1342
  %v1344 = vpop.f32.mrf.mxu0
  %v1345 = vadd.f32 %v783, %v1344
  %1346 = vmatprep.mubr.bf16.mxu0 %v222
  %1347 = vmatmul.mubr.bf16.gmra.mxu0 %v221
  %v1348 = vpop.f32.mrf.mxu0
  %v1349 = vadd.f32 %v787, %v1348
  %v1350 = vpop.f32.mrf.mxu0
  %v1351 = vadd.f32 %v789, %v1350
  %v1352 = vpop.f32.mrf.mxu0
  %v1353 = vadd.f32 %v791, %v1352
  %v1354 = vpop.f32.mrf.mxu0
  %v1355 = vadd.f32 %v793, %v1354
  %1356 = vmatprep.mubr.bf16.mxu0 %v224
  %1357 = vmatmul.mubr.bf16.gmra.mxu0 %v223
  %v1358 = vpop.f32.mrf.mxu0
  %v1359 = vadd.f32 %v797, %v1358
  %v1360 = vpop.f32.mrf.mxu0
  %v1361 = vadd.f32 %v799, %v1360
  %v1362 = vpop.f32.mrf.mxu0
  %v1363 = vadd.f32 %v801, %v1362
  %v1364 = vpop.f32.mrf.mxu0
  %v1365 = vadd.f32 %v803, %v1364
  %1366 = vmatprep.mubr.bf16.mxu0 %v226
  %1367 = vmatmul.mubr.bf16.gmra.mxu0 %v225
  %v1368 = vpop.f32.mrf.mxu0
  %v1369 = vadd.f32 %v807, %v1368
  %v1370 = vpop.f32.mrf.mxu0
  %v1371 = vadd.f32 %v809, %v1370
  %v1372 = vpop.f32.mrf.mxu0
  %v1373 = vadd.f32 %v811, %v1372
  %v1374 = vpop.f32.mrf.mxu0
  %v1375 = vadd.f32 %v813, %v1374
  %1376 = vdwg.mxu0
  %1377 = vmatprep.subr.bf16.mxu0 %v1167
  %1378 = vmatpush1.bf16.msra.mxu0 %v1166
  %1379 = vmatprep.subr.bf16.mxu0 %v1163
  %1380 = vmatpush1.bf16.msra.mxu0 %v1162
  %1381 = vmatprep.subr.bf16.mxu0 %v1159
  %1382 = vmatpush1.bf16.msra.mxu0 %v1158
  %1383 = vmatprep.subr.bf16.mxu0 %v1155
  %1384 = vmatpush1.bf16.msra.mxu0 %v1154
  %1385 = vmatprep.subr.bf16.mxu0 %v1151
  %1386 = vmatpush1.bf16.msra.mxu0 %v1150
  %1387 = vmatprep.subr.bf16.mxu0 %v1147
  %1388 = vmatpush1.bf16.msra.mxu0 %v1146
  %1389 = vmatprep.subr.bf16.mxu0 %v1143
  %1390 = vmatpush1.bf16.msra.mxu0 %v1142
  %1391 = vmatprep.subr.bf16.mxu0 %v1139
  %1392 = vmatpush1.bf16.msra.mxu0 %v1138
  %1393 = vmatprep.subr.bf16.mxu0 %v1199
  %1394 = vmatpush2.bf16.msra.mxu0 %v1198
  %1395 = vmatprep.subr.bf16.mxu0 %v1195
  %1396 = vmatpush2.bf16.msra.mxu0 %v1194
  %1397 = vmatprep.subr.bf16.mxu0 %v1191
  %1398 = vmatpush2.bf16.msra.mxu0 %v1190
  %1399 = vmatprep.subr.bf16.mxu0 %v1187
  %1400 = vmatpush2.bf16.msra.mxu0 %v1186
  %1401 = vmatprep.subr.bf16.mxu0 %v1183
  %1402 = vmatpush2.bf16.msra.mxu0 %v1182
  %1403 = vmatprep.subr.bf16.mxu0 %v1179
  %1404 = vmatpush2.bf16.msra.mxu0 %v1178
  %1405 = vmatprep.subr.bf16.mxu0 %v1175
  %1406 = vmatpush2.bf16.msra.mxu0 %v1174
  %1407 = vmatprep.subr.bf16.mxu0 %v1171
  %1408 = vmatpush2.bf16.msra.mxu0 %v1170
  %1409 = vmatprep.mubr.bf16.mxu0 %v212
  %1410 = vmatmul.mubr.bf16.gmra.mxu0 %v211
  %v1411 = vpop.f32.mrf.mxu0
  %v1412 = vadd.f32 %v850, %v1411
  %v1413 = vpop.f32.mrf.mxu0
  %v1414 = vadd.f32 %v852, %v1413
  %v1415 = vpop.f32.mrf.mxu0
  %v1416 = vadd.f32 %v854, %v1415
  %v1417 = vpop.f32.mrf.mxu0
  %v1418 = vadd.f32 %v856, %v1417
  %1419 = vmatprep.mubr.bf16.mxu0 %v214
  %1420 = vmatmul.mubr.bf16.gmra.mxu0 %v213
  %v1421 = vpop.f32.mrf.mxu0
  %v1422 = vadd.f32 %v860, %v1421
  %v1423 = vpop.f32.mrf.mxu0
  %v1424 = vadd.f32 %v862, %v1423
  %v1425 = vpop.f32.mrf.mxu0
  %v1426 = vadd.f32 %v864, %v1425
  %v1427 = vpop.f32.mrf.mxu0
  %v1428 = vadd.f32 %v866, %v1427
  %1429 = vmatprep.mubr.bf16.mxu0 %v216
  %1430 = vmatmul.mubr.bf16.gmra.mxu0 %v215
  %v1431 = vpop.f32.mrf.mxu0
  %v1432 = vadd.f32 %v870, %v1431
  %v1433 = vpop.f32.mrf.mxu0
  %v1434 = vadd.f32 %v872, %v1433
  %v1435 = vpop.f32.mrf.mxu0
  %v1436 = vadd.f32 %v874, %v1435
  %v1437 = vpop.f32.mrf.mxu0
  %v1438 = vadd.f32 %v876, %v1437
  %1439 = vmatprep.mubr.bf16.mxu0 %v218
  %1440 = vmatmul.mubr.bf16.gmra.mxu0 %v217
  %v1441 = vpop.f32.mrf.mxu0
  %v1442 = vadd.f32 %v880, %v1441
  %v1443 = vpop.f32.mrf.mxu0
  %v1444 = vadd.f32 %v882, %v1443
  %v1445 = vpop.f32.mrf.mxu0
  %v1446 = vadd.f32 %v884, %v1445
  %v1447 = vpop.f32.mrf.mxu0
  %v1448 = vadd.f32 %v886, %v1447
  %1449 = vmatprep.mubr.bf16.mxu0 %v220
  %1450 = vmatmul.mubr.bf16.gmra.mxu0 %v219
  %v1451 = vpop.f32.mrf.mxu0
  %v1452 = vadd.f32 %v890, %v1451
  %v1453 = vpop.f32.mrf.mxu0
  %v1454 = vadd.f32 %v892, %v1453
  %v1455 = vpop.f32.mrf.mxu0
  %v1456 = vadd.f32 %v894, %v1455
  %v1457 = vpop.f32.mrf.mxu0
  %v1458 = vadd.f32 %v896, %v1457
  %1459 = vmatprep.mubr.bf16.mxu0 %v222
  %1460 = vmatmul.mubr.bf16.gmra.mxu0 %v221
  %v1461 = vpop.f32.mrf.mxu0
  %v1462 = vadd.f32 %v900, %v1461
  %v1463 = vpop.f32.mrf.mxu0
  %v1464 = vadd.f32 %v902, %v1463
  %v1465 = vpop.f32.mrf.mxu0
  %v1466 = vadd.f32 %v904, %v1465
  %v1467 = vpop.f32.mrf.mxu0
  %v1468 = vadd.f32 %v906, %v1467
  %1469 = vmatprep.mubr.bf16.mxu0 %v224
  %1470 = vmatmul.mubr.bf16.gmra.mxu0 %v223
  %v1471 = vpop.f32.mrf.mxu0
  %v1472 = vadd.f32 %v910, %v1471
  %v1473 = vpop.f32.mrf.mxu0
  %v1474 = vadd.f32 %v912, %v1473
  %v1475 = vpop.f32.mrf.mxu0
  %v1476 = vadd.f32 %v914, %v1475
  %v1477 = vpop.f32.mrf.mxu0
  %v1478 = vadd.f32 %v916, %v1477
  %1479 = vmatprep.mubr.bf16.mxu0 %v226
  %1480 = vmatmul.mubr.bf16.gmra.mxu0 %v225
  %v1481 = vpop.f32.mrf.mxu0
  %v1482 = vadd.f32 %v920, %v1481
  %v1483 = vpop.f32.mrf.mxu0
  %v1484 = vadd.f32 %v922, %v1483
  %v1485 = vpop.f32.mrf.mxu0
  %v1486 = vadd.f32 %v924, %v1485
  %v1487 = vpop.f32.mrf.mxu0
  %v1488 = vadd.f32 %v926, %v1487
  %1489 = vdwg.mxu0
  %v1490 = vld [vmem:[%s0] sm:$0xee]
  %s1491 = scalar_lea.vmem %s1, 1024
  %v1492 = vld [vmem:[%s1491] sm:$0xff]
  %v1493 = vld [vmem:[%s1491 + $0x8] sm:$0xff]
  %v1494 = vld [vmem:[%s1491 + $0x10] sm:$0xff]
  %v1495 = vld [vmem:[%s1491 + $0x18] sm:$0xff]
  %v1496 = vld [vmem:[%s1491 + $0x20] sm:$0xff]
  %v1497 = vld [vmem:[%s1491 + $0x28] sm:$0xff]
  %v1498 = vld [vmem:[%s1491 + $0x30] sm:$0xff]
  %v1499 = vld [vmem:[%s1491 + $0x38] sm:$0xff]
  %v1500 = vld [vmem:[%s1491 + $0x40] sm:$0xff]
  %v1501 = vld [vmem:[%s1491 + $0x48] sm:$0xff]
  %v1502 = vld [vmem:[%s1491 + $0x50] sm:$0xff]
  %v1503 = vld [vmem:[%s1491 + $0x58] sm:$0xff]
  %v1504 = vld [vmem:[%s1491 + $0x60] sm:$0xff]
  %v1505 = vld [vmem:[%s1491 + $0x68] sm:$0xff]
  %v1506 = vld [vmem:[%s1491 + $0x70] sm:$0xff]
  %v1507 = vld [vmem:[%s1491 + $0x78] sm:$0xff]
  %v1508 = vld [vmem:[%s1491 + $0x80] sm:$0xff]
  %v1509 = vld [vmem:[%s1491 + $0x88] sm:$0xff]
  %v1510 = vld [vmem:[%s1491 + $0x90] sm:$0xff]
  %v1511 = vld [vmem:[%s1491 + $0x98] sm:$0xff]
  %v1512 = vld [vmem:[%s1491 + $0xa0] sm:$0xff]
  %v1513 = vld [vmem:[%s1491 + $0xa8] sm:$0xff]
  %v1514 = vld [vmem:[%s1491 + $0xb0] sm:$0xff]
  %v1515 = vld [vmem:[%s1491 + $0xb8] sm:$0xff]
  %v1516 = vld [vmem:[%s1491 + $0xc0] sm:$0xff]
  %v1517 = vld [vmem:[%s1491 + $0xc8] sm:$0xff]
  %v1518 = vld [vmem:[%s1491 + $0xd0] sm:$0xff]
  %v1519 = vld [vmem:[%s1491 + $0xd8] sm:$0xff]
  %v1520 = vld [vmem:[%s1491 + $0xe0] sm:$0xff]
  %v1521 = vld [vmem:[%s1491 + $0xe8] sm:$0xff]
  %v1522 = vld [vmem:[%s1491 + $0xf0] sm:$0xff]
  %v1523 = vld [vmem:[%s1491 + $0xf8] sm:$0xff]
  %v1524 = vld [vmem:[%s1491 + $0x100] sm:$0xff]
  %v1525 = vld [vmem:[%s1491 + $0x108] sm:$0xff]
  %v1526 = vld [vmem:[%s1491 + $0x110] sm:$0xff]
  %v1527 = vld [vmem:[%s1491 + $0x118] sm:$0xff]
  %v1528 = vld [vmem:[%s1491 + $0x120] sm:$0xff]
  %v1529 = vld [vmem:[%s1491 + $0x128] sm:$0xff]
  %v1530 = vld [vmem:[%s1491 + $0x130] sm:$0xff]
  %v1531 = vld [vmem:[%s1491 + $0x138] sm:$0xff]
  %v1532 = vld [vmem:[%s1491 + $0x140] sm:$0xff]
  %v1533 = vld [vmem:[%s1491 + $0x148] sm:$0xff]
  %v1534 = vld [vmem:[%s1491 + $0x150] sm:$0xff]
  %v1535 = vld [vmem:[%s1491 + $0x158] sm:$0xff]
  %v1536 = vld [vmem:[%s1491 + $0x160] sm:$0xff]
  %v1537 = vld [vmem:[%s1491 + $0x168] sm:$0xff]
  %v1538 = vld [vmem:[%s1491 + $0x170] sm:$0xff]
  %v1539 = vld [vmem:[%s1491 + $0x178] sm:$0xff]
  %v1540 = vld [vmem:[%s1491 + $0x180] sm:$0xff]
  %v1541 = vld [vmem:[%s1491 + $0x188] sm:$0xff]
  %v1542 = vld [vmem:[%s1491 + $0x190] sm:$0xff]
  %v1543 = vld [vmem:[%s1491 + $0x198] sm:$0xff]
  %v1544 = vld [vmem:[%s1491 + $0x1a0] sm:$0xff]
  %v1545 = vld [vmem:[%s1491 + $0x1a8] sm:$0xff]
  %v1546 = vld [vmem:[%s1491 + $0x1b0] sm:$0xff]
  %v1547 = vld [vmem:[%s1491 + $0x1b8] sm:$0xff]
  %v1548 = vld [vmem:[%s1491 + $0x1c0] sm:$0xff]
  %v1549 = vld [vmem:[%s1491 + $0x1c8] sm:$0xff]
  %v1550 = vld [vmem:[%s1491 + $0x1d0] sm:$0xff]
  %v1551 = vld [vmem:[%s1491 + $0x1d8] sm:$0xff]
  %v1552 = vld [vmem:[%s1491 + $0x1e0] sm:$0xff]
  %v1553 = vld [vmem:[%s1491 + $0x1e8] sm:$0xff]
  %v1554 = vld [vmem:[%s1491 + $0x1f0] sm:$0xff]
  %v1555 = vld [vmem:[%s1491 + $0x1f8] sm:$0xff]
  %v1557 = vunpack.c.l.b16 %v1490
  %v1558 = vunpack.c.h.b16 %v1490
  %v1559 = vpack.c.b16 %v179, %v1557
  %v1560 = vpack.c.b16 %v180, %v1558
  %vm1561 = vcmask 1046528
  %v1562 = vrot.slane %v1559, 1
  %v1563 = vrot.slane %v213, 1
  %v1564 = vsel %vm1561, %v1562, %v1563
  %v1565 = vrot.slane %v1560, 1
  %v1566 = vrot.slane %v214, 1
  %v1567 = vsel %vm1561, %v1565, %v1566
  %v1568 = vrot.slane %v215, 1
  %v1569 = vsel %vm1561, %v1563, %v1568
  %v1570 = vrot.slane %v216, 1
  %v1571 = vsel %vm1561, %v1566, %v1570
  %v1572 = vrot.slane %v217, 1
  %v1573 = vsel %vm1561, %v1568, %v1572
  %v1574 = vrot.slane %v218, 1
  %v1575 = vsel %vm1561, %v1570, %v1574
  %v1576 = vrot.slane %v219, 1
  %v1577 = vsel %vm1561, %v1572, %v1576
  %v1578 = vrot.slane %v220, 1
  %v1579 = vsel %vm1561, %v1574, %v1578
  %v1580 = vrot.slane %v221, 1
  %v1581 = vsel %vm1561, %v1576, %v1580
  %v1582 = vrot.slane %v222, 1
  %v1583 = vsel %vm1561, %v1578, %v1582
  %v1584 = vrot.slane %v223, 1
  %v1585 = vsel %vm1561, %v1580, %v1584
  %v1586 = vrot.slane %v224, 1
  %v1587 = vsel %vm1561, %v1582, %v1586
  %v1588 = vrot.slane %v225, 1
  %v1589 = vsel %vm1561, %v1584, %v1588
  %v1590 = vrot.slane %v226, 1
  %v1591 = vsel %vm1561, %v1586, %v1590
  %v1592 = vrot.slane %v227, 1
  %v1593 = vsel %vm1561, %v1588, %v1592
  %v1594 = vrot.slane %v228, 1
  %v1595 = vsel %vm1561, %v1590, %v1594
  %v1676 = vunpack.c.l.b16 %v1492
  %v1677 = vunpack.c.h.b16 %v1492
  %v1678 = vunpack.c.l.b16 %v1493
  %v1679 = vunpack.c.h.b16 %v1493
  %v1680 = vunpack.c.l.b16 %v1494
  %v1681 = vunpack.c.h.b16 %v1494
  %v1682 = vunpack.c.l.b16 %v1495
  %v1683 = vunpack.c.h.b16 %v1495
  %v1684 = vunpack.c.l.b16 %v1496
  %v1685 = vunpack.c.h.b16 %v1496
  %v1686 = vunpack.c.l.b16 %v1497
  %v1687 = vunpack.c.h.b16 %v1497
  %v1688 = vunpack.c.l.b16 %v1498
  %v1689 = vunpack.c.h.b16 %v1498
  %v1690 = vunpack.c.l.b16 %v1499
  %v1691 = vunpack.c.h.b16 %v1499
  %v1692 = vunpack.c.l.b16 %v1500
  %v1693 = vunpack.c.h.b16 %v1500
  %v1694 = vunpack.c.l.b16 %v1501
  %v1695 = vunpack.c.h.b16 %v1501
  %v1696 = vunpack.c.l.b16 %v1502
  %v1697 = vunpack.c.h.b16 %v1502
  %v1698 = vunpack.c.l.b16 %v1503
  %v1699 = vunpack.c.h.b16 %v1503
  %v1700 = vunpack.c.l.b16 %v1504
  %v1701 = vunpack.c.h.b16 %v1504
  %v1702 = vunpack.c.l.b16 %v1505
  %v1703 = vunpack.c.h.b16 %v1505
  %v1704 = vunpack.c.l.b16 %v1506
  %v1705 = vunpack.c.h.b16 %v1506
  %v1706 = vunpack.c.l.b16 %v1507
  %v1707 = vunpack.c.h.b16 %v1507
  %v1708 = vunpack.c.l.b16 %v1508
  %v1709 = vunpack.c.h.b16 %v1508
  %v1710 = vunpack.c.l.b16 %v1509
  %v1711 = vunpack.c.h.b16 %v1509
  %v1712 = vunpack.c.l.b16 %v1510
  %v1713 = vunpack.c.h.b16 %v1510
  %v1714 = vunpack.c.l.b16 %v1511
  %v1715 = vunpack.c.h.b16 %v1511
  %v1716 = vunpack.c.l.b16 %v1512
  %v1717 = vunpack.c.h.b16 %v1512
  %v1718 = vunpack.c.l.b16 %v1513
  %v1719 = vunpack.c.h.b16 %v1513
  %v1720 = vunpack.c.l.b16 %v1514
  %v1721 = vunpack.c.h.b16 %v1514
  %v1722 = vunpack.c.l.b16 %v1515
  %v1723 = vunpack.c.h.b16 %v1515
  %v1724 = vunpack.c.l.b16 %v1516
  %v1725 = vunpack.c.h.b16 %v1516
  %v1726 = vunpack.c.l.b16 %v1517
  %v1727 = vunpack.c.h.b16 %v1517
  %v1728 = vunpack.c.l.b16 %v1518
  %v1729 = vunpack.c.h.b16 %v1518
  %v1730 = vunpack.c.l.b16 %v1519
  %v1731 = vunpack.c.h.b16 %v1519
  %v1732 = vunpack.c.l.b16 %v1520
  %v1733 = vunpack.c.h.b16 %v1520
  %v1734 = vunpack.c.l.b16 %v1521
  %v1735 = vunpack.c.h.b16 %v1521
  %v1736 = vunpack.c.l.b16 %v1522
  %v1737 = vunpack.c.h.b16 %v1522
  %v1738 = vunpack.c.l.b16 %v1523
  %v1739 = vunpack.c.h.b16 %v1523
  %v1740 = vunpack.c.l.b16 %v1524
  %v1741 = vunpack.c.h.b16 %v1524
  %v1742 = vunpack.c.l.b16 %v1525
  %v1743 = vunpack.c.h.b16 %v1525
  %v1744 = vunpack.c.l.b16 %v1526
  %v1745 = vunpack.c.h.b16 %v1526
  %v1746 = vunpack.c.l.b16 %v1527
  %v1747 = vunpack.c.h.b16 %v1527
  %v1748 = vunpack.c.l.b16 %v1528
  %v1749 = vunpack.c.h.b16 %v1528
  %v1750 = vunpack.c.l.b16 %v1529
  %v1751 = vunpack.c.h.b16 %v1529
  %v1752 = vunpack.c.l.b16 %v1530
  %v1753 = vunpack.c.h.b16 %v1530
  %v1754 = vunpack.c.l.b16 %v1531
  %v1755 = vunpack.c.h.b16 %v1531
  %v1756 = vunpack.c.l.b16 %v1532
  %v1757 = vunpack.c.h.b16 %v1532
  %v1758 = vunpack.c.l.b16 %v1533
  %v1759 = vunpack.c.h.b16 %v1533
  %v1760 = vunpack.c.l.b16 %v1534
  %v1761 = vunpack.c.h.b16 %v1534
  %v1762 = vunpack.c.l.b16 %v1535
  %v1763 = vunpack.c.h.b16 %v1535
  %v1764 = vunpack.c.l.b16 %v1536
  %v1765 = vunpack.c.h.b16 %v1536
  %v1766 = vunpack.c.l.b16 %v1537
  %v1767 = vunpack.c.h.b16 %v1537
  %v1768 = vunpack.c.l.b16 %v1538
  %v1769 = vunpack.c.h.b16 %v1538
  %v1770 = vunpack.c.l.b16 %v1539
  %v1771 = vunpack.c.h.b16 %v1539
  %v1772 = vunpack.c.l.b16 %v1540
  %v1773 = vunpack.c.h.b16 %v1540
  %v1774 = vunpack.c.l.b16 %v1541
  %v1775 = vunpack.c.h.b16 %v1541
  %v1776 = vunpack.c.l.b16 %v1542
  %v1777 = vunpack.c.h.b16 %v1542
  %v1778 = vunpack.c.l.b16 %v1543
  %v1779 = vunpack.c.h.b16 %v1543
  %v1780 = vunpack.c.l.b16 %v1544
  %v1781 = vunpack.c.h.b16 %v1544
  %v1782 = vunpack.c.l.b16 %v1545
  %v1783 = vunpack.c.h.b16 %v1545
  %v1784 = vunpack.c.l.b16 %v1546
  %v1785 = vunpack.c.h.b16 %v1546
  %v1786 = vunpack.c.l.b16 %v1547
  %v1787 = vunpack.c.h.b16 %v1547
  %v1788 = vunpack.c.l.b16 %v1548
  %v1789 = vunpack.c.h.b16 %v1548
  %v1790 = vunpack.c.l.b16 %v1549
  %v1791 = vunpack.c.h.b16 %v1549
  %v1792 = vunpack.c.l.b16 %v1550
  %v1793 = vunpack.c.h.b16 %v1550
  %v1794 = vunpack.c.l.b16 %v1551
  %v1795 = vunpack.c.h.b16 %v1551
  %v1796 = vunpack.c.l.b16 %v1552
  %v1797 = vunpack.c.h.b16 %v1552
  %v1798 = vunpack.c.l.b16 %v1553
  %v1799 = vunpack.c.h.b16 %v1553
  %v1800 = vunpack.c.l.b16 %v1554
  %v1801 = vunpack.c.h.b16 %v1554
  %v1802 = vunpack.c.l.b16 %v1555
  %v1803 = vunpack.c.h.b16 %v1555
  %v1804 = vpack.c.b16 %v1680, %v1676
  %v1805 = vpack.c.b16 %v1681, %v1677
  %v1806 = vpack.c.b16 %v1682, %v1678
  %v1807 = vpack.c.b16 %v1683, %v1679
  %v1808 = vpack.c.b16 %v1688, %v1684
  %v1809 = vpack.c.b16 %v1689, %v1685
  %v1810 = vpack.c.b16 %v1690, %v1686
  %v1811 = vpack.c.b16 %v1691, %v1687
  %v1812 = vpack.c.b16 %v1696, %v1692
  %v1813 = vpack.c.b16 %v1697, %v1693
  %v1814 = vpack.c.b16 %v1698, %v1694
  %v1815 = vpack.c.b16 %v1699, %v1695
  %v1816 = vpack.c.b16 %v1704, %v1700
  %v1817 = vpack.c.b16 %v1705, %v1701
  %v1818 = vpack.c.b16 %v1706, %v1702
  %v1819 = vpack.c.b16 %v1707, %v1703
  %v1820 = vpack.c.b16 %v1712, %v1708
  %v1821 = vpack.c.b16 %v1713, %v1709
  %v1822 = vpack.c.b16 %v1714, %v1710
  %v1823 = vpack.c.b16 %v1715, %v1711
  %v1824 = vpack.c.b16 %v1720, %v1716
  %v1825 = vpack.c.b16 %v1721, %v1717
  %v1826 = vpack.c.b16 %v1722, %v1718
  %v1827 = vpack.c.b16 %v1723, %v1719
  %v1828 = vpack.c.b16 %v1728, %v1724
  %v1829 = vpack.c.b16 %v1729, %v1725
  %v1830 = vpack.c.b16 %v1730, %v1726
  %v1831 = vpack.c.b16 %v1731, %v1727
  %v1832 = vpack.c.b16 %v1736, %v1732
  %v1833 = vpack.c.b16 %v1737, %v1733
  %v1834 = vpack.c.b16 %v1738, %v1734
  %v1835 = vpack.c.b16 %v1739, %v1735
  %v1836 = vpack.c.b16 %v1744, %v1740
  %v1837 = vpack.c.b16 %v1745, %v1741
  %v1838 = vpack.c.b16 %v1746, %v1742
  %v1839 = vpack.c.b16 %v1747, %v1743
  %v1840 = vpack.c.b16 %v1752, %v1748
  %v1841 = vpack.c.b16 %v1753, %v1749
  %v1842 = vpack.c.b16 %v1754, %v1750
  %v1843 = vpack.c.b16 %v1755, %v1751
  %v1844 = vpack.c.b16 %v1760, %v1756
  %v1845 = vpack.c.b16 %v1761, %v1757
  %v1846 = vpack.c.b16 %v1762, %v1758
  %v1847 = vpack.c.b16 %v1763, %v1759
  %v1848 = vpack.c.b16 %v1768, %v1764
  %v1849 = vpack.c.b16 %v1769, %v1765
  %v1850 = vpack.c.b16 %v1770, %v1766
  %v1851 = vpack.c.b16 %v1771, %v1767
  %v1852 = vpack.c.b16 %v1776, %v1772
  %v1853 = vpack.c.b16 %v1777, %v1773
  %v1854 = vpack.c.b16 %v1778, %v1774
  %v1855 = vpack.c.b16 %v1779, %v1775
  %v1856 = vpack.c.b16 %v1784, %v1780
  %v1857 = vpack.c.b16 %v1785, %v1781
  %v1858 = vpack.c.b16 %v1786, %v1782
  %v1859 = vpack.c.b16 %v1787, %v1783
  %v1860 = vpack.c.b16 %v1792, %v1788
  %v1861 = vpack.c.b16 %v1793, %v1789
  %v1862 = vpack.c.b16 %v1794, %v1790
  %v1863 = vpack.c.b16 %v1795, %v1791
  %v1864 = vpack.c.b16 %v1800, %v1796
  %v1865 = vpack.c.b16 %v1801, %v1797
  %v1866 = vpack.c.b16 %v1802, %v1798
  %v1867 = vpack.c.b16 %v1803, %v1799
  %1932 = vmatprep.subr.bf16.mxu0 %v1833
  %1933 = vmatpush1.bf16.msra.mxu0 %v1832
  %1934 = vmatprep.subr.bf16.mxu0 %v1829
  %1935 = vmatpush1.bf16.msra.mxu0 %v1828
  %1936 = vmatprep.subr.bf16.mxu0 %v1825
  %1937 = vmatpush1.bf16.msra.mxu0 %v1824
  %1938 = vmatprep.subr.bf16.mxu0 %v1821
  %1939 = vmatpush1.bf16.msra.mxu0 %v1820
  %1940 = vmatprep.subr.bf16.mxu0 %v1817
  %1941 = vmatpush1.bf16.msra.mxu0 %v1816
  %1942 = vmatprep.subr.bf16.mxu0 %v1813
  %1943 = vmatpush1.bf16.msra.mxu0 %v1812
  %1944 = vmatprep.subr.bf16.mxu0 %v1809
  %1945 = vmatpush1.bf16.msra.mxu0 %v1808
  %1946 = vmatprep.subr.bf16.mxu0 %v1805
  %1947 = vmatpush1.bf16.msra.mxu0 %v1804
  %1948 = vmatprep.subr.bf16.mxu0 %v1865
  %1949 = vmatpush2.bf16.msra.mxu0 %v1864
  %1950 = vmatprep.subr.bf16.mxu0 %v1861
  %1951 = vmatpush2.bf16.msra.mxu0 %v1860
  %1952 = vmatprep.subr.bf16.mxu0 %v1857
  %1953 = vmatpush2.bf16.msra.mxu0 %v1856
  %1954 = vmatprep.subr.bf16.mxu0 %v1853
  %1955 = vmatpush2.bf16.msra.mxu0 %v1852
  %1956 = vmatprep.subr.bf16.mxu0 %v1849
  %1957 = vmatpush2.bf16.msra.mxu0 %v1848
  %1958 = vmatprep.subr.bf16.mxu0 %v1845
  %1959 = vmatpush2.bf16.msra.mxu0 %v1844
  %1960 = vmatprep.subr.bf16.mxu0 %v1841
  %1961 = vmatpush2.bf16.msra.mxu0 %v1840
  %1962 = vmatprep.subr.bf16.mxu0 %v1837
  %1963 = vmatpush2.bf16.msra.mxu0 %v1836
  %1964 = vmatprep.mubr.bf16.mxu0 %v1567
  %1965 = vmatmul.mubr.bf16.gmra.mxu0 %v1564
  %v1966 = vpop.f32.mrf.mxu0
  %v1967 = vadd.f32 0.0, %v1966
  %v1968 = vpop.f32.mrf.mxu0
  %v1969 = vadd.f32 0.0, %v1968
  %v1970 = vpop.f32.mrf.mxu0
  %v1971 = vadd.f32 0.0, %v1970
  %v1972 = vpop.f32.mrf.mxu0
  %v1973 = vadd.f32 0.0, %v1972
  %1974 = vmatprep.mubr.bf16.mxu0 %v1571
  %1975 = vmatmul.mubr.bf16.gmra.mxu0 %v1569
  %v1976 = vpop.f32.mrf.mxu0
  %v1977 = vadd.f32 0.0, %v1976
  %v1978 = vpop.f32.mrf.mxu0
  %v1979 = vadd.f32 0.0, %v1978
  %v1980 = vpop.f32.mrf.mxu0
  %v1981 = vadd.f32 0.0, %v1980
  %v1982 = vpop.f32.mrf.mxu0
  %v1983 = vadd.f32 0.0, %v1982
  %1984 = vmatprep.mubr.bf16.mxu0 %v1575
  %1985 = vmatmul.mubr.bf16.gmra.mxu0 %v1573
  %v1986 = vpop.f32.mrf.mxu0
  %v1987 = vadd.f32 0.0, %v1986
  %v1988 = vpop.f32.mrf.mxu0
  %v1989 = vadd.f32 0.0, %v1988
  %v1990 = vpop.f32.mrf.mxu0
  %v1991 = vadd.f32 0.0, %v1990
  %v1992 = vpop.f32.mrf.mxu0
  %v1993 = vadd.f32 0.0, %v1992
  %1994 = vmatprep.mubr.bf16.mxu0 %v1579
  %1995 = vmatmul.mubr.bf16.gmra.mxu0 %v1577
  %v1996 = vpop.f32.mrf.mxu0
  %v1997 = vadd.f32 0.0, %v1996
  %v1998 = vpop.f32.mrf.mxu0
  %v1999 = vadd.f32 0.0, %v1998
  %v2000 = vpop.f32.mrf.mxu0
  %v2001 = vadd.f32 0.0, %v2000
  %v2002 = vpop.f32.mrf.mxu0
  %v2003 = vadd.f32 0.0, %v2002
  %2004 = vmatprep.mubr.bf16.mxu0 %v1583
  %2005 = vmatmul.mubr.bf16.gmra.mxu0 %v1581
  %v2006 = vpop.f32.mrf.mxu0
  %v2007 = vadd.f32 0.0, %v2006
  %v2008 = vpop.f32.mrf.mxu0
  %v2009 = vadd.f32 0.0, %v2008
  %v2010 = vpop.f32.mrf.mxu0
  %v2011 = vadd.f32 0.0, %v2010
  %v2012 = vpop.f32.mrf.mxu0
  %v2013 = vadd.f32 0.0, %v2012
  %2014 = vmatprep.mubr.bf16.mxu0 %v1587
  %2015 = vmatmul.mubr.bf16.gmra.mxu0 %v1585
  %v2016 = vpop.f32.mrf.mxu0
  %v2017 = vadd.f32 0.0, %v2016
  %v2018 = vpop.f32.mrf.mxu0
  %v2019 = vadd.f32 0.0, %v2018
  %v2020 = vpop.f32.mrf.mxu0
  %v2021 = vadd.f32 0.0, %v2020
  %v2022 = vpop.f32.mrf.mxu0
  %v2023 = vadd.f32 0.0, %v2022
  %2024 = vmatprep.mubr.bf16.mxu0 %v1591
  %2025 = vmatmul.mubr.bf16.gmra.mxu0 %v1589
  %v2026 = vpop.f32.mrf.mxu0
  %v2027 = vadd.f32 0.0, %v2026
  %v2028 = vpop.f32.mrf.mxu0
  %v2029 = vadd.f32 0.0, %v2028
  %v2030 = vpop.f32.mrf.mxu0
  %v2031 = vadd.f32 0.0, %v2030
  %v2032 = vpop.f32.mrf.mxu0
  %v2033 = vadd.f32 0.0, %v2032
  %2034 = vmatprep.mubr.bf16.mxu0 %v1595
  %2035 = vmatmul.mubr.bf16.gmra.mxu0 %v1593
  %v2036 = vpop.f32.mrf.mxu0
  %v2037 = vadd.f32 0.0, %v2036
  %v2038 = vpop.f32.mrf.mxu0
  %v2039 = vadd.f32 0.0, %v2038
  %v2040 = vpop.f32.mrf.mxu0
  %v2041 = vadd.f32 0.0, %v2040
  %v2042 = vpop.f32.mrf.mxu0
  %v2043 = vadd.f32 0.0, %v2042
  %2044 = vdwg.mxu0
  %2045 = vmatprep.subr.bf16.mxu0 %v1835
  %2046 = vmatpush1.bf16.msra.mxu0 %v1834
  %2047 = vmatprep.subr.bf16.mxu0 %v1831
  %2048 = vmatpush1.bf16.msra.mxu0 %v1830
  %2049 = vmatprep.subr.bf16.mxu0 %v1827
  %2050 = vmatpush1.bf16.msra.mxu0 %v1826
  %2051 = vmatprep.subr.bf16.mxu0 %v1823
  %2052 = vmatpush1.bf16.msra.mxu0 %v1822
  %2053 = vmatprep.subr.bf16.mxu0 %v1819
  %2054 = vmatpush1.bf16.msra.mxu0 %v1818
  %2055 = vmatprep.subr.bf16.mxu0 %v1815
  %2056 = vmatpush1.bf16.msra.mxu0 %v1814
  %2057 = vmatprep.subr.bf16.mxu0 %v1811
  %2058 = vmatpush1.bf16.msra.mxu0 %v1810
  %2059 = vmatprep.subr.bf16.mxu0 %v1807
  %2060 = vmatpush1.bf16.msra.mxu0 %v1806
  %2061 = vmatprep.subr.bf16.mxu0 %v1867
  %2062 = vmatpush2.bf16.msra.mxu0 %v1866
  %2063 = vmatprep.subr.bf16.mxu0 %v1863
  %2064 = vmatpush2.bf16.msra.mxu0 %v1862
  %2065 = vmatprep.subr.bf16.mxu0 %v1859
  %2066 = vmatpush2.bf16.msra.mxu0 %v1858
  %2067 = vmatprep.subr.bf16.mxu0 %v1855
  %2068 = vmatpush2.bf16.msra.mxu0 %v1854
  %2069 = vmatprep.subr.bf16.mxu0 %v1851
  %2070 = vmatpush2.bf16.msra.mxu0 %v1850
  %2071 = vmatprep.subr.bf16.mxu0 %v1847
  %2072 = vmatpush2.bf16.msra.mxu0 %v1846
  %2073 = vmatprep.subr.bf16.mxu0 %v1843
  %2074 = vmatpush2.bf16.msra.mxu0 %v1842
  %2075 = vmatprep.subr.bf16.mxu0 %v1839
  %2076 = vmatpush2.bf16.msra.mxu0 %v1838
  %2077 = vmatprep.mubr.bf16.mxu0 %v1567
  %2078 = vmatmul.mubr.bf16.gmra.mxu0 %v1564
  %v2079 = vpop.f32.mrf.mxu0
  %v2080 = vadd.f32 0.0, %v2079
  %v2081 = vpop.f32.mrf.mxu0
  %v2082 = vadd.f32 0.0, %v2081
  %v2083 = vpop.f32.mrf.mxu0
  %v2084 = vadd.f32 0.0, %v2083
  %v2085 = vpop.f32.mrf.mxu0
  %v2086 = vadd.f32 0.0, %v2085
  %2087 = vmatprep.mubr.bf16.mxu0 %v1571
  %2088 = vmatmul.mubr.bf16.gmra.mxu0 %v1569
  %v2089 = vpop.f32.mrf.mxu0
  %v2090 = vadd.f32 0.0, %v2089
  %v2091 = vpop.f32.mrf.mxu0
  %v2092 = vadd.f32 0.0, %v2091
  %v2093 = vpop.f32.mrf.mxu0
  %v2094 = vadd.f32 0.0, %v2093
  %v2095 = vpop.f32.mrf.mxu0
  %v2096 = vadd.f32 0.0, %v2095
  %2097 = vmatprep.mubr.bf16.mxu0 %v1575
  %2098 = vmatmul.mubr.bf16.gmra.mxu0 %v1573
  %v2099 = vpop.f32.mrf.mxu0
  %v2100 = vadd.f32 0.0, %v2099
  %v2101 = vpop.f32.mrf.mxu0
  %v2102 = vadd.f32 0.0, %v2101
  %v2103 = vpop.f32.mrf.mxu0
  %v2104 = vadd.f32 0.0, %v2103
  %v2105 = vpop.f32.mrf.mxu0
  %v2106 = vadd.f32 0.0, %v2105
  %2107 = vmatprep.mubr.bf16.mxu0 %v1579
  %2108 = vmatmul.mubr.bf16.gmra.mxu0 %v1577
  %v2109 = vpop.f32.mrf.mxu0
  %v2110 = vadd.f32 0.0, %v2109
  %v2111 = vpop.f32.mrf.mxu0
  %v2112 = vadd.f32 0.0, %v2111
  %v2113 = vpop.f32.mrf.mxu0
  %v2114 = vadd.f32 0.0, %v2113
  %v2115 = vpop.f32.mrf.mxu0
  %v2116 = vadd.f32 0.0, %v2115
  %2117 = vmatprep.mubr.bf16.mxu0 %v1583
  %2118 = vmatmul.mubr.bf16.gmra.mxu0 %v1581
  %v2119 = vpop.f32.mrf.mxu0
  %v2120 = vadd.f32 0.0, %v2119
  %v2121 = vpop.f32.mrf.mxu0
  %v2122 = vadd.f32 0.0, %v2121
  %v2123 = vpop.f32.mrf.mxu0
  %v2124 = vadd.f32 0.0, %v2123
  %v2125 = vpop.f32.mrf.mxu0
  %v2126 = vadd.f32 0.0, %v2125
  %2127 = vmatprep.mubr.bf16.mxu0 %v1587
  %2128 = vmatmul.mubr.bf16.gmra.mxu0 %v1585
  %v2129 = vpop.f32.mrf.mxu0
  %v2130 = vadd.f32 0.0, %v2129
  %v2131 = vpop.f32.mrf.mxu0
  %v2132 = vadd.f32 0.0, %v2131
  %v2133 = vpop.f32.mrf.mxu0
  %v2134 = vadd.f32 0.0, %v2133
  %v2135 = vpop.f32.mrf.mxu0
  %v2136 = vadd.f32 0.0, %v2135
  %2137 = vmatprep.mubr.bf16.mxu0 %v1591
  %2138 = vmatmul.mubr.bf16.gmra.mxu0 %v1589
  %v2139 = vpop.f32.mrf.mxu0
  %v2140 = vadd.f32 0.0, %v2139
  %v2141 = vpop.f32.mrf.mxu0
  %v2142 = vadd.f32 0.0, %v2141
  %v2143 = vpop.f32.mrf.mxu0
  %v2144 = vadd.f32 0.0, %v2143
  %v2145 = vpop.f32.mrf.mxu0
  %v2146 = vadd.f32 0.0, %v2145
  %2147 = vmatprep.mubr.bf16.mxu0 %v1595
  %2148 = vmatmul.mubr.bf16.gmra.mxu0 %v1593
  %v2149 = vpop.f32.mrf.mxu0
  %v2150 = vadd.f32 0.0, %v2149
  %v2151 = vpop.f32.mrf.mxu0
  %v2152 = vadd.f32 0.0, %v2151
  %v2153 = vpop.f32.mrf.mxu0
  %v2154 = vadd.f32 0.0, %v2153
  %v2155 = vpop.f32.mrf.mxu0
  %v2156 = vadd.f32 0.0, %v2155
  %2157 = vdwg.mxu0
  %v2158 = vadd.f32 %v1299, %v1967
  %v2159 = vadd.f32 %v1301, %v1969
  %v2160 = vadd.f32 %v1412, %v2080
  %v2161 = vadd.f32 %v1414, %v2082
  %v2162 = vadd.f32 %v1303, %v1971
  %v2163 = vadd.f32 %v1305, %v1973
  %v2164 = vadd.f32 %v1416, %v2084
  %v2165 = vadd.f32 %v1418, %v2086
  %v2166 = vadd.f32 %v1309, %v1977
  %v2167 = vadd.f32 %v1311, %v1979
  %v2168 = vadd.f32 %v1422, %v2090
  %v2169 = vadd.f32 %v1424, %v2092
  %v2170 = vadd.f32 %v1313, %v1981
  %v2171 = vadd.f32 %v1315, %v1983
  %v2172 = vadd.f32 %v1426, %v2094
  %v2173 = vadd.f32 %v1428, %v2096
  %v2174 = vadd.f32 %v1319, %v1987
  %v2175 = vadd.f32 %v1321, %v1989
  %v2176 = vadd.f32 %v1432, %v2100
  %v2177 = vadd.f32 %v1434, %v2102
  %v2178 = vadd.f32 %v1323, %v1991
  %v2179 = vadd.f32 %v1325, %v1993
  %v2180 = vadd.f32 %v1436, %v2104
  %v2181 = vadd.f32 %v1438, %v2106
  %v2182 = vadd.f32 %v1329, %v1997
  %v2183 = vadd.f32 %v1331, %v1999
  %v2184 = vadd.f32 %v1442, %v2110
  %v2185 = vadd.f32 %v1444, %v2112
  %v2186 = vadd.f32 %v1333, %v2001
  %v2187 = vadd.f32 %v1335, %v2003
  %v2188 = vadd.f32 %v1446, %v2114
  %v2189 = vadd.f32 %v1448, %v2116
  %v2190 = vadd.f32 %v1339, %v2007
  %v2191 = vadd.f32 %v1341, %v2009
  %v2192 = vadd.f32 %v1452, %v2120
  %v2193 = vadd.f32 %v1454, %v2122
  %v2194 = vadd.f32 %v1343, %v2011
  %v2195 = vadd.f32 %v1345, %v2013
  %v2196 = vadd.f32 %v1456, %v2124
  %v2197 = vadd.f32 %v1458, %v2126
  %v2198 = vadd.f32 %v1349, %v2017
  %v2199 = vadd.f32 %v1351, %v2019
  %v2200 = vadd.f32 %v1462, %v2130
  %v2201 = vadd.f32 %v1464, %v2132
  %v2202 = vadd.f32 %v1353, %v2021
  %v2203 = vadd.f32 %v1355, %v2023
  %v2204 = vadd.f32 %v1466, %v2134
  %v2205 = vadd.f32 %v1468, %v2136
  %v2206 = vadd.f32 %v1359, %v2027
  %v2207 = vadd.f32 %v1361, %v2029
  %v2208 = vadd.f32 %v1472, %v2140
  %v2209 = vadd.f32 %v1474, %v2142
  %v2210 = vadd.f32 %v1363, %v2031
  %v2211 = vadd.f32 %v1365, %v2033
  %v2212 = vadd.f32 %v1476, %v2144
  %v2213 = vadd.f32 %v1478, %v2146
  %v2214 = vadd.f32 %v1369, %v2037
  %v2215 = vadd.f32 %v1371, %v2039
  %v2216 = vadd.f32 %v1482, %v2150
  %v2217 = vadd.f32 %v1484, %v2152
  %v2218 = vadd.f32 %v1373, %v2041
  %v2219 = vadd.f32 %v1375, %v2043
  %v2220 = vadd.f32 %v1486, %v2154
  %v2221 = vadd.f32 %v1488, %v2156
  %v2222 = vld [vmem:[%s2] sm:$0xf]
  %v2224 = vlaneseq
  %v2225 = vshrl.u32 %v2224, 7
  %v2226 = vsub.s32 0, %v2225
  %v2227 = vrot.slane %v2222, %v2226
  %v2228 = vlaneseq
  %v2229 = vshrl.u32 %v2228, 7
  %v2230 = vsub.s32 1, %v2229
  %v2231 = vrot.slane %v2222, %v2230
  %v2232 = vlaneseq
  %v2233 = vshrl.u32 %v2232, 7
  %v2234 = vsub.s32 2, %v2233
  %v2235 = vrot.slane %v2222, %v2234
  %v2236 = vlaneseq
  %v2237 = vshrl.u32 %v2236, 7
  %v2238 = vsub.s32 3, %v2237
  %v2239 = vrot.slane %v2222, %v2238
  %v2244 = vadd.f32 %v2158, %v2227
  %v2245 = vadd.f32 %v2159, %v2231
  %v2246 = vadd.f32 %v2160, %v2235
  %v2247 = vadd.f32 %v2161, %v2239
  %v2248 = vadd.f32 %v2162, %v2227
  %v2249 = vadd.f32 %v2163, %v2231
  %v2250 = vadd.f32 %v2164, %v2235
  %v2251 = vadd.f32 %v2165, %v2239
  %v2252 = vadd.f32 %v2166, %v2227
  %v2253 = vadd.f32 %v2167, %v2231
  %v2254 = vadd.f32 %v2168, %v2235
  %v2255 = vadd.f32 %v2169, %v2239
  %v2256 = vadd.f32 %v2170, %v2227
  %v2257 = vadd.f32 %v2171, %v2231
  %v2258 = vadd.f32 %v2172, %v2235
  %v2259 = vadd.f32 %v2173, %v2239
  %v2260 = vadd.f32 %v2174, %v2227
  %v2261 = vadd.f32 %v2175, %v2231
  %v2262 = vadd.f32 %v2176, %v2235
  %v2263 = vadd.f32 %v2177, %v2239
  %v2264 = vadd.f32 %v2178, %v2227
  %v2265 = vadd.f32 %v2179, %v2231
  %v2266 = vadd.f32 %v2180, %v2235
  %v2267 = vadd.f32 %v2181, %v2239
  %v2268 = vadd.f32 %v2182, %v2227
  %v2269 = vadd.f32 %v2183, %v2231
  %v2270 = vadd.f32 %v2184, %v2235
  %v2271 = vadd.f32 %v2185, %v2239
  %v2272 = vadd.f32 %v2186, %v2227
  %v2273 = vadd.f32 %v2187, %v2231
  %v2274 = vadd.f32 %v2188, %v2235
  %v2275 = vadd.f32 %v2189, %v2239
  %v2276 = vadd.f32 %v2190, %v2227
  %v2277 = vadd.f32 %v2191, %v2231
  %v2278 = vadd.f32 %v2192, %v2235
  %v2279 = vadd.f32 %v2193, %v2239
  %v2280 = vadd.f32 %v2194, %v2227
  %v2281 = vadd.f32 %v2195, %v2231
  %v2282 = vadd.f32 %v2196, %v2235
  %v2283 = vadd.f32 %v2197, %v2239
  %v2284 = vadd.f32 %v2198, %v2227
  %v2285 = vadd.f32 %v2199, %v2231
  %v2286 = vadd.f32 %v2200, %v2235
  %v2287 = vadd.f32 %v2201, %v2239
  %v2288 = vadd.f32 %v2202, %v2227
  %v2289 = vadd.f32 %v2203, %v2231
  %v2290 = vadd.f32 %v2204, %v2235
  %v2291 = vadd.f32 %v2205, %v2239
  %v2292 = vadd.f32 %v2206, %v2227
  %v2293 = vadd.f32 %v2207, %v2231
  %v2294 = vadd.f32 %v2208, %v2235
  %v2295 = vadd.f32 %v2209, %v2239
  %v2296 = vadd.f32 %v2210, %v2227
  %v2297 = vadd.f32 %v2211, %v2231
  %v2298 = vadd.f32 %v2212, %v2235
  %v2299 = vadd.f32 %v2213, %v2239
  %v2300 = vadd.f32 %v2214, %v2227
  %v2301 = vadd.f32 %v2215, %v2231
  %v2302 = vadd.f32 %v2216, %v2235
  %v2303 = vadd.f32 %v2217, %v2239
  %v2304 = vadd.f32 %v2218, %v2227
  %v2305 = vadd.f32 %v2219, %v2231
  %v2306 = vadd.f32 %v2220, %v2235
  %v2307 = vadd.f32 %v2221, %v2239
  %v2308 = vmax.f32 %v2244, 0.0
  %v2309 = vmax.f32 %v2245, 0.0
  %v2310 = vmax.f32 %v2246, 0.0
  %v2311 = vmax.f32 %v2247, 0.0
  %v2312 = vmax.f32 %v2248, 0.0
  %v2313 = vmax.f32 %v2249, 0.0
  %v2314 = vmax.f32 %v2250, 0.0
  %v2315 = vmax.f32 %v2251, 0.0
  %v2316 = vmax.f32 %v2252, 0.0
  %v2317 = vmax.f32 %v2253, 0.0
  %v2318 = vmax.f32 %v2254, 0.0
  %v2319 = vmax.f32 %v2255, 0.0
  %v2320 = vmax.f32 %v2256, 0.0
  %v2321 = vmax.f32 %v2257, 0.0
  %v2322 = vmax.f32 %v2258, 0.0
  %v2323 = vmax.f32 %v2259, 0.0
  %v2324 = vmax.f32 %v2260, 0.0
  %v2325 = vmax.f32 %v2261, 0.0
  %v2326 = vmax.f32 %v2262, 0.0
  %v2327 = vmax.f32 %v2263, 0.0
  %v2328 = vmax.f32 %v2264, 0.0
  %v2329 = vmax.f32 %v2265, 0.0
  %v2330 = vmax.f32 %v2266, 0.0
  %v2331 = vmax.f32 %v2267, 0.0
  %v2332 = vmax.f32 %v2268, 0.0
  %v2333 = vmax.f32 %v2269, 0.0
  %v2334 = vmax.f32 %v2270, 0.0
  %v2335 = vmax.f32 %v2271, 0.0
  %v2336 = vmax.f32 %v2272, 0.0
  %v2337 = vmax.f32 %v2273, 0.0
  %v2338 = vmax.f32 %v2274, 0.0
  %v2339 = vmax.f32 %v2275, 0.0
  %v2340 = vmax.f32 %v2276, 0.0
  %v2341 = vmax.f32 %v2277, 0.0
  %v2342 = vmax.f32 %v2278, 0.0
  %v2343 = vmax.f32 %v2279, 0.0
  %v2344 = vmax.f32 %v2280, 0.0
  %v2345 = vmax.f32 %v2281, 0.0
  %v2346 = vmax.f32 %v2282, 0.0
  %v2347 = vmax.f32 %v2283, 0.0
  %v2348 = vmax.f32 %v2284, 0.0
  %v2349 = vmax.f32 %v2285, 0.0
  %v2350 = vmax.f32 %v2286, 0.0
  %v2351 = vmax.f32 %v2287, 0.0
  %v2352 = vmax.f32 %v2288, 0.0
  %v2353 = vmax.f32 %v2289, 0.0
  %v2354 = vmax.f32 %v2290, 0.0
  %v2355 = vmax.f32 %v2291, 0.0
  %v2356 = vmax.f32 %v2292, 0.0
  %v2357 = vmax.f32 %v2293, 0.0
  %v2358 = vmax.f32 %v2294, 0.0
  %v2359 = vmax.f32 %v2295, 0.0
  %v2360 = vmax.f32 %v2296, 0.0
  %v2361 = vmax.f32 %v2297, 0.0
  %v2362 = vmax.f32 %v2298, 0.0
  %v2363 = vmax.f32 %v2299, 0.0
  %v2364 = vmax.f32 %v2300, 0.0
  %v2365 = vmax.f32 %v2301, 0.0
  %v2366 = vmax.f32 %v2302, 0.0
  %v2367 = vmax.f32 %v2303, 0.0
  %v2368 = vmax.f32 %v2304, 0.0
  %v2369 = vmax.f32 %v2305, 0.0
  %v2370 = vmax.f32 %v2306, 0.0
  %v2371 = vmax.f32 %v2307, 0.0
  %v2372 = vpack.c.bf16 %v2312, %v2308
  %v2373 = vpack.c.bf16 %v2313, %v2309
  %v2374 = vpack.c.bf16 %v2314, %v2310
  %v2375 = vpack.c.bf16 %v2315, %v2311
  %v2376 = vpack.c.bf16 %v2320, %v2316
  %v2377 = vpack.c.bf16 %v2321, %v2317
  %v2378 = vpack.c.bf16 %v2322, %v2318
  %v2379 = vpack.c.bf16 %v2323, %v2319
  %v2380 = vpack.c.bf16 %v2328, %v2324
  %v2381 = vpack.c.bf16 %v2329, %v2325
  %v2382 = vpack.c.bf16 %v2330, %v2326
  %v2383 = vpack.c.bf16 %v2331, %v2327
  %v2384 = vpack.c.bf16 %v2336, %v2332
  %v2385 = vpack.c.bf16 %v2337, %v2333
  %v2386 = vpack.c.bf16 %v2338, %v2334
  %v2387 = vpack.c.bf16 %v2339, %v2335
  %v2388 = vpack.c.bf16 %v2344, %v2340
  %v2389 = vpack.c.bf16 %v2345, %v2341
  %v2390 = vpack.c.bf16 %v2346, %v2342
  %v2391 = vpack.c.bf16 %v2347, %v2343
  %v2392 = vpack.c.bf16 %v2352, %v2348
  %v2393 = vpack.c.bf16 %v2353, %v2349
  %v2394 = vpack.c.bf16 %v2354, %v2350
  %v2395 = vpack.c.bf16 %v2355, %v2351
  %v2396 = vpack.c.bf16 %v2360, %v2356
  %v2397 = vpack.c.bf16 %v2361, %v2357
  %v2398 = vpack.c.bf16 %v2362, %v2358
  %v2399 = vpack.c.bf16 %v2363, %v2359
  %v2400 = vpack.c.bf16 %v2368, %v2364
  %v2401 = vpack.c.bf16 %v2369, %v2365
  %v2402 = vpack.c.bf16 %v2370, %v2366
  %v2403 = vpack.c.bf16 %v2371, %v2367
  %v2436 = vunpack.c.l.b16 %v2372
  %v2437 = vunpack.c.l.b16 %v2373
  %v2438 = vunpack.c.l.b16 %v2374
  %v2439 = vunpack.c.l.b16 %v2375
  %v2440 = vunpack.c.h.b16 %v2372
  %v2441 = vunpack.c.h.b16 %v2373
  %v2442 = vunpack.c.h.b16 %v2374
  %v2443 = vunpack.c.h.b16 %v2375
  %v2444 = vunpack.c.l.b16 %v2376
  %v2445 = vunpack.c.l.b16 %v2377
  %v2446 = vunpack.c.l.b16 %v2378
  %v2447 = vunpack.c.l.b16 %v2379
  %v2448 = vunpack.c.h.b16 %v2376
  %v2449 = vunpack.c.h.b16 %v2377
  %v2450 = vunpack.c.h.b16 %v2378
  %v2451 = vunpack.c.h.b16 %v2379
  %v2452 = vunpack.c.l.b16 %v2380
  %v2453 = vunpack.c.l.b16 %v2381
  %v2454 = vunpack.c.l.b16 %v2382
  %v2455 = vunpack.c.l.b16 %v2383
  %v2456 = vunpack.c.h.b16 %v2380
  %v2457 = vunpack.c.h.b16 %v2381
  %v2458 = vunpack.c.h.b16 %v2382
  %v2459 = vunpack.c.h.b16 %v2383
  %v2460 = vunpack.c.l.b16 %v2384
  %v2461 = vunpack.c.l.b16 %v2385
  %v2462 = vunpack.c.l.b16 %v2386
  %v2463 = vunpack.c.l.b16 %v2387
  %v2464 = vunpack.c.h.b16 %v2384
  %v2465 = vunpack.c.h.b16 %v2385
  %v2466 = vunpack.c.h.b16 %v2386
  %v2467 = vunpack.c.h.b16 %v2387
  %v2468 = vunpack.c.l.b16 %v2388
  %v2469 = vunpack.c.l.b16 %v2389
  %v2470 = vunpack.c.l.b16 %v2390
  %v2471 = vunpack.c.l.b16 %v2391
  %v2472 = vunpack.c.h.b16 %v2388
  %v2473 = vunpack.c.h.b16 %v2389
  %v2474 = vunpack.c.h.b16 %v2390
  %v2475 = vunpack.c.h.b16 %v2391
  %v2476 = vunpack.c.l.b16 %v2392
  %v2477 = vunpack.c.l.b16 %v2393
  %v2478 = vunpack.c.l.b16 %v2394
  %v2479 = vunpack.c.l.b16 %v2395
  %v2480 = vunpack.c.h.b16 %v2392
  %v2481 = vunpack.c.h.b16 %v2393
  %v2482 = vunpack.c.h.b16 %v2394
  %v2483 = vunpack.c.h.b16 %v2395
  %v2484 = vunpack.c.l.b16 %v2396
  %v2485 = vunpack.c.l.b16 %v2397
  %v2486 = vunpack.c.l.b16 %v2398
  %v2487 = vunpack.c.l.b16 %v2399
  %v2488 = vunpack.c.h.b16 %v2396
  %v2489 = vunpack.c.h.b16 %v2397
  %v2490 = vunpack.c.h.b16 %v2398
  %v2491 = vunpack.c.h.b16 %v2399
  %v2492 = vunpack.c.l.b16 %v2400
  %v2493 = vunpack.c.l.b16 %v2401
  %v2494 = vunpack.c.l.b16 %v2402
  %v2495 = vunpack.c.l.b16 %v2403
  %v2496 = vunpack.c.h.b16 %v2400
  %v2497 = vunpack.c.h.b16 %v2401
  %v2498 = vunpack.c.h.b16 %v2402
  %v2499 = vunpack.c.h.b16 %v2403
  %v2500 = vpack.c.b16 %v2437, %v2436
  %v2501 = vpack.c.b16 %v2439, %v2438
  %v2502 = vpack.c.b16 %v2441, %v2440
  %v2503 = vpack.c.b16 %v2443, %v2442
  %v2504 = vpack.c.b16 %v2445, %v2444
  %v2505 = vpack.c.b16 %v2447, %v2446
  %v2506 = vpack.c.b16 %v2449, %v2448
  %v2507 = vpack.c.b16 %v2451, %v2450
  %v2508 = vpack.c.b16 %v2453, %v2452
  %v2509 = vpack.c.b16 %v2455, %v2454
  %v2510 = vpack.c.b16 %v2457, %v2456
  %v2511 = vpack.c.b16 %v2459, %v2458
  %v2512 = vpack.c.b16 %v2461, %v2460
  %v2513 = vpack.c.b16 %v2463, %v2462
  %v2514 = vpack.c.b16 %v2465, %v2464
  %v2515 = vpack.c.b16 %v2467, %v2466
  %v2516 = vpack.c.b16 %v2469, %v2468
  %v2517 = vpack.c.b16 %v2471, %v2470
  %v2518 = vpack.c.b16 %v2473, %v2472
  %v2519 = vpack.c.b16 %v2475, %v2474
  %v2520 = vpack.c.b16 %v2477, %v2476
  %v2521 = vpack.c.b16 %v2479, %v2478
  %v2522 = vpack.c.b16 %v2481, %v2480
  %v2523 = vpack.c.b16 %v2483, %v2482
  %v2524 = vpack.c.b16 %v2485, %v2484
  %v2525 = vpack.c.b16 %v2487, %v2486
  %v2526 = vpack.c.b16 %v2489, %v2488
  %v2527 = vpack.c.b16 %v2491, %v2490
  %v2528 = vpack.c.b16 %v2493, %v2492
  %v2529 = vpack.c.b16 %v2495, %v2494
  %v2530 = vpack.c.b16 %v2497, %v2496
  %v2531 = vpack.c.b16 %v2499, %v2498
  %2564 = vst [vmem:[%s3] sm:$0xff] %v2500
  %vm2565 = vcmask 1043456
  %vm2566 = vcmask 523268
  %vm2567 = vmor %vm2566, %vm2565
  %2568 = vst.msk [vmem:[%s3 + $0x8] sm:$0xff] %vm2567, %v2501
  %2569 = vst [vmem:[%s3 + $0x10] sm:$0xff] %v2502
  %2570 = vst.msk [vmem:[%s3 + $0x18] sm:$0xff] %vm2567, %v2503
  %2571 = vst [vmem:[%s3 + $0x20] sm:$0xff] %v2504
  %2572 = vst.msk [vmem:[%s3 + $0x28] sm:$0xff] %vm2567, %v2505
  %2573 = vst [vmem:[%s3 + $0x30] sm:$0xff] %v2506
  %2574 = vst.msk [vmem:[%s3 + $0x38] sm:$0xff] %vm2567, %v2507
  %2575 = vst [vmem:[%s3 + $0x40] sm:$0xff] %v2508
  %2576 = vst.msk [vmem:[%s3 + $0x48] sm:$0xff] %vm2567, %v2509
  %2577 = vst [vmem:[%s3 + $0x50] sm:$0xff] %v2510
  %2578 = vst.msk [vmem:[%s3 + $0x58] sm:$0xff] %vm2567, %v2511
  %2579 = vst [vmem:[%s3 + $0x60] sm:$0xff] %v2512
  %2580 = vst.msk [vmem:[%s3 + $0x68] sm:$0xff] %vm2567, %v2513
  %2581 = vst [vmem:[%s3 + $0x70] sm:$0xff] %v2514
  %2582 = vst.msk [vmem:[%s3 + $0x78] sm:$0xff] %vm2567, %v2515
  %2583 = vst [vmem:[%s3 + $0x80] sm:$0xff] %v2516
  %2584 = vst.msk [vmem:[%s3 + $0x88] sm:$0xff] %vm2567, %v2517
  %2585 = vst [vmem:[%s3 + $0x90] sm:$0xff] %v2518
  %2586 = vst.msk [vmem:[%s3 + $0x98] sm:$0xff] %vm2567, %v2519
  %2587 = vst [vmem:[%s3 + $0xa0] sm:$0xff] %v2520
  %2588 = vst.msk [vmem:[%s3 + $0xa8] sm:$0xff] %vm2567, %v2521
  %2589 = vst [vmem:[%s3 + $0xb0] sm:$0xff] %v2522
  %2590 = vst.msk [vmem:[%s3 + $0xb8] sm:$0xff] %vm2567, %v2523
  %2591 = vst [vmem:[%s3 + $0xc0] sm:$0xff] %v2524
  %2592 = vst.msk [vmem:[%s3 + $0xc8] sm:$0xff] %vm2567, %v2525
  %2593 = vst [vmem:[%s3 + $0xd0] sm:$0xff] %v2526
  %2594 = vst.msk [vmem:[%s3 + $0xd8] sm:$0xff] %vm2567, %v2527
  %2595 = vst [vmem:[%s3 + $0xe0] sm:$0xff] %v2528
  %2596 = vst.msk [vmem:[%s3 + $0xe8] sm:$0xff] %vm2567, %v2529
  %2597 = vst [vmem:[%s3 + $0xf0] sm:$0xff] %v2530
  %2598 = vst.msk [vmem:[%s3 + $0xf8] sm:$0xff] %vm2567, %v2531
  // Predicated region
  $region14: #{net_forward.5} parent=0 // pred_check
    _
  $region15: #{net_forward.5} parent=0 // pred_check_branch
    %2600 = sbr.rel (0) target = $region17
  $region16: #{net_forward.5} parent=0 // pred_region
    _
  $region17: #{net_forward.5} parent=0 // pred_fallthru
    _
  // Predicated region
  $region18: #{net_forward.5} parent=0 // pred_check
    _
  $region19: #{net_forward.5} parent=0 // pred_check_branch
    %2602 = sbr.rel (0) target = $region21
  $region20: #{net_forward.5} parent=0 // pred_region
    _
  $region21: #{net_forward.5} parent=0 // pred_fallthru
    _

// kernel: net_forward.6
$region0: #{net_forward.6}
  #allocation0 [shape = 'u32[]', space=smem, size = 0x4, offset = 0x4, fixed_abs, tag = 'smem constant byte address 0x4 - core index']
  #allocation1 [shape = 'u32[144,128]{1,0:T(1,128)}', space=vmem, size = 0x12000, scoped, tag = 'internal scratch']
  %s0 = inlined_call_operand.vmem [shape: bf16[1,74,288], index: 0, kind: input, shape index: {}]
  %s1 = inlined_call_operand.vmem [shape: bf16[3,288,448], index: 1, kind: input, shape index: {}]
  %s2 = inlined_call_operand.vmem [shape: f32[1,448], index: 2, kind: input, shape index: {}]
  %s3 = inlined_call_operand.vmem [shape: bf16[1,72,448], index: 3, kind: output, shape index: {}]
  %s4 = sld [smem:[#allocation0]]
  $region22: #{net_forward.6} parent=0
    _
  %s6 = ssub.s32 1, %s4
  %s7 = scalar_select 0, %s6, %s4
  // Predicated region
  $region2: #{net_forward.6} parent=0 // pred_check
    _
  $region3: #{net_forward.6} parent=0 // pred_check_branch
    %9 = sbr.rel (0) target = $region5
  $region4: #{net_forward.6} parent=0 // pred_region
    _
  $region5: #{net_forward.6} parent=0 // pred_fallthru
    _
  // Predicated region
  $region6: #{net_forward.6} parent=0 // pred_check
    _
  $region7: #{net_forward.6} parent=0 // pred_check_branch
    %11 = sbr.rel (0) target = $region9
  $region8: #{net_forward.6} parent=0 // pred_region
    _
  $region9: #{net_forward.6} parent=0 // pred_fallthru
    _
  // Predicated region
  $region10: #{net_forward.6} parent=0 // pred_check
    _
  $region11: #{net_forward.6} parent=0 // pred_check_branch
    %13 = sbr.rel (0) target = $region13
  $region12: #{net_forward.6} parent=0 // pred_region
    _
  $region13: #{net_forward.6} parent=0 // pred_fallthru
    _
  %v15 = vld [vmem:[%s0] sm:$0xff]
  %v16 = vld [vmem:[%s0 + $0x8] sm:$0xf]
  %v17 = vld [vmem:[%s0 + $0xc] sm:$0xff]
  %v18 = vld [vmem:[%s0 + $0x14] sm:$0xf]
  %v19 = vld [vmem:[%s0 + $0x18] sm:$0xff]
  %v20 = vld [vmem:[%s0 + $0x20] sm:$0xf]
  %v21 = vld [vmem:[%s0 + $0x24] sm:$0xff]
  %v22 = vld [vmem:[%s0 + $0x2c] sm:$0xf]
  %v23 = vld [vmem:[%s0 + $0x30] sm:$0xff]
  %v24 = vld [vmem:[%s0 + $0x38] sm:$0xf]
  %v25 = vld [vmem:[%s0 + $0x3c] sm:$0xff]
  %v26 = vld [vmem:[%s0 + $0x44] sm:$0xf]
  %v27 = vld [vmem:[%s0 + $0x48] sm:$0xff]
  %v28 = vld [vmem:[%s0 + $0x50] sm:$0xf]
  %v29 = vld [vmem:[%s0 + $0x54] sm:$0xff]
  %v30 = vld [vmem:[%s0 + $0x5c] sm:$0xf]
  %v31 = vld [vmem:[%s0 + $0x60] sm:$0xff]
  %v32 = vld [vmem:[%s0 + $0x68] sm:$0xf]
  %v33 = vld [vmem:[%s1] sm:$0xff]
  %v34 = vld [vmem:[%s1 + $0x8] sm:$0xff]
  %v35 = vld [vmem:[%s1 + $0x10] sm:$0xff]
  %v36 = vld [vmem:[%s1 + $0x18] sm:$0xff]
  %v37 = vld [vmem:[%s1 + $0x20] sm:$0xff]
  %v38 = vld [vmem:[%s1 + $0x28] sm:$0xff]
  %v39 = vld [vmem:[%s1 + $0x30] sm:$0xff]
  %v40 = vld [vmem:[%s1 + $0x38] sm:$0xff]
  %v41 = vld [vmem:[%s1 + $0x40] sm:$0xff]
  %v42 = vld [vmem:[%s1 + $0x48] sm:$0xff]
  %v43 = vld [vmem:[%s1 + $0x50] sm:$0xff]
  %v44 = vld [vmem:[%s1 + $0x58] sm:$0xff]
  %v45 = vld [vmem:[%s1 + $0x60] sm:$0xff]
  %v46 = vld [vmem:[%s1 + $0x68] sm:$0xff]
  %v47 = vld [vmem:[%s1 + $0x70] sm:$0xff]
  %v48 = vld [vmem:[%s1 + $0x78] sm:$0xff]
  %v49 = vld [vmem:[%s1 + $0x80] sm:$0xff]
  %v50 = vld [vmem:[%s1 + $0x88] sm:$0xff]
  %v51 = vld [vmem:[%s1 + $0x90] sm:$0xff]
  %v52 = vld [vmem:[%s1 + $0x98] sm:$0xff]
  %v53 = vld [vmem:[%s1 + $0xa0] sm:$0xff]
  %v54 = vld [vmem:[%s1 + $0xa8] sm:$0xff]
  %v55 = vld [vmem:[%s1 + $0xb0] sm:$0xff]
  %v56 = vld [vmem:[%s1 + $0xb8] sm:$0xff]
  %v57 = vld [vmem:[%s1 + $0xc0] sm:$0xff]
  %v58 = vld [vmem:[%s1 + $0xc8] sm:$0xff]
  %v59 = vld [vmem:[%s1 + $0xd0] sm:$0xff]
  %v60 = vld [vmem:[%s1 + $0xd8] sm:$0xff]
  %v61 = vld [vmem:[%s1 + $0xe0] sm:$0xff]
  %v62 = vld [vmem:[%s1 + $0xe8] sm:$0xff]
  %v63 = vld [vmem:[%s1 + $0xf0] sm:$0xff]
  %v64 = vld [vmem:[%s1 + $0xf8] sm:$0xff]
  %v65 = vld [vmem:[%s1 + $0x100] sm:$0xff]
  %v66 = vld [vmem:[%s1 + $0x108] sm:$0xff]
  %v67 = vld [vmem:[%s1 + $0x110] sm:$0xff]
  %v68 = vld [vmem:[%s1 + $0x118] sm:$0xff]
  %v69 = vld [vmem:[%s1 + $0x120] sm:$0xff]
  %v70 = vld [vmem:[%s1 + $0x128] sm:$0xff]
  %v71 = vld [vmem:[%s1 + $0x130] sm:$0xff]
  %v72 = vld [vmem:[%s1 + $0x138] sm:$0xff]
  %v73 = vld [vmem:[%s1 + $0x140] sm:$0xff]
  %v74 = vld [vmem:[%s1 + $0x148] sm:$0xff]
  %v75 = vld [vmem:[%s1 + $0x150] sm:$0xff]
  %v76 = vld [vmem:[%s1 + $0x158] sm:$0xff]
  %v77 = vld [vmem:[%s1 + $0x160] sm:$0xff]
  %v78 = vld [vmem:[%s1 + $0x168] sm:$0xff]
  %v79 = vld [vmem:[%s1 + $0x170] sm:$0xff]
  %v80 = vld [vmem:[%s1 + $0x178] sm:$0xff]
  %v81 = vld [vmem:[%s1 + $0x180] sm:$0xff]
  %v82 = vld [vmem:[%s1 + $0x188] sm:$0xff]
  %v83 = vld [vmem:[%s1 + $0x190] sm:$0xff]
  %v84 = vld [vmem:[%s1 + $0x198] sm:$0xff]
  %v85 = vld [vmem:[%s1 + $0x1a0] sm:$0xff]
  %v86 = vld [vmem:[%s1 + $0x1a8] sm:$0xff]
  %v87 = vld [vmem:[%s1 + $0x1b0] sm:$0xff]
  %v88 = vld [vmem:[%s1 + $0x1b8] sm:$0xff]
  %v89 = vld [vmem:[%s1 + $0x1c0] sm:$0xff]
  %v90 = vld [vmem:[%s1 + $0x1c8] sm:$0xff]
  %v91 = vld [vmem:[%s1 + $0x1d0] sm:$0xff]
  %v92 = vld [vmem:[%s1 + $0x1d8] sm:$0xff]
  %v93 = vld [vmem:[%s1 + $0x1e0] sm:$0xff]
  %v94 = vld [vmem:[%s1 + $0x1e8] sm:$0xff]
  %v95 = vld [vmem:[%s1 + $0x1f0] sm:$0xff]
  %v96 = vld [vmem:[%s1 + $0x1f8] sm:$0xff]
  %v97 = vld [vmem:[%s1 + $0x200] sm:$0xff]
  %v98 = vld [vmem:[%s1 + $0x208] sm:$0xff]
  %v99 = vld [vmem:[%s1 + $0x210] sm:$0xff]
  %v100 = vld [vmem:[%s1 + $0x218] sm:$0xff]
  %v101 = vld [vmem:[%s1 + $0x220] sm:$0xff]
  %v102 = vld [vmem:[%s1 + $0x228] sm:$0xff]
  %v103 = vld [vmem:[%s1 + $0x230] sm:$0xff]
  %v104 = vld [vmem:[%s1 + $0x238] sm:$0xff]
  %v105 = vld [vmem:[%s0 + $0x6c] sm:$0x11]
  %v106 = vld [vmem:[%s0 + $0x74] sm:$0x1]
  %s107 = scalar_lea.vmem %s1, 576
  %v108 = vld [vmem:[%s107] sm:$0xff]
  %v109 = vld [vmem:[%s107 + $0x8] sm:$0xff]
  %v110 = vld [vmem:[%s107 + $0x10] sm:$0xff]
  %v111 = vld [vmem:[%s107 + $0x18] sm:$0xff]
  %v112 = vld [vmem:[%s107 + $0x20] sm:$0xff]
  %v113 = vld [vmem:[%s107 + $0x28] sm:$0xff]
  %v114 = vld [vmem:[%s107 + $0x30] sm:$0xff]
  %v115 = vld [vmem:[%s107 + $0x38] sm:$0xff]
  %v116 = vld [vmem:[%s107 + $0x40] sm:$0xff]
  %v117 = vld [vmem:[%s107 + $0x48] sm:$0xff]
  %v118 = vld [vmem:[%s107 + $0x50] sm:$0xff]
  %v119 = vld [vmem:[%s107 + $0x58] sm:$0xff]
  %v120 = vld [vmem:[%s107 + $0x60] sm:$0xff]
  %v121 = vld [vmem:[%s107 + $0x68] sm:$0xff]
  %v122 = vld [vmem:[%s107 + $0x70] sm:$0xff]
  %v123 = vld [vmem:[%s107 + $0x78] sm:$0xff]
  %v124 = vld [vmem:[%s107 + $0x80] sm:$0xff]
  %v125 = vld [vmem:[%s107 + $0x88] sm:$0xff]
  %v126 = vld [vmem:[%s107 + $0x90] sm:$0xff]
  %v127 = vld [vmem:[%s107 + $0x98] sm:$0xff]
  %v128 = vld [vmem:[%s107 + $0xa0] sm:$0xff]
  %v129 = vld [vmem:[%s107 + $0xa8] sm:$0xff]
  %v130 = vld [vmem:[%s107 + $0xb0] sm:$0xff]
  %v131 = vld [vmem:[%s107 + $0xb8] sm:$0xff]
  %v132 = vld [vmem:[%s107 + $0xc0] sm:$0xff]
  %v133 = vld [vmem:[%s107 + $0xc8] sm:$0xff]
  %v134 = vld [vmem:[%s107 + $0xd0] sm:$0xff]
  %v135 = vld [vmem:[%s107 + $0xd8] sm:$0xff]
  %v136 = vld [vmem:[%s107 + $0xe0] sm:$0xff]
  %v137 = vld [vmem:[%s107 + $0xe8] sm:$0xff]
  %v138 = vld [vmem:[%s107 + $0xf0] sm:$0xff]
  %v139 = vld [vmem:[%s107 + $0xf8] sm:$0xff]
  %v140 = vld [vmem:[%s107 + $0x100] sm:$0xff]
  %v141 = vld [vmem:[%s107 + $0x108] sm:$0xff]
  %v142 = vld [vmem:[%s107 + $0x110] sm:$0xff]
  %v143 = vld [vmem:[%s107 + $0x118] sm:$0xff]
  %v144 = vld [vmem:[%s107 + $0x120] sm:$0xff]
  %v145 = vld [vmem:[%s107 + $0x128] sm:$0xff]
  %v146 = vld [vmem:[%s107 + $0x130] sm:$0xff]
  %v147 = vld [vmem:[%s107 + $0x138] sm:$0xff]
  %v148 = vld [vmem:[%s107 + $0x140] sm:$0xff]
  %v149 = vld [vmem:[%s107 + $0x148] sm:$0xff]
  %v150 = vld [vmem:[%s107 + $0x150] sm:$0xff]
  %v151 = vld [vmem:[%s107 + $0x158] sm:$0xff]
  %v152 = vld [vmem:[%s107 + $0x160] sm:$0xff]
  %v153 = vld [vmem:[%s107 + $0x168] sm:$0xff]
  %v154 = vld [vmem:[%s107 + $0x170] sm:$0xff]
  %v155 = vld [vmem:[%s107 + $0x178] sm:$0xff]
  %v156 = vld [vmem:[%s107 + $0x180] sm:$0xff]
  %v157 = vld [vmem:[%s107 + $0x188] sm:$0xff]
  %v158 = vld [vmem:[%s107 + $0x190] sm:$0xff]
  %v159 = vld [vmem:[%s107 + $0x198] sm:$0xff]
  %v160 = vld [vmem:[%s107 + $0x1a0] sm:$0xff]
  %v161 = vld [vmem:[%s107 + $0x1a8] sm:$0xff]
  %v162 = vld [vmem:[%s107 + $0x1b0] sm:$0xff]
  %v163 = vld [vmem:[%s107 + $0x1b8] sm:$0xff]
  %v164 = vld [vmem:[%s107 + $0x1c0] sm:$0xff]
  %v165 = vld [vmem:[%s107 + $0x1c8] sm:$0xff]
  %v166 = vld [vmem:[%s107 + $0x1d0] sm:$0xff]
  %v167 = vld [vmem:[%s107 + $0x1d8] sm:$0xff]
  %v168 = vld [vmem:[%s107 + $0x1e0] sm:$0xff]
  %v169 = vld [vmem:[%s107 + $0x1e8] sm:$0xff]
  %v170 = vld [vmem:[%s107 + $0x1f0] sm:$0xff]
  %v171 = vld [vmem:[%s107 + $0x1f8] sm:$0xff]
  %v172 = vld [vmem:[%s107 + $0x200] sm:$0xff]
  %v173 = vld [vmem:[%s107 + $0x208] sm:$0xff]
  %v174 = vld [vmem:[%s107 + $0x210] sm:$0xff]
  %v175 = vld [vmem:[%s107 + $0x218] sm:$0xff]
  %v176 = vld [vmem:[%s107 + $0x220] sm:$0xff]
  %v177 = vld [vmem:[%s107 + $0x228] sm:$0xff]
  %v178 = vld [vmem:[%s107 + $0x230] sm:$0xff]
  %v179 = vld [vmem:[%s107 + $0x238] sm:$0xff]
  %v200 = vunpack.c.l.b16 %v15
  %v201 = vunpack.c.h.b16 %v15
  %v202 = vunpack.c.l.b16 %v16
  %v203 = vunpack.c.l.b16 %v17
  %v204 = vunpack.c.h.b16 %v17
  %v205 = vunpack.c.l.b16 %v18
  %v206 = vunpack.c.l.b16 %v19
  %v207 = vunpack.c.h.b16 %v19
  %v208 = vunpack.c.l.b16 %v20
  %v209 = vunpack.c.l.b16 %v21
  %v210 = vunpack.c.h.b16 %v21
  %v211 = vunpack.c.l.b16 %v22
  %v212 = vunpack.c.l.b16 %v23
  %v213 = vunpack.c.h.b16 %v23
  %v214 = vunpack.c.l.b16 %v24
  %v215 = vunpack.c.l.b16 %v25
  %v216 = vunpack.c.h.b16 %v25
  %v217 = vunpack.c.l.b16 %v26
  %v218 = vunpack.c.l.b16 %v27
  %v219 = vunpack.c.h.b16 %v27
  %v220 = vunpack.c.l.b16 %v28
  %v221 = vunpack.c.l.b16 %v29
  %v222 = vunpack.c.h.b16 %v29
  %v223 = vunpack.c.l.b16 %v30
  %v224 = vunpack.c.l.b16 %v31
  %v225 = vunpack.c.h.b16 %v31
  %v226 = vunpack.c.l.b16 %v32
  %v227 = vunpack.c.l.b16 %v105
  %v228 = vunpack.c.h.b16 %v105
  %v229 = vunpack.c.l.b16 %v106
  %v230 = vpack.c.b16 %v203, %v200
  %v231 = vpack.c.b16 %v204, %v201
  %v232 = vpack.c.b16 %v205, %v202
  %v233 = vpack.c.b16 %v209, %v206
  %v234 = vpack.c.b16 %v210, %v207
  %v235 = vpack.c.b16 %v211, %v208
  %v236 = vpack.c.b16 %v215, %v212
  %v237 = vpack.c.b16 %v216, %v213
  %v238 = vpack.c.b16 %v217, %v214
  %v239 = vpack.c.b16 %v221, %v218
  %v240 = vpack.c.b16 %v222, %v219
  %v241 = vpack.c.b16 %v223, %v220
  %v242 = vpack.c.b16 %v227, %v224
  %v243 = vpack.c.b16 %v228, %v225
  %v244 = vpack.c.b16 %v229, %v226
  %vm245 = vsmask.f32 7424
  %v247 = vshrl.u32 %v230, 16
  %v249 = vshll.u32 %v230, 16
  %v251 = vrot.slane %v249, 1
  %v252 = vor.u32 %v247, %v251
  %v254 = vshll.u32 %v233, 16
  %v256 = vrot.slane %v254, 1
  %v257 = vsel %vm245, %v252, %v256
  %v259 = vshrl.u32 %v231, 16
  %v261 = vshll.u32 %v231, 16
  %v263 = vrot.slane %v261, 1
  %v264 = vor.u32 %v259, %v263
  %v266 = vshll.u32 %v234, 16
  %v268 = vrot.slane %v266, 1
  %v269 = vsel %vm245, %v264, %v268
  %v271 = vshrl.u32 %v232, 16
  %v273 = vshll.u32 %v232, 16
  %v275 = vrot.slane %v273, 1
  %v276 = vor.u32 %v271, %v275
  %v278 = vshll.u32 %v235, 16
  %v280 = vrot.slane %v278, 1
  %v281 = vsel %vm245, %v276, %v280
  %v282 = vshrl.u32 %v233, 16
  %v284 = vor.u32 %v282, %v256
  %v286 = vshll.u32 %v236, 16
  %v288 = vrot.slane %v286, 1
  %v289 = vsel %vm245, %v284, %v288
  %v290 = vshrl.u32 %v234, 16
  %v292 = vor.u32 %v290, %v268
  %v294 = vshll.u32 %v237, 16
  %v296 = vrot.slane %v294, 1
  %v297 = vsel %vm245, %v292, %v296
  %v298 = vshrl.u32 %v235, 16
  %v300 = vor.u32 %v298, %v280
  %v302 = vshll.u32 %v238, 16
  %v304 = vrot.slane %v302, 1
  %v305 = vsel %vm245, %v300, %v304
  %v306 = vshrl.u32 %v236, 16
  %v308 = vor.u32 %v306, %v288
  %v310 = vshll.u32 %v239, 16
  %v312 = vrot.slane %v310, 1
  %v313 = vsel %vm245, %v308, %v312
  %v314 = vshrl.u32 %v237, 16
  %v316 = vor.u32 %v314, %v296
  %v318 = vshll.u32 %v240, 16
  %v320 = vrot.slane %v318, 1
  %v321 = vsel %vm245, %v316, %v320
  %v322 = vshrl.u32 %v238, 16
  %v324 = vor.u32 %v322, %v304
  %v326 = vshll.u32 %v241, 16
  %v328 = vrot.slane %v326, 1
  %v329 = vsel %vm245, %v324, %v328
  %v330 = vshrl.u32 %v239, 16
  %v332 = vor.u32 %v330, %v312
  %v334 = vshll.u32 %v242, 16
  %v336 = vrot.slane %v334, 1
  %v337 = vsel %vm245, %v332, %v336
  %v338 = vshrl.u32 %v240, 16
  %v340 = vor.u32 %v338, %v320
  %v342 = vshll.u32 %v243, 16
  %v344 = vrot.slane %v342, 1
  %v345 = vsel %vm245, %v340, %v344
  %v346 = vshrl.u32 %v241, 16
  %v348 = vor.u32 %v346, %v328
  %v350 = vshll.u32 %v244, 16
  %v352 = vrot.slane %v350, 1
  %v353 = vsel %vm245, %v348, %v352
  %v354 = vshrl.u32 %v242, 16
  %v356 = vor.u32 %v354, %v336
  %v357 = vshrl.u32 %v243, 16
  %v359 = vor.u32 %v357, %v344
  %v360 = vshrl.u32 %v244, 16
  %v362 = vor.u32 %v360, %v352
  %v445 = vunpack.c.l.b16 %v108
  %v446 = vunpack.c.h.b16 %v108
  %v447 = vunpack.c.l.b16 %v109
  %v448 = vunpack.c.h.b16 %v109
  %v449 = vunpack.c.l.b16 %v110
  %v450 = vunpack.c.h.b16 %v110
  %v451 = vunpack.c.l.b16 %v111
  %v452 = vunpack.c.h.b16 %v111
  %v453 = vunpack.c.l.b16 %v112
  %v454 = vunpack.c.h.b16 %v112
  %v455 = vunpack.c.l.b16 %v113
  %v456 = vunpack.c.h.b16 %v113
  %v457 = vunpack.c.l.b16 %v114
  %v458 = vunpack.c.h.b16 %v114
  %v459 = vunpack.c.l.b16 %v115
  %v460 = vunpack.c.h.b16 %v115
  %v461 = vunpack.c.l.b16 %v116
  %v462 = vunpack.c.h.b16 %v116
  %v463 = vunpack.c.l.b16 %v117
  %v464 = vunpack.c.h.b16 %v117
  %v465 = vunpack.c.l.b16 %v118
  %v466 = vunpack.c.h.b16 %v118
  %v467 = vunpack.c.l.b16 %v119
  %v468 = vunpack.c.h.b16 %v119
  %v469 = vunpack.c.l.b16 %v120
  %v470 = vunpack.c.h.b16 %v120
  %v471 = vunpack.c.l.b16 %v121
  %v472 = vunpack.c.h.b16 %v121
  %v473 = vunpack.c.l.b16 %v122
  %v474 = vunpack.c.h.b16 %v122
  %v475 = vunpack.c.l.b16 %v123
  %v476 = vunpack.c.h.b16 %v123
  %v477 = vunpack.c.l.b16 %v124
  %v478 = vunpack.c.h.b16 %v124
  %v479 = vunpack.c.l.b16 %v125
  %v480 = vunpack.c.h.b16 %v125
  %v481 = vunpack.c.l.b16 %v126
  %v482 = vunpack.c.h.b16 %v126
  %v483 = vunpack.c.l.b16 %v127
  %v484 = vunpack.c.h.b16 %v127
  %v485 = vunpack.c.l.b16 %v128
  %v486 = vunpack.c.h.b16 %v128
  %v487 = vunpack.c.l.b16 %v129
  %v488 = vunpack.c.h.b16 %v129
  %v489 = vunpack.c.l.b16 %v130
  %v490 = vunpack.c.h.b16 %v130
  %v491 = vunpack.c.l.b16 %v131
  %v492 = vunpack.c.h.b16 %v131
  %v493 = vunpack.c.l.b16 %v132
  %v494 = vunpack.c.h.b16 %v132
  %v495 = vunpack.c.l.b16 %v133
  %v496 = vunpack.c.h.b16 %v133
  %v497 = vunpack.c.l.b16 %v134
  %v498 = vunpack.c.h.b16 %v134
  %v499 = vunpack.c.l.b16 %v135
  %v500 = vunpack.c.h.b16 %v135
  %v501 = vunpack.c.l.b16 %v136
  %v502 = vunpack.c.h.b16 %v136
  %v503 = vunpack.c.l.b16 %v137
  %v504 = vunpack.c.h.b16 %v137
  %v505 = vunpack.c.l.b16 %v138
  %v506 = vunpack.c.h.b16 %v138
  %v507 = vunpack.c.l.b16 %v139
  %v508 = vunpack.c.h.b16 %v139
  %v509 = vunpack.c.l.b16 %v140
  %v510 = vunpack.c.h.b16 %v140
  %v511 = vunpack.c.l.b16 %v141
  %v512 = vunpack.c.h.b16 %v141
  %v513 = vunpack.c.l.b16 %v142
  %v514 = vunpack.c.h.b16 %v142
  %v515 = vunpack.c.l.b16 %v143
  %v516 = vunpack.c.h.b16 %v143
  %v517 = vunpack.c.l.b16 %v144
  %v518 = vunpack.c.h.b16 %v144
  %v519 = vunpack.c.l.b16 %v145
  %v520 = vunpack.c.h.b16 %v145
  %v521 = vunpack.c.l.b16 %v146
  %v522 = vunpack.c.h.b16 %v146
  %v523 = vunpack.c.l.b16 %v147
  %v524 = vunpack.c.h.b16 %v147
  %v525 = vunpack.c.l.b16 %v148
  %v526 = vunpack.c.h.b16 %v148
  %v527 = vunpack.c.l.b16 %v149
  %v528 = vunpack.c.h.b16 %v149
  %v529 = vunpack.c.l.b16 %v150
  %v530 = vunpack.c.h.b16 %v150
  %v531 = vunpack.c.l.b16 %v151
  %v532 = vunpack.c.h.b16 %v151
  %v533 = vunpack.c.l.b16 %v152
  %v534 = vunpack.c.h.b16 %v152
  %v535 = vunpack.c.l.b16 %v153
  %v536 = vunpack.c.h.b16 %v153
  %v537 = vunpack.c.l.b16 %v154
  %v538 = vunpack.c.h.b16 %v154
  %v539 = vunpack.c.l.b16 %v155
  %v540 = vunpack.c.h.b16 %v155
  %v541 = vunpack.c.l.b16 %v156
  %v542 = vunpack.c.h.b16 %v156
  %v543 = vunpack.c.l.b16 %v157
  %v544 = vunpack.c.h.b16 %v157
  %v545 = vunpack.c.l.b16 %v158
  %v546 = vunpack.c.h.b16 %v158
  %v547 = vunpack.c.l.b16 %v159
  %v548 = vunpack.c.h.b16 %v159
  %v549 = vunpack.c.l.b16 %v160
  %v550 = vunpack.c.h.b16 %v160
  %v551 = vunpack.c.l.b16 %v161
  %v552 = vunpack.c.h.b16 %v161
  %v553 = vunpack.c.l.b16 %v162
  %v554 = vunpack.c.h.b16 %v162
  %v555 = vunpack.c.l.b16 %v163
  %v556 = vunpack.c.h.b16 %v163
  %v557 = vunpack.c.l.b16 %v164
  %v558 = vunpack.c.h.b16 %v164
  %v559 = vunpack.c.l.b16 %v165
  %v560 = vunpack.c.h.b16 %v165
  %v561 = vunpack.c.l.b16 %v166
  %v562 = vunpack.c.h.b16 %v166
  %v563 = vunpack.c.l.b16 %v167
  %v564 = vunpack.c.h.b16 %v167
  %v565 = vunpack.c.l.b16 %v168
  %v566 = vunpack.c.h.b16 %v168
  %v567 = vunpack.c.l.b16 %v169
  %v568 = vunpack.c.h.b16 %v169
  %v569 = vunpack.c.l.b16 %v170
  %v570 = vunpack.c.h.b16 %v170
  %v571 = vunpack.c.l.b16 %v171
  %v572 = vunpack.c.h.b16 %v171
  %v573 = vunpack.c.l.b16 %v172
  %v574 = vunpack.c.h.b16 %v172
  %v575 = vunpack.c.l.b16 %v173
  %v576 = vunpack.c.h.b16 %v173
  %v577 = vunpack.c.l.b16 %v174
  %v578 = vunpack.c.h.b16 %v174
  %v579 = vunpack.c.l.b16 %v175
  %v580 = vunpack.c.h.b16 %v175
  %v581 = vunpack.c.l.b16 %v176
  %v582 = vunpack.c.h.b16 %v176
  %v583 = vunpack.c.l.b16 %v177
  %v584 = vunpack.c.h.b16 %v177
  %v585 = vunpack.c.l.b16 %v178
  %v586 = vunpack.c.h.b16 %v178
  %v587 = vunpack.c.l.b16 %v179
  %v588 = vunpack.c.h.b16 %v179
  %v589 = vpack.c.b16 %v449, %v445
  %v590 = vpack.c.b16 %v450, %v446
  %v591 = vpack.c.b16 %v451, %v447
  %v592 = vpack.c.b16 %v452, %v448
  %v593 = vpack.c.b16 %v457, %v453
  %v594 = vpack.c.b16 %v458, %v454
  %v595 = vpack.c.b16 %v459, %v455
  %v596 = vpack.c.b16 %v460, %v456
  %v597 = vpack.c.b16 %v465, %v461
  %v598 = vpack.c.b16 %v466, %v462
  %v599 = vpack.c.b16 %v467, %v463
  %v600 = vpack.c.b16 %v468, %v464
  %v601 = vpack.c.b16 %v473, %v469
  %v602 = vpack.c.b16 %v474, %v470
  %v603 = vpack.c.b16 %v475, %v471
  %v604 = vpack.c.b16 %v476, %v472
  %v605 = vpack.c.b16 %v481, %v477
  %v606 = vpack.c.b16 %v482, %v478
  %v607 = vpack.c.b16 %v483, %v479
  %v608 = vpack.c.b16 %v484, %v480
  %v609 = vpack.c.b16 %v489, %v485
  %v610 = vpack.c.b16 %v490, %v486
  %v611 = vpack.c.b16 %v491, %v487
  %v612 = vpack.c.b16 %v492, %v488
  %v613 = vpack.c.b16 %v497, %v493
  %v614 = vpack.c.b16 %v498, %v494
  %v615 = vpack.c.b16 %v499, %v495
  %v616 = vpack.c.b16 %v500, %v496
  %v617 = vpack.c.b16 %v505, %v501
  %v618 = vpack.c.b16 %v506, %v502
  %v619 = vpack.c.b16 %v507, %v503
  %v620 = vpack.c.b16 %v508, %v504
  %v621 = vpack.c.b16 %v513, %v509
  %v622 = vpack.c.b16 %v514, %v510
  %v623 = vpack.c.b16 %v515, %v511
  %v624 = vpack.c.b16 %v516, %v512
  %v625 = vpack.c.b16 %v521, %v517
  %v626 = vpack.c.b16 %v522, %v518
  %v627 = vpack.c.b16 %v523, %v519
  %v628 = vpack.c.b16 %v524, %v520
  %v629 = vpack.c.b16 %v529, %v525
  %v630 = vpack.c.b16 %v530, %v526
  %v631 = vpack.c.b16 %v531, %v527
  %v632 = vpack.c.b16 %v532, %v528
  %v633 = vpack.c.b16 %v537, %v533
  %v634 = vpack.c.b16 %v538, %v534
  %v635 = vpack.c.b16 %v539, %v535
  %v636 = vpack.c.b16 %v540, %v536
  %v637 = vpack.c.b16 %v545, %v541
  %v638 = vpack.c.b16 %v546, %v542
  %v639 = vpack.c.b16 %v547, %v543
  %v640 = vpack.c.b16 %v548, %v544
  %v641 = vpack.c.b16 %v553, %v549
  %v642 = vpack.c.b16 %v554, %v550
  %v643 = vpack.c.b16 %v555, %v551
  %v644 = vpack.c.b16 %v556, %v552
  %v645 = vpack.c.b16 %v561, %v557
  %v646 = vpack.c.b16 %v562, %v558
  %v647 = vpack.c.b16 %v563, %v559
  %v648 = vpack.c.b16 %v564, %v560
  %v649 = vpack.c.b16 %v569, %v565
  %v650 = vpack.c.b16 %v570, %v566
  %v651 = vpack.c.b16 %v571, %v567
  %v652 = vpack.c.b16 %v572, %v568
  %v653 = vpack.c.b16 %v577, %v573
  %v654 = vpack.c.b16 %v578, %v574
  %v655 = vpack.c.b16 %v579, %v575
  %v656 = vpack.c.b16 %v580, %v576
  %v657 = vpack.c.b16 %v585, %v581
  %v658 = vpack.c.b16 %v586, %v582
  %v659 = vpack.c.b16 %v587, %v583
  %v660 = vpack.c.b16 %v588, %v584
  %vm733 = vcmask 261120
  %v735 = vsel %vm733, %v281, 0
  %v738 = vsel %vm733, %v305, 0
  %v741 = vsel %vm733, %v329, 0
  %v744 = vsel %vm733, %v353, 0
  %v747 = vsel %vm733, %v362, 0
  %749 = vmatprep.subr.bf16.mxu0 %v618
  %750 = vmatpush1.bf16.msra.mxu0 %v617
  %751 = vmatprep.subr.bf16.mxu0 %v614
  %752 = vmatpush1.bf16.msra.mxu0 %v613
  %753 = vmatprep.subr.bf16.mxu0 %v610
  %754 = vmatpush1.bf16.msra.mxu0 %v609
  %755 = vmatprep.subr.bf16.mxu0 %v606
  %756 = vmatpush1.bf16.msra.mxu0 %v605
  %757 = vmatprep.subr.bf16.mxu0 %v602
  %758 = vmatpush1.bf16.msra.mxu0 %v601
  %759 = vmatprep.subr.bf16.mxu0 %v598
  %760 = vmatpush1.bf16.msra.mxu0 %v597
  %761 = vmatprep.subr.bf16.mxu0 %v594
  %762 = vmatpush1.bf16.msra.mxu0 %v593
  %763 = vmatprep.subr.bf16.mxu0 %v590
  %764 = vmatpush1.bf16.msra.mxu0 %v589
  %765 = vmatprep.subr.bf16.mxu0 %v650
  %766 = vmatpush2.bf16.msra.mxu0 %v649
  %767 = vmatprep.subr.bf16.mxu0 %v646
  %768 = vmatpush2.bf16.msra.mxu0 %v645
  %769 = vmatprep.subr.bf16.mxu0 %v642
  %770 = vmatpush2.bf16.msra.mxu0 %v641
  %771 = vmatprep.subr.bf16.mxu0 %v638
  %772 = vmatpush2.bf16.msra.mxu0 %v637
  %773 = vmatprep.subr.bf16.mxu0 %v634
  %774 = vmatpush2.bf16.msra.mxu0 %v633
  %775 = vmatprep.subr.bf16.mxu0 %v630
  %776 = vmatpush2.bf16.msra.mxu0 %v629
  %777 = vmatprep.subr.bf16.mxu0 %v626
  %778 = vmatpush2.bf16.msra.mxu0 %v625
  %779 = vmatprep.subr.bf16.mxu0 %v622
  %780 = vmatpush2.bf16.msra.mxu0 %v621
  %781 = vmatprep.mubr.bf16.mxu0 %v269
  %782 = vmatmul.mubr.bf16.gmra.mxu0 %v257
  %v783 = vpop.f32.mrf.mxu0
  %v784 = vadd.f32 0.0, %v783
  %v785 = vpop.f32.mrf.mxu0
  %v786 = vadd.f32 0.0, %v785
  %v787 = vpop.f32.mrf.mxu0
  %v788 = vadd.f32 0.0, %v787
  %v789 = vpop.f32.mrf.mxu0
  %v790 = vadd.f32 0.0, %v789
  %791 = vmatprep.mubr.bf16.mxu0 %v297
  %792 = vmatmul.mubr.bf16.gmra.mxu0 %v289
  %v793 = vpop.f32.mrf.mxu0
  %v794 = vadd.f32 0.0, %v793
  %v795 = vpop.f32.mrf.mxu0
  %v796 = vadd.f32 0.0, %v795
  %v797 = vpop.f32.mrf.mxu0
  %v798 = vadd.f32 0.0, %v797
  %v799 = vpop.f32.mrf.mxu0
  %v800 = vadd.f32 0.0, %v799
  %801 = vmatprep.mubr.bf16.mxu0 %v321
  %802 = vmatmul.mubr.bf16.gmra.mxu0 %v313
  %v803 = vpop.f32.mrf.mxu0
  %v804 = vadd.f32 0.0, %v803
  %v805 = vpop.f32.mrf.mxu0
  %v806 = vadd.f32 0.0, %v805
  %v807 = vpop.f32.mrf.mxu0
  %v808 = vadd.f32 0.0, %v807
  %v809 = vpop.f32.mrf.mxu0
  %v810 = vadd.f32 0.0, %v809
  %811 = vmatprep.mubr.bf16.mxu0 %v345
  %812 = vmatmul.mubr.bf16.gmra.mxu0 %v337
  %v813 = vpop.f32.mrf.mxu0
  %v814 = vadd.f32 0.0, %v813
  %v815 = vpop.f32.mrf.mxu0
  %v816 = vadd.f32 0.0, %v815
  %v817 = vpop.f32.mrf.mxu0
  %v818 = vadd.f32 0.0, %v817
  %v819 = vpop.f32.mrf.mxu0
  %v820 = vadd.f32 0.0, %v819
  %821 = vmatprep.mubr.bf16.mxu0 %v359
  %822 = vmatmul.mubr.bf16.gmra.mxu0 %v356
  %v823 = vpop.f32.mrf.mxu0
  %v824 = vadd.f32 0.0, %v823
  %v825 = vpop.f32.mrf.mxu0
  %v826 = vadd.f32 0.0, %v825
  %v827 = vpop.f32.mrf.mxu0
  %v828 = vpop.f32.mrf.mxu0
  %829 = vdwg.mxu0
  %830 = vmatprep.subr.bf16.mxu0 0
  %831 = vmatpush1.bf16.msra.mxu0 0
  %832 = vmatprep.subr.bf16.mxu0 0
  %833 = vmatpush1.bf16.msra.mxu0 0
  %834 = vmatprep.subr.bf16.mxu0 0
  %835 = vmatpush1.bf16.msra.mxu0 0
  %836 = vmatprep.subr.bf16.mxu0 0
  %837 = vmatpush1.bf16.msra.mxu0 0
  %838 = vmatprep.subr.bf16.mxu0 0
  %839 = vmatpush1.bf16.msra.mxu0 0
  %840 = vmatprep.subr.bf16.mxu0 0
  %841 = vmatpush1.bf16.msra.mxu0 0
  %842 = vmatprep.subr.bf16.mxu0 %v658
  %843 = vmatpush1.bf16.msra.mxu0 %v657
  %844 = vmatprep.subr.bf16.mxu0 %v654
  %845 = vmatpush1.bf16.msra.mxu0 %v653
  %846 = vmatprep.subr.bf16.mxu0 0
  %847 = vmatpush2.bf16.msra.mxu0 0
  %848 = vmatprep.subr.bf16.mxu0 0
  %849 = vmatpush2.bf16.msra.mxu0 0
  %850 = vmatprep.subr.bf16.mxu0 0
  %851 = vmatpush2.bf16.msra.mxu0 0
  %852 = vmatprep.subr.bf16.mxu0 0
  %853 = vmatpush2.bf16.msra.mxu0 0
  %854 = vmatprep.subr.bf16.mxu0 0
  %855 = vmatpush2.bf16.msra.mxu0 0
  %856 = vmatprep.subr.bf16.mxu0 0
  %857 = vmatpush2.bf16.msra.mxu0 0
  %858 = vmatprep.subr.bf16.mxu0 0
  %859 = vmatpush2.bf16.msra.mxu0 0
  %860 = vmatprep.subr.bf16.mxu0 0
  %861 = vmatpush2.bf16.msra.mxu0 0
  %862 = vmatprep.mubr.bf16.mxu0 0
  %863 = vmatmul.mubr.bf16.gmra.mxu0 %v735
  %v864 = vpop.f32.mrf.mxu0
  %v865 = vadd.f32 %v784, %v864
  %v866 = vpop.f32.mrf.mxu0
  %v867 = vadd.f32 %v786, %v866
  %v868 = vpop.f32.mrf.mxu0
  %v869 = vadd.f32 %v788, %v868
  %v870 = vpop.f32.mrf.mxu0
  %v871 = vadd.f32 %v790, %v870
  %872 = vmatprep.mubr.bf16.mxu0 0
  %873 = vmatmul.mubr.bf16.gmra.mxu0 %v738
  %v874 = vpop.f32.mrf.mxu0
  %v875 = vadd.f32 %v794, %v874
  %v876 = vpop.f32.mrf.mxu0
  %v877 = vadd.f32 %v796, %v876
  %v878 = vpop.f32.mrf.mxu0
  %v879 = vadd.f32 %v798, %v878
  %v880 = vpop.f32.mrf.mxu0
  %v881 = vadd.f32 %v800, %v880
  %882 = vmatprep.mubr.bf16.mxu0 0
  %883 = vmatmul.mubr.bf16.gmra.mxu0 %v741
  %v884 = vpop.f32.mrf.mxu0
  %v885 = vadd.f32 %v804, %v884
  %v886 = vpop.f32.mrf.mxu0
  %v887 = vadd.f32 %v806, %v886
  %v888 = vpop.f32.mrf.mxu0
  %v889 = vadd.f32 %v808, %v888
  %v890 = vpop.f32.mrf.mxu0
  %v891 = vadd.f32 %v810, %v890
  %892 = vmatprep.mubr.bf16.mxu0 0
  %893 = vmatmul.mubr.bf16.gmra.mxu0 %v744
  %v894 = vpop.f32.mrf.mxu0
  %v895 = vadd.f32 %v814, %v894
  %v896 = vpop.f32.mrf.mxu0
  %v897 = vadd.f32 %v816, %v896
  %v898 = vpop.f32.mrf.mxu0
  %v899 = vadd.f32 %v818, %v898
  %v900 = vpop.f32.mrf.mxu0
  %v901 = vadd.f32 %v820, %v900
  %902 = vmatprep.mubr.bf16.mxu0 0
  %903 = vmatmul.mubr.bf16.gmra.mxu0 %v747
  %v904 = vpop.f32.mrf.mxu0
  %v905 = vadd.f32 %v824, %v904
  %v906 = vpop.f32.mrf.mxu0
  %v907 = vadd.f32 %v826, %v906
  %v908 = vpop.f32.mrf.mxu0
  %v909 = vpop.f32.mrf.mxu0
  %910 = vdwg.mxu0
  %911 = vmatprep.subr.bf16.mxu0 %v620
  %912 = vmatpush1.bf16.msra.mxu0 %v619
  %913 = vmatprep.subr.bf16.mxu0 %v616
  %914 = vmatpush1.bf16.msra.mxu0 %v615
  %915 = vmatprep.subr.bf16.mxu0 %v612
  %916 = vmatpush1.bf16.msra.mxu0 %v611
  %917 = vmatprep.subr.bf16.mxu0 %v608
  %918 = vmatpush1.bf16.msra.mxu0 %v607
  %919 = vmatprep.subr.bf16.mxu0 %v604
  %920 = vmatpush1.bf16.msra.mxu0 %v603
  %921 = vmatprep.subr.bf16.mxu0 %v600
  %922 = vmatpush1.bf16.msra.mxu0 %v599
  %923 = vmatprep.subr.bf16.mxu0 %v596
  %924 = vmatpush1.bf16.msra.mxu0 %v595
  %925 = vmatprep.subr.bf16.mxu0 %v592
  %926 = vmatpush1.bf16.msra.mxu0 %v591
  %927 = vmatprep.subr.bf16.mxu0 %v652
  %928 = vmatpush2.bf16.msra.mxu0 %v651
  %929 = vmatprep.subr.bf16.mxu0 %v648
  %930 = vmatpush2.bf16.msra.mxu0 %v647
  %931 = vmatprep.subr.bf16.mxu0 %v644
  %932 = vmatpush2.bf16.msra.mxu0 %v643
  %933 = vmatprep.subr.bf16.mxu0 %v640
  %934 = vmatpush2.bf16.msra.mxu0 %v639
  %935 = vmatprep.subr.bf16.mxu0 %v636
  %936 = vmatpush2.bf16.msra.mxu0 %v635
  %937 = vmatprep.subr.bf16.mxu0 %v632
  %938 = vmatpush2.bf16.msra.mxu0 %v631
  %939 = vmatprep.subr.bf16.mxu0 %v628
  %940 = vmatpush2.bf16.msra.mxu0 %v627
  %941 = vmatprep.subr.bf16.mxu0 %v624
  %942 = vmatpush2.bf16.msra.mxu0 %v623
  %943 = vmatprep.mubr.bf16.mxu0 %v269
  %944 = vmatmul.mubr.bf16.gmra.mxu0 %v257
  %v945 = vpop.f32.mrf.mxu0
  %v946 = vadd.f32 0.0, %v945
  %v947 = vpop.f32.mrf.mxu0
  %v948 = vadd.f32 0.0, %v947
  %v949 = vpop.f32.mrf.mxu0
  %v950 = vadd.f32 0.0, %v949
  %v951 = vpop.f32.mrf.mxu0
  %v952 = vadd.f32 0.0, %v951
  %953 = vmatprep.mubr.bf16.mxu0 %v297
  %954 = vmatmul.mubr.bf16.gmra.mxu0 %v289
  %v955 = vpop.f32.mrf.mxu0
  %v956 = vadd.f32 0.0, %v955
  %v957 = vpop.f32.mrf.mxu0
  %v958 = vadd.f32 0.0, %v957
  %v959 = vpop.f32.mrf.mxu0
  %v960 = vadd.f32 0.0, %v959
  %v961 = vpop.f32.mrf.mxu0
  %v962 = vadd.f32 0.0, %v961
  %963 = vmatprep.mubr.bf16.mxu0 %v321
  %964 = vmatmul.mubr.bf16.gmra.mxu0 %v313
  %v965 = vpop.f32.mrf.mxu0
  %v966 = vadd.f32 0.0, %v965
  %v967 = vpop.f32.mrf.mxu0
  %v968 = vadd.f32 0.0, %v967
  %v969 = vpop.f32.mrf.mxu0
  %v970 = vadd.f32 0.0, %v969
  %v971 = vpop.f32.mrf.mxu0
  %v972 = vadd.f32 0.0, %v971
  %973 = vmatprep.mubr.bf16.mxu0 %v345
  %974 = vmatmul.mubr.bf16.gmra.mxu0 %v337
  %v975 = vpop.f32.mrf.mxu0
  %v976 = vadd.f32 0.0, %v975
  %v977 = vpop.f32.mrf.mxu0
  %v978 = vadd.f32 0.0, %v977
  %v979 = vpop.f32.mrf.mxu0
  %v980 = vadd.f32 0.0, %v979
  %v981 = vpop.f32.mrf.mxu0
  %v982 = vadd.f32 0.0, %v981
  %983 = vmatprep.mubr.bf16.mxu0 %v359
  %984 = vmatmul.mubr.bf16.gmra.mxu0 %v356
  %v985 = vpop.f32.mrf.mxu0
  %v986 = vadd.f32 0.0, %v985
  %v987 = vpop.f32.mrf.mxu0
  %v988 = vadd.f32 0.0, %v987
  %v989 = vpop.f32.mrf.mxu0
  %v990 = vpop.f32.mrf.mxu0
  %991 = vdwg.mxu0
  %992 = vmatprep.subr.bf16.mxu0 0
  %993 = vmatpush1.bf16.msra.mxu0 0
  %994 = vmatprep.subr.bf16.mxu0 0
  %995 = vmatpush1.bf16.msra.mxu0 0
  %996 = vmatprep.subr.bf16.mxu0 0
  %997 = vmatpush1.bf16.msra.mxu0 0
  %998 = vmatprep.subr.bf16.mxu0 0
  %999 = vmatpush1.bf16.msra.mxu0 0
  %1000 = vmatprep.subr.bf16.mxu0 0
  %1001 = vmatpush1.bf16.msra.mxu0 0
  %1002 = vmatprep.subr.bf16.mxu0 0
  %1003 = vmatpush1.bf16.msra.mxu0 0
  %1004 = vmatprep.subr.bf16.mxu0 %v660
  %1005 = vmatpush1.bf16.msra.mxu0 %v659
  %1006 = vmatprep.subr.bf16.mxu0 %v656
  %1007 = vmatpush1.bf16.msra.mxu0 %v655
  %1008 = vmatprep.subr.bf16.mxu0 0
  %1009 = vmatpush2.bf16.msra.mxu0 0
  %1010 = vmatprep.subr.bf16.mxu0 0
  %1011 = vmatpush2.bf16.msra.mxu0 0
  %1012 = vmatprep.subr.bf16.mxu0 0
  %1013 = vmatpush2.bf16.msra.mxu0 0
  %1014 = vmatprep.subr.bf16.mxu0 0
  %1015 = vmatpush2.bf16.msra.mxu0 0
  %1016 = vmatprep.subr.bf16.mxu0 0
  %1017 = vmatpush2.bf16.msra.mxu0 0
  %1018 = vmatprep.subr.bf16.mxu0 0
  %1019 = vmatpush2.bf16.msra.mxu0 0
  %1020 = vmatprep.subr.bf16.mxu0 0
  %1021 = vmatpush2.bf16.msra.mxu0 0
  %1022 = vmatprep.subr.bf16.mxu0 0
  %1023 = vmatpush2.bf16.msra.mxu0 0
  %1024 = vmatprep.mubr.bf16.mxu0 0
  %1025 = vmatmul.mubr.bf16.gmra.mxu0 %v735
  %v1026 = vpop.f32.mrf.mxu0
  %v1027 = vadd.f32 %v946, %v1026
  %v1028 = vpop.f32.mrf.mxu0
  %v1029 = vadd.f32 %v948, %v1028
  %v1030 = vpop.f32.mrf.mxu0
  %v1031 = vadd.f32 %v950, %v1030
  %v1032 = vpop.f32.mrf.mxu0
  %v1033 = vadd.f32 %v952, %v1032
  %1034 = vmatprep.mubr.bf16.mxu0 0
  %1035 = vmatmul.mubr.bf16.gmra.mxu0 %v738
  %v1036 = vpop.f32.mrf.mxu0
  %v1037 = vadd.f32 %v956, %v1036
  %v1038 = vpop.f32.mrf.mxu0
  %v1039 = vadd.f32 %v958, %v1038
  %v1040 = vpop.f32.mrf.mxu0
  %v1041 = vadd.f32 %v960, %v1040
  %v1042 = vpop.f32.mrf.mxu0
  %v1043 = vadd.f32 %v962, %v1042
  %1044 = vmatprep.mubr.bf16.mxu0 0
  %1045 = vmatmul.mubr.bf16.gmra.mxu0 %v741
  %v1046 = vpop.f32.mrf.mxu0
  %v1047 = vadd.f32 %v966, %v1046
  %v1048 = vpop.f32.mrf.mxu0
  %v1049 = vadd.f32 %v968, %v1048
  %v1050 = vpop.f32.mrf.mxu0
  %v1051 = vadd.f32 %v970, %v1050
  %v1052 = vpop.f32.mrf.mxu0
  %v1053 = vadd.f32 %v972, %v1052
  %1054 = vmatprep.mubr.bf16.mxu0 0
  %1055 = vmatmul.mubr.bf16.gmra.mxu0 %v744
  %v1056 = vpop.f32.mrf.mxu0
  %v1057 = vadd.f32 %v976, %v1056
  %v1058 = vpop.f32.mrf.mxu0
  %v1059 = vadd.f32 %v978, %v1058
  %v1060 = vpop.f32.mrf.mxu0
  %v1061 = vadd.f32 %v980, %v1060
  %v1062 = vpop.f32.mrf.mxu0
  %v1063 = vadd.f32 %v982, %v1062
  %1064 = vmatprep.mubr.bf16.mxu0 0
  %1065 = vmatmul.mubr.bf16.gmra.mxu0 %v747
  %v1066 = vpop.f32.mrf.mxu0
  %v1067 = vadd.f32 %v986, %v1066
  %v1068 = vpop.f32.mrf.mxu0
  %v1069 = vadd.f32 %v988, %v1068
  %v1070 = vpop.f32.mrf.mxu0
  %v1071 = vpop.f32.mrf.mxu0
  %1072 = vdwg.mxu0
  %v1073 = vpack.c.b16 %v224, %v224
  %v1074 = vpack.c.b16 %v225, %v225
  %v1075 = vpack.c.b16 %v226, %v226
  %v1158 = vunpack.c.l.b16 %v33
  %v1159 = vunpack.c.h.b16 %v33
  %v1160 = vunpack.c.l.b16 %v34
  %v1161 = vunpack.c.h.b16 %v34
  %v1162 = vunpack.c.l.b16 %v35
  %v1163 = vunpack.c.h.b16 %v35
  %v1164 = vunpack.c.l.b16 %v36
  %v1165 = vunpack.c.h.b16 %v36
  %v1166 = vunpack.c.l.b16 %v37
  %v1167 = vunpack.c.h.b16 %v37
  %v1168 = vunpack.c.l.b16 %v38
  %v1169 = vunpack.c.h.b16 %v38
  %v1170 = vunpack.c.l.b16 %v39
  %v1171 = vunpack.c.h.b16 %v39
  %v1172 = vunpack.c.l.b16 %v40
  %v1173 = vunpack.c.h.b16 %v40
  %v1174 = vunpack.c.l.b16 %v41
  %v1175 = vunpack.c.h.b16 %v41
  %v1176 = vunpack.c.l.b16 %v42
  %v1177 = vunpack.c.h.b16 %v42
  %v1178 = vunpack.c.l.b16 %v43
  %v1179 = vunpack.c.h.b16 %v43
  %v1180 = vunpack.c.l.b16 %v44
  %v1181 = vunpack.c.h.b16 %v44
  %v1182 = vunpack.c.l.b16 %v45
  %v1183 = vunpack.c.h.b16 %v45
  %v1184 = vunpack.c.l.b16 %v46
  %v1185 = vunpack.c.h.b16 %v46
  %v1186 = vunpack.c.l.b16 %v47
  %v1187 = vunpack.c.h.b16 %v47
  %v1188 = vunpack.c.l.b16 %v48
  %v1189 = vunpack.c.h.b16 %v48
  %v1190 = vunpack.c.l.b16 %v49
  %v1191 = vunpack.c.h.b16 %v49
  %v1192 = vunpack.c.l.b16 %v50
  %v1193 = vunpack.c.h.b16 %v50
  %v1194 = vunpack.c.l.b16 %v51
  %v1195 = vunpack.c.h.b16 %v51
  %v1196 = vunpack.c.l.b16 %v52
  %v1197 = vunpack.c.h.b16 %v52
  %v1198 = vunpack.c.l.b16 %v53
  %v1199 = vunpack.c.h.b16 %v53
  %v1200 = vunpack.c.l.b16 %v54
  %v1201 = vunpack.c.h.b16 %v54
  %v1202 = vunpack.c.l.b16 %v55
  %v1203 = vunpack.c.h.b16 %v55
  %v1204 = vunpack.c.l.b16 %v56
  %v1205 = vunpack.c.h.b16 %v56
  %v1206 = vunpack.c.l.b16 %v57
  %v1207 = vunpack.c.h.b16 %v57
  %v1208 = vunpack.c.l.b16 %v58
  %v1209 = vunpack.c.h.b16 %v58
  %v1210 = vunpack.c.l.b16 %v59
  %v1211 = vunpack.c.h.b16 %v59
  %v1212 = vunpack.c.l.b16 %v60
  %v1213 = vunpack.c.h.b16 %v60
  %v1214 = vunpack.c.l.b16 %v61
  %v1215 = vunpack.c.h.b16 %v61
  %v1216 = vunpack.c.l.b16 %v62
  %v1217 = vunpack.c.h.b16 %v62
  %v1218 = vunpack.c.l.b16 %v63
  %v1219 = vunpack.c.h.b16 %v63
  %v1220 = vunpack.c.l.b16 %v64
  %v1221 = vunpack.c.h.b16 %v64
  %v1222 = vunpack.c.l.b16 %v65
  %v1223 = vunpack.c.h.b16 %v65
  %v1224 = vunpack.c.l.b16 %v66
  %v1225 = vunpack.c.h.b16 %v66
  %v1226 = vunpack.c.l.b16 %v67
  %v1227 = vunpack.c.h.b16 %v67
  %v1228 = vunpack.c.l.b16 %v68
  %v1229 = vunpack.c.h.b16 %v68
  %v1230 = vunpack.c.l.b16 %v69
  %v1231 = vunpack.c.h.b16 %v69
  %v1232 = vunpack.c.l.b16 %v70
  %v1233 = vunpack.c.h.b16 %v70
  %v1234 = vunpack.c.l.b16 %v71
  %v1235 = vunpack.c.h.b16 %v71
  %v1236 = vunpack.c.l.b16 %v72
  %v1237 = vunpack.c.h.b16 %v72
  %v1238 = vunpack.c.l.b16 %v73
  %v1239 = vunpack.c.h.b16 %v73
  %v1240 = vunpack.c.l.b16 %v74
  %v1241 = vunpack.c.h.b16 %v74
  %v1242 = vunpack.c.l.b16 %v75
  %v1243 = vunpack.c.h.b16 %v75
  %v1244 = vunpack.c.l.b16 %v76
  %v1245 = vunpack.c.h.b16 %v76
  %v1246 = vunpack.c.l.b16 %v77
  %v1247 = vunpack.c.h.b16 %v77
  %v1248 = vunpack.c.l.b16 %v78
  %v1249 = vunpack.c.h.b16 %v78
  %v1250 = vunpack.c.l.b16 %v79
  %v1251 = vunpack.c.h.b16 %v79
  %v1252 = vunpack.c.l.b16 %v80
  %v1253 = vunpack.c.h.b16 %v80
  %v1254 = vunpack.c.l.b16 %v81
  %v1255 = vunpack.c.h.b16 %v81
  %v1256 = vunpack.c.l.b16 %v82
  %v1257 = vunpack.c.h.b16 %v82
  %v1258 = vunpack.c.l.b16 %v83
  %v1259 = vunpack.c.h.b16 %v83
  %v1260 = vunpack.c.l.b16 %v84
  %v1261 = vunpack.c.h.b16 %v84
  %v1262 = vunpack.c.l.b16 %v85
  %v1263 = vunpack.c.h.b16 %v85
  %v1264 = vunpack.c.l.b16 %v86
  %v1265 = vunpack.c.h.b16 %v86
  %v1266 = vunpack.c.l.b16 %v87
  %v1267 = vunpack.c.h.b16 %v87
  %v1268 = vunpack.c.l.b16 %v88
  %v1269 = vunpack.c.h.b16 %v88
  %v1270 = vunpack.c.l.b16 %v89
  %v1271 = vunpack.c.h.b16 %v89
  %v1272 = vunpack.c.l.b16 %v90
  %v1273 = vunpack.c.h.b16 %v90
  %v1274 = vunpack.c.l.b16 %v91
  %v1275 = vunpack.c.h.b16 %v91
  %v1276 = vunpack.c.l.b16 %v92
  %v1277 = vunpack.c.h.b16 %v92
  %v1278 = vunpack.c.l.b16 %v93
  %v1279 = vunpack.c.h.b16 %v93
  %v1280 = vunpack.c.l.b16 %v94
  %v1281 = vunpack.c.h.b16 %v94
  %v1282 = vunpack.c.l.b16 %v95
  %v1283 = vunpack.c.h.b16 %v95
  %v1284 = vunpack.c.l.b16 %v96
  %v1285 = vunpack.c.h.b16 %v96
  %v1286 = vunpack.c.l.b16 %v97
  %v1287 = vunpack.c.h.b16 %v97
  %v1288 = vunpack.c.l.b16 %v98
  %v1289 = vunpack.c.h.b16 %v98
  %v1290 = vunpack.c.l.b16 %v99
  %v1291 = vunpack.c.h.b16 %v99
  %v1292 = vunpack.c.l.b16 %v100
  %v1293 = vunpack.c.h.b16 %v100
  %v1294 = vunpack.c.l.b16 %v101
  %v1295 = vunpack.c.h.b16 %v101
  %v1296 = vunpack.c.l.b16 %v102
  %v1297 = vunpack.c.h.b16 %v102
  %v1298 = vunpack.c.l.b16 %v103
  %v1299 = vunpack.c.h.b16 %v103
  %v1300 = vunpack.c.l.b16 %v104
  %v1301 = vunpack.c.h.b16 %v104
  %v1302 = vpack.c.b16 %v1162, %v1158
  %v1303 = vpack.c.b16 %v1163, %v1159
  %v1304 = vpack.c.b16 %v1164, %v1160
  %v1305 = vpack.c.b16 %v1165, %v1161
  %v1306 = vpack.c.b16 %v1170, %v1166
  %v1307 = vpack.c.b16 %v1171, %v1167
  %v1308 = vpack.c.b16 %v1172, %v1168
  %v1309 = vpack.c.b16 %v1173, %v1169
  %v1310 = vpack.c.b16 %v1178, %v1174
  %v1311 = vpack.c.b16 %v1179, %v1175
  %v1312 = vpack.c.b16 %v1180, %v1176
  %v1313 = vpack.c.b16 %v1181, %v1177
  %v1314 = vpack.c.b16 %v1186, %v1182
  %v1315 = vpack.c.b16 %v1187, %v1183
  %v1316 = vpack.c.b16 %v1188, %v1184
  %v1317 = vpack.c.b16 %v1189, %v1185
  %v1318 = vpack.c.b16 %v1194, %v1190
  %v1319 = vpack.c.b16 %v1195, %v1191
  %v1320 = vpack.c.b16 %v1196, %v1192
  %v1321 = vpack.c.b16 %v1197, %v1193
  %v1322 = vpack.c.b16 %v1202, %v1198
  %v1323 = vpack.c.b16 %v1203, %v1199
  %v1324 = vpack.c.b16 %v1204, %v1200
  %v1325 = vpack.c.b16 %v1205, %v1201
  %v1326 = vpack.c.b16 %v1210, %v1206
  %v1327 = vpack.c.b16 %v1211, %v1207
  %v1328 = vpack.c.b16 %v1212, %v1208
  %v1329 = vpack.c.b16 %v1213, %v1209
  %v1330 = vpack.c.b16 %v1218, %v1214
  %v1331 = vpack.c.b16 %v1219, %v1215
  %v1332 = vpack.c.b16 %v1220, %v1216
  %v1333 = vpack.c.b16 %v1221, %v1217
  %v1334 = vpack.c.b16 %v1226, %v1222
  %v1335 = vpack.c.b16 %v1227, %v1223
  %v1336 = vpack.c.b16 %v1228, %v1224
  %v1337 = vpack.c.b16 %v1229, %v1225
  %v1338 = vpack.c.b16 %v1234, %v1230
  %v1339 = vpack.c.b16 %v1235, %v1231
  %v1340 = vpack.c.b16 %v1236, %v1232
  %v1341 = vpack.c.b16 %v1237, %v1233
  %v1342 = vpack.c.b16 %v1242, %v1238
  %v1343 = vpack.c.b16 %v1243, %v1239
  %v1344 = vpack.c.b16 %v1244, %v1240
  %v1345 = vpack.c.b16 %v1245, %v1241
  %v1346 = vpack.c.b16 %v1250, %v1246
  %v1347 = vpack.c.b16 %v1251, %v1247
  %v1348 = vpack.c.b16 %v1252, %v1248
  %v1349 = vpack.c.b16 %v1253, %v1249
  %v1350 = vpack.c.b16 %v1258, %v1254
  %v1351 = vpack.c.b16 %v1259, %v1255
  %v1352 = vpack.c.b16 %v1260, %v1256
  %v1353 = vpack.c.b16 %v1261, %v1257
  %v1354 = vpack.c.b16 %v1266, %v1262
  %v1355 = vpack.c.b16 %v1267, %v1263
  %v1356 = vpack.c.b16 %v1268, %v1264
  %v1357 = vpack.c.b16 %v1269, %v1265
  %v1358 = vpack.c.b16 %v1274, %v1270
  %v1359 = vpack.c.b16 %v1275, %v1271
  %v1360 = vpack.c.b16 %v1276, %v1272
  %v1361 = vpack.c.b16 %v1277, %v1273
  %v1362 = vpack.c.b16 %v1282, %v1278
  %v1363 = vpack.c.b16 %v1283, %v1279
  %v1364 = vpack.c.b16 %v1284, %v1280
  %v1365 = vpack.c.b16 %v1285, %v1281
  %v1366 = vpack.c.b16 %v1290, %v1286
  %v1367 = vpack.c.b16 %v1291, %v1287
  %v1368 = vpack.c.b16 %v1292, %v1288
  %v1369 = vpack.c.b16 %v1293, %v1289
  %v1370 = vpack.c.b16 %v1298, %v1294
  %v1371 = vpack.c.b16 %v1299, %v1295
  %v1372 = vpack.c.b16 %v1300, %v1296
  %v1373 = vpack.c.b16 %v1301, %v1297
  %v1446 = vsel %vm733, %v232, 0
  %v1448 = vsel %vm733, %v235, 0
  %v1450 = vsel %vm733, %v238, 0
  %v1452 = vsel %vm733, %v241, 0
  %v1455 = vsel %vm733, %v1075, 0
  %1457 = vmatprep.subr.bf16.mxu0 %v1331
  %1458 = vmatpush1.bf16.msra.mxu0 %v1330
  %1459 = vmatprep.subr.bf16.mxu0 %v1327
  %1460 = vmatpush1.bf16.msra.mxu0 %v1326
  %1461 = vmatprep.subr.bf16.mxu0 %v1323
  %1462 = vmatpush1.bf16.msra.mxu0 %v1322
  %1463 = vmatprep.subr.bf16.mxu0 %v1319
  %1464 = vmatpush1.bf16.msra.mxu0 %v1318
  %1465 = vmatprep.subr.bf16.mxu0 %v1315
  %1466 = vmatpush1.bf16.msra.mxu0 %v1314
  %1467 = vmatprep.subr.bf16.mxu0 %v1311
  %1468 = vmatpush1.bf16.msra.mxu0 %v1310
  %1469 = vmatprep.subr.bf16.mxu0 %v1307
  %1470 = vmatpush1.bf16.msra.mxu0 %v1306
  %1471 = vmatprep.subr.bf16.mxu0 %v1303
  %1472 = vmatpush1.bf16.msra.mxu0 %v1302
  %1473 = vmatprep.subr.bf16.mxu0 %v1363
  %1474 = vmatpush2.bf16.msra.mxu0 %v1362
  %1475 = vmatprep.subr.bf16.mxu0 %v1359
  %1476 = vmatpush2.bf16.msra.mxu0 %v1358
  %1477 = vmatprep.subr.bf16.mxu0 %v1355
  %1478 = vmatpush2.bf16.msra.mxu0 %v1354
  %1479 = vmatprep.subr.bf16.mxu0 %v1351
  %1480 = vmatpush2.bf16.msra.mxu0 %v1350
  %1481 = vmatprep.subr.bf16.mxu0 %v1347
  %1482 = vmatpush2.bf16.msra.mxu0 %v1346
  %1483 = vmatprep.subr.bf16.mxu0 %v1343
  %1484 = vmatpush2.bf16.msra.mxu0 %v1342
  %1485 = vmatprep.subr.bf16.mxu0 %v1339
  %1486 = vmatpush2.bf16.msra.mxu0 %v1338
  %1487 = vmatprep.subr.bf16.mxu0 %v1335
  %1488 = vmatpush2.bf16.msra.mxu0 %v1334
  %1489 = vmatprep.mubr.bf16.mxu0 %v231
  %1490 = vmatmul.mubr.bf16.gmra.mxu0 %v230
  %v1491 = vpop.f32.mrf.mxu0
  %v1492 = vadd.f32 %v865, %v1491
  %v1493 = vpop.f32.mrf.mxu0
  %v1494 = vadd.f32 %v867, %v1493
  %v1495 = vpop.f32.mrf.mxu0
  %v1496 = vadd.f32 %v869, %v1495
  %v1497 = vpop.f32.mrf.mxu0
  %v1498 = vadd.f32 %v871, %v1497
  %1499 = vmatprep.mubr.bf16.mxu0 %v234
  %1500 = vmatmul.mubr.bf16.gmra.mxu0 %v233
  %v1501 = vpop.f32.mrf.mxu0
  %v1502 = vadd.f32 %v875, %v1501
  %v1503 = vpop.f32.mrf.mxu0
  %v1504 = vadd.f32 %v877, %v1503
  %v1505 = vpop.f32.mrf.mxu0
  %v1506 = vadd.f32 %v879, %v1505
  %v1507 = vpop.f32.mrf.mxu0
  %v1508 = vadd.f32 %v881, %v1507
  %1509 = vmatprep.mubr.bf16.mxu0 %v237
  %1510 = vmatmul.mubr.bf16.gmra.mxu0 %v236
  %v1511 = vpop.f32.mrf.mxu0
  %v1512 = vadd.f32 %v885, %v1511
  %v1513 = vpop.f32.mrf.mxu0
  %v1514 = vadd.f32 %v887, %v1513
  %v1515 = vpop.f32.mrf.mxu0
  %v1516 = vadd.f32 %v889, %v1515
  %v1517 = vpop.f32.mrf.mxu0
  %v1518 = vadd.f32 %v891, %v1517
  %1519 = vmatprep.mubr.bf16.mxu0 %v240
  %1520 = vmatmul.mubr.bf16.gmra.mxu0 %v239
  %v1521 = vpop.f32.mrf.mxu0
  %v1522 = vadd.f32 %v895, %v1521
  %v1523 = vpop.f32.mrf.mxu0
  %v1524 = vadd.f32 %v897, %v1523
  %v1525 = vpop.f32.mrf.mxu0
  %v1526 = vadd.f32 %v899, %v1525
  %v1527 = vpop.f32.mrf.mxu0
  %v1528 = vadd.f32 %v901, %v1527
  %1529 = vmatprep.mubr.bf16.mxu0 %v1074
  %1530 = vmatmul.mubr.bf16.gmra.mxu0 %v1073
  %v1531 = vpop.f32.mrf.mxu0
  %v1532 = vadd.f32 %v905, %v1531
  %v1533 = vpop.f32.mrf.mxu0
  %v1534 = vadd.f32 %v907, %v1533
  %v1535 = vpop.f32.mrf.mxu0
  %v1536 = vpop.f32.mrf.mxu0
  %1537 = vdwg.mxu0
  %1538 = vmatprep.subr.bf16.mxu0 0
  %1539 = vmatpush1.bf16.msra.mxu0 0
  %1540 = vmatprep.subr.bf16.mxu0 0
  %1541 = vmatpush1.bf16.msra.mxu0 0
  %1542 = vmatprep.subr.bf16.mxu0 0
  %1543 = vmatpush1.bf16.msra.mxu0 0
  %1544 = vmatprep.subr.bf16.mxu0 0
  %1545 = vmatpush1.bf16.msra.mxu0 0
  %1546 = vmatprep.subr.bf16.mxu0 0
  %1547 = vmatpush1.bf16.msra.mxu0 0
  %1548 = vmatprep.subr.bf16.mxu0 0
  %1549 = vmatpush1.bf16.msra.mxu0 0
  %1550 = vmatprep.subr.bf16.mxu0 %v1371
  %1551 = vmatpush1.bf16.msra.mxu0 %v1370
  %1552 = vmatprep.subr.bf16.mxu0 %v1367
  %1553 = vmatpush1.bf16.msra.mxu0 %v1366
  %1554 = vmatprep.subr.bf16.mxu0 0
  %1555 = vmatpush2.bf16.msra.mxu0 0
  %1556 = vmatprep.subr.bf16.mxu0 0
  %1557 = vmatpush2.bf16.msra.mxu0 0
  %1558 = vmatprep.subr.bf16.mxu0 0
  %1559 = vmatpush2.bf16.msra.mxu0 0
  %1560 = vmatprep.subr.bf16.mxu0 0
  %1561 = vmatpush2.bf16.msra.mxu0 0
  %1562 = vmatprep.subr.bf16.mxu0 0
  %1563 = vmatpush2.bf16.msra.mxu0 0
  %1564 = vmatprep.subr.bf16.mxu0 0
  %1565 = vmatpush2.bf16.msra.mxu0 0
  %1566 = vmatprep.subr.bf16.mxu0 0
  %1567 = vmatpush2.bf16.msra.mxu0 0
  %1568 = vmatprep.subr.bf16.mxu0 0
  %1569 = vmatpush2.bf16.msra.mxu0 0
  %1570 = vmatprep.mubr.bf16.mxu0 0
  %1571 = vmatmul.mubr.bf16.gmra.mxu0 %v1446
  %v1572 = vpop.f32.mrf.mxu0
  %v1573 = vadd.f32 %v1492, %v1572
  %v1574 = vpop.f32.mrf.mxu0
  %v1575 = vadd.f32 %v1494, %v1574
  %v1576 = vpop.f32.mrf.mxu0
  %v1577 = vadd.f32 %v1496, %v1576
  %v1578 = vpop.f32.mrf.mxu0
  %v1579 = vadd.f32 %v1498, %v1578
  %1580 = vmatprep.mubr.bf16.mxu0 0
  %1581 = vmatmul.mubr.bf16.gmra.mxu0 %v1448
  %v1582 = vpop.f32.mrf.mxu0
  %v1583 = vadd.f32 %v1502, %v1582
  %v1584 = vpop.f32.mrf.mxu0
  %v1585 = vadd.f32 %v1504, %v1584
  %v1586 = vpop.f32.mrf.mxu0
  %v1587 = vadd.f32 %v1506, %v1586
  %v1588 = vpop.f32.mrf.mxu0
  %v1589 = vadd.f32 %v1508, %v1588
  %1590 = vmatprep.mubr.bf16.mxu0 0
  %1591 = vmatmul.mubr.bf16.gmra.mxu0 %v1450
  %v1592 = vpop.f32.mrf.mxu0
  %v1593 = vadd.f32 %v1512, %v1592
  %v1594 = vpop.f32.mrf.mxu0
  %v1595 = vadd.f32 %v1514, %v1594
  %v1596 = vpop.f32.mrf.mxu0
  %v1597 = vadd.f32 %v1516, %v1596
  %v1598 = vpop.f32.mrf.mxu0
  %v1599 = vadd.f32 %v1518, %v1598
  %1600 = vmatprep.mubr.bf16.mxu0 0
  %1601 = vmatmul.mubr.bf16.gmra.mxu0 %v1452
  %v1602 = vpop.f32.mrf.mxu0
  %v1603 = vadd.f32 %v1522, %v1602
  %v1604 = vpop.f32.mrf.mxu0
  %v1605 = vadd.f32 %v1524, %v1604
  %v1606 = vpop.f32.mrf.mxu0
  %v1607 = vadd.f32 %v1526, %v1606
  %v1608 = vpop.f32.mrf.mxu0
  %v1609 = vadd.f32 %v1528, %v1608
  %1610 = vmatprep.mubr.bf16.mxu0 0
  %1611 = vmatmul.mubr.bf16.gmra.mxu0 %v1455
  %v1612 = vpop.f32.mrf.mxu0
  %v1613 = vadd.f32 %v1532, %v1612
  %v1614 = vpop.f32.mrf.mxu0
  %v1615 = vadd.f32 %v1534, %v1614
  %v1616 = vpop.f32.mrf.mxu0
  %v1617 = vpop.f32.mrf.mxu0
  %1618 = vdwg.mxu0
  %1619 = vmatprep.subr.bf16.mxu0 %v1333
  %1620 = vmatpush1.bf16.msra.mxu0 %v1332
  %1621 = vmatprep.subr.bf16.mxu0 %v1329
  %1622 = vmatpush1.bf16.msra.mxu0 %v1328
  %1623 = vmatprep.subr.bf16.mxu0 %v1325
  %1624 = vmatpush1.bf16.msra.mxu0 %v1324
  %1625 = vmatprep.subr.bf16.mxu0 %v1321
  %1626 = vmatpush1.bf16.msra.mxu0 %v1320
  %1627 = vmatprep.subr.bf16.mxu0 %v1317
  %1628 = vmatpush1.bf16.msra.mxu0 %v1316
  %1629 = vmatprep.subr.bf16.mxu0 %v1313
  %1630 = vmatpush1.bf16.msra.mxu0 %v1312
  %1631 = vmatprep.subr.bf16.mxu0 %v1309
  %1632 = vmatpush1.bf16.msra.mxu0 %v1308
  %1633 = vmatprep.subr.bf16.mxu0 %v1305
  %1634 = vmatpush1.bf16.msra.mxu0 %v1304
  %1635 = vmatprep.subr.bf16.mxu0 %v1365
  %1636 = vmatpush2.bf16.msra.mxu0 %v1364
  %1637 = vmatprep.subr.bf16.mxu0 %v1361
  %1638 = vmatpush2.bf16.msra.mxu0 %v1360
  %1639 = vmatprep.subr.bf16.mxu0 %v1357
  %1640 = vmatpush2.bf16.msra.mxu0 %v1356
  %1641 = vmatprep.subr.bf16.mxu0 %v1353
  %1642 = vmatpush2.bf16.msra.mxu0 %v1352
  %1643 = vmatprep.subr.bf16.mxu0 %v1349
  %1644 = vmatpush2.bf16.msra.mxu0 %v1348
  %1645 = vmatprep.subr.bf16.mxu0 %v1345
  %1646 = vmatpush2.bf16.msra.mxu0 %v1344
  %1647 = vmatprep.subr.bf16.mxu0 %v1341
  %1648 = vmatpush2.bf16.msra.mxu0 %v1340
  %1649 = vmatprep.subr.bf16.mxu0 %v1337
  %1650 = vmatpush2.bf16.msra.mxu0 %v1336
  %1651 = vmatprep.mubr.bf16.mxu0 %v231
  %1652 = vmatmul.mubr.bf16.gmra.mxu0 %v230
  %v1653 = vpop.f32.mrf.mxu0
  %v1654 = vadd.f32 %v1027, %v1653
  %v1655 = vpop.f32.mrf.mxu0
  %v1656 = vadd.f32 %v1029, %v1655
  %v1657 = vpop.f32.mrf.mxu0
  %v1658 = vadd.f32 %v1031, %v1657
  %v1659 = vpop.f32.mrf.mxu0
  %v1660 = vadd.f32 %v1033, %v1659
  %1661 = vmatprep.mubr.bf16.mxu0 %v234
  %1662 = vmatmul.mubr.bf16.gmra.mxu0 %v233
  %v1663 = vpop.f32.mrf.mxu0
  %v1664 = vadd.f32 %v1037, %v1663
  %v1665 = vpop.f32.mrf.mxu0
  %v1666 = vadd.f32 %v1039, %v1665
  %v1667 = vpop.f32.mrf.mxu0
  %v1668 = vadd.f32 %v1041, %v1667
  %v1669 = vpop.f32.mrf.mxu0
  %v1670 = vadd.f32 %v1043, %v1669
  %1671 = vmatprep.mubr.bf16.mxu0 %v237
  %1672 = vmatmul.mubr.bf16.gmra.mxu0 %v236
  %v1673 = vpop.f32.mrf.mxu0
  %v1674 = vadd.f32 %v1047, %v1673
  %v1675 = vpop.f32.mrf.mxu0
  %v1676 = vadd.f32 %v1049, %v1675
  %v1677 = vpop.f32.mrf.mxu0
  %v1678 = vadd.f32 %v1051, %v1677
  %v1679 = vpop.f32.mrf.mxu0
  %v1680 = vadd.f32 %v1053, %v1679
  %1681 = vmatprep.mubr.bf16.mxu0 %v240
  %1682 = vmatmul.mubr.bf16.gmra.mxu0 %v239
  %v1683 = vpop.f32.mrf.mxu0
  %v1684 = vadd.f32 %v1057, %v1683
  %v1685 = vpop.f32.mrf.mxu0
  %v1686 = vadd.f32 %v1059, %v1685
  %v1687 = vpop.f32.mrf.mxu0
  %v1688 = vadd.f32 %v1061, %v1687
  %v1689 = vpop.f32.mrf.mxu0
  %v1690 = vadd.f32 %v1063, %v1689
  %1691 = vmatprep.mubr.bf16.mxu0 %v1074
  %1692 = vmatmul.mubr.bf16.gmra.mxu0 %v1073
  %v1693 = vpop.f32.mrf.mxu0
  %v1694 = vadd.f32 %v1067, %v1693
  %v1695 = vpop.f32.mrf.mxu0
  %v1696 = vadd.f32 %v1069, %v1695
  %v1697 = vpop.f32.mrf.mxu0
  %v1698 = vpop.f32.mrf.mxu0
  %1699 = vdwg.mxu0
  %1700 = vmatprep.subr.bf16.mxu0 0
  %1701 = vmatpush1.bf16.msra.mxu0 0
  %1702 = vmatprep.subr.bf16.mxu0 0
  %1703 = vmatpush1.bf16.msra.mxu0 0
  %1704 = vmatprep.subr.bf16.mxu0 0
  %1705 = vmatpush1.bf16.msra.mxu0 0
  %1706 = vmatprep.subr.bf16.mxu0 0
  %1707 = vmatpush1.bf16.msra.mxu0 0
  %1708 = vmatprep.subr.bf16.mxu0 0
  %1709 = vmatpush1.bf16.msra.mxu0 0
  %1710 = vmatprep.subr.bf16.mxu0 0
  %1711 = vmatpush1.bf16.msra.mxu0 0
  %1712 = vmatprep.subr.bf16.mxu0 %v1373
  %1713 = vmatpush1.bf16.msra.mxu0 %v1372
  %1714 = vmatprep.subr.bf16.mxu0 %v1369
  %1715 = vmatpush1.bf16.msra.mxu0 %v1368
  %1716 = vmatprep.subr.bf16.mxu0 0
  %1717 = vmatpush2.bf16.msra.mxu0 0
  %1718 = vmatprep.subr.bf16.mxu0 0
  %1719 = vmatpush2.bf16.msra.mxu0 0
  %1720 = vmatprep.subr.bf16.mxu0 0
  %1721 = vmatpush2.bf16.msra.mxu0 0
  %1722 = vmatprep.subr.bf16.mxu0 0
  %1723 = vmatpush2.bf16.msra.mxu0 0
  %1724 = vmatprep.subr.bf16.mxu0 0
  %1725 = vmatpush2.bf16.msra.mxu0 0
  %1726 = vmatprep.subr.bf16.mxu0 0
  %1727 = vmatpush2.bf16.msra.mxu0 0
  %1728 = vmatprep.subr.bf16.mxu0 0
  %1729 = vmatpush2.bf16.msra.mxu0 0
  %1730 = vmatprep.subr.bf16.mxu0 0
  %1731 = vmatpush2.bf16.msra.mxu0 0
  %1732 = vmatprep.mubr.bf16.mxu0 0
  %1733 = vmatmul.mubr.bf16.gmra.mxu0 %v1446
  %v1734 = vpop.f32.mrf.mxu0
  %v1735 = vadd.f32 %v1654, %v1734
  %v1736 = vpop.f32.mrf.mxu0
  %v1737 = vadd.f32 %v1656, %v1736
  %v1738 = vpop.f32.mrf.mxu0
  %v1739 = vadd.f32 %v1658, %v1738
  %v1740 = vpop.f32.mrf.mxu0
  %v1741 = vadd.f32 %v1660, %v1740
  %1742 = vmatprep.mubr.bf16.mxu0 0
  %1743 = vmatmul.mubr.bf16.gmra.mxu0 %v1448
  %v1744 = vpop.f32.mrf.mxu0
  %v1745 = vadd.f32 %v1664, %v1744
  %v1746 = vpop.f32.mrf.mxu0
  %v1747 = vadd.f32 %v1666, %v1746
  %v1748 = vpop.f32.mrf.mxu0
  %v1749 = vadd.f32 %v1668, %v1748
  %v1750 = vpop.f32.mrf.mxu0
  %v1751 = vadd.f32 %v1670, %v1750
  %1752 = vmatprep.mubr.bf16.mxu0 0
  %1753 = vmatmul.mubr.bf16.gmra.mxu0 %v1450
  %v1754 = vpop.f32.mrf.mxu0
  %v1755 = vadd.f32 %v1674, %v1754
  %v1756 = vpop.f32.mrf.mxu0
  %v1757 = vadd.f32 %v1676, %v1756
  %v1758 = vpop.f32.mrf.mxu0
  %v1759 = vadd.f32 %v1678, %v1758
  %v1760 = vpop.f32.mrf.mxu0
  %v1761 = vadd.f32 %v1680, %v1760
  %1762 = vmatprep.mubr.bf16.mxu0 0
  %1763 = vmatmul.mubr.bf16.gmra.mxu0 %v1452
  %v1764 = vpop.f32.mrf.mxu0
  %v1765 = vadd.f32 %v1684, %v1764
  %v1766 = vpop.f32.mrf.mxu0
  %v1767 = vadd.f32 %v1686, %v1766
  %v1768 = vpop.f32.mrf.mxu0
  %v1769 = vadd.f32 %v1688, %v1768
  %v1770 = vpop.f32.mrf.mxu0
  %v1771 = vadd.f32 %v1690, %v1770
  %1772 = vmatprep.mubr.bf16.mxu0 0
  %1773 = vmatmul.mubr.bf16.gmra.mxu0 %v1455
  %v1774 = vpop.f32.mrf.mxu0
  %v1775 = vadd.f32 %v1694, %v1774
  %v1776 = vpop.f32.mrf.mxu0
  %v1777 = vadd.f32 %v1696, %v1776
  %v1778 = vpop.f32.mrf.mxu0
  %v1779 = vpop.f32.mrf.mxu0
  %1780 = vdwg.mxu0
  %v1781 = vld [vmem:[%s0] sm:$0xee]
  %v1782 = vld [vmem:[%s0 + $0x8] sm:$0xe]
  %s1783 = scalar_lea.vmem %s1, 1152
  %v1784 = vld [vmem:[%s1783] sm:$0xff]
  %v1785 = vld [vmem:[%s1783 + $0x8] sm:$0xff]
  %v1786 = vld [vmem:[%s1783 + $0x10] sm:$0xff]
  %v1787 = vld [vmem:[%s1783 + $0x18] sm:$0xff]
  %v1788 = vld [vmem:[%s1783 + $0x20] sm:$0xff]
  %v1789 = vld [vmem:[%s1783 + $0x28] sm:$0xff]
  %v1790 = vld [vmem:[%s1783 + $0x30] sm:$0xff]
  %v1791 = vld [vmem:[%s1783 + $0x38] sm:$0xff]
  %v1792 = vld [vmem:[%s1783 + $0x40] sm:$0xff]
  %v1793 = vld [vmem:[%s1783 + $0x48] sm:$0xff]
  %v1794 = vld [vmem:[%s1783 + $0x50] sm:$0xff]
  %v1795 = vld [vmem:[%s1783 + $0x58] sm:$0xff]
  %v1796 = vld [vmem:[%s1783 + $0x60] sm:$0xff]
  %v1797 = vld [vmem:[%s1783 + $0x68] sm:$0xff]
  %v1798 = vld [vmem:[%s1783 + $0x70] sm:$0xff]
  %v1799 = vld [vmem:[%s1783 + $0x78] sm:$0xff]
  %v1800 = vld [vmem:[%s1783 + $0x80] sm:$0xff]
  %v1801 = vld [vmem:[%s1783 + $0x88] sm:$0xff]
  %v1802 = vld [vmem:[%s1783 + $0x90] sm:$0xff]
  %v1803 = vld [vmem:[%s1783 + $0x98] sm:$0xff]
  %v1804 = vld [vmem:[%s1783 + $0xa0] sm:$0xff]
  %v1805 = vld [vmem:[%s1783 + $0xa8] sm:$0xff]
  %v1806 = vld [vmem:[%s1783 + $0xb0] sm:$0xff]
  %v1807 = vld [vmem:[%s1783 + $0xb8] sm:$0xff]
  %v1808 = vld [vmem:[%s1783 + $0xc0] sm:$0xff]
  %v1809 = vld [vmem:[%s1783 + $0xc8] sm:$0xff]
  %v1810 = vld [vmem:[%s1783 + $0xd0] sm:$0xff]
  %v1811 = vld [vmem:[%s1783 + $0xd8] sm:$0xff]
  %v1812 = vld [vmem:[%s1783 + $0xe0] sm:$0xff]
  %v1813 = vld [vmem:[%s1783 + $0xe8] sm:$0xff]
  %v1814 = vld [vmem:[%s1783 + $0xf0] sm:$0xff]
  %v1815 = vld [vmem:[%s1783 + $0xf8] sm:$0xff]
  %v1816 = vld [vmem:[%s1783 + $0x100] sm:$0xff]
  %v1817 = vld [vmem:[%s1783 + $0x108] sm:$0xff]
  %v1818 = vld [vmem:[%s1783 + $0x110] sm:$0xff]
  %v1819 = vld [vmem:[%s1783 + $0x118] sm:$0xff]
  %v1820 = vld [vmem:[%s1783 + $0x120] sm:$0xff]
  %v1821 = vld [vmem:[%s1783 + $0x128] sm:$0xff]
  %v1822 = vld [vmem:[%s1783 + $0x130] sm:$0xff]
  %v1823 = vld [vmem:[%s1783 + $0x138] sm:$0xff]
  %v1824 = vld [vmem:[%s1783 + $0x140] sm:$0xff]
  %v1825 = vld [vmem:[%s1783 + $0x148] sm:$0xff]
  %v1826 = vld [vmem:[%s1783 + $0x150] sm:$0xff]
  %v1827 = vld [vmem:[%s1783 + $0x158] sm:$0xff]
  %v1828 = vld [vmem:[%s1783 + $0x160] sm:$0xff]
  %v1829 = vld [vmem:[%s1783 + $0x168] sm:$0xff]
  %v1830 = vld [vmem:[%s1783 + $0x170] sm:$0xff]
  %v1831 = vld [vmem:[%s1783 + $0x178] sm:$0xff]
  %v1832 = vld [vmem:[%s1783 + $0x180] sm:$0xff]
  %v1833 = vld [vmem:[%s1783 + $0x188] sm:$0xff]
  %v1834 = vld [vmem:[%s1783 + $0x190] sm:$0xff]
  %v1835 = vld [vmem:[%s1783 + $0x198] sm:$0xff]
  %v1836 = vld [vmem:[%s1783 + $0x1a0] sm:$0xff]
  %v1837 = vld [vmem:[%s1783 + $0x1a8] sm:$0xff]
  %v1838 = vld [vmem:[%s1783 + $0x1b0] sm:$0xff]
  %v1839 = vld [vmem:[%s1783 + $0x1b8] sm:$0xff]
  %v1840 = vld [vmem:[%s1783 + $0x1c0] sm:$0xff]
  %v1841 = vld [vmem:[%s1783 + $0x1c8] sm:$0xff]
  %v1842 = vld [vmem:[%s1783 + $0x1d0] sm:$0xff]
  %v1843 = vld [vmem:[%s1783 + $0x1d8] sm:$0xff]
  %v1844 = vld [vmem:[%s1783 + $0x1e0] sm:$0xff]
  %v1845 = vld [vmem:[%s1783 + $0x1e8] sm:$0xff]
  %v1846 = vld [vmem:[%s1783 + $0x1f0] sm:$0xff]
  %v1847 = vld [vmem:[%s1783 + $0x1f8] sm:$0xff]
  %v1848 = vld [vmem:[%s1783 + $0x200] sm:$0xff]
  %v1849 = vld [vmem:[%s1783 + $0x208] sm:$0xff]
  %v1850 = vld [vmem:[%s1783 + $0x210] sm:$0xff]
  %v1851 = vld [vmem:[%s1783 + $0x218] sm:$0xff]
  %v1852 = vld [vmem:[%s1783 + $0x220] sm:$0xff]
  %v1853 = vld [vmem:[%s1783 + $0x228] sm:$0xff]
  %v1854 = vld [vmem:[%s1783 + $0x230] sm:$0xff]
  %v1855 = vld [vmem:[%s1783 + $0x238] sm:$0xff]
  %v1858 = vunpack.c.l.b16 %v1781
  %v1859 = vunpack.c.h.b16 %v1781
  %v1860 = vunpack.c.l.b16 %v1782
  %v1861 = vpack.c.b16 %v203, %v1858
  %v1862 = vpack.c.b16 %v204, %v1859
  %v1863 = vpack.c.b16 %v205, %v1860
  %vm1864 = vcmask 1046528
  %v1865 = vrot.slane %v1861, 1
  %v1866 = vrot.slane %v233, 1
  %v1867 = vsel %vm1864, %v1865, %v1866
  %v1868 = vrot.slane %v1862, 1
  %v1869 = vrot.slane %v234, 1
  %v1870 = vsel %vm1864, %v1868, %v1869
  %v1871 = vrot.slane %v1863, 1
  %v1872 = vrot.slane %v235, 1
  %v1873 = vsel %vm1864, %v1871, %v1872
  %v1874 = vrot.slane %v236, 1
  %v1875 = vsel %vm1864, %v1866, %v1874
  %v1876 = vrot.slane %v237, 1
  %v1877 = vsel %vm1864, %v1869, %v1876
  %v1878 = vrot.slane %v238, 1
  %v1879 = vsel %vm1864, %v1872, %v1878
  %v1880 = vrot.slane %v239, 1
  %v1881 = vsel %vm1864, %v1874, %v1880
  %v1882 = vrot.slane %v240, 1
  %v1883 = vsel %vm1864, %v1876, %v1882
  %v1884 = vrot.slane %v241, 1
  %v1885 = vsel %vm1864, %v1878, %v1884
  %v1886 = vrot.slane %v242, 1
  %v1887 = vsel %vm1864, %v1880, %v1886
  %v1888 = vrot.slane %v243, 1
  %v1889 = vsel %vm1864, %v1882, %v1888
  %v1890 = vrot.slane %v244, 1
  %v1891 = vsel %vm1864, %v1884, %v1890
  %v1974 = vunpack.c.l.b16 %v1784
  %v1975 = vunpack.c.h.b16 %v1784
  %v1976 = vunpack.c.l.b16 %v1785
  %v1977 = vunpack.c.h.b16 %v1785
  %v1978 = vunpack.c.l.b16 %v1786
  %v1979 = vunpack.c.h.b16 %v1786
  %v1980 = vunpack.c.l.b16 %v1787
  %v1981 = vunpack.c.h.b16 %v1787
  %v1982 = vunpack.c.l.b16 %v1788
  %v1983 = vunpack.c.h.b16 %v1788
  %v1984 = vunpack.c.l.b16 %v1789
  %v1985 = vunpack.c.h.b16 %v1789
  %v1986 = vunpack.c.l.b16 %v1790
  %v1987 = vunpack.c.h.b16 %v1790
  %v1988 = vunpack.c.l.b16 %v1791
  %v1989 = vunpack.c.h.b16 %v1791
  %v1990 = vunpack.c.l.b16 %v1792
  %v1991 = vunpack.c.h.b16 %v1792
  %v1992 = vunpack.c.l.b16 %v1793
  %v1993 = vunpack.c.h.b16 %v1793
  %v1994 = vunpack.c.l.b16 %v1794
  %v1995 = vunpack.c.h.b16 %v1794
  %v1996 = vunpack.c.l.b16 %v1795
  %v1997 = vunpack.c.h.b16 %v1795
  %v1998 = vunpack.c.l.b16 %v1796
  %v1999 = vunpack.c.h.b16 %v1796
  %v2000 = vunpack.c.l.b16 %v1797
  %v2001 = vunpack.c.h.b16 %v1797
  %v2002 = vunpack.c.l.b16 %v1798
  %v2003 = vunpack.c.h.b16 %v1798
  %v2004 = vunpack.c.l.b16 %v1799
  %v2005 = vunpack.c.h.b16 %v1799
  %v2006 = vunpack.c.l.b16 %v1800
  %v2007 = vunpack.c.h.b16 %v1800
  %v2008 = vunpack.c.l.b16 %v1801
  %v2009 = vunpack.c.h.b16 %v1801
  %v2010 = vunpack.c.l.b16 %v1802
  %v2011 = vunpack.c.h.b16 %v1802
  %v2012 = vunpack.c.l.b16 %v1803
  %v2013 = vunpack.c.h.b16 %v1803
  %v2014 = vunpack.c.l.b16 %v1804
  %v2015 = vunpack.c.h.b16 %v1804
  %v2016 = vunpack.c.l.b16 %v1805
  %v2017 = vunpack.c.h.b16 %v1805
  %v2018 = vunpack.c.l.b16 %v1806
  %v2019 = vunpack.c.h.b16 %v1806
  %v2020 = vunpack.c.l.b16 %v1807
  %v2021 = vunpack.c.h.b16 %v1807
  %v2022 = vunpack.c.l.b16 %v1808
  %v2023 = vunpack.c.h.b16 %v1808
  %v2024 = vunpack.c.l.b16 %v1809
  %v2025 = vunpack.c.h.b16 %v1809
  %v2026 = vunpack.c.l.b16 %v1810
  %v2027 = vunpack.c.h.b16 %v1810
  %v2028 = vunpack.c.l.b16 %v1811
  %v2029 = vunpack.c.h.b16 %v1811
  %v2030 = vunpack.c.l.b16 %v1812
  %v2031 = vunpack.c.h.b16 %v1812
  %v2032 = vunpack.c.l.b16 %v1813
  %v2033 = vunpack.c.h.b16 %v1813
  %v2034 = vunpack.c.l.b16 %v1814
  %v2035 = vunpack.c.h.b16 %v1814
  %v2036 = vunpack.c.l.b16 %v1815
  %v2037 = vunpack.c.h.b16 %v1815
  %v2038 = vunpack.c.l.b16 %v1816
  %v2039 = vunpack.c.h.b16 %v1816
  %v2040 = vunpack.c.l.b16 %v1817
  %v2041 = vunpack.c.h.b16 %v1817
  %v2042 = vunpack.c.l.b16 %v1818
  %v2043 = vunpack.c.h.b16 %v1818
  %v2044 = vunpack.c.l.b16 %v1819
  %v2045 = vunpack.c.h.b16 %v1819
  %v2046 = vunpack.c.l.b16 %v1820
  %v2047 = vunpack.c.h.b16 %v1820
  %v2048 = vunpack.c.l.b16 %v1821
  %v2049 = vunpack.c.h.b16 %v1821
  %v2050 = vunpack.c.l.b16 %v1822
  %v2051 = vunpack.c.h.b16 %v1822
  %v2052 = vunpack.c.l.b16 %v1823
  %v2053 = vunpack.c.h.b16 %v1823
  %v2054 = vunpack.c.l.b16 %v1824
  %v2055 = vunpack.c.h.b16 %v1824
  %v2056 = vunpack.c.l.b16 %v1825
  %v2057 = vunpack.c.h.b16 %v1825
  %v2058 = vunpack.c.l.b16 %v1826
  %v2059 = vunpack.c.h.b16 %v1826
  %v2060 = vunpack.c.l.b16 %v1827
  %v2061 = vunpack.c.h.b16 %v1827
  %v2062 = vunpack.c.l.b16 %v1828
  %v2063 = vunpack.c.h.b16 %v1828
  %v2064 = vunpack.c.l.b16 %v1829
  %v2065 = vunpack.c.h.b16 %v1829
  %v2066 = vunpack.c.l.b16 %v1830
  %v2067 = vunpack.c.h.b16 %v1830
  %v2068 = vunpack.c.l.b16 %v1831
  %v2069 = vunpack.c.h.b16 %v1831
  %v2070 = vunpack.c.l.b16 %v1832
  %v2071 = vunpack.c.h.b16 %v1832
  %v2072 = vunpack.c.l.b16 %v1833
  %v2073 = vunpack.c.h.b16 %v1833
  %v2074 = vunpack.c.l.b16 %v1834
  %v2075 = vunpack.c.h.b16 %v1834
  %v2076 = vunpack.c.l.b16 %v1835
  %v2077 = vunpack.c.h.b16 %v1835
  %v2078 = vunpack.c.l.b16 %v1836
  %v2079 = vunpack.c.h.b16 %v1836
  %v2080 = vunpack.c.l.b16 %v1837
  %v2081 = vunpack.c.h.b16 %v1837
  %v2082 = vunpack.c.l.b16 %v1838
  %v2083 = vunpack.c.h.b16 %v1838
  %v2084 = vunpack.c.l.b16 %v1839
  %v2085 = vunpack.c.h.b16 %v1839
  %v2086 = vunpack.c.l.b16 %v1840
  %v2087 = vunpack.c.h.b16 %v1840
  %v2088 = vunpack.c.l.b16 %v1841
  %v2089 = vunpack.c.h.b16 %v1841
  %v2090 = vunpack.c.l.b16 %v1842
  %v2091 = vunpack.c.h.b16 %v1842
  %v2092 = vunpack.c.l.b16 %v1843
  %v2093 = vunpack.c.h.b16 %v1843
  %v2094 = vunpack.c.l.b16 %v1844
  %v2095 = vunpack.c.h.b16 %v1844
  %v2096 = vunpack.c.l.b16 %v1845
  %v2097 = vunpack.c.h.b16 %v1845
  %v2098 = vunpack.c.l.b16 %v1846
  %v2099 = vunpack.c.h.b16 %v1846
  %v2100 = vunpack.c.l.b16 %v1847
  %v2101 = vunpack.c.h.b16 %v1847
  %v2102 = vunpack.c.l.b16 %v1848
  %v2103 = vunpack.c.h.b16 %v1848
  %v2104 = vunpack.c.l.b16 %v1849
  %v2105 = vunpack.c.h.b16 %v1849
  %v2106 = vunpack.c.l.b16 %v1850
  %v2107 = vunpack.c.h.b16 %v1850
  %v2108 = vunpack.c.l.b16 %v1851
  %v2109 = vunpack.c.h.b16 %v1851
  %v2110 = vunpack.c.l.b16 %v1852
  %v2111 = vunpack.c.h.b16 %v1852
  %v2112 = vunpack.c.l.b16 %v1853
  %v2113 = vunpack.c.h.b16 %v1853
  %v2114 = vunpack.c.l.b16 %v1854
  %v2115 = vunpack.c.h.b16 %v1854
  %v2116 = vunpack.c.l.b16 %v1855
  %v2117 = vunpack.c.h.b16 %v1855
  %v2118 = vpack.c.b16 %v1978, %v1974
  %v2119 = vpack.c.b16 %v1979, %v1975
  %v2120 = vpack.c.b16 %v1980, %v1976
  %v2121 = vpack.c.b16 %v1981, %v1977
  %v2122 = vpack.c.b16 %v1986, %v1982
  %v2123 = vpack.c.b16 %v1987, %v1983
  %v2124 = vpack.c.b16 %v1988, %v1984
  %v2125 = vpack.c.b16 %v1989, %v1985
  %v2126 = vpack.c.b16 %v1994, %v1990
  %v2127 = vpack.c.b16 %v1995, %v1991
  %v2128 = vpack.c.b16 %v1996, %v1992
  %v2129 = vpack.c.b16 %v1997, %v1993
  %v2130 = vpack.c.b16 %v2002, %v1998
  %v2131 = vpack.c.b16 %v2003, %v1999
  %v2132 = vpack.c.b16 %v2004, %v2000
  %v2133 = vpack.c.b16 %v2005, %v2001
  %v2134 = vpack.c.b16 %v2010, %v2006
  %v2135 = vpack.c.b16 %v2011, %v2007
  %v2136 = vpack.c.b16 %v2012, %v2008
  %v2137 = vpack.c.b16 %v2013, %v2009
  %v2138 = vpack.c.b16 %v2018, %v2014
  %v2139 = vpack.c.b16 %v2019, %v2015
  %v2140 = vpack.c.b16 %v2020, %v2016
  %v2141 = vpack.c.b16 %v2021, %v2017
  %v2142 = vpack.c.b16 %v2026, %v2022
  %v2143 = vpack.c.b16 %v2027, %v2023
  %v2144 = vpack.c.b16 %v2028, %v2024
  %v2145 = vpack.c.b16 %v2029, %v2025
  %v2146 = vpack.c.b16 %v2034, %v2030
  %v2147 = vpack.c.b16 %v2035, %v2031
  %v2148 = vpack.c.b16 %v2036, %v2032
  %v2149 = vpack.c.b16 %v2037, %v2033
  %v2150 = vpack.c.b16 %v2042, %v2038
  %v2151 = vpack.c.b16 %v2043, %v2039
  %v2152 = vpack.c.b16 %v2044, %v2040
  %v2153 = vpack.c.b16 %v2045, %v2041
  %v2154 = vpack.c.b16 %v2050, %v2046
  %v2155 = vpack.c.b16 %v2051, %v2047
  %v2156 = vpack.c.b16 %v2052, %v2048
  %v2157 = vpack.c.b16 %v2053, %v2049
  %v2158 = vpack.c.b16 %v2058, %v2054
  %v2159 = vpack.c.b16 %v2059, %v2055
  %v2160 = vpack.c.b16 %v2060, %v2056
  %v2161 = vpack.c.b16 %v2061, %v2057
  %v2162 = vpack.c.b16 %v2066, %v2062
  %v2163 = vpack.c.b16 %v2067, %v2063
  %v2164 = vpack.c.b16 %v2068, %v2064
  %v2165 = vpack.c.b16 %v2069, %v2065
  %v2166 = vpack.c.b16 %v2074, %v2070
  %v2167 = vpack.c.b16 %v2075, %v2071
  %v2168 = vpack.c.b16 %v2076, %v2072
  %v2169 = vpack.c.b16 %v2077, %v2073
  %v2170 = vpack.c.b16 %v2082, %v2078
  %v2171 = vpack.c.b16 %v2083, %v2079
  %v2172 = vpack.c.b16 %v2084, %v2080
  %v2173 = vpack.c.b16 %v2085, %v2081
  %v2174 = vpack.c.b16 %v2090, %v2086
  %v2175 = vpack.c.b16 %v2091, %v2087
  %v2176 = vpack.c.b16 %v2092, %v2088
  %v2177 = vpack.c.b16 %v2093, %v2089
  %v2178 = vpack.c.b16 %v2098, %v2094
  %v2179 = vpack.c.b16 %v2099, %v2095
  %v2180 = vpack.c.b16 %v2100, %v2096
  %v2181 = vpack.c.b16 %v2101, %v2097
  %v2182 = vpack.c.b16 %v2106, %v2102
  %v2183 = vpack.c.b16 %v2107, %v2103
  %v2184 = vpack.c.b16 %v2108, %v2104
  %v2185 = vpack.c.b16 %v2109, %v2105
  %v2186 = vpack.c.b16 %v2114, %v2110
  %v2187 = vpack.c.b16 %v2115, %v2111
  %v2188 = vpack.c.b16 %v2116, %v2112
  %v2189 = vpack.c.b16 %v2117, %v2113
  %v2263 = vsel %vm733, %v1873, 0
  %v2266 = vsel %vm733, %v1879, 0
  %v2269 = vsel %vm733, %v1885, 0
  %v2272 = vsel %vm733, %v1891, 0
  %v2275 = vsel %vm733, %v1890, 0
  %2277 = vmatprep.subr.bf16.mxu0 %v2147
  %2278 = vmatpush1.bf16.msra.mxu0 %v2146
  %2279 = vmatprep.subr.bf16.mxu0 %v2143
  %2280 = vmatpush1.bf16.msra.mxu0 %v2142
  %2281 = vmatprep.subr.bf16.mxu0 %v2139
  %2282 = vmatpush1.bf16.msra.mxu0 %v2138
  %2283 = vmatprep.subr.bf16.mxu0 %v2135
  %2284 = vmatpush1.bf16.msra.mxu0 %v2134
  %2285 = vmatprep.subr.bf16.mxu0 %v2131
  %2286 = vmatpush1.bf16.msra.mxu0 %v2130
  %2287 = vmatprep.subr.bf16.mxu0 %v2127
  %2288 = vmatpush1.bf16.msra.mxu0 %v2126
  %2289 = vmatprep.subr.bf16.mxu0 %v2123
  %2290 = vmatpush1.bf16.msra.mxu0 %v2122
  %2291 = vmatprep.subr.bf16.mxu0 %v2119
  %2292 = vmatpush1.bf16.msra.mxu0 %v2118
  %2293 = vmatprep.subr.bf16.mxu0 %v2179
  %2294 = vmatpush2.bf16.msra.mxu0 %v2178
  %2295 = vmatprep.subr.bf16.mxu0 %v2175
  %2296 = vmatpush2.bf16.msra.mxu0 %v2174
  %2297 = vmatprep.subr.bf16.mxu0 %v2171
  %2298 = vmatpush2.bf16.msra.mxu0 %v2170
  %2299 = vmatprep.subr.bf16.mxu0 %v2167
  %2300 = vmatpush2.bf16.msra.mxu0 %v2166
  %2301 = vmatprep.subr.bf16.mxu0 %v2163
  %2302 = vmatpush2.bf16.msra.mxu0 %v2162
  %2303 = vmatprep.subr.bf16.mxu0 %v2159
  %2304 = vmatpush2.bf16.msra.mxu0 %v2158
  %2305 = vmatprep.subr.bf16.mxu0 %v2155
  %2306 = vmatpush2.bf16.msra.mxu0 %v2154
  %2307 = vmatprep.subr.bf16.mxu0 %v2151
  %2308 = vmatpush2.bf16.msra.mxu0 %v2150
  %2309 = vmatprep.mubr.bf16.mxu0 %v1870
  %2310 = vmatmul.mubr.bf16.gmra.mxu0 %v1867
  %v2311 = vpop.f32.mrf.mxu0
  %v2312 = vadd.f32 0.0, %v2311
  %v2313 = vpop.f32.mrf.mxu0
  %v2314 = vadd.f32 0.0, %v2313
  %v2315 = vpop.f32.mrf.mxu0
  %v2316 = vadd.f32 0.0, %v2315
  %v2317 = vpop.f32.mrf.mxu0
  %v2318 = vadd.f32 0.0, %v2317
  %2319 = vmatprep.mubr.bf16.mxu0 %v1877
  %2320 = vmatmul.mubr.bf16.gmra.mxu0 %v1875
  %v2321 = vpop.f32.mrf.mxu0
  %v2322 = vadd.f32 0.0, %v2321
  %v2323 = vpop.f32.mrf.mxu0
  %v2324 = vadd.f32 0.0, %v2323
  %v2325 = vpop.f32.mrf.mxu0
  %v2326 = vadd.f32 0.0, %v2325
  %v2327 = vpop.f32.mrf.mxu0
  %v2328 = vadd.f32 0.0, %v2327
  %2329 = vmatprep.mubr.bf16.mxu0 %v1883
  %2330 = vmatmul.mubr.bf16.gmra.mxu0 %v1881
  %v2331 = vpop.f32.mrf.mxu0
  %v2332 = vadd.f32 0.0, %v2331
  %v2333 = vpop.f32.mrf.mxu0
  %v2334 = vadd.f32 0.0, %v2333
  %v2335 = vpop.f32.mrf.mxu0
  %v2336 = vadd.f32 0.0, %v2335
  %v2337 = vpop.f32.mrf.mxu0
  %v2338 = vadd.f32 0.0, %v2337
  %2339 = vmatprep.mubr.bf16.mxu0 %v1889
  %2340 = vmatmul.mubr.bf16.gmra.mxu0 %v1887
  %v2341 = vpop.f32.mrf.mxu0
  %v2342 = vadd.f32 0.0, %v2341
  %v2343 = vpop.f32.mrf.mxu0
  %v2344 = vadd.f32 0.0, %v2343
  %v2345 = vpop.f32.mrf.mxu0
  %v2346 = vadd.f32 0.0, %v2345
  %v2347 = vpop.f32.mrf.mxu0
  %v2348 = vadd.f32 0.0, %v2347
  %2349 = vmatprep.mubr.bf16.mxu0 %v1888
  %2350 = vmatmul.mubr.bf16.gmra.mxu0 %v1886
  %v2351 = vpop.f32.mrf.mxu0
  %v2352 = vadd.f32 0.0, %v2351
  %v2353 = vpop.f32.mrf.mxu0
  %v2354 = vadd.f32 0.0, %v2353
  %v2355 = vpop.f32.mrf.mxu0
  %v2356 = vpop.f32.mrf.mxu0
  %2357 = vdwg.mxu0
  %2358 = vmatprep.subr.bf16.mxu0 0
  %2359 = vmatpush1.bf16.msra.mxu0 0
  %2360 = vmatprep.subr.bf16.mxu0 0
  %2361 = vmatpush1.bf16.msra.mxu0 0
  %2362 = vmatprep.subr.bf16.mxu0 0
  %2363 = vmatpush1.bf16.msra.mxu0 0
  %2364 = vmatprep.subr.bf16.mxu0 0
  %2365 = vmatpush1.bf16.msra.mxu0 0
  %2366 = vmatprep.subr.bf16.mxu0 0
  %2367 = vmatpush1.bf16.msra.mxu0 0
  %2368 = vmatprep.subr.bf16.mxu0 0
  %2369 = vmatpush1.bf16.msra.mxu0 0
  %2370 = vmatprep.subr.bf16.mxu0 %v2187
  %2371 = vmatpush1.bf16.msra.mxu0 %v2186
  %2372 = vmatprep.subr.bf16.mxu0 %v2183
  %2373 = vmatpush1.bf16.msra.mxu0 %v2182
  %2374 = vmatprep.subr.bf16.mxu0 0
  %2375 = vmatpush2.bf16.msra.mxu0 0
  %2376 = vmatprep.subr.bf16.mxu0 0
  %2377 = vmatpush2.bf16.msra.mxu0 0
  %2378 = vmatprep.subr.bf16.mxu0 0
  %2379 = vmatpush2.bf16.msra.mxu0 0
  %2380 = vmatprep.subr.bf16.mxu0 0
  %2381 = vmatpush2.bf16.msra.mxu0 0
  %2382 = vmatprep.subr.bf16.mxu0 0
  %2383 = vmatpush2.bf16.msra.mxu0 0
  %2384 = vmatprep.subr.bf16.mxu0 0
  %2385 = vmatpush2.bf16.msra.mxu0 0
  %2386 = vmatprep.subr.bf16.mxu0 0
  %2387 = vmatpush2.bf16.msra.mxu0 0
  %2388 = vmatprep.subr.bf16.mxu0 0
  %2389 = vmatpush2.bf16.msra.mxu0 0
  %2390 = vmatprep.mubr.bf16.mxu0 0
  %2391 = vmatmul.mubr.bf16.gmra.mxu0 %v2263
  %v2392 = vpop.f32.mrf.mxu0
  %v2393 = vadd.f32 %v2312, %v2392
  %v2394 = vpop.f32.mrf.mxu0
  %v2395 = vadd.f32 %v2314, %v2394
  %v2396 = vpop.f32.mrf.mxu0
  %v2397 = vadd.f32 %v2316, %v2396
  %v2398 = vpop.f32.mrf.mxu0
  %v2399 = vadd.f32 %v2318, %v2398
  %2400 = vmatprep.mubr.bf16.mxu0 0
  %2401 = vmatmul.mubr.bf16.gmra.mxu0 %v2266
  %v2402 = vpop.f32.mrf.mxu0
  %v2403 = vadd.f32 %v2322, %v2402
  %v2404 = vpop.f32.mrf.mxu0
  %v2405 = vadd.f32 %v2324, %v2404
  %v2406 = vpop.f32.mrf.mxu0
  %v2407 = vadd.f32 %v2326, %v2406
  %v2408 = vpop.f32.mrf.mxu0
  %v2409 = vadd.f32 %v2328, %v2408
  %2410 = vmatprep.mubr.bf16.mxu0 0
  %2411 = vmatmul.mubr.bf16.gmra.mxu0 %v2269
  %v2412 = vpop.f32.mrf.mxu0
  %v2413 = vadd.f32 %v2332, %v2412
  %v2414 = vpop.f32.mrf.mxu0
  %v2415 = vadd.f32 %v2334, %v2414
  %v2416 = vpop.f32.mrf.mxu0
  %v2417 = vadd.f32 %v2336, %v2416
  %v2418 = vpop.f32.mrf.mxu0
  %v2419 = vadd.f32 %v2338, %v2418
  %2420 = vmatprep.mubr.bf16.mxu0 0
  %2421 = vmatmul.mubr.bf16.gmra.mxu0 %v2272
  %v2422 = vpop.f32.mrf.mxu0
  %v2423 = vadd.f32 %v2342, %v2422
  %v2424 = vpop.f32.mrf.mxu0
  %v2425 = vadd.f32 %v2344, %v2424
  %v2426 = vpop.f32.mrf.mxu0
  %v2427 = vadd.f32 %v2346, %v2426
  %v2428 = vpop.f32.mrf.mxu0
  %v2429 = vadd.f32 %v2348, %v2428
  %2430 = vmatprep.mubr.bf16.mxu0 0
  %2431 = vmatmul.mubr.bf16.gmra.mxu0 %v2275
  %v2432 = vpop.f32.mrf.mxu0
  %v2433 = vadd.f32 %v2352, %v2432
  %v2434 = vpop.f32.mrf.mxu0
  %v2435 = vadd.f32 %v2354, %v2434
  %v2436 = vpop.f32.mrf.mxu0
  %v2437 = vpop.f32.mrf.mxu0
  %2438 = vdwg.mxu0
  %2439 = vmatprep.subr.bf16.mxu0 %v2149
  %2440 = vmatpush1.bf16.msra.mxu0 %v2148
  %2441 = vmatprep.subr.bf16.mxu0 %v2145
  %2442 = vmatpush1.bf16.msra.mxu0 %v2144
  %2443 = vmatprep.subr.bf16.mxu0 %v2141
  %2444 = vmatpush1.bf16.msra.mxu0 %v2140
  %2445 = vmatprep.subr.bf16.mxu0 %v2137
  %2446 = vmatpush1.bf16.msra.mxu0 %v2136
  %2447 = vmatprep.subr.bf16.mxu0 %v2133
  %2448 = vmatpush1.bf16.msra.mxu0 %v2132
  %2449 = vmatprep.subr.bf16.mxu0 %v2129
  %2450 = vmatpush1.bf16.msra.mxu0 %v2128
  %2451 = vmatprep.subr.bf16.mxu0 %v2125
  %2452 = vmatpush1.bf16.msra.mxu0 %v2124
  %2453 = vmatprep.subr.bf16.mxu0 %v2121
  %2454 = vmatpush1.bf16.msra.mxu0 %v2120
  %2455 = vmatprep.subr.bf16.mxu0 %v2181
  %2456 = vmatpush2.bf16.msra.mxu0 %v2180
  %2457 = vmatprep.subr.bf16.mxu0 %v2177
  %2458 = vmatpush2.bf16.msra.mxu0 %v2176
  %2459 = vmatprep.subr.bf16.mxu0 %v2173
  %2460 = vmatpush2.bf16.msra.mxu0 %v2172
  %2461 = vmatprep.subr.bf16.mxu0 %v2169
  %2462 = vmatpush2.bf16.msra.mxu0 %v2168
  %2463 = vmatprep.subr.bf16.mxu0 %v2165
  %2464 = vmatpush2.bf16.msra.mxu0 %v2164
  %2465 = vmatprep.subr.bf16.mxu0 %v2161
  %2466 = vmatpush2.bf16.msra.mxu0 %v2160
  %2467 = vmatprep.subr.bf16.mxu0 %v2157
  %2468 = vmatpush2.bf16.msra.mxu0 %v2156
  %2469 = vmatprep.subr.bf16.mxu0 %v2153
  %2470 = vmatpush2.bf16.msra.mxu0 %v2152
  %2471 = vmatprep.mubr.bf16.mxu0 %v1870
  %2472 = vmatmul.mubr.bf16.gmra.mxu0 %v1867
  %v2473 = vpop.f32.mrf.mxu0
  %v2474 = vadd.f32 0.0, %v2473
  %v2475 = vpop.f32.mrf.mxu0
  %v2476 = vadd.f32 0.0, %v2475
  %v2477 = vpop.f32.mrf.mxu0
  %v2478 = vadd.f32 0.0, %v2477
  %v2479 = vpop.f32.mrf.mxu0
  %v2480 = vadd.f32 0.0, %v2479
  %2481 = vmatprep.mubr.bf16.mxu0 %v1877
  %2482 = vmatmul.mubr.bf16.gmra.mxu0 %v1875
  %v2483 = vpop.f32.mrf.mxu0
  %v2484 = vadd.f32 0.0, %v2483
  %v2485 = vpop.f32.mrf.mxu0
  %v2486 = vadd.f32 0.0, %v2485
  %v2487 = vpop.f32.mrf.mxu0
  %v2488 = vadd.f32 0.0, %v2487
  %v2489 = vpop.f32.mrf.mxu0
  %v2490 = vadd.f32 0.0, %v2489
  %2491 = vmatprep.mubr.bf16.mxu0 %v1883
  %2492 = vmatmul.mubr.bf16.gmra.mxu0 %v1881
  %v2493 = vpop.f32.mrf.mxu0
  %v2494 = vadd.f32 0.0, %v2493
  %v2495 = vpop.f32.mrf.mxu0
  %v2496 = vadd.f32 0.0, %v2495
  %v2497 = vpop.f32.mrf.mxu0
  %v2498 = vadd.f32 0.0, %v2497
  %v2499 = vpop.f32.mrf.mxu0
  %v2500 = vadd.f32 0.0, %v2499
  %2501 = vmatprep.mubr.bf16.mxu0 %v1889
  %2502 = vmatmul.mubr.bf16.gmra.mxu0 %v1887
  %v2503 = vpop.f32.mrf.mxu0
  %v2504 = vadd.f32 0.0, %v2503
  %v2505 = vpop.f32.mrf.mxu0
  %v2506 = vadd.f32 0.0, %v2505
  %v2507 = vpop.f32.mrf.mxu0
  %v2508 = vadd.f32 0.0, %v2507
  %v2509 = vpop.f32.mrf.mxu0
  %v2510 = vadd.f32 0.0, %v2509
  %2511 = vmatprep.mubr.bf16.mxu0 %v1888
  %2512 = vmatmul.mubr.bf16.gmra.mxu0 %v1886
  %v2513 = vpop.f32.mrf.mxu0
  %v2514 = vadd.f32 0.0, %v2513
  %v2515 = vpop.f32.mrf.mxu0
  %v2516 = vadd.f32 0.0, %v2515
  %v2517 = vpop.f32.mrf.mxu0
  %v2518 = vpop.f32.mrf.mxu0
  %2519 = vdwg.mxu0
  %2520 = vmatprep.subr.bf16.mxu0 0
  %2521 = vmatpush1.bf16.msra.mxu0 0
  %2522 = vmatprep.subr.bf16.mxu0 0
  %2523 = vmatpush1.bf16.msra.mxu0 0
  %2524 = vmatprep.subr.bf16.mxu0 0
  %2525 = vmatpush1.bf16.msra.mxu0 0
  %2526 = vmatprep.subr.bf16.mxu0 0
  %2527 = vmatpush1.bf16.msra.mxu0 0
  %2528 = vmatprep.subr.bf16.mxu0 0
  %2529 = vmatpush1.bf16.msra.mxu0 0
  %2530 = vmatprep.subr.bf16.mxu0 0
  %2531 = vmatpush1.bf16.msra.mxu0 0
  %2532 = vmatprep.subr.bf16.mxu0 %v2189
  %2533 = vmatpush1.bf16.msra.mxu0 %v2188
  %2534 = vmatprep.subr.bf16.mxu0 %v2185
  %2535 = vmatpush1.bf16.msra.mxu0 %v2184
  %2536 = vmatprep.subr.bf16.mxu0 0
  %2537 = vmatpush2.bf16.msra.mxu0 0
  %2538 = vmatprep.subr.bf16.mxu0 0
  %2539 = vmatpush2.bf16.msra.mxu0 0
  %2540 = vmatprep.subr.bf16.mxu0 0
  %2541 = vmatpush2.bf16.msra.mxu0 0
  %2542 = vmatprep.subr.bf16.mxu0 0
  %2543 = vmatpush2.bf16.msra.mxu0 0
  %2544 = vmatprep.subr.bf16.mxu0 0
  %2545 = vmatpush2.bf16.msra.mxu0 0
  %2546 = vmatprep.subr.bf16.mxu0 0
  %2547 = vmatpush2.bf16.msra.mxu0 0
  %2548 = vmatprep.subr.bf16.mxu0 0
  %2549 = vmatpush2.bf16.msra.mxu0 0
  %2550 = vmatprep.subr.bf16.mxu0 0
  %2551 = vmatpush2.bf16.msra.mxu0 0
  %2552 = vmatprep.mubr.bf16.mxu0 0
  %2553 = vmatmul.mubr.bf16.gmra.mxu0 %v2263
  %v2554 = vpop.f32.mrf.mxu0
  %v2555 = vadd.f32 %v2474, %v2554
  %v2556 = vpop.f32.mrf.mxu0
  %v2557 = vadd.f32 %v2476, %v2556
  %v2558 = vpop.f32.mrf.mxu0
  %v2559 = vadd.f32 %v2478, %v2558
  %v2560 = vpop.f32.mrf.mxu0
  %v2561 = vadd.f32 %v2480, %v2560
  %2562 = vmatprep.mubr.bf16.mxu0 0
  %2563 = vmatmul.mubr.bf16.gmra.mxu0 %v2266
  %v2564 = vpop.f32.mrf.mxu0
  %v2565 = vadd.f32 %v2484, %v2564
  %v2566 = vpop.f32.mrf.mxu0
  %v2567 = vadd.f32 %v2486, %v2566
  %v2568 = vpop.f32.mrf.mxu0
  %v2569 = vadd.f32 %v2488, %v2568
  %v2570 = vpop.f32.mrf.mxu0
  %v2571 = vadd.f32 %v2490, %v2570
  %2572 = vmatprep.mubr.bf16.mxu0 0
  %2573 = vmatmul.mubr.bf16.gmra.mxu0 %v2269
  %v2574 = vpop.f32.mrf.mxu0
  %v2575 = vadd.f32 %v2494, %v2574
  %v2576 = vpop.f32.mrf.mxu0
  %v2577 = vadd.f32 %v2496, %v2576
  %v2578 = vpop.f32.mrf.mxu0
  %v2579 = vadd.f32 %v2498, %v2578
  %v2580 = vpop.f32.mrf.mxu0
  %v2581 = vadd.f32 %v2500, %v2580
  %2582 = vmatprep.mubr.bf16.mxu0 0
  %2583 = vmatmul.mubr.bf16.gmra.mxu0 %v2272
  %v2584 = vpop.f32.mrf.mxu0
  %v2585 = vadd.f32 %v2504, %v2584
  %v2586 = vpop.f32.mrf.mxu0
  %v2587 = vadd.f32 %v2506, %v2586
  %v2588 = vpop.f32.mrf.mxu0
  %v2589 = vadd.f32 %v2508, %v2588
  %v2590 = vpop.f32.mrf.mxu0
  %v2591 = vadd.f32 %v2510, %v2590
  %2592 = vmatprep.mubr.bf16.mxu0 0
  %2593 = vmatmul.mubr.bf16.gmra.mxu0 %v2275
  %v2594 = vpop.f32.mrf.mxu0
  %v2595 = vadd.f32 %v2514, %v2594
  %v2596 = vpop.f32.mrf.mxu0
  %v2597 = vadd.f32 %v2516, %v2596
  %v2598 = vpop.f32.mrf.mxu0
  %v2599 = vpop.f32.mrf.mxu0
  %2600 = vdwg.mxu0
  %v2601 = vadd.f32 %v1573, %v2393
  %v2602 = vadd.f32 %v1575, %v2395
  %v2603 = vadd.f32 %v1735, %v2555
  %v2604 = vadd.f32 %v1737, %v2557
  %v2605 = vadd.f32 %v1577, %v2397
  %v2606 = vadd.f32 %v1579, %v2399
  %v2607 = vadd.f32 %v1739, %v2559
  %v2608 = vadd.f32 %v1741, %v2561
  %v2609 = vadd.f32 %v1583, %v2403
  %v2610 = vadd.f32 %v1585, %v2405
  %v2611 = vadd.f32 %v1745, %v2565
  %v2612 = vadd.f32 %v1747, %v2567
  %v2613 = vadd.f32 %v1587, %v2407
  %v2614 = vadd.f32 %v1589, %v2409
  %v2615 = vadd.f32 %v1749, %v2569
  %v2616 = vadd.f32 %v1751, %v2571
  %v2617 = vadd.f32 %v1593, %v2413
  %v2618 = vadd.f32 %v1595, %v2415
  %v2619 = vadd.f32 %v1755, %v2575
  %v2620 = vadd.f32 %v1757, %v2577
  %v2621 = vadd.f32 %v1597, %v2417
  %v2622 = vadd.f32 %v1599, %v2419
  %v2623 = vadd.f32 %v1759, %v2579
  %v2624 = vadd.f32 %v1761, %v2581
  %v2625 = vadd.f32 %v1603, %v2423
  %v2626 = vadd.f32 %v1605, %v2425
  %v2627 = vadd.f32 %v1765, %v2585
  %v2628 = vadd.f32 %v1767, %v2587
  %v2629 = vadd.f32 %v1607, %v2427
  %v2630 = vadd.f32 %v1609, %v2429
  %v2631 = vadd.f32 %v1769, %v2589
  %v2632 = vadd.f32 %v1771, %v2591
  %v2633 = vadd.f32 %v1613, %v2433
  %v2634 = vadd.f32 %v1615, %v2435
  %v2635 = vadd.f32 %v1775, %v2595
  %v2636 = vadd.f32 %v1777, %v2597
  %v2637 = vld [vmem:[%s2] sm:$0xf]
  %v2639 = vlaneseq
  %v2640 = vshrl.u32 %v2639, 7
  %v2641 = vsub.s32 0, %v2640
  %v2642 = vrot.slane %v2637, %v2641
  %v2643 = vlaneseq
  %v2644 = vshrl.u32 %v2643, 7
  %v2645 = vsub.s32 1, %v2644
  %v2646 = vrot.slane %v2637, %v2645
  %v2647 = vlaneseq
  %v2648 = vshrl.u32 %v2647, 7
  %v2649 = vsub.s32 2, %v2648
  %v2650 = vrot.slane %v2637, %v2649
  %v2651 = vlaneseq
  %v2652 = vshrl.u32 %v2651, 7
  %v2653 = vsub.s32 3, %v2652
  %v2654 = vrot.slane %v2637, %v2653
  %v2659 = vadd.f32 %v2601, %v2642
  %v2660 = vadd.f32 %v2602, %v2646
  %v2661 = vadd.f32 %v2603, %v2650
  %v2662 = vadd.f32 %v2604, %v2654
  %v2663 = vadd.f32 %v2605, %v2642
  %v2664 = vadd.f32 %v2606, %v2646
  %v2665 = vadd.f32 %v2607, %v2650
  %v2666 = vadd.f32 %v2608, %v2654
  %v2667 = vadd.f32 %v2609, %v2642
  %v2668 = vadd.f32 %v2610, %v2646
  %v2669 = vadd.f32 %v2611, %v2650
  %v2670 = vadd.f32 %v2612, %v2654
  %v2671 = vadd.f32 %v2613, %v2642
  %v2672 = vadd.f32 %v2614, %v2646
  %v2673 = vadd.f32 %v2615, %v2650
  %v2674 = vadd.f32 %v2616, %v2654
  %v2675 = vadd.f32 %v2617, %v2642
  %v2676 = vadd.f32 %v2618, %v2646
  %v2677 = vadd.f32 %v2619, %v2650
  %v2678 = vadd.f32 %v2620, %v2654
  %v2679 = vadd.f32 %v2621, %v2642
  %v2680 = vadd.f32 %v2622, %v2646
  %v2681 = vadd.f32 %v2623, %v2650
  %v2682 = vadd.f32 %v2624, %v2654
  %v2683 = vadd.f32 %v2625, %v2642
  %v2684 = vadd.f32 %v2626, %v2646
  %v2685 = vadd.f32 %v2627, %v2650
  %v2686 = vadd.f32 %v2628, %v2654
  %v2687 = vadd.f32 %v2629, %v2642
  %v2688 = vadd.f32 %v2630, %v2646
  %v2689 = vadd.f32 %v2631, %v2650
  %v2690 = vadd.f32 %v2632, %v2654
  %v2691 = vadd.f32 %v2633, %v2642
  %v2692 = vadd.f32 %v2634, %v2646
  %v2693 = vadd.f32 %v2635, %v2650
  %v2694 = vadd.f32 %v2636, %v2654
  %v2695 = vmax.f32 %v2659, 0.0
  %v2696 = vmax.f32 %v2660, 0.0
  %v2697 = vmax.f32 %v2661, 0.0
  %v2698 = vmax.f32 %v2662, 0.0
  %v2699 = vmax.f32 %v2663, 0.0
  %v2700 = vmax.f32 %v2664, 0.0
  %v2701 = vmax.f32 %v2665, 0.0
  %v2702 = vmax.f32 %v2666, 0.0
  %v2703 = vmax.f32 %v2667, 0.0
  %v2704 = vmax.f32 %v2668, 0.0
  %v2705 = vmax.f32 %v2669, 0.0
  %v2706 = vmax.f32 %v2670, 0.0
  %v2707 = vmax.f32 %v2671, 0.0
  %v2708 = vmax.f32 %v2672, 0.0
  %v2709 = vmax.f32 %v2673, 0.0
  %v2710 = vmax.f32 %v2674, 0.0
  %v2711 = vmax.f32 %v2675, 0.0
  %v2712 = vmax.f32 %v2676, 0.0
  %v2713 = vmax.f32 %v2677, 0.0
  %v2714 = vmax.f32 %v2678, 0.0
  %v2715 = vmax.f32 %v2679, 0.0
  %v2716 = vmax.f32 %v2680, 0.0
  %v2717 = vmax.f32 %v2681, 0.0
  %v2718 = vmax.f32 %v2682, 0.0
  %v2719 = vmax.f32 %v2683, 0.0
  %v2720 = vmax.f32 %v2684, 0.0
  %v2721 = vmax.f32 %v2685, 0.0
  %v2722 = vmax.f32 %v2686, 0.0
  %v2723 = vmax.f32 %v2687, 0.0
  %v2724 = vmax.f32 %v2688, 0.0
  %v2725 = vmax.f32 %v2689, 0.0
  %v2726 = vmax.f32 %v2690, 0.0
  %v2727 = vmax.f32 %v2691, 0.0
  %v2728 = vmax.f32 %v2692, 0.0
  %v2729 = vmax.f32 %v2693, 0.0
  %v2730 = vmax.f32 %v2694, 0.0
  %v2731 = vpack.c.bf16 %v2699, %v2695
  %v2732 = vpack.c.bf16 %v2700, %v2696
  %v2733 = vpack.c.bf16 %v2701, %v2697
  %v2734 = vpack.c.bf16 %v2702, %v2698
  %v2735 = vpack.c.bf16 %v2707, %v2703
  %v2736 = vpack.c.bf16 %v2708, %v2704
  %v2737 = vpack.c.bf16 %v2709, %v2705
  %v2738 = vpack.c.bf16 %v2710, %v2706
  %v2739 = vpack.c.bf16 %v2715, %v2711
  %v2740 = vpack.c.bf16 %v2716, %v2712
  %v2741 = vpack.c.bf16 %v2717, %v2713
  %v2742 = vpack.c.bf16 %v2718, %v2714
  %v2743 = vpack.c.bf16 %v2723, %v2719
  %v2744 = vpack.c.bf16 %v2724, %v2720
  %v2745 = vpack.c.bf16 %v2725, %v2721
  %v2746 = vpack.c.bf16 %v2726, %v2722
  %v2747 = vpack.c.bf16 %v2727, %v2727
  %v2748 = vpack.c.bf16 %v2728, %v2728
  %v2749 = vpack.c.bf16 %v2729, %v2729
  %v2750 = vpack.c.bf16 %v2730, %v2730
  %v2771 = vunpack.c.l.b16 %v2731
  %v2772 = vunpack.c.l.b16 %v2732
  %v2773 = vunpack.c.l.b16 %v2733
  %v2774 = vunpack.c.l.b16 %v2734
  %v2775 = vunpack.c.h.b16 %v2731
  %v2776 = vunpack.c.h.b16 %v2732
  %v2777 = vunpack.c.h.b16 %v2733
  %v2778 = vunpack.c.h.b16 %v2734
  %v2779 = vunpack.c.l.b16 %v2735
  %v2780 = vunpack.c.l.b16 %v2736
  %v2781 = vunpack.c.l.b16 %v2737
  %v2782 = vunpack.c.l.b16 %v2738
  %v2783 = vunpack.c.h.b16 %v2735
  %v2784 = vunpack.c.h.b16 %v2736
  %v2785 = vunpack.c.h.b16 %v2737
  %v2786 = vunpack.c.h.b16 %v2738
  %v2787 = vunpack.c.l.b16 %v2739
  %v2788 = vunpack.c.l.b16 %v2740
  %v2789 = vunpack.c.l.b16 %v2741
  %v2790 = vunpack.c.l.b16 %v2742
  %v2791 = vunpack.c.h.b16 %v2739
  %v2792 = vunpack.c.h.b16 %v2740
  %v2793 = vunpack.c.h.b16 %v2741
  %v2794 = vunpack.c.h.b16 %v2742
  %v2795 = vunpack.c.l.b16 %v2743
  %v2796 = vunpack.c.l.b16 %v2744
  %v2797 = vunpack.c.l.b16 %v2745
  %v2798 = vunpack.c.l.b16 %v2746
  %v2799 = vunpack.c.h.b16 %v2743
  %v2800 = vunpack.c.h.b16 %v2744
  %v2801 = vunpack.c.h.b16 %v2745
  %v2802 = vunpack.c.h.b16 %v2746
  %v2803 = vunpack.c.l.b16 %v2747
  %v2804 = vunpack.c.l.b16 %v2748
  %v2805 = vunpack.c.l.b16 %v2749
  %v2806 = vunpack.c.l.b16 %v2750
  %v2807 = vpack.c.b16 %v2772, %v2771
  %v2808 = vpack.c.b16 %v2774, %v2773
  %v2809 = vpack.c.b16 %v2776, %v2775
  %v2810 = vpack.c.b16 %v2778, %v2777
  %v2811 = vpack.c.b16 %v2780, %v2779
  %v2812 = vpack.c.b16 %v2782, %v2781
  %v2813 = vpack.c.b16 %v2784, %v2783
  %v2814 = vpack.c.b16 %v2786, %v2785
  %v2815 = vpack.c.b16 %v2788, %v2787
  %v2816 = vpack.c.b16 %v2790, %v2789
  %v2817 = vpack.c.b16 %v2792, %v2791
  %v2818 = vpack.c.b16 %v2794, %v2793
  %v2819 = vpack.c.b16 %v2796, %v2795
  %v2820 = vpack.c.b16 %v2798, %v2797
  %v2821 = vpack.c.b16 %v2800, %v2799
  %v2822 = vpack.c.b16 %v2802, %v2801
  %v2823 = vpack.c.b16 %v2804, %v2803
  %v2824 = vpack.c.b16 %v2806, %v2805
  %2843 = vst [vmem:[%s3] sm:$0xff] %v2807
  %vm2844 = vcmask 1043456
  %vm2845 = vcmask 523268
  %vm2846 = vmor %vm2845, %vm2844
  %2847 = vst.msk [vmem:[%s3 + $0x8] sm:$0xff] %vm2846, %v2808
  %2848 = vst [vmem:[%s3 + $0x10] sm:$0xff] %v2809
  %2849 = vst.msk [vmem:[%s3 + $0x18] sm:$0xff] %vm2846, %v2810
  %2850 = vst [vmem:[%s3 + $0x20] sm:$0xff] %v2811
  %2851 = vst.msk [vmem:[%s3 + $0x28] sm:$0xff] %vm2846, %v2812
  %2852 = vst [vmem:[%s3 + $0x30] sm:$0xff] %v2813
  %2853 = vst.msk [vmem:[%s3 + $0x38] sm:$0xff] %vm2846, %v2814
  %2854 = vst [vmem:[%s3 + $0x40] sm:$0xff] %v2815
  %2855 = vst.msk [vmem:[%s3 + $0x48] sm:$0xff] %vm2846, %v2816
  %2856 = vst [vmem:[%s3 + $0x50] sm:$0xff] %v2817
  %2857 = vst.msk [vmem:[%s3 + $0x58] sm:$0xff] %vm2846, %v2818
  %2858 = vst [vmem:[%s3 + $0x60] sm:$0xff] %v2819
  %2859 = vst.msk [vmem:[%s3 + $0x68] sm:$0xff] %vm2846, %v2820
  %2860 = vst [vmem:[%s3 + $0x70] sm:$0xff] %v2821
  %2861 = vst.msk [vmem:[%s3 + $0x78] sm:$0xff] %vm2846, %v2822
  %2862 = vst [vmem:[%s3 + $0x80] sm:$0xff] %v2823
  %2863 = vst.msk [vmem:[%s3 + $0x88] sm:$0xff] %vm2846, %v2824
  // Predicated region
  $region14: #{net_forward.6} parent=0 // pred_check
    _
  $region15: #{net_forward.6} parent=0 // pred_check_branch
    %2865 = sbr.rel (0) target = $region17
  $region16: #{net_forward.6} parent=0 // pred_region
    _
  $region17: #{net_forward.6} parent=0 // pred_fallthru
    _
  // Predicated region
  $region18: #{net_forward.6} parent=0 // pred_check
    _
  $region19: #{net_forward.6} parent=0 // pred_check_branch
    %2867 = sbr.rel (0) target = $region21
  $region20: #{net_forward.6} parent=0 // pred_region
    _
  $region21: #{net_forward.6} parent=0 // pred_fallthru
    _

// kernel: net_forward.7
$region0: #{net_forward.7}
  #allocation0 [shape = 'u32[]', space=smem, size = 0x4, offset = 0x4, fixed_abs, tag = 'smem constant byte address 0x4 - core index']
  #allocation1 [shape = 'u32[144,128]{1,0:T(1,128)}', space=vmem, size = 0x12000, scoped, tag = 'internal scratch']
  %s0 = inlined_call_operand.vmem [shape: bf16[8,3136], index: 0, kind: input, shape index: {}]
  %s1 = inlined_call_operand.vmem [shape: bf16[3136,128], index: 1, kind: input, shape index: {}]
  %s2 = inlined_call_operand.vmem [shape: f32[1,128], index: 2, kind: input, shape index: {}]
  %s3 = inlined_call_operand.vmem [shape: bf16[128,10], index: 3, kind: input, shape index: {}]
  %s4 = inlined_call_operand.vmem [shape: f32[1,10], index: 4, kind: input, shape index: {}]
  %s5 = inlined_call_operand.vmem [shape: f32[8,10], index: 5, kind: output, shape index: {}]
  %s6 = sld [smem:[#allocation0]]
  $region30: #{net_forward.7} parent=0
    _
  %s8 = ssub.s32 1, %s6
  %s9 = scalar_select 0, %s8, %s6
  // Predicated region
  $region2: #{net_forward.7} parent=0 // pred_check
    _
  $region3: #{net_forward.7} parent=0 // pred_check_branch
    %11 = sbr.rel (0) target = $region5
  $region4: #{net_forward.7} parent=0 // pred_region
    _
  $region5: #{net_forward.7} parent=0 // pred_fallthru
    _
  // Predicated region
  $region6: #{net_forward.7} parent=0 // pred_check
    _
  $region7: #{net_forward.7} parent=0 // pred_check_branch
    %13 = sbr.rel (0) target = $region9
  $region8: #{net_forward.7} parent=0 // pred_region
    _
  $region9: #{net_forward.7} parent=0 // pred_fallthru
    _
  // Predicated region
  $region10: #{net_forward.7} parent=0 // pred_check
    _
  $region11: #{net_forward.7} parent=0 // pred_check_branch
    %15 = sbr.rel (0) target = $region13
  $region12: #{net_forward.7} parent=0 // pred_region
    _
  $region13: #{net_forward.7} parent=0 // pred_fallthru
    _
  // Predicated region
  $region14: #{net_forward.7} parent=0 // pred_check
    _
  $region15: #{net_forward.7} parent=0 // pred_check_branch
    %17 = sbr.rel (0) target = $region17
  $region16: #{net_forward.7} parent=0 // pred_region
    _
  $region17: #{net_forward.7} parent=0 // pred_fallthru
    _
  // Predicated region
  $region18: #{net_forward.7} parent=0 // pred_check
    _
  $region19: #{net_forward.7} parent=0 // pred_check_branch
    %19 = sbr.rel (0) target = $region21
  $region20: #{net_forward.7} parent=0 // pred_region
    _
  $region21: #{net_forward.7} parent=0 // pred_fallthru
    _
  %v21 = vld [vmem:[%s0] sm:$0xff]
  %v22 = vld [vmem:[%s0 + $0x8] sm:$0xff]
  %v23 = vld [vmem:[%s0 + $0x10] sm:$0xff]
  %v24 = vld [vmem:[%s0 + $0x18] sm:$0xff]
  %v25 = vld [vmem:[%s0 + $0x20] sm:$0xff]
  %v26 = vld [vmem:[%s0 + $0x28] sm:$0xff]
  %v27 = vld [vmem:[%s0 + $0x30] sm:$0xff]
  %v28 = vld [vmem:[%s0 + $0x38] sm:$0xff]
  %v29 = vld [vmem:[%s0 + $0x40] sm:$0xff]
  %v30 = vld [vmem:[%s0 + $0x48] sm:$0xff]
  %v31 = vld [vmem:[%s0 + $0x50] sm:$0xff]
  %v32 = vld [vmem:[%s0 + $0x58] sm:$0xff]
  %v33 = vld [vmem:[%s0 + $0x60] sm:$0xf]
  %v34 = vld [vmem:[%s1] sm:$0xf]
  %v35 = vld [vmem:[%s1 + $0x4] sm:$0xf]
  %v36 = vld [vmem:[%s1 + $0x8] sm:$0xf]
  %v37 = vld [vmem:[%s1 + $0xc] sm:$0xf]
  %v38 = vld [vmem:[%s1 + $0x10] sm:$0xf]
  %v39 = vld [vmem:[%s1 + $0x14] sm:$0xf]
  %v40 = vld [vmem:[%s1 + $0x18] sm:$0xf]
  %v41 = vld [vmem:[%s1 + $0x1c] sm:$0xf]
  %v42 = vld [vmem:[%s1 + $0x20] sm:$0xf]
  %v43 = vld [vmem:[%s1 + $0x24] sm:$0xf]
  %v44 = vld [vmem:[%s1 + $0x28] sm:$0xf]
  %v45 = vld [vmem:[%s1 + $0x2c] sm:$0xf]
  %v46 = vld [vmem:[%s1 + $0x30] sm:$0xf]
  %v47 = vld [vmem:[%s1 + $0x34] sm:$0xf]
  %v48 = vld [vmem:[%s1 + $0x38] sm:$0xf]
  %v49 = vld [vmem:[%s1 + $0x3c] sm:$0xf]
  %v50 = vld [vmem:[%s1 + $0x40] sm:$0xf]
  %v51 = vld [vmem:[%s1 + $0x44] sm:$0xf]
  %v52 = vld [vmem:[%s1 + $0x48] sm:$0xf]
  %v53 = vld [vmem:[%s1 + $0x4c] sm:$0xf]
  %v54 = vld [vmem:[%s1 + $0x50] sm:$0xf]
  %v55 = vld [vmem:[%s1 + $0x54] sm:$0xf]
  %v56 = vld [vmem:[%s1 + $0x58] sm:$0xf]
  %v57 = vld [vmem:[%s1 + $0x5c] sm:$0xf]
  %v58 = vld [vmem:[%s1 + $0x60] sm:$0xf]
  %v59 = vld [vmem:[%s1 + $0x64] sm:$0xf]
  %v60 = vld [vmem:[%s1 + $0x68] sm:$0xf]
  %v61 = vld [vmem:[%s1 + $0x6c] sm:$0xf]
  %v62 = vld [vmem:[%s1 + $0x70] sm:$0xf]
  %v63 = vld [vmem:[%s1 + $0x74] sm:$0xf]
  %v64 = vld [vmem:[%s1 + $0x78] sm:$0xf]
  %v65 = vld [vmem:[%s1 + $0x7c] sm:$0xf]
  %v66 = vld [vmem:[%s1 + $0x80] sm:$0xf]
  %v67 = vld [vmem:[%s1 + $0x84] sm:$0xf]
  %v68 = vld [vmem:[%s1 + $0x88] sm:$0xf]
  %v69 = vld [vmem:[%s1 + $0x8c] sm:$0xf]
  %v70 = vld [vmem:[%s1 + $0x90] sm:$0xf]
  %v71 = vld [vmem:[%s1 + $0x94] sm:$0xf]
  %v72 = vld [vmem:[%s1 + $0x98] sm:$0xf]
  %v73 = vld [vmem:[%s1 + $0x9c] sm:$0xf]
  %v74 = vld [vmem:[%s1 + $0xa0] sm:$0xf]
  %v75 = vld [vmem:[%s1 + $0xa4] sm:$0xf]
  %v76 = vld [vmem:[%s1 + $0xa8] sm:$0xf]
  %v77 = vld [vmem:[%s1 + $0xac] sm:$0xf]
  %v78 = vld [vmem:[%s1 + $0xb0] sm:$0xf]
  %v79 = vld [vmem:[%s1 + $0xb4] sm:$0xf]
  %v80 = vld [vmem:[%s1 + $0xb8] sm:$0xf]
  %v81 = vld [vmem:[%s1 + $0xbc] sm:$0xf]
  %v82 = vld [vmem:[%s1 + $0xc0] sm:$0xf]
  %v83 = vld [vmem:[%s1 + $0xc4] sm:$0xf]
  %v84 = vld [vmem:[%s1 + $0xc8] sm:$0xf]
  %v85 = vld [vmem:[%s1 + $0xcc] sm:$0xf]
  %v86 = vld [vmem:[%s1 + $0xd0] sm:$0xf]
  %v87 = vld [vmem:[%s1 + $0xd4] sm:$0xf]
  %v88 = vld [vmem:[%s1 + $0xd8] sm:$0xf]
  %v89 = vld [vmem:[%s1 + $0xdc] sm:$0xf]
  %v90 = vld [vmem:[%s1 + $0xe0] sm:$0xf]
  %v91 = vld [vmem:[%s1 + $0xe4] sm:$0xf]
  %v92 = vld [vmem:[%s1 + $0xe8] sm:$0xf]
  %v93 = vld [vmem:[%s1 + $0xec] sm:$0xf]
  %v94 = vld [vmem:[%s1 + $0xf0] sm:$0xf]
  %v95 = vld [vmem:[%s1 + $0xf4] sm:$0xf]
  %v96 = vld [vmem:[%s1 + $0xf8] sm:$0xf]
  %v97 = vld [vmem:[%s1 + $0xfc] sm:$0xf]
  %v98 = vld [vmem:[%s1 + $0x100] sm:$0xf]
  %v99 = vld [vmem:[%s1 + $0x104] sm:$0xf]
  %v100 = vld [vmem:[%s1 + $0x108] sm:$0xf]
  %v101 = vld [vmem:[%s1 + $0x10c] sm:$0xf]
  %v102 = vld [vmem:[%s1 + $0x110] sm:$0xf]
  %v103 = vld [vmem:[%s1 + $0x114] sm:$0xf]
  %v104 = vld [vmem:[%s1 + $0x118] sm:$0xf]
  %v105 = vld [vmem:[%s1 + $0x11c] sm:$0xf]
  %v106 = vld [vmem:[%s1 + $0x120] sm:$0xf]
  %v107 = vld [vmem:[%s1 + $0x124] sm:$0xf]
  %v108 = vld [vmem:[%s1 + $0x128] sm:$0xf]
  %v109 = vld [vmem:[%s1 + $0x12c] sm:$0xf]
  %v110 = vld [vmem:[%s1 + $0x130] sm:$0xf]
  %v111 = vld [vmem:[%s1 + $0x134] sm:$0xf]
  %v112 = vld [vmem:[%s1 + $0x138] sm:$0xf]
  %v113 = vld [vmem:[%s1 + $0x13c] sm:$0xf]
  %v114 = vld [vmem:[%s1 + $0x140] sm:$0xf]
  %v115 = vld [vmem:[%s1 + $0x144] sm:$0xf]
  %v116 = vld [vmem:[%s1 + $0x148] sm:$0xf]
  %v117 = vld [vmem:[%s1 + $0x14c] sm:$0xf]
  %v118 = vld [vmem:[%s1 + $0x150] sm:$0xf]
  %v119 = vld [vmem:[%s1 + $0x154] sm:$0xf]
  %v120 = vld [vmem:[%s1 + $0x158] sm:$0xf]
  %v121 = vld [vmem:[%s1 + $0x15c] sm:$0xf]
  %v122 = vld [vmem:[%s1 + $0x160] sm:$0xf]
  %v123 = vld [vmem:[%s1 + $0x164] sm:$0xf]
  %v124 = vld [vmem:[%s1 + $0x168] sm:$0xf]
  %v125 = vld [vmem:[%s1 + $0x16c] sm:$0xf]
  %v126 = vld [vmem:[%s1 + $0x170] sm:$0xf]
  %v127 = vld [vmem:[%s1 + $0x174] sm:$0xf]
  %v128 = vld [vmem:[%s1 + $0x178] sm:$0xf]
  %v129 = vld [vmem:[%s1 + $0x17c] sm:$0xf]
  %v130 = vld [vmem:[%s1 + $0x180] sm:$0xf]
  %v131 = vld [vmem:[%s1 + $0x184] sm:$0xf]
  %v132 = vld [vmem:[%s1 + $0x188] sm:$0xf]
  %v133 = vld [vmem:[%s1 + $0x18c] sm:$0xf]
  %v134 = vld [vmem:[%s1 + $0x190] sm:$0xf]
  %v135 = vld [vmem:[%s1 + $0x194] sm:$0xf]
  %v136 = vld [vmem:[%s1 + $0x198] sm:$0xf]
  %v137 = vld [vmem:[%s1 + $0x19c] sm:$0xf]
  %v138 = vld [vmem:[%s1 + $0x1a0] sm:$0xf]
  %v139 = vld [vmem:[%s1 + $0x1a4] sm:$0xf]
  %v140 = vld [vmem:[%s1 + $0x1a8] sm:$0xf]
  %v141 = vld [vmem:[%s1 + $0x1ac] sm:$0xf]
  %v142 = vld [vmem:[%s1 + $0x1b0] sm:$0xf]
  %v143 = vld [vmem:[%s1 + $0x1b4] sm:$0xf]
  %v144 = vld [vmem:[%s1 + $0x1b8] sm:$0xf]
  %v145 = vld [vmem:[%s1 + $0x1bc] sm:$0xf]
  %v146 = vld [vmem:[%s1 + $0x1c0] sm:$0xf]
  %v147 = vld [vmem:[%s1 + $0x1c4] sm:$0xf]
  %v148 = vld [vmem:[%s1 + $0x1c8] sm:$0xf]
  %v149 = vld [vmem:[%s1 + $0x1cc] sm:$0xf]
  %v150 = vld [vmem:[%s1 + $0x1d0] sm:$0xf]
  %v151 = vld [vmem:[%s1 + $0x1d4] sm:$0xf]
  %v152 = vld [vmem:[%s1 + $0x1d8] sm:$0xf]
  %v153 = vld [vmem:[%s1 + $0x1dc] sm:$0xf]
  %v154 = vld [vmem:[%s1 + $0x1e0] sm:$0xf]
  %v155 = vld [vmem:[%s1 + $0x1e4] sm:$0xf]
  %v156 = vld [vmem:[%s1 + $0x1e8] sm:$0xf]
  %v157 = vld [vmem:[%s1 + $0x1ec] sm:$0xf]
  %v158 = vld [vmem:[%s1 + $0x1f0] sm:$0xf]
  %v159 = vld [vmem:[%s1 + $0x1f4] sm:$0xf]
  %v160 = vld [vmem:[%s1 + $0x1f8] sm:$0xf]
  %v161 = vld [vmem:[%s1 + $0x1fc] sm:$0xf]
  %v162 = vld [vmem:[%s1 + $0x200] sm:$0xf]
  %v163 = vld [vmem:[%s1 + $0x204] sm:$0xf]
  %v164 = vld [vmem:[%s1 + $0x208] sm:$0xf]
  %v165 = vld [vmem:[%s1 + $0x20c] sm:$0xf]
  %v166 = vld [vmem:[%s1 + $0x210] sm:$0xf]
  %v167 = vld [vmem:[%s1 + $0x214] sm:$0xf]
  %v168 = vld [vmem:[%s1 + $0x218] sm:$0xf]
  %v169 = vld [vmem:[%s1 + $0x21c] sm:$0xf]
  %v170 = vld [vmem:[%s1 + $0x220] sm:$0xf]
  %v171 = vld [vmem:[%s1 + $0x224] sm:$0xf]
  %v172 = vld [vmem:[%s1 + $0x228] sm:$0xf]
  %v173 = vld [vmem:[%s1 + $0x22c] sm:$0xf]
  %v174 = vld [vmem:[%s1 + $0x230] sm:$0xf]
  %v175 = vld [vmem:[%s1 + $0x234] sm:$0xf]
  %v176 = vld [vmem:[%s1 + $0x238] sm:$0xf]
  %v177 = vld [vmem:[%s1 + $0x23c] sm:$0xf]
  %v178 = vld [vmem:[%s1 + $0x240] sm:$0xf]
  %v179 = vld [vmem:[%s1 + $0x244] sm:$0xf]
  %v180 = vld [vmem:[%s1 + $0x248] sm:$0xf]
  %v181 = vld [vmem:[%s1 + $0x24c] sm:$0xf]
  %v182 = vld [vmem:[%s1 + $0x250] sm:$0xf]
  %v183 = vld [vmem:[%s1 + $0x254] sm:$0xf]
  %v184 = vld [vmem:[%s1 + $0x258] sm:$0xf]
  %v185 = vld [vmem:[%s1 + $0x25c] sm:$0xf]
  %v186 = vld [vmem:[%s1 + $0x260] sm:$0xf]
  %v187 = vld [vmem:[%s1 + $0x264] sm:$0xf]
  %v188 = vld [vmem:[%s1 + $0x268] sm:$0xf]
  %v189 = vld [vmem:[%s1 + $0x26c] sm:$0xf]
  %v190 = vld [vmem:[%s1 + $0x270] sm:$0xf]
  %v191 = vld [vmem:[%s1 + $0x274] sm:$0xf]
  %v192 = vld [vmem:[%s1 + $0x278] sm:$0xf]
  %v193 = vld [vmem:[%s1 + $0x27c] sm:$0xf]
  %v194 = vld [vmem:[%s1 + $0x280] sm:$0xf]
  %v195 = vld [vmem:[%s1 + $0x284] sm:$0xf]
  %v196 = vld [vmem:[%s1 + $0x288] sm:$0xf]
  %v197 = vld [vmem:[%s1 + $0x28c] sm:$0xf]
  %v198 = vld [vmem:[%s1 + $0x290] sm:$0xf]
  %v199 = vld [vmem:[%s1 + $0x294] sm:$0xf]
  %v200 = vld [vmem:[%s1 + $0x298] sm:$0xf]
  %v201 = vld [vmem:[%s1 + $0x29c] sm:$0xf]
  %v202 = vld [vmem:[%s1 + $0x2a0] sm:$0xf]
  %v203 = vld [vmem:[%s1 + $0x2a4] sm:$0xf]
  %v204 = vld [vmem:[%s1 + $0x2a8] sm:$0xf]
  %v205 = vld [vmem:[%s1 + $0x2ac] sm:$0xf]
  %v206 = vld [vmem:[%s1 + $0x2b0] sm:$0xf]
  %v207 = vld [vmem:[%s1 + $0x2b4] sm:$0xf]
  %v208 = vld [vmem:[%s1 + $0x2b8] sm:$0xf]
  %v209 = vld [vmem:[%s1 + $0x2bc] sm:$0xf]
  %v210 = vld [vmem:[%s1 + $0x2c0] sm:$0xf]
  %v211 = vld [vmem:[%s1 + $0x2c4] sm:$0xf]
  %v212 = vld [vmem:[%s1 + $0x2c8] sm:$0xf]
  %v213 = vld [vmem:[%s1 + $0x2cc] sm:$0xf]
  %v214 = vld [vmem:[%s1 + $0x2d0] sm:$0xf]
  %v215 = vld [vmem:[%s1 + $0x2d4] sm:$0xf]
  %v216 = vld [vmem:[%s1 + $0x2d8] sm:$0xf]
  %v217 = vld [vmem:[%s1 + $0x2dc] sm:$0xf]
  %v218 = vld [vmem:[%s1 + $0x2e0] sm:$0xf]
  %v219 = vld [vmem:[%s1 + $0x2e4] sm:$0xf]
  %v220 = vld [vmem:[%s1 + $0x2e8] sm:$0xf]
  %v221 = vld [vmem:[%s1 + $0x2ec] sm:$0xf]
  %v222 = vld [vmem:[%s1 + $0x2f0] sm:$0xf]
  %v223 = vld [vmem:[%s1 + $0x2f4] sm:$0xf]
  %v224 = vld [vmem:[%s1 + $0x2f8] sm:$0xf]
  %v225 = vld [vmem:[%s1 + $0x2fc] sm:$0xf]
  %v226 = vld [vmem:[%s1 + $0x300] sm:$0xf]
  %v227 = vld [vmem:[%s1 + $0x304] sm:$0xf]
  %v228 = vld [vmem:[%s1 + $0x308] sm:$0xf]
  %v229 = vld [vmem:[%s1 + $0x30c] sm:$0xf]
  %v230 = vld [vmem:[%s1 + $0x310] sm:$0xf]
  %v231 = vld [vmem:[%s1 + $0x314] sm:$0xf]
  %v232 = vld [vmem:[%s1 + $0x318] sm:$0xf]
  %v233 = vld [vmem:[%s1 + $0x31c] sm:$0xf]
  %v234 = vld [vmem:[%s1 + $0x320] sm:$0xf]
  %v235 = vld [vmem:[%s1 + $0x324] sm:$0xf]
  %v236 = vld [vmem:[%s1 + $0x328] sm:$0xf]
  %v237 = vld [vmem:[%s1 + $0x32c] sm:$0xf]
  %v238 = vld [vmem:[%s1 + $0x330] sm:$0xf]
  %v239 = vld [vmem:[%s1 + $0x334] sm:$0xf]
  %v240 = vld [vmem:[%s1 + $0x338] sm:$0xf]
  %v241 = vld [vmem:[%s1 + $0x33c] sm:$0xf]
  %v242 = vld [vmem:[%s1 + $0x340] sm:$0xf]
  %v243 = vld [vmem:[%s1 + $0x344] sm:$0xf]
  %v244 = vld [vmem:[%s1 + $0x348] sm:$0xf]
  %v245 = vld [vmem:[%s1 + $0x34c] sm:$0xf]
  %v246 = vld [vmem:[%s1 + $0x350] sm:$0xf]
  %v247 = vld [vmem:[%s1 + $0x354] sm:$0xf]
  %v248 = vld [vmem:[%s1 + $0x358] sm:$0xf]
  %v249 = vld [vmem:[%s1 + $0x35c] sm:$0xf]
  %v250 = vld [vmem:[%s1 + $0x360] sm:$0xf]
  %v251 = vld [vmem:[%s1 + $0x364] sm:$0xf]
  %v252 = vld [vmem:[%s1 + $0x368] sm:$0xf]
  %v253 = vld [vmem:[%s1 + $0x36c] sm:$0xf]
  %v254 = vld [vmem:[%s1 + $0x370] sm:$0xf]
  %v255 = vld [vmem:[%s1 + $0x374] sm:$0xf]
  %v256 = vld [vmem:[%s1 + $0x378] sm:$0xf]
  %v257 = vld [vmem:[%s1 + $0x37c] sm:$0xf]
  %v258 = vld [vmem:[%s1 + $0x380] sm:$0xf]
  %v259 = vld [vmem:[%s1 + $0x384] sm:$0xf]
  %v260 = vld [vmem:[%s1 + $0x388] sm:$0xf]
  %v261 = vld [vmem:[%s1 + $0x38c] sm:$0xf]
  %v262 = vld [vmem:[%s1 + $0x390] sm:$0xf]
  %v263 = vld [vmem:[%s1 + $0x394] sm:$0xf]
  %v264 = vld [vmem:[%s1 + $0x398] sm:$0xf]
  %v265 = vld [vmem:[%s1 + $0x39c] sm:$0xf]
  %v266 = vld [vmem:[%s1 + $0x3a0] sm:$0xf]
  %v267 = vld [vmem:[%s1 + $0x3a4] sm:$0xf]
  %v268 = vld [vmem:[%s1 + $0x3a8] sm:$0xf]
  %v269 = vld [vmem:[%s1 + $0x3ac] sm:$0xf]
  %v270 = vld [vmem:[%s1 + $0x3b0] sm:$0xf]
  %v271 = vld [vmem:[%s1 + $0x3b4] sm:$0xf]
  %v272 = vld [vmem:[%s1 + $0x3b8] sm:$0xf]
  %v273 = vld [vmem:[%s1 + $0x3bc] sm:$0xf]
  %v274 = vld [vmem:[%s1 + $0x3c0] sm:$0xf]
  %v275 = vld [vmem:[%s1 + $0x3c4] sm:$0xf]
  %v276 = vld [vmem:[%s1 + $0x3c8] sm:$0xf]
  %v277 = vld [vmem:[%s1 + $0x3cc] sm:$0xf]
  %v278 = vld [vmem:[%s1 + $0x3d0] sm:$0xf]
  %v279 = vld [vmem:[%s1 + $0x3d4] sm:$0xf]
  %v280 = vld [vmem:[%s1 + $0x3d8] sm:$0xf]
  %v281 = vld [vmem:[%s1 + $0x3dc] sm:$0xf]
  %v282 = vld [vmem:[%s1 + $0x3e0] sm:$0xf]
  %v283 = vld [vmem:[%s1 + $0x3e4] sm:$0xf]
  %v284 = vld [vmem:[%s1 + $0x3e8] sm:$0xf]
  %v285 = vld [vmem:[%s1 + $0x3ec] sm:$0xf]
  %v286 = vld [vmem:[%s1 + $0x3f0] sm:$0xf]
  %v287 = vld [vmem:[%s1 + $0x3f4] sm:$0xf]
  %v288 = vld [vmem:[%s1 + $0x3f8] sm:$0xf]
  %v289 = vld [vmem:[%s1 + $0x3fc] sm:$0xf]
  %v290 = vld [vmem:[%s1 + $0x400] sm:$0xf]
  %v291 = vld [vmem:[%s1 + $0x404] sm:$0xf]
  %v292 = vld [vmem:[%s1 + $0x408] sm:$0xf]
  %v293 = vld [vmem:[%s1 + $0x40c] sm:$0xf]
  %v294 = vld [vmem:[%s1 + $0x410] sm:$0xf]
  %v295 = vld [vmem:[%s1 + $0x414] sm:$0xf]
  %v296 = vld [vmem:[%s1 + $0x418] sm:$0xf]
  %v297 = vld [vmem:[%s1 + $0x41c] sm:$0xf]
  %v298 = vld [vmem:[%s1 + $0x420] sm:$0xf]
  %v299 = vld [vmem:[%s1 + $0x424] sm:$0xf]
  %v300 = vld [vmem:[%s1 + $0x428] sm:$0xf]
  %v301 = vld [vmem:[%s1 + $0x42c] sm:$0xf]
  %v302 = vld [vmem:[%s1 + $0x430] sm:$0xf]
  %v303 = vld [vmem:[%s1 + $0x434] sm:$0xf]
  %v304 = vld [vmem:[%s1 + $0x438] sm:$0xf]
  %v305 = vld [vmem:[%s1 + $0x43c] sm:$0xf]
  %v306 = vld [vmem:[%s1 + $0x440] sm:$0xf]
  %v307 = vld [vmem:[%s1 + $0x444] sm:$0xf]
  %v308 = vld [vmem:[%s1 + $0x448] sm:$0xf]
  %v309 = vld [vmem:[%s1 + $0x44c] sm:$0xf]
  %v310 = vld [vmem:[%s1 + $0x450] sm:$0xf]
  %v311 = vld [vmem:[%s1 + $0x454] sm:$0xf]
  %v312 = vld [vmem:[%s1 + $0x458] sm:$0xf]
  %v313 = vld [vmem:[%s1 + $0x45c] sm:$0xf]
  %v314 = vld [vmem:[%s1 + $0x460] sm:$0xf]
  %v315 = vld [vmem:[%s1 + $0x464] sm:$0xf]
  %v316 = vld [vmem:[%s1 + $0x468] sm:$0xf]
  %v317 = vld [vmem:[%s1 + $0x46c] sm:$0xf]
  %v318 = vld [vmem:[%s1 + $0x470] sm:$0xf]
  %v319 = vld [vmem:[%s1 + $0x474] sm:$0xf]
  %v320 = vld [vmem:[%s1 + $0x478] sm:$0xf]
  %v321 = vld [vmem:[%s1 + $0x47c] sm:$0xf]
  %v322 = vld [vmem:[%s1 + $0x480] sm:$0xf]
  %v323 = vld [vmem:[%s1 + $0x484] sm:$0xf]
  %v324 = vld [vmem:[%s1 + $0x488] sm:$0xf]
  %v325 = vld [vmem:[%s1 + $0x48c] sm:$0xf]
  %v326 = vld [vmem:[%s1 + $0x490] sm:$0xf]
  %v327 = vld [vmem:[%s1 + $0x494] sm:$0xf]
  %v328 = vld [vmem:[%s1 + $0x498] sm:$0xf]
  %v329 = vld [vmem:[%s1 + $0x49c] sm:$0xf]
  %v330 = vld [vmem:[%s1 + $0x4a0] sm:$0xf]
  %v331 = vld [vmem:[%s1 + $0x4a4] sm:$0xf]
  %v332 = vld [vmem:[%s1 + $0x4a8] sm:$0xf]
  %v333 = vld [vmem:[%s1 + $0x4ac] sm:$0xf]
  %v334 = vld [vmem:[%s1 + $0x4b0] sm:$0xf]
  %v335 = vld [vmem:[%s1 + $0x4b4] sm:$0xf]
  %v336 = vld [vmem:[%s1 + $0x4b8] sm:$0xf]
  %v337 = vld [vmem:[%s1 + $0x4bc] sm:$0xf]
  %v338 = vld [vmem:[%s1 + $0x4c0] sm:$0xf]
  %v339 = vld [vmem:[%s1 + $0x4c4] sm:$0xf]
  %v340 = vld [vmem:[%s1 + $0x4c8] sm:$0xf]
  %v341 = vld [vmem:[%s1 + $0x4cc] sm:$0xf]
  %v342 = vld [vmem:[%s1 + $0x4d0] sm:$0xf]
  %v343 = vld [vmem:[%s1 + $0x4d4] sm:$0xf]
  %v344 = vld [vmem:[%s1 + $0x4d8] sm:$0xf]
  %v345 = vld [vmem:[%s1 + $0x4dc] sm:$0xf]
  %v346 = vld [vmem:[%s1 + $0x4e0] sm:$0xf]
  %v347 = vld [vmem:[%s1 + $0x4e4] sm:$0xf]
  %v348 = vld [vmem:[%s1 + $0x4e8] sm:$0xf]
  %v349 = vld [vmem:[%s1 + $0x4ec] sm:$0xf]
  %v350 = vld [vmem:[%s1 + $0x4f0] sm:$0xf]
  %v351 = vld [vmem:[%s1 + $0x4f4] sm:$0xf]
  %v352 = vld [vmem:[%s1 + $0x4f8] sm:$0xf]
  %v353 = vld [vmem:[%s1 + $0x4fc] sm:$0xf]
  %v354 = vld [vmem:[%s1 + $0x500] sm:$0xf]
  %v355 = vld [vmem:[%s1 + $0x504] sm:$0xf]
  %v356 = vld [vmem:[%s1 + $0x508] sm:$0xf]
  %v357 = vld [vmem:[%s1 + $0x50c] sm:$0xf]
  %v358 = vld [vmem:[%s1 + $0x510] sm:$0xf]
  %v359 = vld [vmem:[%s1 + $0x514] sm:$0xf]
  %v360 = vld [vmem:[%s1 + $0x518] sm:$0xf]
  %v361 = vld [vmem:[%s1 + $0x51c] sm:$0xf]
  %v362 = vld [vmem:[%s1 + $0x520] sm:$0xf]
  %v363 = vld [vmem:[%s1 + $0x524] sm:$0xf]
  %v364 = vld [vmem:[%s1 + $0x528] sm:$0xf]
  %v365 = vld [vmem:[%s1 + $0x52c] sm:$0xf]
  %v366 = vld [vmem:[%s1 + $0x530] sm:$0xf]
  %v367 = vld [vmem:[%s1 + $0x534] sm:$0xf]
  %v368 = vld [vmem:[%s1 + $0x538] sm:$0xf]
  %v369 = vld [vmem:[%s1 + $0x53c] sm:$0xf]
  %v370 = vld [vmem:[%s1 + $0x540] sm:$0xf]
  %v371 = vld [vmem:[%s1 + $0x544] sm:$0xf]
  %v372 = vld [vmem:[%s1 + $0x548] sm:$0xf]
  %v373 = vld [vmem:[%s1 + $0x54c] sm:$0xf]
  %v374 = vld [vmem:[%s1 + $0x550] sm:$0xf]
  %v375 = vld [vmem:[%s1 + $0x554] sm:$0xf]
  %v376 = vld [vmem:[%s1 + $0x558] sm:$0xf]
  %v377 = vld [vmem:[%s1 + $0x55c] sm:$0xf]
  %v378 = vld [vmem:[%s1 + $0x560] sm:$0xf]
  %v379 = vld [vmem:[%s1 + $0x564] sm:$0xf]
  %v380 = vld [vmem:[%s1 + $0x568] sm:$0xf]
  %v381 = vld [vmem:[%s1 + $0x56c] sm:$0xf]
  %v382 = vld [vmem:[%s1 + $0x570] sm:$0xf]
  %v383 = vld [vmem:[%s1 + $0x574] sm:$0xf]
  %v384 = vld [vmem:[%s1 + $0x578] sm:$0xf]
  %v385 = vld [vmem:[%s1 + $0x57c] sm:$0xf]
  %v386 = vld [vmem:[%s1 + $0x580] sm:$0xf]
  %v387 = vld [vmem:[%s1 + $0x584] sm:$0xf]
  %v388 = vld [vmem:[%s1 + $0x588] sm:$0xf]
  %v389 = vld [vmem:[%s1 + $0x58c] sm:$0xf]
  %v390 = vld [vmem:[%s1 + $0x590] sm:$0xf]
  %v391 = vld [vmem:[%s1 + $0x594] sm:$0xf]
  %v392 = vld [vmem:[%s1 + $0x598] sm:$0xf]
  %v393 = vld [vmem:[%s1 + $0x59c] sm:$0xf]
  %v394 = vld [vmem:[%s1 + $0x5a0] sm:$0xf]
  %v395 = vld [vmem:[%s1 + $0x5a4] sm:$0xf]
  %v396 = vld [vmem:[%s1 + $0x5a8] sm:$0xf]
  %v397 = vld [vmem:[%s1 + $0x5ac] sm:$0xf]
  %v398 = vld [vmem:[%s1 + $0x5b0] sm:$0xf]
  %v399 = vld [vmem:[%s1 + $0x5b4] sm:$0xf]
  %v400 = vld [vmem:[%s1 + $0x5b8] sm:$0xf]
  %v401 = vld [vmem:[%s1 + $0x5bc] sm:$0xf]
  %v402 = vld [vmem:[%s1 + $0x5c0] sm:$0xf]
  %v403 = vld [vmem:[%s1 + $0x5c4] sm:$0xf]
  %v404 = vld [vmem:[%s1 + $0x5c8] sm:$0xf]
  %v405 = vld [vmem:[%s1 + $0x5cc] sm:$0xf]
  %v406 = vld [vmem:[%s1 + $0x5d0] sm:$0xf]
  %v407 = vld [vmem:[%s1 + $0x5d4] sm:$0xf]
  %v408 = vld [vmem:[%s1 + $0x5d8] sm:$0xf]
  %v409 = vld [vmem:[%s1 + $0x5dc] sm:$0xf]
  %v410 = vld [vmem:[%s1 + $0x5e0] sm:$0xf]
  %v411 = vld [vmem:[%s1 + $0x5e4] sm:$0xf]
  %v412 = vld [vmem:[%s1 + $0x5e8] sm:$0xf]
  %v413 = vld [vmem:[%s1 + $0x5ec] sm:$0xf]
  %v414 = vld [vmem:[%s1 + $0x5f0] sm:$0xf]
  %v415 = vld [vmem:[%s1 + $0x5f4] sm:$0xf]
  %v416 = vld [vmem:[%s1 + $0x5f8] sm:$0xf]
  %v417 = vld [vmem:[%s1 + $0x5fc] sm:$0xf]
  %v418 = vld [vmem:[%s1 + $0x600] sm:$0xf]
  %v419 = vld [vmem:[%s1 + $0x604] sm:$0xf]
  %v420 = vld [vmem:[%s1 + $0x608] sm:$0xf]
  %v421 = vld [vmem:[%s1 + $0x60c] sm:$0xf]
  %v422 = vld [vmem:[%s1 + $0x610] sm:$0xf]
  %v423 = vld [vmem:[%s1 + $0x614] sm:$0xf]
  %v424 = vld [vmem:[%s1 + $0x618] sm:$0xf]
  %v425 = vld [vmem:[%s1 + $0x61c] sm:$0xf]
  %v426 = vld [vmem:[%s2] sm:$0x1]
  %v428 = vlaneseq
  %v429 = vshrl.u32 %v428, 7
  %v430 = vsub.s32 0, %v429
  %v431 = vrot.slane %v426, %v430
  %v446 = vunpack.c.l.b16 %v21
  %v447 = vunpack.c.h.b16 %v21
  %v448 = vunpack.c.l.b16 %v22
  %v449 = vunpack.c.h.b16 %v22
  %v450 = vunpack.c.l.b16 %v23
  %v451 = vunpack.c.h.b16 %v23
  %v452 = vunpack.c.l.b16 %v24
  %v453 = vunpack.c.h.b16 %v24
  %v454 = vunpack.c.l.b16 %v25
  %v455 = vunpack.c.h.b16 %v25
  %v456 = vunpack.c.l.b16 %v26
  %v457 = vunpack.c.h.b16 %v26
  %v458 = vunpack.c.l.b16 %v27
  %v459 = vunpack.c.h.b16 %v27
  %v460 = vunpack.c.l.b16 %v28
  %v461 = vunpack.c.h.b16 %v28
  %v462 = vunpack.c.l.b16 %v29
  %v463 = vunpack.c.h.b16 %v29
  %v464 = vunpack.c.l.b16 %v30
  %v465 = vunpack.c.h.b16 %v30
  %v466 = vunpack.c.l.b16 %v31
  %v467 = vunpack.c.h.b16 %v31
  %v468 = vunpack.c.l.b16 %v32
  %v469 = vunpack.c.h.b16 %v32
  %v470 = vunpack.c.l.b16 %v33
  %v471 = vpack.c.b16 %v446, %v446
  %v472 = vpack.c.b16 %v447, %v447
  %v473 = vpack.c.b16 %v448, %v448
  %v474 = vpack.c.b16 %v449, %v449
  %v475 = vpack.c.b16 %v450, %v450
  %v476 = vpack.c.b16 %v451, %v451
  %v477 = vpack.c.b16 %v452, %v452
  %v478 = vpack.c.b16 %v453, %v453
  %v479 = vpack.c.b16 %v454, %v454
  %v480 = vpack.c.b16 %v455, %v455
  %v481 = vpack.c.b16 %v456, %v456
  %v482 = vpack.c.b16 %v457, %v457
  %v483 = vpack.c.b16 %v458, %v458
  %v484 = vpack.c.b16 %v459, %v459
  %v485 = vpack.c.b16 %v460, %v460
  %v486 = vpack.c.b16 %v461, %v461
  %v487 = vpack.c.b16 %v462, %v462
  %v488 = vpack.c.b16 %v463, %v463
  %v489 = vpack.c.b16 %v464, %v464
  %v490 = vpack.c.b16 %v465, %v465
  %v491 = vpack.c.b16 %v466, %v466
  %v492 = vpack.c.b16 %v467, %v467
  %v493 = vpack.c.b16 %v468, %v468
  %v494 = vpack.c.b16 %v469, %v469
  %v495 = vpack.c.b16 %v470, %v470
  %v912 = vunpack.c.l.b16 %v34
  %v913 = vunpack.c.l.b16 %v35
  %v914 = vunpack.c.l.b16 %v36
  %v915 = vunpack.c.l.b16 %v37
  %v916 = vunpack.c.l.b16 %v38
  %v917 = vunpack.c.l.b16 %v39
  %v918 = vunpack.c.l.b16 %v40
  %v919 = vunpack.c.l.b16 %v41
  %v920 = vunpack.c.l.b16 %v42
  %v921 = vunpack.c.l.b16 %v43
  %v922 = vunpack.c.l.b16 %v44
  %v923 = vunpack.c.l.b16 %v45
  %v924 = vunpack.c.l.b16 %v46
  %v925 = vunpack.c.l.b16 %v47
  %v926 = vunpack.c.l.b16 %v48
  %v927 = vunpack.c.l.b16 %v49
  %v928 = vunpack.c.l.b16 %v50
  %v929 = vunpack.c.l.b16 %v51
  %v930 = vunpack.c.l.b16 %v52
  %v931 = vunpack.c.l.b16 %v53
  %v932 = vunpack.c.l.b16 %v54
  %v933 = vunpack.c.l.b16 %v55
  %v934 = vunpack.c.l.b16 %v56
  %v935 = vunpack.c.l.b16 %v57
  %v936 = vunpack.c.l.b16 %v58
  %v937 = vunpack.c.l.b16 %v59
  %v938 = vunpack.c.l.b16 %v60
  %v939 = vunpack.c.l.b16 %v61
  %v940 = vunpack.c.l.b16 %v62
  %v941 = vunpack.c.l.b16 %v63
  %v942 = vunpack.c.l.b16 %v64
  %v943 = vunpack.c.l.b16 %v65
  %v944 = vunpack.c.l.b16 %v66
  %v945 = vunpack.c.l.b16 %v67
  %v946 = vunpack.c.l.b16 %v68
  %v947 = vunpack.c.l.b16 %v69
  %v948 = vunpack.c.l.b16 %v70
  %v949 = vunpack.c.l.b16 %v71
  %v950 = vunpack.c.l.b16 %v72
  %v951 = vunpack.c.l.b16 %v73
  %v952 = vunpack.c.l.b16 %v74
  %v953 = vunpack.c.l.b16 %v75
  %v954 = vunpack.c.l.b16 %v76
  %v955 = vunpack.c.l.b16 %v77
  %v956 = vunpack.c.l.b16 %v78
  %v957 = vunpack.c.l.b16 %v79
  %v958 = vunpack.c.l.b16 %v80
  %v959 = vunpack.c.l.b16 %v81
  %v960 = vunpack.c.l.b16 %v82
  %v961 = vunpack.c.l.b16 %v83
  %v962 = vunpack.c.l.b16 %v84
  %v963 = vunpack.c.l.b16 %v85
  %v964 = vunpack.c.l.b16 %v86
  %v965 = vunpack.c.l.b16 %v87
  %v966 = vunpack.c.l.b16 %v88
  %v967 = vunpack.c.l.b16 %v89
  %v968 = vunpack.c.l.b16 %v90
  %v969 = vunpack.c.l.b16 %v91
  %v970 = vunpack.c.l.b16 %v92
  %v971 = vunpack.c.l.b16 %v93
  %v972 = vunpack.c.l.b16 %v94
  %v973 = vunpack.c.l.b16 %v95
  %v974 = vunpack.c.l.b16 %v96
  %v975 = vunpack.c.l.b16 %v97
  %v976 = vunpack.c.l.b16 %v98
  %v977 = vunpack.c.l.b16 %v99
  %v978 = vunpack.c.l.b16 %v100
  %v979 = vunpack.c.l.b16 %v101
  %v980 = vunpack.c.l.b16 %v102
  %v981 = vunpack.c.l.b16 %v103
  %v982 = vunpack.c.l.b16 %v104
  %v983 = vunpack.c.l.b16 %v105
  %v984 = vunpack.c.l.b16 %v106
  %v985 = vunpack.c.l.b16 %v107
  %v986 = vunpack.c.l.b16 %v108
  %v987 = vunpack.c.l.b16 %v109
  %v988 = vunpack.c.l.b16 %v110
  %v989 = vunpack.c.l.b16 %v111
  %v990 = vunpack.c.l.b16 %v112
  %v991 = vunpack.c.l.b16 %v113
  %v992 = vunpack.c.l.b16 %v114
  %v993 = vunpack.c.l.b16 %v115
  %v994 = vunpack.c.l.b16 %v116
  %v995 = vunpack.c.l.b16 %v117
  %v996 = vunpack.c.l.b16 %v118
  %v997 = vunpack.c.l.b16 %v119
  %v998 = vunpack.c.l.b16 %v120
  %v999 = vunpack.c.l.b16 %v121
  %v1000 = vunpack.c.l.b16 %v122
  %v1001 = vunpack.c.l.b16 %v123
  %v1002 = vunpack.c.l.b16 %v124
  %v1003 = vunpack.c.l.b16 %v125
  %v1004 = vunpack.c.l.b16 %v126
  %v1005 = vunpack.c.l.b16 %v127
  %v1006 = vunpack.c.l.b16 %v128
  %v1007 = vunpack.c.l.b16 %v129
  %v1008 = vunpack.c.l.b16 %v130
  %v1009 = vunpack.c.l.b16 %v131
  %v1010 = vunpack.c.l.b16 %v132
  %v1011 = vunpack.c.l.b16 %v133
  %v1012 = vunpack.c.l.b16 %v134
  %v1013 = vunpack.c.l.b16 %v135
  %v1014 = vunpack.c.l.b16 %v136
  %v1015 = vunpack.c.l.b16 %v137
  %v1016 = vunpack.c.l.b16 %v138
  %v1017 = vunpack.c.l.b16 %v139
  %v1018 = vunpack.c.l.b16 %v140
  %v1019 = vunpack.c.l.b16 %v141
  %v1020 = vunpack.c.l.b16 %v142
  %v1021 = vunpack.c.l.b16 %v143
  %v1022 = vunpack.c.l.b16 %v144
  %v1023 = vunpack.c.l.b16 %v145
  %v1024 = vunpack.c.l.b16 %v146
  %v1025 = vunpack.c.l.b16 %v147
  %v1026 = vunpack.c.l.b16 %v148
  %v1027 = vunpack.c.l.b16 %v149
  %v1028 = vunpack.c.l.b16 %v150
  %v1029 = vunpack.c.l.b16 %v151
  %v1030 = vunpack.c.l.b16 %v152
  %v1031 = vunpack.c.l.b16 %v153
  %v1032 = vunpack.c.l.b16 %v154
  %v1033 = vunpack.c.l.b16 %v155
  %v1034 = vunpack.c.l.b16 %v156
  %v1035 = vunpack.c.l.b16 %v157
  %v1036 = vunpack.c.l.b16 %v158
  %v1037 = vunpack.c.l.b16 %v159
  %v1038 = vunpack.c.l.b16 %v160
  %v1039 = vunpack.c.l.b16 %v161
  %v1040 = vunpack.c.l.b16 %v162
  %v1041 = vunpack.c.l.b16 %v163
  %v1042 = vunpack.c.l.b16 %v164
  %v1043 = vunpack.c.l.b16 %v165
  %v1044 = vunpack.c.l.b16 %v166
  %v1045 = vunpack.c.l.b16 %v167
  %v1046 = vunpack.c.l.b16 %v168
  %v1047 = vunpack.c.l.b16 %v169
  %v1048 = vunpack.c.l.b16 %v170
  %v1049 = vunpack.c.l.b16 %v171
  %v1050 = vunpack.c.l.b16 %v172
  %v1051 = vunpack.c.l.b16 %v173
  %v1052 = vunpack.c.l.b16 %v174
  %v1053 = vunpack.c.l.b16 %v175
  %v1054 = vunpack.c.l.b16 %v176
  %v1055 = vunpack.c.l.b16 %v177
  %v1056 = vunpack.c.l.b16 %v178
  %v1057 = vunpack.c.l.b16 %v179
  %v1058 = vunpack.c.l.b16 %v180
  %v1059 = vunpack.c.l.b16 %v181
  %v1060 = vunpack.c.l.b16 %v182
  %v1061 = vunpack.c.l.b16 %v183
  %v1062 = vunpack.c.l.b16 %v184
  %v1063 = vunpack.c.l.b16 %v185
  %v1064 = vunpack.c.l.b16 %v186
  %v1065 = vunpack.c.l.b16 %v187
  %v1066 = vunpack.c.l.b16 %v188
  %v1067 = vunpack.c.l.b16 %v189
  %v1068 = vunpack.c.l.b16 %v190
  %v1069 = vunpack.c.l.b16 %v191
  %v1070 = vunpack.c.l.b16 %v192
  %v1071 = vunpack.c.l.b16 %v193
  %v1072 = vunpack.c.l.b16 %v194
  %v1073 = vunpack.c.l.b16 %v195
  %v1074 = vunpack.c.l.b16 %v196
  %v1075 = vunpack.c.l.b16 %v197
  %v1076 = vunpack.c.l.b16 %v198
  %v1077 = vunpack.c.l.b16 %v199
  %v1078 = vunpack.c.l.b16 %v200
  %v1079 = vunpack.c.l.b16 %v201
  %v1080 = vunpack.c.l.b16 %v202
  %v1081 = vunpack.c.l.b16 %v203
  %v1082 = vunpack.c.l.b16 %v204
  %v1083 = vunpack.c.l.b16 %v205
  %v1084 = vunpack.c.l.b16 %v206
  %v1085 = vunpack.c.l.b16 %v207
  %v1086 = vunpack.c.l.b16 %v208
  %v1087 = vunpack.c.l.b16 %v209
  %v1088 = vunpack.c.l.b16 %v210
  %v1089 = vunpack.c.l.b16 %v211
  %v1090 = vunpack.c.l.b16 %v212
  %v1091 = vunpack.c.l.b16 %v213
  %v1092 = vunpack.c.l.b16 %v214
  %v1093 = vunpack.c.l.b16 %v215
  %v1094 = vunpack.c.l.b16 %v216
  %v1095 = vunpack.c.l.b16 %v217
  %v1096 = vunpack.c.l.b16 %v218
  %v1097 = vunpack.c.l.b16 %v219
  %v1098 = vunpack.c.l.b16 %v220
  %v1099 = vunpack.c.l.b16 %v221
  %v1100 = vunpack.c.l.b16 %v222
  %v1101 = vunpack.c.l.b16 %v223
  %v1102 = vunpack.c.l.b16 %v224
  %v1103 = vunpack.c.l.b16 %v225
  %v1104 = vunpack.c.l.b16 %v226
  %v1105 = vunpack.c.l.b16 %v227
  %v1106 = vunpack.c.l.b16 %v228
  %v1107 = vunpack.c.l.b16 %v229
  %v1108 = vunpack.c.l.b16 %v230
  %v1109 = vunpack.c.l.b16 %v231
  %v1110 = vunpack.c.l.b16 %v232
  %v1111 = vunpack.c.l.b16 %v233
  %v1112 = vunpack.c.l.b16 %v234
  %v1113 = vunpack.c.l.b16 %v235
  %v1114 = vunpack.c.l.b16 %v236
  %v1115 = vunpack.c.l.b16 %v237
  %v1116 = vunpack.c.l.b16 %v238
  %v1117 = vunpack.c.l.b16 %v239
  %v1118 = vunpack.c.l.b16 %v240
  %v1119 = vunpack.c.l.b16 %v241
  %v1120 = vunpack.c.l.b16 %v242
  %v1121 = vunpack.c.l.b16 %v243
  %v1122 = vunpack.c.l.b16 %v244
  %v1123 = vunpack.c.l.b16 %v245
  %v1124 = vunpack.c.l.b16 %v246
  %v1125 = vunpack.c.l.b16 %v247
  %v1126 = vunpack.c.l.b16 %v248
  %v1127 = vunpack.c.l.b16 %v249
  %v1128 = vunpack.c.l.b16 %v250
  %v1129 = vunpack.c.l.b16 %v251
  %v1130 = vunpack.c.l.b16 %v252
  %v1131 = vunpack.c.l.b16 %v253
  %v1132 = vunpack.c.l.b16 %v254
  %v1133 = vunpack.c.l.b16 %v255
  %v1134 = vunpack.c.l.b16 %v256
  %v1135 = vunpack.c.l.b16 %v257
  %v1136 = vunpack.c.l.b16 %v258
  %v1137 = vunpack.c.l.b16 %v259
  %v1138 = vunpack.c.l.b16 %v260
  %v1139 = vunpack.c.l.b16 %v261
  %v1140 = vunpack.c.l.b16 %v262
  %v1141 = vunpack.c.l.b16 %v263
  %v1142 = vunpack.c.l.b16 %v264
  %v1143 = vunpack.c.l.b16 %v265
  %v1144 = vunpack.c.l.b16 %v266
  %v1145 = vunpack.c.l.b16 %v267
  %v1146 = vunpack.c.l.b16 %v268
  %v1147 = vunpack.c.l.b16 %v269
  %v1148 = vunpack.c.l.b16 %v270
  %v1149 = vunpack.c.l.b16 %v271
  %v1150 = vunpack.c.l.b16 %v272
  %v1151 = vunpack.c.l.b16 %v273
  %v1152 = vunpack.c.l.b16 %v274
  %v1153 = vunpack.c.l.b16 %v275
  %v1154 = vunpack.c.l.b16 %v276
  %v1155 = vunpack.c.l.b16 %v277
  %v1156 = vunpack.c.l.b16 %v278
  %v1157 = vunpack.c.l.b16 %v279
  %v1158 = vunpack.c.l.b16 %v280
  %v1159 = vunpack.c.l.b16 %v281
  %v1160 = vunpack.c.l.b16 %v282
  %v1161 = vunpack.c.l.b16 %v283
  %v1162 = vunpack.c.l.b16 %v284
  %v1163 = vunpack.c.l.b16 %v285
  %v1164 = vunpack.c.l.b16 %v286
  %v1165 = vunpack.c.l.b16 %v287
  %v1166 = vunpack.c.l.b16 %v288
  %v1167 = vunpack.c.l.b16 %v289
  %v1168 = vunpack.c.l.b16 %v290
  %v1169 = vunpack.c.l.b16 %v291
  %v1170 = vunpack.c.l.b16 %v292
  %v1171 = vunpack.c.l.b16 %v293
  %v1172 = vunpack.c.l.b16 %v294
  %v1173 = vunpack.c.l.b16 %v295
  %v1174 = vunpack.c.l.b16 %v296
  %v1175 = vunpack.c.l.b16 %v297
  %v1176 = vunpack.c.l.b16 %v298
  %v1177 = vunpack.c.l.b16 %v299
  %v1178 = vunpack.c.l.b16 %v300
  %v1179 = vunpack.c.l.b16 %v301
  %v1180 = vunpack.c.l.b16 %v302
  %v1181 = vunpack.c.l.b16 %v303
  %v1182 = vunpack.c.l.b16 %v304
  %v1183 = vunpack.c.l.b16 %v305
  %v1184 = vunpack.c.l.b16 %v306
  %v1185 = vunpack.c.l.b16 %v307
  %v1186 = vunpack.c.l.b16 %v308
  %v1187 = vunpack.c.l.b16 %v309
  %v1188 = vunpack.c.l.b16 %v310
  %v1189 = vunpack.c.l.b16 %v311
  %v1190 = vunpack.c.l.b16 %v312
  %v1191 = vunpack.c.l.b16 %v313
  %v1192 = vunpack.c.l.b16 %v314
  %v1193 = vunpack.c.l.b16 %v315
  %v1194 = vunpack.c.l.b16 %v316
  %v1195 = vunpack.c.l.b16 %v317
  %v1196 = vunpack.c.l.b16 %v318
  %v1197 = vunpack.c.l.b16 %v319
  %v1198 = vunpack.c.l.b16 %v320
  %v1199 = vunpack.c.l.b16 %v321
  %v1200 = vunpack.c.l.b16 %v322
  %v1201 = vunpack.c.l.b16 %v323
  %v1202 = vunpack.c.l.b16 %v324
  %v1203 = vunpack.c.l.b16 %v325
  %v1204 = vunpack.c.l.b16 %v326
  %v1205 = vunpack.c.l.b16 %v327
  %v1206 = vunpack.c.l.b16 %v328
  %v1207 = vunpack.c.l.b16 %v329
  %v1208 = vunpack.c.l.b16 %v330
  %v1209 = vunpack.c.l.b16 %v331
  %v1210 = vunpack.c.l.b16 %v332
  %v1211 = vunpack.c.l.b16 %v333
  %v1212 = vunpack.c.l.b16 %v334
  %v1213 = vunpack.c.l.b16 %v335
  %v1214 = vunpack.c.l.b16 %v336
  %v1215 = vunpack.c.l.b16 %v337
  %v1216 = vunpack.c.l.b16 %v338
  %v1217 = vunpack.c.l.b16 %v339
  %v1218 = vunpack.c.l.b16 %v340
  %v1219 = vunpack.c.l.b16 %v341
  %v1220 = vunpack.c.l.b16 %v342
  %v1221 = vunpack.c.l.b16 %v343
  %v1222 = vunpack.c.l.b16 %v344
  %v1223 = vunpack.c.l.b16 %v345
  %v1224 = vunpack.c.l.b16 %v346
  %v1225 = vunpack.c.l.b16 %v347
  %v1226 = vunpack.c.l.b16 %v348
  %v1227 = vunpack.c.l.b16 %v349
  %v1228 = vunpack.c.l.b16 %v350
  %v1229 = vunpack.c.l.b16 %v351
  %v1230 = vunpack.c.l.b16 %v352
  %v1231 = vunpack.c.l.b16 %v353
  %v1232 = vunpack.c.l.b16 %v354
  %v1233 = vunpack.c.l.b16 %v355
  %v1234 = vunpack.c.l.b16 %v356
  %v1235 = vunpack.c.l.b16 %v357
  %v1236 = vunpack.c.l.b16 %v358
  %v1237 = vunpack.c.l.b16 %v359
  %v1238 = vunpack.c.l.b16 %v360
  %v1239 = vunpack.c.l.b16 %v361
  %v1240 = vunpack.c.l.b16 %v362
  %v1241 = vunpack.c.l.b16 %v363
  %v1242 = vunpack.c.l.b16 %v364
  %v1243 = vunpack.c.l.b16 %v365
  %v1244 = vunpack.c.l.b16 %v366
  %v1245 = vunpack.c.l.b16 %v367
  %v1246 = vunpack.c.l.b16 %v368
  %v1247 = vunpack.c.l.b16 %v369
  %v1248 = vunpack.c.l.b16 %v370
  %v1249 = vunpack.c.l.b16 %v371
  %v1250 = vunpack.c.l.b16 %v372
  %v1251 = vunpack.c.l.b16 %v373
  %v1252 = vunpack.c.l.b16 %v374
  %v1253 = vunpack.c.l.b16 %v375
  %v1254 = vunpack.c.l.b16 %v376
  %v1255 = vunpack.c.l.b16 %v377
  %v1256 = vunpack.c.l.b16 %v378
  %v1257 = vunpack.c.l.b16 %v379
  %v1258 = vunpack.c.l.b16 %v380
  %v1259 = vunpack.c.l.b16 %v381
  %v1260 = vunpack.c.l.b16 %v382
  %v1261 = vunpack.c.l.b16 %v383
  %v1262 = vunpack.c.l.b16 %v384
  %v1263 = vunpack.c.l.b16 %v385
  %v1264 = vunpack.c.l.b16 %v386
  %v1265 = vunpack.c.l.b16 %v387
  %v1266 = vunpack.c.l.b16 %v388
  %v1267 = vunpack.c.l.b16 %v389
  %v1268 = vunpack.c.l.b16 %v390
  %v1269 = vunpack.c.l.b16 %v391
  %v1270 = vunpack.c.l.b16 %v392
  %v1271 = vunpack.c.l.b16 %v393
  %v1272 = vunpack.c.l.b16 %v394
  %v1273 = vunpack.c.l.b16 %v395
  %v1274 = vunpack.c.l.b16 %v396
  %v1275 = vunpack.c.l.b16 %v397
  %v1276 = vunpack.c.l.b16 %v398
  %v1277 = vunpack.c.l.b16 %v399
  %v1278 = vunpack.c.l.b16 %v400
  %v1279 = vunpack.c.l.b16 %v401
  %v1280 = vunpack.c.l.b16 %v402
  %v1281 = vunpack.c.l.b16 %v403
  %v1282 = vunpack.c.l.b16 %v404
  %v1283 = vunpack.c.l.b16 %v405
  %v1284 = vunpack.c.l.b16 %v406
  %v1285 = vunpack.c.l.b16 %v407
  %v1286 = vunpack.c.l.b16 %v408
  %v1287 = vunpack.c.l.b16 %v409
  %v1288 = vunpack.c.l.b16 %v410
  %v1289 = vunpack.c.l.b16 %v411
  %v1290 = vunpack.c.l.b16 %v412
  %v1291 = vunpack.c.l.b16 %v413
  %v1292 = vunpack.c.l.b16 %v414
  %v1293 = vunpack.c.l.b16 %v415
  %v1294 = vunpack.c.l.b16 %v416
  %v1295 = vunpack.c.l.b16 %v417
  %v1296 = vunpack.c.l.b16 %v418
  %v1297 = vunpack.c.l.b16 %v419
  %v1298 = vunpack.c.l.b16 %v420
  %v1299 = vunpack.c.l.b16 %v421
  %v1300 = vunpack.c.l.b16 %v422
  %v1301 = vunpack.c.l.b16 %v423
  %v1302 = vunpack.c.l.b16 %v424
  %v1303 = vunpack.c.l.b16 %v425
  %v1304 = vpack.c.b16 %v913, %v912
  %v1305 = vpack.c.b16 %v915, %v914
  %v1306 = vpack.c.b16 %v917, %v916
  %v1307 = vpack.c.b16 %v919, %v918
  %v1308 = vpack.c.b16 %v921, %v920
  %v1309 = vpack.c.b16 %v923, %v922
  %v1310 = vpack.c.b16 %v925, %v924
  %v1311 = vpack.c.b16 %v927, %v926
  %v1312 = vpack.c.b16 %v929, %v928
  %v1313 = vpack.c.b16 %v931, %v930
  %v1314 = vpack.c.b16 %v933, %v932
  %v1315 = vpack.c.b16 %v935, %v934
  %v1316 = vpack.c.b16 %v937, %v936
  %v1317 = vpack.c.b16 %v939, %v938
  %v1318 = vpack.c.b16 %v941, %v940
  %v1319 = vpack.c.b16 %v943, %v942
  %v1320 = vpack.c.b16 %v945, %v944
  %v1321 = vpack.c.b16 %v947, %v946
  %v1322 = vpack.c.b16 %v949, %v948
  %v1323 = vpack.c.b16 %v951, %v950
  %v1324 = vpack.c.b16 %v953, %v952
  %v1325 = vpack.c.b16 %v955, %v954
  %v1326 = vpack.c.b16 %v957, %v956
  %v1327 = vpack.c.b16 %v959, %v958
  %v1328 = vpack.c.b16 %v961, %v960
  %v1329 = vpack.c.b16 %v963, %v962
  %v1330 = vpack.c.b16 %v965, %v964
  %v1331 = vpack.c.b16 %v967, %v966
  %v1332 = vpack.c.b16 %v969, %v968
  %v1333 = vpack.c.b16 %v971, %v970
  %v1334 = vpack.c.b16 %v973, %v972
  %v1335 = vpack.c.b16 %v975, %v974
  %v1336 = vpack.c.b16 %v977, %v976
  %v1337 = vpack.c.b16 %v979, %v978
  %v1338 = vpack.c.b16 %v981, %v980
  %v1339 = vpack.c.b16 %v983, %v982
  %v1340 = vpack.c.b16 %v985, %v984
  %v1341 = vpack.c.b16 %v987, %v986
  %v1342 = vpack.c.b16 %v989, %v988
  %v1343 = vpack.c.b16 %v991, %v990
  %v1344 = vpack.c.b16 %v993, %v992
  %v1345 = vpack.c.b16 %v995, %v994
  %v1346 = vpack.c.b16 %v997, %v996
  %v1347 = vpack.c.b16 %v999, %v998
  %v1348 = vpack.c.b16 %v1001, %v1000
  %v1349 = vpack.c.b16 %v1003, %v1002
  %v1350 = vpack.c.b16 %v1005, %v1004
  %v1351 = vpack.c.b16 %v1007, %v1006
  %v1352 = vpack.c.b16 %v1009, %v1008
  %v1353 = vpack.c.b16 %v1011, %v1010
  %v1354 = vpack.c.b16 %v1013, %v1012
  %v1355 = vpack.c.b16 %v1015, %v1014
  %v1356 = vpack.c.b16 %v1017, %v1016
  %v1357 = vpack.c.b16 %v1019, %v1018
  %v1358 = vpack.c.b16 %v1021, %v1020
  %v1359 = vpack.c.b16 %v1023, %v1022
  %v1360 = vpack.c.b16 %v1025, %v1024
  %v1361 = vpack.c.b16 %v1027, %v1026
  %v1362 = vpack.c.b16 %v1029, %v1028
  %v1363 = vpack.c.b16 %v1031, %v1030
  %v1364 = vpack.c.b16 %v1033, %v1032
  %v1365 = vpack.c.b16 %v1035, %v1034
  %v1366 = vpack.c.b16 %v1037, %v1036
  %v1367 = vpack.c.b16 %v1039, %v1038
  %v1368 = vpack.c.b16 %v1041, %v1040
  %v1369 = vpack.c.b16 %v1043, %v1042
  %v1370 = vpack.c.b16 %v1045, %v1044
  %v1371 = vpack.c.b16 %v1047, %v1046
  %v1372 = vpack.c.b16 %v1049, %v1048
  %v1373 = vpack.c.b16 %v1051, %v1050
  %v1374 = vpack.c.b16 %v1053, %v1052
  %v1375 = vpack.c.b16 %v1055, %v1054
  %v1376 = vpack.c.b16 %v1057, %v1056
  %v1377 = vpack.c.b16 %v1059, %v1058
  %v1378 = vpack.c.b16 %v1061, %v1060
  %v1379 = vpack.c.b16 %v1063, %v1062
  %v1380 = vpack.c.b16 %v1065, %v1064
  %v1381 = vpack.c.b16 %v1067, %v1066
  %v1382 = vpack.c.b16 %v1069, %v1068
  %v1383 = vpack.c.b16 %v1071, %v1070
  %v1384 = vpack.c.b16 %v1073, %v1072
  %v1385 = vpack.c.b16 %v1075, %v1074
  %v1386 = vpack.c.b16 %v1077, %v1076
  %v1387 = vpack.c.b16 %v1079, %v1078
  %v1388 = vpack.c.b16 %v1081, %v1080
  %v1389 = vpack.c.b16 %v1083, %v1082
  %v1390 = vpack.c.b16 %v1085, %v1084
  %v1391 = vpack.c.b16 %v1087, %v1086
  %v1392 = vpack.c.b16 %v1089, %v1088
  %v1393 = vpack.c.b16 %v1091, %v1090
  %v1394 = vpack.c.b16 %v1093, %v1092
  %v1395 = vpack.c.b16 %v1095, %v1094
  %v1396 = vpack.c.b16 %v1097, %v1096
  %v1397 = vpack.c.b16 %v1099, %v1098
  %v1398 = vpack.c.b16 %v1101, %v1100
  %v1399 = vpack.c.b16 %v1103, %v1102
  %v1400 = vpack.c.b16 %v1105, %v1104
  %v1401 = vpack.c.b16 %v1107, %v1106
  %v1402 = vpack.c.b16 %v1109, %v1108
  %v1403 = vpack.c.b16 %v1111, %v1110
  %v1404 = vpack.c.b16 %v1113, %v1112
  %v1405 = vpack.c.b16 %v1115, %v1114
  %v1406 = vpack.c.b16 %v1117, %v1116
  %v1407 = vpack.c.b16 %v1119, %v1118
  %v1408 = vpack.c.b16 %v1121, %v1120
  %v1409 = vpack.c.b16 %v1123, %v1122
  %v1410 = vpack.c.b16 %v1125, %v1124
  %v1411 = vpack.c.b16 %v1127, %v1126
  %v1412 = vpack.c.b16 %v1129, %v1128
  %v1413 = vpack.c.b16 %v1131, %v1130
  %v1414 = vpack.c.b16 %v1133, %v1132
  %v1415 = vpack.c.b16 %v1135, %v1134
  %v1416 = vpack.c.b16 %v1137, %v1136
  %v1417 = vpack.c.b16 %v1139, %v1138
  %v1418 = vpack.c.b16 %v1141, %v1140
  %v1419 = vpack.c.b16 %v1143, %v1142
  %v1420 = vpack.c.b16 %v1145, %v1144
  %v1421 = vpack.c.b16 %v1147, %v1146
  %v1422 = vpack.c.b16 %v1149, %v1148
  %v1423 = vpack.c.b16 %v1151, %v1150
  %v1424 = vpack.c.b16 %v1153, %v1152
  %v1425 = vpack.c.b16 %v1155, %v1154
  %v1426 = vpack.c.b16 %v1157, %v1156
  %v1427 = vpack.c.b16 %v1159, %v1158
  %v1428 = vpack.c.b16 %v1161, %v1160
  %v1429 = vpack.c.b16 %v1163, %v1162
  %v1430 = vpack.c.b16 %v1165, %v1164
  %v1431 = vpack.c.b16 %v1167, %v1166
  %v1432 = vpack.c.b16 %v1169, %v1168
  %v1433 = vpack.c.b16 %v1171, %v1170
  %v1434 = vpack.c.b16 %v1173, %v1172
  %v1435 = vpack.c.b16 %v1175, %v1174
  %v1436 = vpack.c.b16 %v1177, %v1176
  %v1437 = vpack.c.b16 %v1179, %v1178
  %v1438 = vpack.c.b16 %v1181, %v1180
  %v1439 = vpack.c.b16 %v1183, %v1182
  %v1440 = vpack.c.b16 %v1185, %v1184
  %v1441 = vpack.c.b16 %v1187, %v1186
  %v1442 = vpack.c.b16 %v1189, %v1188
  %v1443 = vpack.c.b16 %v1191, %v1190
  %v1444 = vpack.c.b16 %v1193, %v1192
  %v1445 = vpack.c.b16 %v1195, %v1194
  %v1446 = vpack.c.b16 %v1197, %v1196
  %v1447 = vpack.c.b16 %v1199, %v1198
  %v1448 = vpack.c.b16 %v1201, %v1200
  %v1449 = vpack.c.b16 %v1203, %v1202
  %v1450 = vpack.c.b16 %v1205, %v1204
  %v1451 = vpack.c.b16 %v1207, %v1206
  %v1452 = vpack.c.b16 %v1209, %v1208
  %v1453 = vpack.c.b16 %v1211, %v1210
  %v1454 = vpack.c.b16 %v1213, %v1212
  %v1455 = vpack.c.b16 %v1215, %v1214
  %v1456 = vpack.c.b16 %v1217, %v1216
  %v1457 = vpack.c.b16 %v1219, %v1218
  %v1458 = vpack.c.b16 %v1221, %v1220
  %v1459 = vpack.c.b16 %v1223, %v1222
  %v1460 = vpack.c.b16 %v1225, %v1224
  %v1461 = vpack.c.b16 %v1227, %v1226
  %v1462 = vpack.c.b16 %v1229, %v1228
  %v1463 = vpack.c.b16 %v1231, %v1230
  %v1464 = vpack.c.b16 %v1233, %v1232
  %v1465 = vpack.c.b16 %v1235, %v1234
  %v1466 = vpack.c.b16 %v1237, %v1236
  %v1467 = vpack.c.b16 %v1239, %v1238
  %v1468 = vpack.c.b16 %v1241, %v1240
  %v1469 = vpack.c.b16 %v1243, %v1242
  %v1470 = vpack.c.b16 %v1245, %v1244
  %v1471 = vpack.c.b16 %v1247, %v1246
  %v1472 = vpack.c.b16 %v1249, %v1248
  %v1473 = vpack.c.b16 %v1251, %v1250
  %v1474 = vpack.c.b16 %v1253, %v1252
  %v1475 = vpack.c.b16 %v1255, %v1254
  %v1476 = vpack.c.b16 %v1257, %v1256
  %v1477 = vpack.c.b16 %v1259, %v1258
  %v1478 = vpack.c.b16 %v1261, %v1260
  %v1479 = vpack.c.b16 %v1263, %v1262
  %v1480 = vpack.c.b16 %v1265, %v1264
  %v1481 = vpack.c.b16 %v1267, %v1266
  %v1482 = vpack.c.b16 %v1269, %v1268
  %v1483 = vpack.c.b16 %v1271, %v1270
  %v1484 = vpack.c.b16 %v1273, %v1272
  %v1485 = vpack.c.b16 %v1275, %v1274
  %v1486 = vpack.c.b16 %v1277, %v1276
  %v1487 = vpack.c.b16 %v1279, %v1278
  %v1488 = vpack.c.b16 %v1281, %v1280
  %v1489 = vpack.c.b16 %v1283, %v1282
  %v1490 = vpack.c.b16 %v1285, %v1284
  %v1491 = vpack.c.b16 %v1287, %v1286
  %v1492 = vpack.c.b16 %v1289, %v1288
  %v1493 = vpack.c.b16 %v1291, %v1290
  %v1494 = vpack.c.b16 %v1293, %v1292
  %v1495 = vpack.c.b16 %v1295, %v1294
  %v1496 = vpack.c.b16 %v1297, %v1296
  %v1497 = vpack.c.b16 %v1299, %v1298
  %v1498 = vpack.c.b16 %v1301, %v1300
  %v1499 = vpack.c.b16 %v1303, %v1302
  %vm1696 = vcmask 523264
  %v1698 = vsel %vm1696, %v495, 0
  %1700 = vmatprep.subr.bf16.mxu0 0
  %1701 = vmatpush1.bf16.msra.mxu0 %v1311
  %1702 = vmatprep.subr.bf16.mxu0 0
  %1703 = vmatpush1.bf16.msra.mxu0 %v1310
  %1704 = vmatprep.subr.bf16.mxu0 0
  %1705 = vmatpush1.bf16.msra.mxu0 %v1309
  %1706 = vmatprep.subr.bf16.mxu0 0
  %1707 = vmatpush1.bf16.msra.mxu0 %v1308
  %1708 = vmatprep.subr.bf16.mxu0 0
  %1709 = vmatpush1.bf16.msra.mxu0 %v1307
  %1710 = vmatprep.subr.bf16.mxu0 0
  %1711 = vmatpush1.bf16.msra.mxu0 %v1306
  %1712 = vmatprep.subr.bf16.mxu0 0
  %1713 = vmatpush1.bf16.msra.mxu0 %v1305
  %1714 = vmatprep.subr.bf16.mxu0 0
  %1715 = vmatpush1.bf16.msra.mxu0 %v1304
  %1716 = vmatprep.subr.bf16.mxu0 0
  %1717 = vmatpush2.bf16.msra.mxu0 %v1319
  %1718 = vmatprep.subr.bf16.mxu0 0
  %1719 = vmatpush2.bf16.msra.mxu0 %v1318
  %1720 = vmatprep.subr.bf16.mxu0 0
  %1721 = vmatpush2.bf16.msra.mxu0 %v1317
  %1722 = vmatprep.subr.bf16.mxu0 0
  %1723 = vmatpush2.bf16.msra.mxu0 %v1316
  %1724 = vmatprep.subr.bf16.mxu0 0
  %1725 = vmatpush2.bf16.msra.mxu0 %v1315
  %1726 = vmatprep.subr.bf16.mxu0 0
  %1727 = vmatpush2.bf16.msra.mxu0 %v1314
  %1728 = vmatprep.subr.bf16.mxu0 0
  %1729 = vmatpush2.bf16.msra.mxu0 %v1313
  %1730 = vmatprep.subr.bf16.mxu0 0
  %1731 = vmatpush2.bf16.msra.mxu0 %v1312
  %1732 = vmatprep.mubr.bf16.mxu0 %v472
  %1733 = vmatmul.mubr.bf16.gmra.mxu0 %v471
  %v1734 = vpop.f32.mrf.mxu0
  %v1735 = vadd.f32 %v431, %v1734
  %v1736 = vpop.f32.mrf.mxu0
  %v1737 = vpop.f32.mrf.mxu0
  %v1738 = vpop.f32.mrf.mxu0
  %1739 = vdwg.mxu0
  %1740 = vmatprep.subr.bf16.mxu0 0
  %1741 = vmatpush1.bf16.msra.mxu0 %v1327
  %1742 = vmatprep.subr.bf16.mxu0 0
  %1743 = vmatpush1.bf16.msra.mxu0 %v1326
  %1744 = vmatprep.subr.bf16.mxu0 0
  %1745 = vmatpush1.bf16.msra.mxu0 %v1325
  %1746 = vmatprep.subr.bf16.mxu0 0
  %1747 = vmatpush1.bf16.msra.mxu0 %v1324
  %1748 = vmatprep.subr.bf16.mxu0 0
  %1749 = vmatpush1.bf16.msra.mxu0 %v1323
  %1750 = vmatprep.subr.bf16.mxu0 0
  %1751 = vmatpush1.bf16.msra.mxu0 %v1322
  %1752 = vmatprep.subr.bf16.mxu0 0
  %1753 = vmatpush1.bf16.msra.mxu0 %v1321
  %1754 = vmatprep.subr.bf16.mxu0 0
  %1755 = vmatpush1.bf16.msra.mxu0 %v1320
  %1756 = vmatprep.subr.bf16.mxu0 0
  %1757 = vmatpush2.bf16.msra.mxu0 %v1335
  %1758 = vmatprep.subr.bf16.mxu0 0
  %1759 = vmatpush2.bf16.msra.mxu0 %v1334
  %1760 = vmatprep.subr.bf16.mxu0 0
  %1761 = vmatpush2.bf16.msra.mxu0 %v1333
  %1762 = vmatprep.subr.bf16.mxu0 0
  %1763 = vmatpush2.bf16.msra.mxu0 %v1332
  %1764 = vmatprep.subr.bf16.mxu0 0
  %1765 = vmatpush2.bf16.msra.mxu0 %v1331
  %1766 = vmatprep.subr.bf16.mxu0 0
  %1767 = vmatpush2.bf16.msra.mxu0 %v1330
  %1768 = vmatprep.subr.bf16.mxu0 0
  %1769 = vmatpush2.bf16.msra.mxu0 %v1329
  %1770 = vmatprep.subr.bf16.mxu0 0
  %1771 = vmatpush2.bf16.msra.mxu0 %v1328
  %1772 = vmatprep.mubr.bf16.mxu0 %v474
  %1773 = vmatmul.mubr.bf16.gmra.mxu0 %v473
  %v1774 = vpop.f32.mrf.mxu0
  %v1775 = vadd.f32 %v1735, %v1774
  %v1776 = vpop.f32.mrf.mxu0
  %v1777 = vpop.f32.mrf.mxu0
  %v1778 = vpop.f32.mrf.mxu0
  %1779 = vdwg.mxu0
  %1780 = vmatprep.subr.bf16.mxu0 0
  %1781 = vmatpush1.bf16.msra.mxu0 %v1343
  %1782 = vmatprep.subr.bf16.mxu0 0
  %1783 = vmatpush1.bf16.msra.mxu0 %v1342
  %1784 = vmatprep.subr.bf16.mxu0 0
  %1785 = vmatpush1.bf16.msra.mxu0 %v1341
  %1786 = vmatprep.subr.bf16.mxu0 0
  %1787 = vmatpush1.bf16.msra.mxu0 %v1340
  %1788 = vmatprep.subr.bf16.mxu0 0
  %1789 = vmatpush1.bf16.msra.mxu0 %v1339
  %1790 = vmatprep.subr.bf16.mxu0 0
  %1791 = vmatpush1.bf16.msra.mxu0 %v1338
  %1792 = vmatprep.subr.bf16.mxu0 0
  %1793 = vmatpush1.bf16.msra.mxu0 %v1337
  %1794 = vmatprep.subr.bf16.mxu0 0
  %1795 = vmatpush1.bf16.msra.mxu0 %v1336
  %1796 = vmatprep.subr.bf16.mxu0 0
  %1797 = vmatpush2.bf16.msra.mxu0 %v1351
  %1798 = vmatprep.subr.bf16.mxu0 0
  %1799 = vmatpush2.bf16.msra.mxu0 %v1350
  %1800 = vmatprep.subr.bf16.mxu0 0
  %1801 = vmatpush2.bf16.msra.mxu0 %v1349
  %1802 = vmatprep.subr.bf16.mxu0 0
  %1803 = vmatpush2.bf16.msra.mxu0 %v1348
  %1804 = vmatprep.subr.bf16.mxu0 0
  %1805 = vmatpush2.bf16.msra.mxu0 %v1347
  %1806 = vmatprep.subr.bf16.mxu0 0
  %1807 = vmatpush2.bf16.msra.mxu0 %v1346
  %1808 = vmatprep.subr.bf16.mxu0 0
  %1809 = vmatpush2.bf16.msra.mxu0 %v1345
  %1810 = vmatprep.subr.bf16.mxu0 0
  %1811 = vmatpush2.bf16.msra.mxu0 %v1344
  %1812 = vmatprep.mubr.bf16.mxu0 %v476
  %1813 = vmatmul.mubr.bf16.gmra.mxu0 %v475
  %v1814 = vpop.f32.mrf.mxu0
  %v1815 = vadd.f32 %v1775, %v1814
  %v1816 = vpop.f32.mrf.mxu0
  %v1817 = vpop.f32.mrf.mxu0
  %v1818 = vpop.f32.mrf.mxu0
  %1819 = vdwg.mxu0
  %1820 = vmatprep.subr.bf16.mxu0 0
  %1821 = vmatpush1.bf16.msra.mxu0 %v1359
  %1822 = vmatprep.subr.bf16.mxu0 0
  %1823 = vmatpush1.bf16.msra.mxu0 %v1358
  %1824 = vmatprep.subr.bf16.mxu0 0
  %1825 = vmatpush1.bf16.msra.mxu0 %v1357
  %1826 = vmatprep.subr.bf16.mxu0 0
  %1827 = vmatpush1.bf16.msra.mxu0 %v1356
  %1828 = vmatprep.subr.bf16.mxu0 0
  %1829 = vmatpush1.bf16.msra.mxu0 %v1355
  %1830 = vmatprep.subr.bf16.mxu0 0
  %1831 = vmatpush1.bf16.msra.mxu0 %v1354
  %1832 = vmatprep.subr.bf16.mxu0 0
  %1833 = vmatpush1.bf16.msra.mxu0 %v1353
  %1834 = vmatprep.subr.bf16.mxu0 0
  %1835 = vmatpush1.bf16.msra.mxu0 %v1352
  %1836 = vmatprep.subr.bf16.mxu0 0
  %1837 = vmatpush2.bf16.msra.mxu0 %v1367
  %1838 = vmatprep.subr.bf16.mxu0 0
  %1839 = vmatpush2.bf16.msra.mxu0 %v1366
  %1840 = vmatprep.subr.bf16.mxu0 0
  %1841 = vmatpush2.bf16.msra.mxu0 %v1365
  %1842 = vmatprep.subr.bf16.mxu0 0
  %1843 = vmatpush2.bf16.msra.mxu0 %v1364
  %1844 = vmatprep.subr.bf16.mxu0 0
  %1845 = vmatpush2.bf16.msra.mxu0 %v1363
  %1846 = vmatprep.subr.bf16.mxu0 0
  %1847 = vmatpush2.bf16.msra.mxu0 %v1362
  %1848 = vmatprep.subr.bf16.mxu0 0
  %1849 = vmatpush2.bf16.msra.mxu0 %v1361
  %1850 = vmatprep.subr.bf16.mxu0 0
  %1851 = vmatpush2.bf16.msra.mxu0 %v1360
  %1852 = vmatprep.mubr.bf16.mxu0 %v478
  %1853 = vmatmul.mubr.bf16.gmra.mxu0 %v477
  %v1854 = vpop.f32.mrf.mxu0
  %v1855 = vadd.f32 %v1815, %v1854
  %v1856 = vpop.f32.mrf.mxu0
  %v1857 = vpop.f32.mrf.mxu0
  %v1858 = vpop.f32.mrf.mxu0
  %1859 = vdwg.mxu0
  %1860 = vmatprep.subr.bf16.mxu0 0
  %1861 = vmatpush1.bf16.msra.mxu0 %v1375
  %1862 = vmatprep.subr.bf16.mxu0 0
  %1863 = vmatpush1.bf16.msra.mxu0 %v1374
  %1864 = vmatprep.subr.bf16.mxu0 0
  %1865 = vmatpush1.bf16.msra.mxu0 %v1373
  %1866 = vmatprep.subr.bf16.mxu0 0
  %1867 = vmatpush1.bf16.msra.mxu0 %v1372
  %1868 = vmatprep.subr.bf16.mxu0 0
  %1869 = vmatpush1.bf16.msra.mxu0 %v1371
  %1870 = vmatprep.subr.bf16.mxu0 0
  %1871 = vmatpush1.bf16.msra.mxu0 %v1370
  %1872 = vmatprep.subr.bf16.mxu0 0
  %1873 = vmatpush1.bf16.msra.mxu0 %v1369
  %1874 = vmatprep.subr.bf16.mxu0 0
  %1875 = vmatpush1.bf16.msra.mxu0 %v1368
  %1876 = vmatprep.subr.bf16.mxu0 0
  %1877 = vmatpush2.bf16.msra.mxu0 %v1383
  %1878 = vmatprep.subr.bf16.mxu0 0
  %1879 = vmatpush2.bf16.msra.mxu0 %v1382
  %1880 = vmatprep.subr.bf16.mxu0 0
  %1881 = vmatpush2.bf16.msra.mxu0 %v1381
  %1882 = vmatprep.subr.bf16.mxu0 0
  %1883 = vmatpush2.bf16.msra.mxu0 %v1380
  %1884 = vmatprep.subr.bf16.mxu0 0
  %1885 = vmatpush2.bf16.msra.mxu0 %v1379
  %1886 = vmatprep.subr.bf16.mxu0 0
  %1887 = vmatpush2.bf16.msra.mxu0 %v1378
  %1888 = vmatprep.subr.bf16.mxu0 0
  %1889 = vmatpush2.bf16.msra.mxu0 %v1377
  %1890 = vmatprep.subr.bf16.mxu0 0
  %1891 = vmatpush2.bf16.msra.mxu0 %v1376
  %1892 = vmatprep.mubr.bf16.mxu0 %v480
  %1893 = vmatmul.mubr.bf16.gmra.mxu0 %v479
  %v1894 = vpop.f32.mrf.mxu0
  %v1895 = vadd.f32 %v1855, %v1894
  %v1896 = vpop.f32.mrf.mxu0
  %v1897 = vpop.f32.mrf.mxu0
  %v1898 = vpop.f32.mrf.mxu0
  %1899 = vdwg.mxu0
  %1900 = vmatprep.subr.bf16.mxu0 0
  %1901 = vmatpush1.bf16.msra.mxu0 %v1391
  %1902 = vmatprep.subr.bf16.mxu0 0
  %1903 = vmatpush1.bf16.msra.mxu0 %v1390
  %1904 = vmatprep.subr.bf16.mxu0 0
  %1905 = vmatpush1.bf16.msra.mxu0 %v1389
  %1906 = vmatprep.subr.bf16.mxu0 0
  %1907 = vmatpush1.bf16.msra.mxu0 %v1388
  %1908 = vmatprep.subr.bf16.mxu0 0
  %1909 = vmatpush1.bf16.msra.mxu0 %v1387
  %1910 = vmatprep.subr.bf16.mxu0 0
  %1911 = vmatpush1.bf16.msra.mxu0 %v1386
  %1912 = vmatprep.subr.bf16.mxu0 0
  %1913 = vmatpush1.bf16.msra.mxu0 %v1385
  %1914 = vmatprep.subr.bf16.mxu0 0
  %1915 = vmatpush1.bf16.msra.mxu0 %v1384
  %1916 = vmatprep.subr.bf16.mxu0 0
  %1917 = vmatpush2.bf16.msra.mxu0 %v1399
  %1918 = vmatprep.subr.bf16.mxu0 0
  %1919 = vmatpush2.bf16.msra.mxu0 %v1398
  %1920 = vmatprep.subr.bf16.mxu0 0
  %1921 = vmatpush2.bf16.msra.mxu0 %v1397
  %1922 = vmatprep.subr.bf16.mxu0 0
  %1923 = vmatpush2.bf16.msra.mxu0 %v1396
  %1924 = vmatprep.subr.bf16.mxu0 0
  %1925 = vmatpush2.bf16.msra.mxu0 %v1395
  %1926 = vmatprep.subr.bf16.mxu0 0
  %1927 = vmatpush2.bf16.msra.mxu0 %v1394
  %1928 = vmatprep.subr.bf16.mxu0 0
  %1929 = vmatpush2.bf16.msra.mxu0 %v1393
  %1930 = vmatprep.subr.bf16.mxu0 0
  %1931 = vmatpush2.bf16.msra.mxu0 %v1392
  %1932 = vmatprep.mubr.bf16.mxu0 %v482
  %1933 = vmatmul.mubr.bf16.gmra.mxu0 %v481
  %v1934 = vpop.f32.mrf.mxu0
  %v1935 = vadd.f32 %v1895, %v1934
  %v1936 = vpop.f32.mrf.mxu0
  %v1937 = vpop.f32.mrf.mxu0
  %v1938 = vpop.f32.mrf.mxu0
  %1939 = vdwg.mxu0
  %1940 = vmatprep.subr.bf16.mxu0 0
  %1941 = vmatpush1.bf16.msra.mxu0 %v1407
  %1942 = vmatprep.subr.bf16.mxu0 0
  %1943 = vmatpush1.bf16.msra.mxu0 %v1406
  %1944 = vmatprep.subr.bf16.mxu0 0
  %1945 = vmatpush1.bf16.msra.mxu0 %v1405
  %1946 = vmatprep.subr.bf16.mxu0 0
  %1947 = vmatpush1.bf16.msra.mxu0 %v1404
  %1948 = vmatprep.subr.bf16.mxu0 0
  %1949 = vmatpush1.bf16.msra.mxu0 %v1403
  %1950 = vmatprep.subr.bf16.mxu0 0
  %1951 = vmatpush1.bf16.msra.mxu0 %v1402
  %1952 = vmatprep.subr.bf16.mxu0 0
  %1953 = vmatpush1.bf16.msra.mxu0 %v1401
  %1954 = vmatprep.subr.bf16.mxu0 0
  %1955 = vmatpush1.bf16.msra.mxu0 %v1400
  %1956 = vmatprep.subr.bf16.mxu0 0
  %1957 = vmatpush2.bf16.msra.mxu0 %v1415
  %1958 = vmatprep.subr.bf16.mxu0 0
  %1959 = vmatpush2.bf16.msra.mxu0 %v1414
  %1960 = vmatprep.subr.bf16.mxu0 0
  %1961 = vmatpush2.bf16.msra.mxu0 %v1413
  %1962 = vmatprep.subr.bf16.mxu0 0
  %1963 = vmatpush2.bf16.msra.mxu0 %v1412
  %1964 = vmatprep.subr.bf16.mxu0 0
  %1965 = vmatpush2.bf16.msra.mxu0 %v1411
  %1966 = vmatprep.subr.bf16.mxu0 0
  %1967 = vmatpush2.bf16.msra.mxu0 %v1410
  %1968 = vmatprep.subr.bf16.mxu0 0
  %1969 = vmatpush2.bf16.msra.mxu0 %v1409
  %1970 = vmatprep.subr.bf16.mxu0 0
  %1971 = vmatpush2.bf16.msra.mxu0 %v1408
  %1972 = vmatprep.mubr.bf16.mxu0 %v484
  %1973 = vmatmul.mubr.bf16.gmra.mxu0 %v483
  %v1974 = vpop.f32.mrf.mxu0
  %v1975 = vadd.f32 %v1935, %v1974
  %v1976 = vpop.f32.mrf.mxu0
  %v1977 = vpop.f32.mrf.mxu0
  %v1978 = vpop.f32.mrf.mxu0
  %1979 = vdwg.mxu0
  %1980 = vmatprep.subr.bf16.mxu0 0
  %1981 = vmatpush1.bf16.msra.mxu0 %v1423
  %1982 = vmatprep.subr.bf16.mxu0 0
  %1983 = vmatpush1.bf16.msra.mxu0 %v1422
  %1984 = vmatprep.subr.bf16.mxu0 0
  %1985 = vmatpush1.bf16.msra.mxu0 %v1421
  %1986 = vmatprep.subr.bf16.mxu0 0
  %1987 = vmatpush1.bf16.msra.mxu0 %v1420
  %1988 = vmatprep.subr.bf16.mxu0 0
  %1989 = vmatpush1.bf16.msra.mxu0 %v1419
  %1990 = vmatprep.subr.bf16.mxu0 0
  %1991 = vmatpush1.bf16.msra.mxu0 %v1418
  %1992 = vmatprep.subr.bf16.mxu0 0
  %1993 = vmatpush1.bf16.msra.mxu0 %v1417
  %1994 = vmatprep.subr.bf16.mxu0 0
  %1995 = vmatpush1.bf16.msra.mxu0 %v1416
  %1996 = vmatprep.subr.bf16.mxu0 0
  %1997 = vmatpush2.bf16.msra.mxu0 %v1431
  %1998 = vmatprep.subr.bf16.mxu0 0
  %1999 = vmatpush2.bf16.msra.mxu0 %v1430
  %2000 = vmatprep.subr.bf16.mxu0 0
  %2001 = vmatpush2.bf16.msra.mxu0 %v1429
  %2002 = vmatprep.subr.bf16.mxu0 0
  %2003 = vmatpush2.bf16.msra.mxu0 %v1428
  %2004 = vmatprep.subr.bf16.mxu0 0
  %2005 = vmatpush2.bf16.msra.mxu0 %v1427
  %2006 = vmatprep.subr.bf16.mxu0 0
  %2007 = vmatpush2.bf16.msra.mxu0 %v1426
  %2008 = vmatprep.subr.bf16.mxu0 0
  %2009 = vmatpush2.bf16.msra.mxu0 %v1425
  %2010 = vmatprep.subr.bf16.mxu0 0
  %2011 = vmatpush2.bf16.msra.mxu0 %v1424
  %2012 = vmatprep.mubr.bf16.mxu0 %v486
  %2013 = vmatmul.mubr.bf16.gmra.mxu0 %v485
  %v2014 = vpop.f32.mrf.mxu0
  %v2015 = vadd.f32 %v1975, %v2014
  %v2016 = vpop.f32.mrf.mxu0
  %v2017 = vpop.f32.mrf.mxu0
  %v2018 = vpop.f32.mrf.mxu0
  %2019 = vdwg.mxu0
  %2020 = vmatprep.subr.bf16.mxu0 0
  %2021 = vmatpush1.bf16.msra.mxu0 %v1439
  %2022 = vmatprep.subr.bf16.mxu0 0
  %2023 = vmatpush1.bf16.msra.mxu0 %v1438
  %2024 = vmatprep.subr.bf16.mxu0 0
  %2025 = vmatpush1.bf16.msra.mxu0 %v1437
  %2026 = vmatprep.subr.bf16.mxu0 0
  %2027 = vmatpush1.bf16.msra.mxu0 %v1436
  %2028 = vmatprep.subr.bf16.mxu0 0
  %2029 = vmatpush1.bf16.msra.mxu0 %v1435
  %2030 = vmatprep.subr.bf16.mxu0 0
  %2031 = vmatpush1.bf16.msra.mxu0 %v1434
  %2032 = vmatprep.subr.bf16.mxu0 0
  %2033 = vmatpush1.bf16.msra.mxu0 %v1433
  %2034 = vmatprep.subr.bf16.mxu0 0
  %2035 = vmatpush1.bf16.msra.mxu0 %v1432
  %2036 = vmatprep.subr.bf16.mxu0 0
  %2037 = vmatpush2.bf16.msra.mxu0 %v1447
  %2038 = vmatprep.subr.bf16.mxu0 0
  %2039 = vmatpush2.bf16.msra.mxu0 %v1446
  %2040 = vmatprep.subr.bf16.mxu0 0
  %2041 = vmatpush2.bf16.msra.mxu0 %v1445
  %2042 = vmatprep.subr.bf16.mxu0 0
  %2043 = vmatpush2.bf16.msra.mxu0 %v1444
  %2044 = vmatprep.subr.bf16.mxu0 0
  %2045 = vmatpush2.bf16.msra.mxu0 %v1443
  %2046 = vmatprep.subr.bf16.mxu0 0
  %2047 = vmatpush2.bf16.msra.mxu0 %v1442
  %2048 = vmatprep.subr.bf16.mxu0 0
  %2049 = vmatpush2.bf16.msra.mxu0 %v1441
  %2050 = vmatprep.subr.bf16.mxu0 0
  %2051 = vmatpush2.bf16.msra.mxu0 %v1440
  %2052 = vmatprep.mubr.bf16.mxu0 %v488
  %2053 = vmatmul.mubr.bf16.gmra.mxu0 %v487
  %v2054 = vpop.f32.mrf.mxu0
  %v2055 = vadd.f32 %v2015, %v2054
  %v2056 = vpop.f32.mrf.mxu0
  %v2057 = vpop.f32.mrf.mxu0
  %v2058 = vpop.f32.mrf.mxu0
  %2059 = vdwg.mxu0
  %2060 = vmatprep.subr.bf16.mxu0 0
  %2061 = vmatpush1.bf16.msra.mxu0 %v1455
  %2062 = vmatprep.subr.bf16.mxu0 0
  %2063 = vmatpush1.bf16.msra.mxu0 %v1454
  %2064 = vmatprep.subr.bf16.mxu0 0
  %2065 = vmatpush1.bf16.msra.mxu0 %v1453
  %2066 = vmatprep.subr.bf16.mxu0 0
  %2067 = vmatpush1.bf16.msra.mxu0 %v1452
  %2068 = vmatprep.subr.bf16.mxu0 0
  %2069 = vmatpush1.bf16.msra.mxu0 %v1451
  %2070 = vmatprep.subr.bf16.mxu0 0
  %2071 = vmatpush1.bf16.msra.mxu0 %v1450
  %2072 = vmatprep.subr.bf16.mxu0 0
  %2073 = vmatpush1.bf16.msra.mxu0 %v1449
  %2074 = vmatprep.subr.bf16.mxu0 0
  %2075 = vmatpush1.bf16.msra.mxu0 %v1448
  %2076 = vmatprep.subr.bf16.mxu0 0
  %2077 = vmatpush2.bf16.msra.mxu0 %v1463
  %2078 = vmatprep.subr.bf16.mxu0 0
  %2079 = vmatpush2.bf16.msra.mxu0 %v1462
  %2080 = vmatprep.subr.bf16.mxu0 0
  %2081 = vmatpush2.bf16.msra.mxu0 %v1461
  %2082 = vmatprep.subr.bf16.mxu0 0
  %2083 = vmatpush2.bf16.msra.mxu0 %v1460
  %2084 = vmatprep.subr.bf16.mxu0 0
  %2085 = vmatpush2.bf16.msra.mxu0 %v1459
  %2086 = vmatprep.subr.bf16.mxu0 0
  %2087 = vmatpush2.bf16.msra.mxu0 %v1458
  %2088 = vmatprep.subr.bf16.mxu0 0
  %2089 = vmatpush2.bf16.msra.mxu0 %v1457
  %2090 = vmatprep.subr.bf16.mxu0 0
  %2091 = vmatpush2.bf16.msra.mxu0 %v1456
  %2092 = vmatprep.mubr.bf16.mxu0 %v490
  %2093 = vmatmul.mubr.bf16.gmra.mxu0 %v489
  %v2094 = vpop.f32.mrf.mxu0
  %v2095 = vadd.f32 %v2055, %v2094
  %v2096 = vpop.f32.mrf.mxu0
  %v2097 = vpop.f32.mrf.mxu0
  %v2098 = vpop.f32.mrf.mxu0
  %2099 = vdwg.mxu0
  %2100 = vmatprep.subr.bf16.mxu0 0
  %2101 = vmatpush1.bf16.msra.mxu0 %v1471
  %2102 = vmatprep.subr.bf16.mxu0 0
  %2103 = vmatpush1.bf16.msra.mxu0 %v1470
  %2104 = vmatprep.subr.bf16.mxu0 0
  %2105 = vmatpush1.bf16.msra.mxu0 %v1469
  %2106 = vmatprep.subr.bf16.mxu0 0
  %2107 = vmatpush1.bf16.msra.mxu0 %v1468
  %2108 = vmatprep.subr.bf16.mxu0 0
  %2109 = vmatpush1.bf16.msra.mxu0 %v1467
  %2110 = vmatprep.subr.bf16.mxu0 0
  %2111 = vmatpush1.bf16.msra.mxu0 %v1466
  %2112 = vmatprep.subr.bf16.mxu0 0
  %2113 = vmatpush1.bf16.msra.mxu0 %v1465
  %2114 = vmatprep.subr.bf16.mxu0 0
  %2115 = vmatpush1.bf16.msra.mxu0 %v1464
  %2116 = vmatprep.subr.bf16.mxu0 0
  %2117 = vmatpush2.bf16.msra.mxu0 %v1479
  %2118 = vmatprep.subr.bf16.mxu0 0
  %2119 = vmatpush2.bf16.msra.mxu0 %v1478
  %2120 = vmatprep.subr.bf16.mxu0 0
  %2121 = vmatpush2.bf16.msra.mxu0 %v1477
  %2122 = vmatprep.subr.bf16.mxu0 0
  %2123 = vmatpush2.bf16.msra.mxu0 %v1476
  %2124 = vmatprep.subr.bf16.mxu0 0
  %2125 = vmatpush2.bf16.msra.mxu0 %v1475
  %2126 = vmatprep.subr.bf16.mxu0 0
  %2127 = vmatpush2.bf16.msra.mxu0 %v1474
  %2128 = vmatprep.subr.bf16.mxu0 0
  %2129 = vmatpush2.bf16.msra.mxu0 %v1473
  %2130 = vmatprep.subr.bf16.mxu0 0
  %2131 = vmatpush2.bf16.msra.mxu0 %v1472
  %2132 = vmatprep.mubr.bf16.mxu0 %v492
  %2133 = vmatmul.mubr.bf16.gmra.mxu0 %v491
  %v2134 = vpop.f32.mrf.mxu0
  %v2135 = vadd.f32 %v2095, %v2134
  %v2136 = vpop.f32.mrf.mxu0
  %v2137 = vpop.f32.mrf.mxu0
  %v2138 = vpop.f32.mrf.mxu0
  %2139 = vdwg.mxu0
  %2140 = vmatprep.subr.bf16.mxu0 0
  %2141 = vmatpush1.bf16.msra.mxu0 %v1487
  %2142 = vmatprep.subr.bf16.mxu0 0
  %2143 = vmatpush1.bf16.msra.mxu0 %v1486
  %2144 = vmatprep.subr.bf16.mxu0 0
  %2145 = vmatpush1.bf16.msra.mxu0 %v1485
  %2146 = vmatprep.subr.bf16.mxu0 0
  %2147 = vmatpush1.bf16.msra.mxu0 %v1484
  %2148 = vmatprep.subr.bf16.mxu0 0
  %2149 = vmatpush1.bf16.msra.mxu0 %v1483
  %2150 = vmatprep.subr.bf16.mxu0 0
  %2151 = vmatpush1.bf16.msra.mxu0 %v1482
  %2152 = vmatprep.subr.bf16.mxu0 0
  %2153 = vmatpush1.bf16.msra.mxu0 %v1481
  %2154 = vmatprep.subr.bf16.mxu0 0
  %2155 = vmatpush1.bf16.msra.mxu0 %v1480
  %2156 = vmatprep.subr.bf16.mxu0 0
  %2157 = vmatpush2.bf16.msra.mxu0 %v1495
  %2158 = vmatprep.subr.bf16.mxu0 0
  %2159 = vmatpush2.bf16.msra.mxu0 %v1494
  %2160 = vmatprep.subr.bf16.mxu0 0
  %2161 = vmatpush2.bf16.msra.mxu0 %v1493
  %2162 = vmatprep.subr.bf16.mxu0 0
  %2163 = vmatpush2.bf16.msra.mxu0 %v1492
  %2164 = vmatprep.subr.bf16.mxu0 0
  %2165 = vmatpush2.bf16.msra.mxu0 %v1491
  %2166 = vmatprep.subr.bf16.mxu0 0
  %2167 = vmatpush2.bf16.msra.mxu0 %v1490
  %2168 = vmatprep.subr.bf16.mxu0 0
  %2169 = vmatpush2.bf16.msra.mxu0 %v1489
  %2170 = vmatprep.subr.bf16.mxu0 0
  %2171 = vmatpush2.bf16.msra.mxu0 %v1488
  %2172 = vmatprep.mubr.bf16.mxu0 %v494
  %2173 = vmatmul.mubr.bf16.gmra.mxu0 %v493
  %v2174 = vpop.f32.mrf.mxu0
  %v2175 = vadd.f32 %v2135, %v2174
  %v2176 = vpop.f32.mrf.mxu0
  %v2177 = vpop.f32.mrf.mxu0
  %v2178 = vpop.f32.mrf.mxu0
  %2179 = vdwg.mxu0
  %2180 = vmatprep.subr.bf16.mxu0 0
  %2181 = vmatpush1.bf16.msra.mxu0 0
  %2182 = vmatprep.subr.bf16.mxu0 0
  %2183 = vmatpush1.bf16.msra.mxu0 0
  %2184 = vmatprep.subr.bf16.mxu0 0
  %2185 = vmatpush1.bf16.msra.mxu0 0
  %2186 = vmatprep.subr.bf16.mxu0 0
  %2187 = vmatpush1.bf16.msra.mxu0 0
  %2188 = vmatprep.subr.bf16.mxu0 0
  %2189 = vmatpush1.bf16.msra.mxu0 %v1499
  %2190 = vmatprep.subr.bf16.mxu0 0
  %2191 = vmatpush1.bf16.msra.mxu0 %v1498
  %2192 = vmatprep.subr.bf16.mxu0 0
  %2193 = vmatpush1.bf16.msra.mxu0 %v1497
  %2194 = vmatprep.subr.bf16.mxu0 0
  %2195 = vmatpush1.bf16.msra.mxu0 %v1496
  %2196 = vmatprep.subr.bf16.mxu0 0
  %2197 = vmatpush2.bf16.msra.mxu0 0
  %2198 = vmatprep.subr.bf16.mxu0 0
  %2199 = vmatpush2.bf16.msra.mxu0 0
  %2200 = vmatprep.subr.bf16.mxu0 0
  %2201 = vmatpush2.bf16.msra.mxu0 0
  %2202 = vmatprep.subr.bf16.mxu0 0
  %2203 = vmatpush2.bf16.msra.mxu0 0
  %2204 = vmatprep.subr.bf16.mxu0 0
  %2205 = vmatpush2.bf16.msra.mxu0 0
  %2206 = vmatprep.subr.bf16.mxu0 0
  %2207 = vmatpush2.bf16.msra.mxu0 0
  %2208 = vmatprep.subr.bf16.mxu0 0
  %2209 = vmatpush2.bf16.msra.mxu0 0
  %2210 = vmatprep.subr.bf16.mxu0 0
  %2211 = vmatpush2.bf16.msra.mxu0 0
  %2212 = vmatprep.mubr.bf16.mxu0 0
  %2213 = vmatmul.mubr.bf16.gmra.mxu0 %v1698
  %v2214 = vpop.f32.mrf.mxu0
  %v2215 = vadd.f32 %v2175, %v2214
  %v2216 = vpop.f32.mrf.mxu0
  %v2217 = vpop.f32.mrf.mxu0
  %v2218 = vpop.f32.mrf.mxu0
  %2219 = vdwg.mxu0
  %v2220 = vmax.f32 %v2215, 0.0
  %v2221 = vpack.c.bf16 %v2220, %v2220
  %v2222 = vld [vmem:[%s3] sm:$0xf]
  %v2223 = vld [vmem:[%s3 + $0x4] sm:$0xf]
  %v2224 = vld [vmem:[%s3 + $0x8] sm:$0xf]
  %v2225 = vld [vmem:[%s3 + $0xc] sm:$0xf]
  %v2226 = vld [vmem:[%s3 + $0x10] sm:$0xf]
  %v2227 = vld [vmem:[%s3 + $0x14] sm:$0xf]
  %v2228 = vld [vmem:[%s3 + $0x18] sm:$0xf]
  %v2229 = vld [vmem:[%s3 + $0x1c] sm:$0xf]
  %v2230 = vld [vmem:[%s3 + $0x20] sm:$0xf]
  %v2231 = vld [vmem:[%s3 + $0x24] sm:$0xf]
  %v2232 = vld [vmem:[%s3 + $0x28] sm:$0xf]
  %v2233 = vld [vmem:[%s3 + $0x2c] sm:$0xf]
  %v2234 = vld [vmem:[%s3 + $0x30] sm:$0xf]
  %v2235 = vld [vmem:[%s3 + $0x34] sm:$0xf]
  %v2236 = vld [vmem:[%s3 + $0x38] sm:$0xf]
  %v2237 = vld [vmem:[%s3 + $0x3c] sm:$0xf]
  %v2238 = vld [vmem:[%s4] sm:$0x1]
  %v2240 = vlaneseq
  %v2241 = vshrl.u32 %v2240, 7
  %v2242 = vsub.s32 0, %v2241
  %v2243 = vrot.slane %v2238, %v2242
  %v2261 = vunpack.c.l.b16 %v2222
  %v2262 = vunpack.c.l.b16 %v2223
  %v2263 = vunpack.c.l.b16 %v2224
  %v2264 = vunpack.c.l.b16 %v2225
  %v2265 = vunpack.c.l.b16 %v2226
  %v2266 = vunpack.c.l.b16 %v2227
  %v2267 = vunpack.c.l.b16 %v2228
  %v2268 = vunpack.c.l.b16 %v2229
  %v2269 = vunpack.c.l.b16 %v2230
  %v2270 = vunpack.c.l.b16 %v2231
  %v2271 = vunpack.c.l.b16 %v2232
  %v2272 = vunpack.c.l.b16 %v2233
  %v2273 = vunpack.c.l.b16 %v2234
  %v2274 = vunpack.c.l.b16 %v2235
  %v2275 = vunpack.c.l.b16 %v2236
  %v2276 = vunpack.c.l.b16 %v2237
  %v2277 = vpack.c.b16 %v2262, %v2261
  %v2278 = vpack.c.b16 %v2264, %v2263
  %v2279 = vpack.c.b16 %v2266, %v2265
  %v2280 = vpack.c.b16 %v2268, %v2267
  %v2281 = vpack.c.b16 %v2270, %v2269
  %v2282 = vpack.c.b16 %v2272, %v2271
  %v2283 = vpack.c.b16 %v2274, %v2273
  %v2284 = vpack.c.b16 %v2276, %v2275
  %2293 = vmatprep.subr.bf16.mxu0 0
  %2294 = vmatpush1.bf16.msra.mxu0 %v2284
  %2295 = vmatprep.subr.bf16.mxu0 0
  %2296 = vmatpush1.bf16.msra.mxu0 %v2283
  %2297 = vmatprep.subr.bf16.mxu0 0
  %2298 = vmatpush1.bf16.msra.mxu0 %v2282
  %2299 = vmatprep.subr.bf16.mxu0 0
  %2300 = vmatpush1.bf16.msra.mxu0 %v2281
  %2301 = vmatprep.subr.bf16.mxu0 0
  %2302 = vmatpush1.bf16.msra.mxu0 %v2280
  %2303 = vmatprep.subr.bf16.mxu0 0
  %2304 = vmatpush1.bf16.msra.mxu0 %v2279
  %2305 = vmatprep.subr.bf16.mxu0 0
  %2306 = vmatpush1.bf16.msra.mxu0 %v2278
  %2307 = vmatprep.subr.bf16.mxu0 0
  %2308 = vmatpush1.bf16.msra.mxu0 %v2277
  %2309 = vmatprep.subr.bf16.mxu0 0
  %2310 = vmatpush2.bf16.msra.mxu0 0
  %2311 = vmatprep.subr.bf16.mxu0 0
  %2312 = vmatpush2.bf16.msra.mxu0 0
  %2313 = vmatprep.subr.bf16.mxu0 0
  %2314 = vmatpush2.bf16.msra.mxu0 0
  %2315 = vmatprep.subr.bf16.mxu0 0
  %2316 = vmatpush2.bf16.msra.mxu0 0
  %2317 = vmatprep.subr.bf16.mxu0 0
  %2318 = vmatpush2.bf16.msra.mxu0 0
  %2319 = vmatprep.subr.bf16.mxu0 0
  %2320 = vmatpush2.bf16.msra.mxu0 0
  %2321 = vmatprep.subr.bf16.mxu0 0
  %2322 = vmatpush2.bf16.msra.mxu0 0
  %2323 = vmatprep.subr.bf16.mxu0 0
  %2324 = vmatpush2.bf16.msra.mxu0 0
  %2325 = vmatprep.mubr.bf16.mxu0 0
  %2326 = vmatmul.mubr.bf16.gmra.mxu0 %v2221
  %v2327 = vpop.f32.mrf.mxu0
  %v2328 = vadd.f32 %v2243, %v2327
  %v2329 = vpop.f32.mrf.mxu0
  %v2330 = vpop.f32.mrf.mxu0
  %v2331 = vpop.f32.mrf.mxu0
  %2332 = vdwg.mxu0
  %vm2333 = vcmask 80896
  %v2334 = vsel %vm2333, %v2328, -inf
  %2335 = vmax.xlane.f32.xlu0 %v2334
  %v2336 = vpop.xlane.xlu0 %2335
  %v2337 = vsub.f32 %v2328, %v2336
  %v2338 = vmul.f32 %v2337, 1.442695
  %v2339 = vpow.pop %v2338
  %v2340 = vsel %vm2333, %v2339, 0.0
  %2341 = vadd.xlane.f32.xlu0 %v2340
  %v2342 = vpop.xlane.xlu0 %2341
  %v2343 = vrcp.pop %v2342
  %v2344 = vmul.f32 %v2339, %v2343
  %2345 = vst.msk [vmem:[%s5] sm:$0xff] %vm2333, %v2344
  // Predicated region
  $region22: #{net_forward.7} parent=0 // pred_check
    _
  $region23: #{net_forward.7} parent=0 // pred_check_branch
    %2347 = sbr.rel (0) target = $region25
  $region24: #{net_forward.7} parent=0 // pred_region
    _
  $region25: #{net_forward.7} parent=0 // pred_fallthru
    _
  // Predicated region
  $region26: #{net_forward.7} parent=0 // pred_check
    _
  $region27: #{net_forward.7} parent=0 // pred_check_branch
    %2349 = sbr.rel (0) target = $region29
  $region28: #{net_forward.7} parent=0 // pred_region
    _
  $region29: #{net_forward.7} parent=0 // pred_fallthru
    _

</llo_original>
